<compile_context>
chip_gen: v6e
topology: v6e:2x2x1
jax: 0.10.0
libtpu: 0.0.40
codegen_flags: <defaults>
</compile_context>

<pallas_src>
import functools

import jax
import jax.numpy as jnp
from jax.experimental import pallas as pl
from jax.experimental.pallas import tpu as pltpu

D_IN = 2048
D_HID = 512
D_HID2B_PAD = 128   # 48 padded to one full lane group


def _round_up(v, m):
    return ((v + m - 1) // m) * m


def classifier_kernel(x_ref,
                      w1_ref, b1_ref,            # fused first layer (2048,1024)
                      w2a_ref, b2a_ref,          # head1 second layer (512,512)
                      w3a_ref, b3a_ref,          # head1 third layer (512, n1p) padded
                      w2b_ref, b2b_ref,          # head2 second layer (512,128) padded
                      w3b_ref, b3b_ref,          # head2 third layer as a (1,128) row + (1,1) bias
                      out1_ref, out2_ref):
    # In-kernel bf16 cast (cheap VPU work hidden under the MXU; avoids a wrapper-side HBM pass).
    x = x_ref[...].astype(jnp.bfloat16)                                # (TILE_B, 2048)

    # ---- fused first layer for both heads: (TILE_B, 1024) f32, ReLU ----
    h_all = jnp.dot(x, w1_ref[...], preferred_element_type=jnp.float32) + b1_ref[...]
    h_all = jnp.maximum(h_all, 0.0)
    h = h_all[:, :D_HID]                                               # head-1 hidden
    g = h_all[:, D_HID:]                                               # head-2 hidden

    # ---- head 1: 512 -> 512 -> n1p (padded output_dim) ----
    h2 = jnp.dot(h.astype(jnp.bfloat16), w2a_ref[...],
                 preferred_element_type=jnp.float32) + b2a_ref[...]
    h2 = jnp.maximum(h2, 0.0)
    y1 = jnp.dot(h2.astype(jnp.bfloat16), w3a_ref[...],
                 preferred_element_type=jnp.float32) + b3a_ref[...]
    out1_ref[...] = y1.astype(out1_ref.dtype)                          # lane-dense (TILE_B, n1p) bf16

    # ---- head 2: 512 -> 48(padded 128) -> 1 ----
    g2 = jnp.dot(g.astype(jnp.bfloat16), w2b_ref[...],
                 preferred_element_type=jnp.float32) + b2b_ref[...]
    g2 = jnp.maximum(g2, 0.0)                                          # padded cols are exactly 0
    # 48->1 on the VPU/XLU instead of burning an MXU pass (padded weight lanes are 0).
    y2 = jnp.sum(g2 * w3b_ref[...], axis=-1, keepdims=True) + b3b_ref[...]
    out2_ref[...] = y2.astype(out2_ref.dtype)


def prepare_params(raw, output_dim=100):
    """Fuse / pad / cast the PyTorch-layout params (weights stored (in,out)) for the kernel."""
    n1p = _round_up(output_dim, 128)

    def pad_cols(a, n):
        p = n - a.shape[-1]
        return jnp.pad(a, ((0, 0), (0, p))) if p > 0 else a

    bf16 = jnp.bfloat16
    f32 = jnp.float32
    return dict(
        # fused first layer: [head1 | head2] along the output axis
        w1=jnp.concatenate([raw["w1a"], raw["w1b"]], axis=1).astype(bf16),       # (2048,1024)
        b1=jnp.concatenate([raw["b1a"], raw["b1b"]], axis=1).astype(f32),        # (1,1024)
        w2a=raw["w2a"].astype(bf16),                                             # (512,512)
        b2a=raw["b2a"].astype(f32),                                              # (1,512)
        w3a=pad_cols(raw["w3a"], n1p).astype(bf16),                              # (512,n1p)
        b3a=pad_cols(raw["b3a"], n1p).astype(f32),                               # (1,n1p)
        w2b=pad_cols(raw["w2b"], D_HID2B_PAD).astype(bf16),                      # (512,128)
        b2b=pad_cols(raw["b2b"], D_HID2B_PAD).astype(f32),                       # (1,128)
        w3b=pad_cols(raw["w3b"].reshape(1, -1), D_HID2B_PAD).astype(f32),        # (1,128)
        b3b=raw["b3b"].reshape(1, 1).astype(f32),                                # (1,1)
    )


@functools.lru_cache(maxsize=1)
def _single_buffer_supported():
    """Check that pipeline_mode=pl.Buffered(1) compiles & runs on this jax/TPU build."""
    try:
        def _k(x_ref, o_ref):
            o_ref[...] = x_ref[...] + 1.0

        out = pl.pallas_call(
            _k,
            out_shape=jax.ShapeDtypeStruct((8, 128), jnp.float32),
            grid=(1,),
            in_specs=[pl.BlockSpec((8, 128), lambda i: (0, 0),
                                   pipeline_mode=pl.Buffered(1))],
            out_specs=pl.BlockSpec((8, 128), lambda i: (0, 0)),
        )(jnp.zeros((8, 128), jnp.float32))
        jax.block_until_ready(out)
        return True
    except Exception:
        return False


def _choose_tile_b(B, tile_b_max):
    """Batch tile: small B -> one 8-aligned tile; B>256 -> >=2 grid steps (v7x megacore)
    sized to minimize padded rows; large B capped at tile_b_max."""
    if B <= 256:
        return _round_up(max(B, 1), 8)
    n_steps = max(2, -(-B // tile_b_max))
    return min(tile_b_max, _round_up(-(-B // n_steps), 8))


@functools.partial(jax.jit,
                   static_argnames=("output_dim", "tile_b_max", "single_buffer_weights"))
def _classifier_forward_impl(x, prepared, output_dim, tile_b_max, single_buffer_weights):
    B = x.shape[0]
    x2d = x.reshape(B, -1)
    assert x2d.shape[1] == D_IN, f"expected {D_IN} flattened features, got {x2d.shape[1]}"
    n1p = _round_up(output_dim, 128)

    tile_b = _choose_tile_b(B, tile_b_max)
    Bp = _round_up(B, tile_b)
    xin = x2d.astype(jnp.float32)            # kernel does the bf16 cast internally
    if Bp != B:
        xin = jnp.pad(xin, ((0, Bp - B), (0, 0)))

    grid = (Bp // tile_b,)

    if single_buffer_weights:
        # Constant-index weight blocks: single-buffer them to reclaim ~5 MiB of VMEM.
        def const_spec(shape):
            return pl.BlockSpec(shape, lambda i: (0,) * len(shape),
                                pipeline_mode=pl.Buffered(1))
    else:
        def const_spec(shape):
            return pl.BlockSpec(shape, lambda i: (0,) * len(shape))

    in_specs = [
        pl.BlockSpec((tile_b, D_IN), lambda i: (i, 0)),        # x: pipelined over batch
        const_spec((D_IN, 2 * D_HID)), const_spec((1, 2 * D_HID)),
        const_spec((D_HID, D_HID)), const_spec((1, D_HID)),
        const_spec((D_HID, n1p)), const_spec((1, n1p)),
        const_spec((D_HID, D_HID2B_PAD)), const_spec((1, D_HID2B_PAD)),
        const_spec((1, D_HID2B_PAD)), const_spec((1, 1)),
    ]
    out_specs = (
        pl.BlockSpec((tile_b, n1p), lambda i: (i, 0)),
        pl.BlockSpec((tile_b, 1), lambda i: (i, 0)),
    )

    weight_bytes_bf16 = 2 * (D_IN * 2 * D_HID + D_HID * D_HID + D_HID * n1p + D_HID * D_HID2B_PAD)
    bias_bytes_f32 = 4 * (2 * D_HID + D_HID + n1p + D_HID2B_PAD + D_HID2B_PAD + 1)
    cost = pl.CostEstimate(
        flops=2 * Bp * (D_IN * 2 * D_HID + D_HID * D_HID + D_HID * n1p
                        + D_HID * D_HID2B_PAD + D_HID2B_PAD),
        transcendentals=0,
        bytes_accessed=Bp * D_IN * 4 + weight_bytes_bf16 + bias_bytes_f32
                       + Bp * n1p * 2 + Bp * 4,
    )

    out1p, out2p = pl.pallas_call(
        classifier_kernel,
        out_shape=(jax.ShapeDtypeStruct((Bp, n1p), jnp.bfloat16),   # lane-dense bf16 writeback
                   jax.ShapeDtypeStruct((Bp, 1), jnp.float32)),
        grid_spec=pltpu.PrefetchScalarGridSpec(
            num_scalar_prefetch=0,
            grid=grid,
            in_specs=in_specs,
            out_specs=out_specs,
        ),
        compiler_params=pltpu.CompilerParams(
            dimension_semantics=("parallel",),
            vmem_limit_bytes=48 << 20,   # fits v7x's 64 MiB physical; headroom on v5e/v6e
        ),
        cost_estimate=cost,
    )(xin,
      prepared["w1"], prepared["b1"],
      prepared["w2a"], prepared["b2a"],
      prepared["w3a"], prepared["b3a"],
      prepared["w2b"], prepared["b2b"],
      prepared["w3b"], prepared["b3b"])

    # out1 is returned in bf16 (it was produced from bf16 MXU operands anyway).
    return out1p[:B, :output_dim], out2p[:B, :]


def classifier_forward(x, prepared, output_dim=100, tile_b_max=512):
    """x: any shape (B, ...) flattening to (B, 2048). Returns (x1: (B, output_dim) bf16, x2: (B, 1) f32)."""
    return _classifier_forward_impl(x, prepared, output_dim=output_dim,
                                    tile_b_max=tile_b_max,
                                    single_buffer_weights=_single_buffer_supported())


def init_params(key, output_dim=100):
    """Deterministic synthetic parameters matching the PyTorch module's shapes.
    Weights stored as (in, out) (i.e. W.T of torch), biases as (1, out)."""
    ks = jax.random.split(key, 12)

    def lin(kw, kb, fan_in, fan_out):
        bound = 1.0 / jnp.sqrt(fan_in)
        w = jax.random.uniform(kw, (fan_in, fan_out), jnp.float32, -bound, bound)
        b = jax.random.uniform(kb, (1, fan_out), jnp.float32, -bound, bound)
        return w, b

    w1a, b1a = lin(ks[0], ks[1], 2048, 512)
    w2a, b2a = lin(ks[2], ks[3], 512, 512)
    w3a, b3a = lin(ks[4], ks[5], 512, output_dim)
    w1b, b1b = lin(ks[6], ks[7], 2048, 512)
    w2b, b2b = lin(ks[8], ks[9], 512, 48)
    w3b, b3b = lin(ks[10], ks[11], 48, 1)
    return dict(w1a=w1a, b1a=b1a, w2a=w2a, b2a=b2a, w3a=w3a, b3a=b3a,
                w1b=w1b, b1b=b1b, w2b=w2b, b2b=b2b, w3b=w3b, b3b=b3b)


def reference_forward(x, raw):
    """Pure-JAX reference mirroring the kernel's bf16-input / f32-accum numerics."""
    B = x.shape[0]
    xb = x.reshape(B, -1).astype(jnp.bfloat16)
    f32 = jnp.float32
    bf16 = jnp.bfloat16

    def lin(a, w, b):
        return jnp.dot(a, w.astype(bf16), preferred_element_type=f32) + b

    h = jnp.maximum(lin(xb, raw["w1a"], raw["b1a"]), 0.0)
    h = jnp.maximum(lin(h.astype(bf16), raw["w2a"], raw["b2a"]), 0.0)
    y1 = lin(h.astype(bf16), raw["w3a"], raw["b3a"])

    g = jnp.maximum(lin(xb, raw["w1b"], raw["b1b"]), 0.0)
    g = jnp.maximum(lin(g.astype(bf16), raw["w2b"], raw["b2b"]), 0.0)
    y2 = jnp.dot(g, raw["w3b"]) + raw["b3b"]   # f32 VPU-style final layer, matches kernel
    return y1, y2


if __name__ == "__main__":
    key = jax.random.PRNGKey(0)
    k_param, k_x = jax.random.split(key)

    output_dim = 100
    raw_params = init_params(k_param, output_dim=output_dim)
    prepared = prepare_params(raw_params, output_dim=output_dim)

    # Input flattens to 2048 features per example (pooled ResNet34 features).
    B = 2
    x = jax.random.normal(k_x, (B, 2048, 1, 1), dtype=jnp.float32)

    x1, x2 = classifier_forward(x, prepared, output_dim=output_dim)
    jax.block_until_ready((x1, x2))

    # Correctness check against a pure-JAX reference with matching bf16/f32 numerics.
    r1, r2 = reference_forward(x, raw_params)
    assert x1.shape == (B, output_dim) and x2.shape == (B, 1)
    # out1 is stored in bf16 -> allow bf16-rounding-level tolerance.
    assert jnp.allclose(x1.astype(jnp.float32), r1, atol=2e-2, rtol=2e-2), \
        float(jnp.max(jnp.abs(x1.astype(jnp.float32) - r1)))
    assert jnp.allclose(x2, r2, atol=2e-3, rtol=2e-3), float(jnp.max(jnp.abs(x2 - r2)))

    # TODO(synk): training-mode Dropout masking is not implemented (eval-mode identity only).
    print("KERNEL_OK")
</pallas_src>

<mosaic_0001>
module attributes {stable_mosaic.version = 11 : i64} {
  func.func @_k(%arg0: i32, %arg1: memref<8x128xf32, #tpu.memory_space<vmem>>, %arg2: memref<8x128xf32, #tpu.memory_space<vmem>>) attributes {dimension_semantics = [#tpu.dimension_semantics<arbitrary>], iteration_bounds = array<i64: 1>, scalar_prefetch = 0 : i64, scratch_operands = 0 : i64, tpu.core_type = #tpu.core_type<tc>, window_params = [{pipeline_mode = #tpu.pipeline_mode<synchronous>, transform_indices = @transform_0, window_bounds = array<i64: 8, 128>}, {pipeline_mode = #tpu.pipeline_mode<synchronous>, transform_indices = @transform_1, window_bounds = array<i64: 8, 128>}]} {
    %c0 = arith.constant 0 : index
    %c0_0 = arith.constant 0 : index
    %0 = vector.load %arg1[%c0, %c0_0] : memref<8x128xf32, #tpu.memory_space<vmem>>, vector<8x128xf32>
    %cst = arith.constant 1.000000e+00 : f32
    %1 = vector.broadcast %cst : f32 to vector<8x128xf32>
    %2 = arith.addf %0, %1 : vector<8x128xf32>
    %c0_1 = arith.constant 0 : index
    %c0_2 = arith.constant 0 : index
    %3 = vector.load %arg2[%c0_1, %c0_2] : memref<8x128xf32, #tpu.memory_space<vmem>>, vector<8x128xf32>
    tpu.vector_store %arg2[%c0_1, %c0_2], %2 {strides = array<i32>} : memref<8x128xf32, #tpu.memory_space<vmem>>, vector<8x128xf32>,
    return
  }
  func.func @transform_0(%arg0: i32) -> (i32, i32) {
    %c0_i32 = arith.constant 0 : i32
    %c0_i32_0 = arith.constant 0 : i32
    %c0_i32_1 = arith.constant 0 : i32
    return %c0_i32, %c0_i32_0 : i32, i32
  }
  func.func @transform_1(%arg0: i32) -> (i32, i32) {
    %c0_i32 = arith.constant 0 : i32
    %c0_i32_0 = arith.constant 0 : i32
    %c0_i32_1 = arith.constant 0 : i32
    return %c0_i32, %c0_i32_0 : i32, i32
  }
}

module attributes {stable_mosaic.version = 11 : i64} {
  func.func @classifier_kernel(%arg0: i32, %arg1: memref<8x2048xf32, #tpu.memory_space<vmem>>, %arg2: memref<2048x1024xbf16, #tpu.memory_space<vmem>>, %arg3: memref<1x1024xf32, #tpu.memory_space<vmem>>, %arg4: memref<512x512xbf16, #tpu.memory_space<vmem>>, %arg5: memref<1x512xf32, #tpu.memory_space<vmem>>, %arg6: memref<512x128xbf16, #tpu.memory_space<vmem>>, %arg7: memref<1x128xf32, #tpu.memory_space<vmem>>, %arg8: memref<512x128xbf16, #tpu.memory_space<vmem>>, %arg9: memref<1x128xf32, #tpu.memory_space<vmem>>, %arg10: memref<1x128xf32, #tpu.memory_space<vmem>>, %arg11: memref<1x1xf32, #tpu.memory_space<vmem>>, %arg12: memref<8x128xbf16, #tpu.memory_space<vmem>>, %arg13: memref<8x1xf32, #tpu.memory_space<vmem>>) attributes {dimension_semantics = [#tpu.dimension_semantics<parallel>], iteration_bounds = array<i64: 1>, scalar_prefetch = 0 : i64, scratch_operands = 0 : i64, tpu.core_type = #tpu.core_type<tc>, window_params = [{transform_indices = @transform_0, window_bounds = array<i64: 8, 2048>}, {pipeline_mode = #tpu.pipeline_mode<synchronous>, transform_indices = @transform_1, window_bounds = array<i64: 2048, 1024>}, {pipeline_mode = #tpu.pipeline_mode<synchronous>, transform_indices = @transform_2, window_bounds = array<i64: 1, 1024>}, {pipeline_mode = #tpu.pipeline_mode<synchronous>, transform_indices = @transform_3, window_bounds = array<i64: 512, 512>}, {pipeline_mode = #tpu.pipeline_mode<synchronous>, transform_indices = @transform_4, window_bounds = array<i64: 1, 512>}, {pipeline_mode = #tpu.pipeline_mode<synchronous>, transform_indices = @transform_5, window_bounds = array<i64: 512, 128>}, {pipeline_mode = #tpu.pipeline_mode<synchronous>, transform_indices = @transform_6, window_bounds = array<i64: 1, 128>}, {pipeline_mode = #tpu.pipeline_mode<synchronous>, transform_indices = @transform_7, window_bounds = array<i64: 512, 128>}, {pipeline_mode = #tpu.pipeline_mode<synchronous>, transform_indices = @transform_8, window_bounds = array<i64: 1, 128>}, {pipeline_mode = #tpu.pipeline_mode<synchronous>, transform_indices = @transform_9, window_bounds = array<i64: 1, 128>}, {pipeline_mode = #tpu.pipeline_mode<synchronous>, transform_indices = @transform_10, window_bounds = array<i64: 1, 1>}, {transform_indices = @transform_11, window_bounds = array<i64: 8, 128>}, {transform_indices = @transform_12, window_bounds = array<i64: 8, 1>}]} {
    %c0 = arith.constant 0 : index
    %c0_0 = arith.constant 0 : index
    %0 = vector.load %arg1[%c0, %c0_0] : memref<8x2048xf32, #tpu.memory_space<vmem>>, vector<8x2048xf32>
    %1 = arith.truncf %0 : vector<8x2048xf32> to vector<8x2048xbf16>
    %c0_1 = arith.constant 0 : index
    %c0_2 = arith.constant 0 : index
    %2 = vector.load %arg2[%c0_1, %c0_2] : memref<2048x1024xbf16, #tpu.memory_space<vmem>>, vector<2048x1024xbf16>
    %cst = arith.constant dense<0.000000e+00> : vector<8x1024xf32>
    %3 = tpu.matmul %1, %2, %cst {dimension_numbers = #tpu.dot_dimension_numbers<[1], [0], [0], [1], [0, 0, 1, 1], [], []>} : vector<8x2048xbf16>, vector<2048x1024xbf16>, vector<8x1024xf32> -> vector<8x1024xf32>
    %c0_3 = arith.constant 0 : index
    %c0_4 = arith.constant 0 : index
    %4 = vector.load %arg3[%c0_3, %c0_4] : memref<1x1024xf32, #tpu.memory_space<vmem>>, vector<1x1024xf32>
    %5 = vector.broadcast %4 : vector<1x1024xf32> to vector<8x1024xf32>
    %6 = arith.addf %3, %5 : vector<8x1024xf32>
    %cst_5 = arith.constant 0.000000e+00 : f32
    %7 = vector.broadcast %cst_5 : f32 to vector<8x1024xf32>
    %8 = arith.maximumf %6, %7 : vector<8x1024xf32>
    %9 = vector.extract_strided_slice %8 {offsets = [0, 0], sizes = [8, 512], strides = [1, 1]} : vector<8x1024xf32> to vector<8x512xf32>
    %10 = vector.extract_strided_slice %8 {offsets = [0, 512], sizes = [8, 512], strides = [1, 1]} : vector<8x1024xf32> to vector<8x512xf32>
    %11 = arith.truncf %9 : vector<8x512xf32> to vector<8x512xbf16>
    %c0_6 = arith.constant 0 : index
    %c0_7 = arith.constant 0 : index
    %12 = vector.load %arg4[%c0_6, %c0_7] : memref<512x512xbf16, #tpu.memory_space<vmem>>, vector<512x512xbf16>
    %cst_8 = arith.constant dense<0.000000e+00> : vector<8x512xf32>
    %13 = tpu.matmul %11, %12, %cst_8 {dimension_numbers = #tpu.dot_dimension_numbers<[1], [0], [0], [1], [0, 0, 1, 1], [], []>} : vector<8x512xbf16>, vector<512x512xbf16>, vector<8x512xf32> -> vector<8x512xf32>
    %c0_9 = arith.constant 0 : index
    %c0_10 = arith.constant 0 : index
    %14 = vector.load %arg5[%c0_9, %c0_10] : memref<1x512xf32, #tpu.memory_space<vmem>>, vector<1x512xf32>
    %15 = vector.broadcast %14 : vector<1x512xf32> to vector<8x512xf32>
    %16 = arith.addf %13, %15 : vector<8x512xf32>
    %cst_11 = arith.constant 0.000000e+00 : f32
    %17 = vector.broadcast %cst_11 : f32 to vector<8x512xf32>
    %18 = arith.maximumf %16, %17 : vector<8x512xf32>
    %19 = arith.truncf %18 : vector<8x512xf32> to vector<8x512xbf16>
    %c0_12 = arith.constant 0 : index
    %c0_13 = arith.constant 0 : index
    %20 = vector.load %arg6[%c0_12, %c0_13] : memref<512x128xbf16, #tpu.memory_space<vmem>>, vector<512x128xbf16>
    %cst_14 = arith.constant dense<0.000000e+00> : vector<8x128xf32>
    %21 = tpu.matmul %19, %20, %cst_14 {dimension_numbers = #tpu.dot_dimension_numbers<[1], [0], [0], [1], [0, 0, 1, 1], [], []>} : vector<8x512xbf16>, vector<512x128xbf16>, vector<8x128xf32> -> vector<8x128xf32>
    %c0_15 = arith.constant 0 : index
    %c0_16 = arith.constant 0 : index
    %22 = vector.load %arg7[%c0_15, %c0_16] : memref<1x128xf32, #tpu.memory_space<vmem>>, vector<1x128xf32>
    %23 = vector.broadcast %22 : vector<1x128xf32> to vector<8x128xf32>
    %24 = arith.addf %21, %23 : vector<8x128xf32>
    %25 = arith.truncf %24 : vector<8x128xf32> to vector<8x128xbf16>
    %c0_17 = arith.constant 0 : index
    %c0_18 = arith.constant 0 : index
    %26 = vector.load %arg12[%c0_17, %c0_18] : memref<8x128xbf16, #tpu.memory_space<vmem>>, vector<8x128xbf16>
    tpu.vector_store %arg12[%c0_17, %c0_18], %25 {strides = array<i32>} : memref<8x128xbf16, #tpu.memory_space<vmem>>, vector<8x128xbf16>,
    %27 = arith.truncf %10 : vector<8x512xf32> to vector<8x512xbf16>
    %c0_19 = arith.constant 0 : index
    %c0_20 = arith.constant 0 : index
    %28 = vector.load %arg8[%c0_19, %c0_20] : memref<512x128xbf16, #tpu.memory_space<vmem>>, vector<512x128xbf16>
    %cst_21 = arith.constant dense<0.000000e+00> : vector<8x128xf32>
    %29 = tpu.matmul %27, %28, %cst_21 {dimension_numbers = #tpu.dot_dimension_numbers<[1], [0], [0], [1], [0, 0, 1, 1], [], []>} : vector<8x512xbf16>, vector<512x128xbf16>, vector<8x128xf32> -> vector<8x128xf32>
    %c0_22 = arith.constant 0 : index
    %c0_23 = arith.constant 0 : index
    %30 = vector.load %arg9[%c0_22, %c0_23] : memref<1x128xf32, #tpu.memory_space<vmem>>, vector<1x128xf32>
    %31 = vector.broadcast %30 : vector<1x128xf32> to vector<8x128xf32>
    %32 = arith.addf %29, %31 : vector<8x128xf32>
    %cst_24 = arith.constant 0.000000e+00 : f32
    %33 = vector.broadcast %cst_24 : f32 to vector<8x128xf32>
    %34 = arith.maximumf %32, %33 : vector<8x128xf32>
    %c0_25 = arith.constant 0 : index
    %c0_26 = arith.constant 0 : index
    %35 = vector.load %arg10[%c0_25, %c0_26] : memref<1x128xf32, #tpu.memory_space<vmem>>, vector<1x128xf32>
    %36 = vector.broadcast %35 : vector<1x128xf32> to vector<8x128xf32>
    %37 = arith.mulf %34, %36 : vector<8x128xf32>
    %cst_27 = arith.constant dense<0.000000e+00> : vector<8xf32>
    %38 = vector.multi_reduction <add>, %37, %cst_27 [1] : vector<8x128xf32> to vector<8xf32>
    %39 = vector.shape_cast %38 : vector<8xf32> to vector<8x1xf32>
    %c0_28 = arith.constant 0 : index
    %c0_29 = arith.constant 0 : index
    %40 = vector.load %arg11[%c0_28, %c0_29] : memref<1x1xf32, #tpu.memory_space<vmem>>, vector<1x1xf32>
    %41 = vector.broadcast %40 : vector<1x1xf32> to vector<8x1xf32>
    %42 = arith.addf %39, %41 : vector<8x1xf32>
    %c0_30 = arith.constant 0 : index
    %c0_31 = arith.constant 0 : index
    %43 = vector.load %arg13[%c0_30, %c0_31] : memref<8x1xf32, #tpu.memory_space<vmem>>, vector<8x1xf32>
    tpu.vector_store %arg13[%c0_30, %c0_31], %42 {strides = array<i32>} : memref<8x1xf32, #tpu.memory_space<vmem>>, vector<8x1xf32>,
    return
  }
  func.func @transform_0(%arg0: i32) -> (i32, i32) {
    %c0_i32 = arith.constant 0 : i32
    %c0_i32_0 = arith.constant 0 : i32
    return %arg0, %c0_i32 : i32, i32
  }
  func.func @transform_1(%arg0: i32) -> (i32, i32) {
    %c0_i32 = arith.constant 0 : i32
    %c0_i32_0 = arith.constant 0 : i32
    %c0_i32_1 = arith.constant 0 : i32
    return %c0_i32, %c0_i32_0 : i32, i32
  }
  func.func @transform_2(%arg0: i32) -> (i32, i32) {
    %c0_i32 = arith.constant 0 : i32
    %c0_i32_0 = arith.constant 0 : i32
    %c0_i32_1 = arith.constant 0 : i32
    return %c0_i32, %c0_i32_0 : i32, i32
  }
  func.func @transform_3(%arg0: i32) -> (i32, i32) {
    %c0_i32 = arith.constant 0 : i32
    %c0_i32_0 = arith.constant 0 : i32
    %c0_i32_1 = arith.constant 0 : i32
    return %c0_i32, %c0_i32_0 : i32, i32
  }
  func.func @transform_4(%arg0: i32) -> (i32, i32) {
    %c0_i32 = arith.constant 0 : i32
    %c0_i32_0 = arith.constant 0 : i32
    %c0_i32_1 = arith.constant 0 : i32
    return %c0_i32, %c0_i32_0 : i32, i32
  }
  func.func @transform_5(%arg0: i32) -> (i32, i32) {
    %c0_i32 = arith.constant 0 : i32
    %c0_i32_0 = arith.constant 0 : i32
    %c0_i32_1 = arith.constant 0 : i32
    return %c0_i32, %c0_i32_0 : i32, i32
  }
  func.func @transform_6(%arg0: i32) -> (i32, i32) {
    %c0_i32 = arith.constant 0 : i32
    %c0_i32_0 = arith.constant 0 : i32
    %c0_i32_1 = arith.constant 0 : i32
    return %c0_i32, %c0_i32_0 : i32, i32
  }
  func.func @transform_7(%arg0: i32) -> (i32, i32) {
    %c0_i32 = arith.constant 0 : i32
    %c0_i32_0 = arith.constant 0 : i32
    %c0_i32_1 = arith.constant 0 : i32
    return %c0_i32, %c0_i32_0 : i32, i32
  }
  func.func @transform_8(%arg0: i32) -> (i32, i32) {
    %c0_i32 = arith.constant 0 : i32
    %c0_i32_0 = arith.constant 0 : i32
    %c0_i32_1 = arith.constant 0 : i32
    return %c0_i32, %c0_i32_0 : i32, i32
  }
  func.func @transform_9(%arg0: i32) -> (i32, i32) {
    %c0_i32 = arith.constant 0 : i32
    %c0_i32_0 = arith.constant 0 : i32
    %c0_i32_1 = arith.constant 0 : i32
    return %c0_i32, %c0_i32_0 : i32, i32
  }
  func.func @transform_10(%arg0: i32) -> (i32, i32) {
    %c0_i32 = arith.constant 0 : i32
    %c0_i32_0 = arith.constant 0 : i32
    %c0_i32_1 = arith.constant 0 : i32
    return %c0_i32, %c0_i32_0 : i32, i32
  }
  func.func @transform_11(%arg0: i32) -> (i32, i32) {
    %c0_i32 = arith.constant 0 : i32
    %c0_i32_0 = arith.constant 0 : i32
    return %arg0, %c0_i32 : i32, i32
  }
  func.func @transform_12(%arg0: i32) -> (i32, i32) {
    %c0_i32 = arith.constant 0 : i32
    %c0_i32_0 = arith.constant 0 : i32
    return %arg0, %c0_i32 : i32, i32
  }
}

</mosaic_0001>

<llo_original>
// kernel: tpu_custom_call.1
$region0: #{tpu_custom_call.1}
  #allocation0 [shape = 'u32[]', space=smem, size = 0x4, offset = 0x4, fixed_abs, tag = 'smem constant byte address 0x4 - core index']
  #allocation1 [shape = 'u32[144,128]{1,0:T(1,128)}', space=vmem, size = 0x12000, scoped, tag = 'internal scratch']
  %s0 = inlined_call_operand.hbm [shape: f32[8,128], index: 0, kind: input, shape index: {}]
  %s1 = inlined_call_operand.hbm [shape: f32[8,128], index: 1, kind: output, shape index: {}]
  %s2 = sld [smem:[#allocation0]]
  $region18: #{tpu_custom_call.1} parent=0
    _
  %s4 = ssub.s32 1, %s2
  %s5 = scalar_select 0, %s4, %s2
  $region1: #{tpu_custom_call.1} parent=0
    #allocation2 [shape = 'u8[4096]{0}', space=vmem, size = 0x1000, scoped, tag = 'input window, operand 0, single buffered']
    #allocation3 [shape = 's32[1]{0}', space=sflag, size = 0x4, scoped, tag = 'scoped memory for tpu_custom_call.1']
    #allocation4 [shape = 's32[1]{0}', space=sflag, size = 0x4, scoped, tag = 'scoped memory for tpu_custom_call.1']
    #allocation5 [shape = 'u8[4096]{0}', space=vmem, size = 0x1000, scoped, tag = 'output window, operand 0, single buffered']
    %6 = vsyncpa [#allocation3], 0
    %7 = vsyncpa [#allocation4], 0
    // Predicated region
    $region2: #{tpu_custom_call.1} parent=1 // pred_check
      _
    $region3: #{tpu_custom_call.1} parent=1 // pred_check_branch
      %9 = sbr.rel (0) target = $region5
    $region4: #{tpu_custom_call.1} parent=1 // pred_region
      %s11 = ssub.s32 128, 128
      %12 = vsyncadd [#allocation3], %s11
      %s14 = sshll.u32 [#allocation2], 4
      %s15 = int_to_ptr.vmem [resolvable:$true] %s14
      %17 = dma.hbm_to_vmem [thread:$0]  %s0, 128, %s15, [#allocation3]
    $region5: #{tpu_custom_call.1} parent=1 // pred_fallthru
      _
    // Predicated region
    $region6: #{tpu_custom_call.1} parent=1 // pred_check
      _
    $region7: #{tpu_custom_call.1} parent=1 // pred_check_branch
      %19 = sbr.rel (0) target = $region9
    $region8: #{tpu_custom_call.1} parent=1 // pred_region
      %20 = dma.done [#allocation3], 128
    $region9: #{tpu_custom_call.1} parent=1 // pred_fallthru
      _
    %v21 = vld [vmem:[#allocation2] sm:$0xff]
    %v22 = vadd.f32 %v21, 1.0
    %23 = vst [vmem:[#allocation5] sm:$0xff] %v22
    // Predicated region
    $region10: #{tpu_custom_call.1} parent=1 // pred_check
      _
    $region11: #{tpu_custom_call.1} parent=1 // pred_check_branch
      %25 = sbr.rel (0) target = $region13
    $region12: #{tpu_custom_call.1} parent=1 // pred_region
      %s27 = ssub.s32 128, 128
      %28 = vsyncadd [#allocation4], %s27
      %s30 = sshll.u32 [#allocation5], 4
      %s31 = int_to_ptr.vmem [resolvable:$true] %s30
      %33 = dma.vmem_to_hbm [thread:$0]  %s31, 128, %s1, [#allocation4]
    $region13: #{tpu_custom_call.1} parent=1 // pred_fallthru
      _
    // Predicated region
    $region14: #{tpu_custom_call.1} parent=1 // pred_check
      _
    $region15: #{tpu_custom_call.1} parent=1 // pred_check_branch
      %35 = sbr.rel (0) target = $region17
    $region16: #{tpu_custom_call.1} parent=1 // pred_region
      %36 = dma.done [#allocation4], 128
    $region17: #{tpu_custom_call.1} parent=1 // pred_fallthru
      _
    %37 = vsyncpa [#allocation3], 1
    %38 = vsyncpa [#allocation4], 1

// kernel: _classifier_forward_impl.1
$region0: #{_classifier_forward_impl.1}
  #allocation0 [shape = 'u32[]', space=smem, size = 0x4, offset = 0x4, fixed_abs, tag = 'smem constant byte address 0x4 - core index']
  #allocation1 [shape = 'u32[144,128]{1,0:T(1,128)}', space=vmem, size = 0x12000, scoped, tag = 'internal scratch']
  #allocation2 [shape = 'f32[1,1]{1,0:T(1,128)S(1)}', space=vmem, size = 0x200, scoped, tag = 'scoped memory for _classifier_forward_impl.1']
  %s0 = inlined_call_operand.vmem [shape: f32[8,2048], index: 0, kind: input, shape index: {}]
  %s1 = inlined_call_operand.hbm [shape: bf16[2048,1024], index: 1, kind: input, shape index: {}]
  %s2 = inlined_call_operand.hbm [shape: f32[1,1024], index: 2, kind: input, shape index: {}]
  %s3 = inlined_call_operand.hbm [shape: bf16[512,512], index: 3, kind: input, shape index: {}]
  %s4 = inlined_call_operand.hbm [shape: f32[1,512], index: 4, kind: input, shape index: {}]
  %s5 = inlined_call_operand.hbm [shape: bf16[512,128], index: 5, kind: input, shape index: {}]
  %s6 = inlined_call_operand.hbm [shape: f32[1,128], index: 6, kind: input, shape index: {}]
  %s7 = inlined_call_operand.hbm [shape: bf16[512,128], index: 7, kind: input, shape index: {}]
  %s8 = inlined_call_operand.hbm [shape: f32[1,128], index: 8, kind: input, shape index: {}]
  %s9 = inlined_call_operand.hbm [shape: f32[1,128], index: 9, kind: input, shape index: {}]
  %s10 = inlined_call_operand.<no memory space> [shape: f32[1,1], index: 10, kind: input, shape index: {}]
  %s11 = inlined_call_operand.vmem [shape: bf16[8,128], index: 11, kind: output, shape index: {0}]
  %s12 = inlined_call_operand.vmem [shape: f32[8,1], index: 12, kind: output, shape index: {1}]
  %13 = xla_tuple %s11, %s12
  %s14 = sld [smem:[#allocation0]]
  $region98: #{_classifier_forward_impl.1} parent=0
    _
  %s16 = ssub.s32 1, %s14
  %s17 = scalar_select 0, %s16, %s14
  %v18 = vstv %s10
  %19 = vst [vmem:[#allocation2] sm:$0x1] %v18
  $region1: #{_classifier_forward_impl.1} parent=0
    #allocation3 [shape = 'u8[4194304]{0}', space=vmem, size = 0x400000, scoped, tag = 'input window, operand 1, single buffered']
    #allocation4 [shape = 's32[1]{0}', space=sflag, size = 0x4, scoped, tag = 'scoped memory for _classifier_forward_impl.1']
    #allocation5 [shape = 'u8[4096]{0}', space=vmem, size = 0x1000, scoped, tag = 'input window, operand 2, single buffered']
    #allocation6 [shape = 's32[1]{0}', space=sflag, size = 0x4, scoped, tag = 'scoped memory for _classifier_forward_impl.1']
    #allocation7 [shape = 'u8[524288]{0}', space=vmem, size = 0x80000, scoped, tag = 'input window, operand 3, single buffered']
    #allocation8 [shape = 'u8[2048]{0}', space=vmem, size = 0x800, scoped, tag = 'input window, operand 4, single buffered']
    #allocation9 [shape = 's32[1]{0}', space=sflag, size = 0x4, scoped, tag = 'scoped memory for _classifier_forward_impl.1']
    #allocation10 [shape = 'u8[131072]{0}', space=vmem, size = 0x20000, scoped, tag = 'input window, operand 5, single buffered']
    #allocation11 [shape = 'u8[512]{0}', space=vmem, size = 0x400, scoped, tag = 'input window, operand 6, single buffered']
    #allocation12 [shape = 's32[1]{0}', space=sflag, size = 0x4, scoped, tag = 'scoped memory for _classifier_forward_impl.1']
    #allocation13 [shape = 'u8[131072]{0}', space=vmem, size = 0x20000, scoped, tag = 'input window, operand 7, single buffered']
    #allocation14 [shape = 'u8[512]{0}', space=vmem, size = 0x400, scoped, tag = 'input window, operand 8, single buffered']
    #allocation15 [shape = 's32[1]{0}', space=sflag, size = 0x4, scoped, tag = 'scoped memory for _classifier_forward_impl.1']
    #allocation16 [shape = 'u8[512]{0}', space=vmem, size = 0x400, scoped, tag = 'input window, operand 9, single buffered']
    %20 = vsyncpa [#allocation4], 0
    %21 = vsyncpa [#allocation6], 0
    %22 = vsyncpa [#allocation9], 0
    %23 = vsyncpa [#allocation12], 0
    %24 = vsyncpa [#allocation15], 0
    // Predicated region
    $region2: #{_classifier_forward_impl.1} parent=1 // pred_check
      _
    $region3: #{_classifier_forward_impl.1} parent=1 // pred_check_branch
      %26 = sbr.rel (0) target = $region5
    $region4: #{_classifier_forward_impl.1} parent=1 // pred_region
      _
    $region5: #{_classifier_forward_impl.1} parent=1 // pred_fallthru
      _
    // Predicated region
    $region6: #{_classifier_forward_impl.1} parent=1 // pred_check
      _
    $region7: #{_classifier_forward_impl.1} parent=1 // pred_check_branch
      %28 = sbr.rel (0) target = $region9
    $region8: #{_classifier_forward_impl.1} parent=1 // pred_region
      %s30 = ssub.s32 131072, 131072
      %31 = vsyncadd [#allocation4], %s30
      %s32 = sshll.u32 [#allocation3], 4
      %s33 = int_to_ptr.vmem [resolvable:$true] %s32
      %38 = dma.hbm_to_vmem [thread:$0]  %s1, 131072, %s33, [#allocation4], 512, 512, 32
    $region9: #{_classifier_forward_impl.1} parent=1 // pred_fallthru
      _
    // Predicated region
    $region10: #{_classifier_forward_impl.1} parent=1 // pred_check
      _
    $region11: #{_classifier_forward_impl.1} parent=1 // pred_check_branch
      %40 = sbr.rel (0) target = $region13
    $region12: #{_classifier_forward_impl.1} parent=1 // pred_region
      %s42 = ssub.s32 128, 128
      %43 = vsyncadd [#allocation6], %s42
      %s45 = sshll.u32 [#allocation5], 4
      %s46 = int_to_ptr.vmem [resolvable:$true] %s45
      %48 = dma.hbm_to_vmem [thread:$0]  %s2, 128, %s46, [#allocation6]
    $region13: #{_classifier_forward_impl.1} parent=1 // pred_fallthru
      _
    // Predicated region
    $region14: #{_classifier_forward_impl.1} parent=1 // pred_check
      _
    $region15: #{_classifier_forward_impl.1} parent=1 // pred_check_branch
      %50 = sbr.rel (0) target = $region17
    $region16: #{_classifier_forward_impl.1} parent=1 // pred_region
      %s52 = ssub.s32 16384, 16384
      %53 = vsyncadd [#allocation6], %s52
      %s54 = sshll.u32 [#allocation7], 4
      %s55 = int_to_ptr.vmem [resolvable:$true] %s54
      %60 = dma.hbm_to_vmem [thread:$0]  %s3, 16384, %s55, [#allocation6], 256, 256, 16
    $region17: #{_classifier_forward_impl.1} parent=1 // pred_fallthru
      _
    // Predicated region
    $region18: #{_classifier_forward_impl.1} parent=1 // pred_check
      _
    $region19: #{_classifier_forward_impl.1} parent=1 // pred_check_branch
      %62 = sbr.rel (0) target = $region21
    $region20: #{_classifier_forward_impl.1} parent=1 // pred_region
      %s64 = ssub.s32 64, 64
      %65 = vsyncadd [#allocation9], %s64
      %s67 = sshll.u32 [#allocation8], 4
      %s68 = int_to_ptr.vmem [resolvable:$true] %s67
      %70 = dma.hbm_to_vmem [thread:$0]  %s4, 64, %s68, [#allocation9]
    $region21: #{_classifier_forward_impl.1} parent=1 // pred_fallthru
      _
    // Predicated region
    $region22: #{_classifier_forward_impl.1} parent=1 // pred_check
      _
    $region23: #{_classifier_forward_impl.1} parent=1 // pred_check_branch
      %72 = sbr.rel (0) target = $region25
    $region24: #{_classifier_forward_impl.1} parent=1 // pred_region
      %s74 = ssub.s32 4096, 4096
      %75 = vsyncadd [#allocation9], %s74
      %s76 = sshll.u32 [#allocation10], 4
      %s77 = int_to_ptr.vmem [resolvable:$true] %s76
      %82 = dma.hbm_to_vmem [thread:$0]  %s5, 4096, %s77, [#allocation9], 64, 64, 4
    $region25: #{_classifier_forward_impl.1} parent=1 // pred_fallthru
      _
    // Predicated region
    $region26: #{_classifier_forward_impl.1} parent=1 // pred_check
      _
    $region27: #{_classifier_forward_impl.1} parent=1 // pred_check_branch
      %84 = sbr.rel (0) target = $region29
    $region28: #{_classifier_forward_impl.1} parent=1 // pred_region
      %s86 = ssub.s32 16, 16
      %87 = vsyncadd [#allocation12], %s86
      %s89 = sshll.u32 [#allocation11], 4
      %s90 = int_to_ptr.vmem [resolvable:$true] %s89
      %92 = dma.hbm_to_vmem [thread:$0]  %s6, 16, %s90, [#allocation12]
    $region29: #{_classifier_forward_impl.1} parent=1 // pred_fallthru
      _
    // Predicated region
    $region30: #{_classifier_forward_impl.1} parent=1 // pred_check
      _
    $region31: #{_classifier_forward_impl.1} parent=1 // pred_check_branch
      %94 = sbr.rel (0) target = $region33
    $region32: #{_classifier_forward_impl.1} parent=1 // pred_region
      %s96 = ssub.s32 4096, 4096
      %97 = vsyncadd [#allocation12], %s96
      %s98 = sshll.u32 [#allocation13], 4
      %s99 = int_to_ptr.vmem [resolvable:$true] %s98
      %104 = dma.hbm_to_vmem [thread:$0]  %s7, 4096, %s99, [#allocation12], 64, 64, 4
    $region33: #{_classifier_forward_impl.1} parent=1 // pred_fallthru
      _
    // Predicated region
    $region34: #{_classifier_forward_impl.1} parent=1 // pred_check
      _
    $region35: #{_classifier_forward_impl.1} parent=1 // pred_check_branch
      %106 = sbr.rel (0) target = $region37
    $region36: #{_classifier_forward_impl.1} parent=1 // pred_region
      %s108 = ssub.s32 16, 16
      %109 = vsyncadd [#allocation15], %s108
      %s111 = sshll.u32 [#allocation14], 4
      %s112 = int_to_ptr.vmem [resolvable:$true] %s111
      %114 = dma.hbm_to_vmem [thread:$0]  %s8, 16, %s112, [#allocation15]
    $region37: #{_classifier_forward_impl.1} parent=1 // pred_fallthru
      _
    // Predicated region
    $region38: #{_classifier_forward_impl.1} parent=1 // pred_check
      _
    $region39: #{_classifier_forward_impl.1} parent=1 // pred_check_branch
      %116 = sbr.rel (0) target = $region41
    $region40: #{_classifier_forward_impl.1} parent=1 // pred_region
      %s118 = ssub.s32 16, 16
      %119 = vsyncadd [#allocation15], %s118
      %s121 = sshll.u32 [#allocation16], 4
      %s122 = int_to_ptr.vmem [resolvable:$true] %s121
      %124 = dma.hbm_to_vmem [thread:$0]  %s9, 16, %s122, [#allocation15]
    $region41: #{_classifier_forward_impl.1} parent=1 // pred_fallthru
      _
    // Predicated region
    $region42: #{_classifier_forward_impl.1} parent=1 // pred_check
      _
    $region43: #{_classifier_forward_impl.1} parent=1 // pred_check_branch
      %126 = sbr.rel (0) target = $region45
    $region44: #{_classifier_forward_impl.1} parent=1 // pred_region
      _
    $region45: #{_classifier_forward_impl.1} parent=1 // pred_fallthru
      _
    // Predicated region
    $region46: #{_classifier_forward_impl.1} parent=1 // pred_check
      _
    $region47: #{_classifier_forward_impl.1} parent=1 // pred_check_branch
      %128 = sbr.rel (0) target = $region49
    $region48: #{_classifier_forward_impl.1} parent=1 // pred_region
      %129 = dma.done [#allocation4], 131072
    $region49: #{_classifier_forward_impl.1} parent=1 // pred_fallthru
      _
    // Predicated region
    $region50: #{_classifier_forward_impl.1} parent=1 // pred_check
      _
    $region51: #{_classifier_forward_impl.1} parent=1 // pred_check_branch
      %131 = sbr.rel (0) target = $region53
    $region52: #{_classifier_forward_impl.1} parent=1 // pred_region
      %132 = dma.done [#allocation6], 128
    $region53: #{_classifier_forward_impl.1} parent=1 // pred_fallthru
      _
    // Predicated region
    $region54: #{_classifier_forward_impl.1} parent=1 // pred_check
      _
    $region55: #{_classifier_forward_impl.1} parent=1 // pred_check_branch
      %134 = sbr.rel (0) target = $region57
    $region56: #{_classifier_forward_impl.1} parent=1 // pred_region
      %135 = dma.done [#allocation6], 16384
    $region57: #{_classifier_forward_impl.1} parent=1 // pred_fallthru
      _
    // Predicated region
    $region58: #{_classifier_forward_impl.1} parent=1 // pred_check
      _
    $region59: #{_classifier_forward_impl.1} parent=1 // pred_check_branch
      %137 = sbr.rel (0) target = $region61
    $region60: #{_classifier_forward_impl.1} parent=1 // pred_region
      %138 = dma.done [#allocation9], 64
    $region61: #{_classifier_forward_impl.1} parent=1 // pred_fallthru
      _
    // Predicated region
    $region62: #{_classifier_forward_impl.1} parent=1 // pred_check
      _
    $region63: #{_classifier_forward_impl.1} parent=1 // pred_check_branch
      %140 = sbr.rel (0) target = $region65
    $region64: #{_classifier_forward_impl.1} parent=1 // pred_region
      %141 = dma.done [#allocation9], 4096
    $region65: #{_classifier_forward_impl.1} parent=1 // pred_fallthru
      _
    // Predicated region
    $region66: #{_classifier_forward_impl.1} parent=1 // pred_check
      _
    $region67: #{_classifier_forward_impl.1} parent=1 // pred_check_branch
      %143 = sbr.rel (0) target = $region69
    $region68: #{_classifier_forward_impl.1} parent=1 // pred_region
      %144 = dma.done [#allocation12], 16
    $region69: #{_classifier_forward_impl.1} parent=1 // pred_fallthru
      _
    // Predicated region
    $region70: #{_classifier_forward_impl.1} parent=1 // pred_check
      _
    $region71: #{_classifier_forward_impl.1} parent=1 // pred_check_branch
      %146 = sbr.rel (0) target = $region73
    $region72: #{_classifier_forward_impl.1} parent=1 // pred_region
      %147 = dma.done [#allocation12], 4096
    $region73: #{_classifier_forward_impl.1} parent=1 // pred_fallthru
      _
    // Predicated region
    $region74: #{_classifier_forward_impl.1} parent=1 // pred_check
      _
    $region75: #{_classifier_forward_impl.1} parent=1 // pred_check_branch
      %149 = sbr.rel (0) target = $region77
    $region76: #{_classifier_forward_impl.1} parent=1 // pred_region
      %150 = dma.done [#allocation15], 16
    $region77: #{_classifier_forward_impl.1} parent=1 // pred_fallthru
      _
    // Predicated region
    $region78: #{_classifier_forward_impl.1} parent=1 // pred_check
      _
    $region79: #{_classifier_forward_impl.1} parent=1 // pred_check_branch
      %152 = sbr.rel (0) target = $region81
    $region80: #{_classifier_forward_impl.1} parent=1 // pred_region
      %153 = dma.done [#allocation15], 16
    $region81: #{_classifier_forward_impl.1} parent=1 // pred_fallthru
      _
    %v155 = vld [vmem:[%s0] sm:$0xff]
    %v156 = vld [vmem:[%s0 + $0x8] sm:$0xff]
    %v157 = vld [vmem:[%s0 + $0x10] sm:$0xff]
    %v158 = vld [vmem:[%s0 + $0x18] sm:$0xff]
    %v159 = vld [vmem:[%s0 + $0x20] sm:$0xff]
    %v160 = vld [vmem:[%s0 + $0x28] sm:$0xff]
    %v161 = vld [vmem:[%s0 + $0x30] sm:$0xff]
    %v162 = vld [vmem:[%s0 + $0x38] sm:$0xff]
    %v163 = vld [vmem:[%s0 + $0x40] sm:$0xff]
    %v164 = vld [vmem:[%s0 + $0x48] sm:$0xff]
    %v165 = vld [vmem:[%s0 + $0x50] sm:$0xff]
    %v166 = vld [vmem:[%s0 + $0x58] sm:$0xff]
    %v167 = vld [vmem:[%s0 + $0x60] sm:$0xff]
    %v168 = vld [vmem:[%s0 + $0x68] sm:$0xff]
    %v169 = vld [vmem:[%s0 + $0x70] sm:$0xff]
    %v170 = vld [vmem:[%s0 + $0x78] sm:$0xff]
    %v171 = vpack.c.bf16 %v155, %v155
    %v172 = vpack.c.bf16 %v156, %v156
    %v173 = vpack.c.bf16 %v157, %v157
    %v174 = vpack.c.bf16 %v158, %v158
    %v175 = vpack.c.bf16 %v159, %v159
    %v176 = vpack.c.bf16 %v160, %v160
    %v177 = vpack.c.bf16 %v161, %v161
    %v178 = vpack.c.bf16 %v162, %v162
    %v179 = vpack.c.bf16 %v163, %v163
    %v180 = vpack.c.bf16 %v164, %v164
    %v181 = vpack.c.bf16 %v165, %v165
    %v182 = vpack.c.bf16 %v166, %v166
    %v183 = vpack.c.bf16 %v167, %v167
    %v184 = vpack.c.bf16 %v168, %v168
    %v185 = vpack.c.bf16 %v169, %v169
    %v186 = vpack.c.bf16 %v170, %v170
    %v187 = vld [vmem:[#allocation3] sm:$0xff]
    %v188 = vld [vmem:[#allocation3 + $0x8] sm:$0xff]
    %v189 = vld [vmem:[#allocation3 + $0x10] sm:$0xff]
    %v190 = vld [vmem:[#allocation3 + $0x18] sm:$0xff]
    %v191 = vld [vmem:[#allocation3 + $0x20] sm:$0xff]
    %v192 = vld [vmem:[#allocation3 + $0x28] sm:$0xff]
    %v193 = vld [vmem:[#allocation3 + $0x30] sm:$0xff]
    %v194 = vld [vmem:[#allocation3 + $0x38] sm:$0xff]
    %v195 = vld [vmem:[#allocation3 + $0x40] sm:$0xff]
    %v196 = vld [vmem:[#allocation3 + $0x48] sm:$0xff]
    %v197 = vld [vmem:[#allocation3 + $0x50] sm:$0xff]
    %v198 = vld [vmem:[#allocation3 + $0x58] sm:$0xff]
    %v199 = vld [vmem:[#allocation3 + $0x60] sm:$0xff]
    %v200 = vld [vmem:[#allocation3 + $0x68] sm:$0xff]
    %v201 = vld [vmem:[#allocation3 + $0x70] sm:$0xff]
    %v202 = vld [vmem:[#allocation3 + $0x78] sm:$0xff]
    %v203 = vld [vmem:[#allocation3 + $0x80] sm:$0xff]
    %v204 = vld [vmem:[#allocation3 + $0x88] sm:$0xff]
    %v205 = vld [vmem:[#allocation3 + $0x90] sm:$0xff]
    %v206 = vld [vmem:[#allocation3 + $0x98] sm:$0xff]
    %v207 = vld [vmem:[#allocation3 + $0xa0] sm:$0xff]
    %v208 = vld [vmem:[#allocation3 + $0xa8] sm:$0xff]
    %v209 = vld [vmem:[#allocation3 + $0xb0] sm:$0xff]
    %v210 = vld [vmem:[#allocation3 + $0xb8] sm:$0xff]
    %v211 = vld [vmem:[#allocation3 + $0xc0] sm:$0xff]
    %v212 = vld [vmem:[#allocation3 + $0xc8] sm:$0xff]
    %v213 = vld [vmem:[#allocation3 + $0xd0] sm:$0xff]
    %v214 = vld [vmem:[#allocation3 + $0xd8] sm:$0xff]
    %v215 = vld [vmem:[#allocation3 + $0xe0] sm:$0xff]
    %v216 = vld [vmem:[#allocation3 + $0xe8] sm:$0xff]
    %v217 = vld [vmem:[#allocation3 + $0xf0] sm:$0xff]
    %v218 = vld [vmem:[#allocation3 + $0xf8] sm:$0xff]
    %v219 = vld [vmem:[#allocation3 + $0x100] sm:$0xff]
    %v220 = vld [vmem:[#allocation3 + $0x108] sm:$0xff]
    %v221 = vld [vmem:[#allocation3 + $0x110] sm:$0xff]
    %v222 = vld [vmem:[#allocation3 + $0x118] sm:$0xff]
    %v223 = vld [vmem:[#allocation3 + $0x120] sm:$0xff]
    %v224 = vld [vmem:[#allocation3 + $0x128] sm:$0xff]
    %v225 = vld [vmem:[#allocation3 + $0x130] sm:$0xff]
    %v226 = vld [vmem:[#allocation3 + $0x138] sm:$0xff]
    %v227 = vld [vmem:[#allocation3 + $0x140] sm:$0xff]
    %v228 = vld [vmem:[#allocation3 + $0x148] sm:$0xff]
    %v229 = vld [vmem:[#allocation3 + $0x150] sm:$0xff]
    %v230 = vld [vmem:[#allocation3 + $0x158] sm:$0xff]
    %v231 = vld [vmem:[#allocation3 + $0x160] sm:$0xff]
    %v232 = vld [vmem:[#allocation3 + $0x168] sm:$0xff]
    %v233 = vld [vmem:[#allocation3 + $0x170] sm:$0xff]
    %v234 = vld [vmem:[#allocation3 + $0x178] sm:$0xff]
    %v235 = vld [vmem:[#allocation3 + $0x180] sm:$0xff]
    %v236 = vld [vmem:[#allocation3 + $0x188] sm:$0xff]
    %v237 = vld [vmem:[#allocation3 + $0x190] sm:$0xff]
    %v238 = vld [vmem:[#allocation3 + $0x198] sm:$0xff]
    %v239 = vld [vmem:[#allocation3 + $0x1a0] sm:$0xff]
    %v240 = vld [vmem:[#allocation3 + $0x1a8] sm:$0xff]
    %v241 = vld [vmem:[#allocation3 + $0x1b0] sm:$0xff]
    %v242 = vld [vmem:[#allocation3 + $0x1b8] sm:$0xff]
    %v243 = vld [vmem:[#allocation3 + $0x1c0] sm:$0xff]
    %v244 = vld [vmem:[#allocation3 + $0x1c8] sm:$0xff]
    %v245 = vld [vmem:[#allocation3 + $0x1d0] sm:$0xff]
    %v246 = vld [vmem:[#allocation3 + $0x1d8] sm:$0xff]
    %v247 = vld [vmem:[#allocation3 + $0x1e0] sm:$0xff]
    %v248 = vld [vmem:[#allocation3 + $0x1e8] sm:$0xff]
    %v249 = vld [vmem:[#allocation3 + $0x1f0] sm:$0xff]
    %v250 = vld [vmem:[#allocation3 + $0x1f8] sm:$0xff]
    %v251 = vld [vmem:[#allocation3 + $0x200] sm:$0xff]
    %v252 = vld [vmem:[#allocation3 + $0x208] sm:$0xff]
    %v253 = vld [vmem:[#allocation3 + $0x210] sm:$0xff]
    %v254 = vld [vmem:[#allocation3 + $0x218] sm:$0xff]
    %v255 = vld [vmem:[#allocation3 + $0x220] sm:$0xff]
    %v256 = vld [vmem:[#allocation3 + $0x228] sm:$0xff]
    %v257 = vld [vmem:[#allocation3 + $0x230] sm:$0xff]
    %v258 = vld [vmem:[#allocation3 + $0x238] sm:$0xff]
    %v259 = vld [vmem:[#allocation3 + $0x240] sm:$0xff]
    %v260 = vld [vmem:[#allocation3 + $0x248] sm:$0xff]
    %v261 = vld [vmem:[#allocation3 + $0x250] sm:$0xff]
    %v262 = vld [vmem:[#allocation3 + $0x258] sm:$0xff]
    %v263 = vld [vmem:[#allocation3 + $0x260] sm:$0xff]
    %v264 = vld [vmem:[#allocation3 + $0x268] sm:$0xff]
    %v265 = vld [vmem:[#allocation3 + $0x270] sm:$0xff]
    %v266 = vld [vmem:[#allocation3 + $0x278] sm:$0xff]
    %v267 = vld [vmem:[#allocation3 + $0x280] sm:$0xff]
    %v268 = vld [vmem:[#allocation3 + $0x288] sm:$0xff]
    %v269 = vld [vmem:[#allocation3 + $0x290] sm:$0xff]
    %v270 = vld [vmem:[#allocation3 + $0x298] sm:$0xff]
    %v271 = vld [vmem:[#allocation3 + $0x2a0] sm:$0xff]
    %v272 = vld [vmem:[#allocation3 + $0x2a8] sm:$0xff]
    %v273 = vld [vmem:[#allocation3 + $0x2b0] sm:$0xff]
    %v274 = vld [vmem:[#allocation3 + $0x2b8] sm:$0xff]
    %v275 = vld [vmem:[#allocation3 + $0x2c0] sm:$0xff]
    %v276 = vld [vmem:[#allocation3 + $0x2c8] sm:$0xff]
    %v277 = vld [vmem:[#allocation3 + $0x2d0] sm:$0xff]
    %v278 = vld [vmem:[#allocation3 + $0x2d8] sm:$0xff]
    %v279 = vld [vmem:[#allocation3 + $0x2e0] sm:$0xff]
    %v280 = vld [vmem:[#allocation3 + $0x2e8] sm:$0xff]
    %v281 = vld [vmem:[#allocation3 + $0x2f0] sm:$0xff]
    %v282 = vld [vmem:[#allocation3 + $0x2f8] sm:$0xff]
    %v283 = vld [vmem:[#allocation3 + $0x300] sm:$0xff]
    %v284 = vld [vmem:[#allocation3 + $0x308] sm:$0xff]
    %v285 = vld [vmem:[#allocation3 + $0x310] sm:$0xff]
    %v286 = vld [vmem:[#allocation3 + $0x318] sm:$0xff]
    %v287 = vld [vmem:[#allocation3 + $0x320] sm:$0xff]
    %v288 = vld [vmem:[#allocation3 + $0x328] sm:$0xff]
    %v289 = vld [vmem:[#allocation3 + $0x330] sm:$0xff]
    %v290 = vld [vmem:[#allocation3 + $0x338] sm:$0xff]
    %v291 = vld [vmem:[#allocation3 + $0x340] sm:$0xff]
    %v292 = vld [vmem:[#allocation3 + $0x348] sm:$0xff]
    %v293 = vld [vmem:[#allocation3 + $0x350] sm:$0xff]
    %v294 = vld [vmem:[#allocation3 + $0x358] sm:$0xff]
    %v295 = vld [vmem:[#allocation3 + $0x360] sm:$0xff]
    %v296 = vld [vmem:[#allocation3 + $0x368] sm:$0xff]
    %v297 = vld [vmem:[#allocation3 + $0x370] sm:$0xff]
    %v298 = vld [vmem:[#allocation3 + $0x378] sm:$0xff]
    %v299 = vld [vmem:[#allocation3 + $0x380] sm:$0xff]
    %v300 = vld [vmem:[#allocation3 + $0x388] sm:$0xff]
    %v301 = vld [vmem:[#allocation3 + $0x390] sm:$0xff]
    %v302 = vld [vmem:[#allocation3 + $0x398] sm:$0xff]
    %v303 = vld [vmem:[#allocation3 + $0x3a0] sm:$0xff]
    %v304 = vld [vmem:[#allocation3 + $0x3a8] sm:$0xff]
    %v305 = vld [vmem:[#allocation3 + $0x3b0] sm:$0xff]
    %v306 = vld [vmem:[#allocation3 + $0x3b8] sm:$0xff]
    %v307 = vld [vmem:[#allocation3 + $0x3c0] sm:$0xff]
    %v308 = vld [vmem:[#allocation3 + $0x3c8] sm:$0xff]
    %v309 = vld [vmem:[#allocation3 + $0x3d0] sm:$0xff]
    %v310 = vld [vmem:[#allocation3 + $0x3d8] sm:$0xff]
    %v311 = vld [vmem:[#allocation3 + $0x3e0] sm:$0xff]
    %v312 = vld [vmem:[#allocation3 + $0x3e8] sm:$0xff]
    %v313 = vld [vmem:[#allocation3 + $0x3f0] sm:$0xff]
    %v314 = vld [vmem:[#allocation3 + $0x3f8] sm:$0xff]
    %v315 = vld [vmem:[#allocation3 + $0x400] sm:$0xff]
    %v316 = vld [vmem:[#allocation3 + $0x408] sm:$0xff]
    %v317 = vld [vmem:[#allocation3 + $0x410] sm:$0xff]
    %v318 = vld [vmem:[#allocation3 + $0x418] sm:$0xff]
    %v319 = vld [vmem:[#allocation3 + $0x420] sm:$0xff]
    %v320 = vld [vmem:[#allocation3 + $0x428] sm:$0xff]
    %v321 = vld [vmem:[#allocation3 + $0x430] sm:$0xff]
    %v322 = vld [vmem:[#allocation3 + $0x438] sm:$0xff]
    %v323 = vld [vmem:[#allocation3 + $0x440] sm:$0xff]
    %v324 = vld [vmem:[#allocation3 + $0x448] sm:$0xff]
    %v325 = vld [vmem:[#allocation3 + $0x450] sm:$0xff]
    %v326 = vld [vmem:[#allocation3 + $0x458] sm:$0xff]
    %v327 = vld [vmem:[#allocation3 + $0x460] sm:$0xff]
    %v328 = vld [vmem:[#allocation3 + $0x468] sm:$0xff]
    %v329 = vld [vmem:[#allocation3 + $0x470] sm:$0xff]
    %v330 = vld [vmem:[#allocation3 + $0x478] sm:$0xff]
    %v331 = vld [vmem:[#allocation3 + $0x480] sm:$0xff]
    %v332 = vld [vmem:[#allocation3 + $0x488] sm:$0xff]
    %v333 = vld [vmem:[#allocation3 + $0x490] sm:$0xff]
    %v334 = vld [vmem:[#allocation3 + $0x498] sm:$0xff]
    %v335 = vld [vmem:[#allocation3 + $0x4a0] sm:$0xff]
    %v336 = vld [vmem:[#allocation3 + $0x4a8] sm:$0xff]
    %v337 = vld [vmem:[#allocation3 + $0x4b0] sm:$0xff]
    %v338 = vld [vmem:[#allocation3 + $0x4b8] sm:$0xff]
    %v339 = vld [vmem:[#allocation3 + $0x4c0] sm:$0xff]
    %v340 = vld [vmem:[#allocation3 + $0x4c8] sm:$0xff]
    %v341 = vld [vmem:[#allocation3 + $0x4d0] sm:$0xff]
    %v342 = vld [vmem:[#allocation3 + $0x4d8] sm:$0xff]
    %v343 = vld [vmem:[#allocation3 + $0x4e0] sm:$0xff]
    %v344 = vld [vmem:[#allocation3 + $0x4e8] sm:$0xff]
    %v345 = vld [vmem:[#allocation3 + $0x4f0] sm:$0xff]
    %v346 = vld [vmem:[#allocation3 + $0x4f8] sm:$0xff]
    %v347 = vld [vmem:[#allocation3 + $0x500] sm:$0xff]
    %v348 = vld [vmem:[#allocation3 + $0x508] sm:$0xff]
    %v349 = vld [vmem:[#allocation3 + $0x510] sm:$0xff]
    %v350 = vld [vmem:[#allocation3 + $0x518] sm:$0xff]
    %v351 = vld [vmem:[#allocation3 + $0x520] sm:$0xff]
    %v352 = vld [vmem:[#allocation3 + $0x528] sm:$0xff]
    %v353 = vld [vmem:[#allocation3 + $0x530] sm:$0xff]
    %v354 = vld [vmem:[#allocation3 + $0x538] sm:$0xff]
    %v355 = vld [vmem:[#allocation3 + $0x540] sm:$0xff]
    %v356 = vld [vmem:[#allocation3 + $0x548] sm:$0xff]
    %v357 = vld [vmem:[#allocation3 + $0x550] sm:$0xff]
    %v358 = vld [vmem:[#allocation3 + $0x558] sm:$0xff]
    %v359 = vld [vmem:[#allocation3 + $0x560] sm:$0xff]
    %v360 = vld [vmem:[#allocation3 + $0x568] sm:$0xff]
    %v361 = vld [vmem:[#allocation3 + $0x570] sm:$0xff]
    %v362 = vld [vmem:[#allocation3 + $0x578] sm:$0xff]
    %v363 = vld [vmem:[#allocation3 + $0x580] sm:$0xff]
    %v364 = vld [vmem:[#allocation3 + $0x588] sm:$0xff]
    %v365 = vld [vmem:[#allocation3 + $0x590] sm:$0xff]
    %v366 = vld [vmem:[#allocation3 + $0x598] sm:$0xff]
    %v367 = vld [vmem:[#allocation3 + $0x5a0] sm:$0xff]
    %v368 = vld [vmem:[#allocation3 + $0x5a8] sm:$0xff]
    %v369 = vld [vmem:[#allocation3 + $0x5b0] sm:$0xff]
    %v370 = vld [vmem:[#allocation3 + $0x5b8] sm:$0xff]
    %v371 = vld [vmem:[#allocation3 + $0x5c0] sm:$0xff]
    %v372 = vld [vmem:[#allocation3 + $0x5c8] sm:$0xff]
    %v373 = vld [vmem:[#allocation3 + $0x5d0] sm:$0xff]
    %v374 = vld [vmem:[#allocation3 + $0x5d8] sm:$0xff]
    %v375 = vld [vmem:[#allocation3 + $0x5e0] sm:$0xff]
    %v376 = vld [vmem:[#allocation3 + $0x5e8] sm:$0xff]
    %v377 = vld [vmem:[#allocation3 + $0x5f0] sm:$0xff]
    %v378 = vld [vmem:[#allocation3 + $0x5f8] sm:$0xff]
    %v379 = vld [vmem:[#allocation3 + $0x600] sm:$0xff]
    %v380 = vld [vmem:[#allocation3 + $0x608] sm:$0xff]
    %v381 = vld [vmem:[#allocation3 + $0x610] sm:$0xff]
    %v382 = vld [vmem:[#allocation3 + $0x618] sm:$0xff]
    %v383 = vld [vmem:[#allocation3 + $0x620] sm:$0xff]
    %v384 = vld [vmem:[#allocation3 + $0x628] sm:$0xff]
    %v385 = vld [vmem:[#allocation3 + $0x630] sm:$0xff]
    %v386 = vld [vmem:[#allocation3 + $0x638] sm:$0xff]
    %v387 = vld [vmem:[#allocation3 + $0x640] sm:$0xff]
    %v388 = vld [vmem:[#allocation3 + $0x648] sm:$0xff]
    %v389 = vld [vmem:[#allocation3 + $0x650] sm:$0xff]
    %v390 = vld [vmem:[#allocation3 + $0x658] sm:$0xff]
    %v391 = vld [vmem:[#allocation3 + $0x660] sm:$0xff]
    %v392 = vld [vmem:[#allocation3 + $0x668] sm:$0xff]
    %v393 = vld [vmem:[#allocation3 + $0x670] sm:$0xff]
    %v394 = vld [vmem:[#allocation3 + $0x678] sm:$0xff]
    %v395 = vld [vmem:[#allocation3 + $0x680] sm:$0xff]
    %v396 = vld [vmem:[#allocation3 + $0x688] sm:$0xff]
    %v397 = vld [vmem:[#allocation3 + $0x690] sm:$0xff]
    %v398 = vld [vmem:[#allocation3 + $0x698] sm:$0xff]
    %v399 = vld [vmem:[#allocation3 + $0x6a0] sm:$0xff]
    %v400 = vld [vmem:[#allocation3 + $0x6a8] sm:$0xff]
    %v401 = vld [vmem:[#allocation3 + $0x6b0] sm:$0xff]
    %v402 = vld [vmem:[#allocation3 + $0x6b8] sm:$0xff]
    %v403 = vld [vmem:[#allocation3 + $0x6c0] sm:$0xff]
    %v404 = vld [vmem:[#allocation3 + $0x6c8] sm:$0xff]
    %v405 = vld [vmem:[#allocation3 + $0x6d0] sm:$0xff]
    %v406 = vld [vmem:[#allocation3 + $0x6d8] sm:$0xff]
    %v407 = vld [vmem:[#allocation3 + $0x6e0] sm:$0xff]
    %v408 = vld [vmem:[#allocation3 + $0x6e8] sm:$0xff]
    %v409 = vld [vmem:[#allocation3 + $0x6f0] sm:$0xff]
    %v410 = vld [vmem:[#allocation3 + $0x6f8] sm:$0xff]
    %v411 = vld [vmem:[#allocation3 + $0x700] sm:$0xff]
    %v412 = vld [vmem:[#allocation3 + $0x708] sm:$0xff]
    %v413 = vld [vmem:[#allocation3 + $0x710] sm:$0xff]
    %v414 = vld [vmem:[#allocation3 + $0x718] sm:$0xff]
    %v415 = vld [vmem:[#allocation3 + $0x720] sm:$0xff]
    %v416 = vld [vmem:[#allocation3 + $0x728] sm:$0xff]
    %v417 = vld [vmem:[#allocation3 + $0x730] sm:$0xff]
    %v418 = vld [vmem:[#allocation3 + $0x738] sm:$0xff]
    %v419 = vld [vmem:[#allocation3 + $0x740] sm:$0xff]
    %v420 = vld [vmem:[#allocation3 + $0x748] sm:$0xff]
    %v421 = vld [vmem:[#allocation3 + $0x750] sm:$0xff]
    %v422 = vld [vmem:[#allocation3 + $0x758] sm:$0xff]
    %v423 = vld [vmem:[#allocation3 + $0x760] sm:$0xff]
    %v424 = vld [vmem:[#allocation3 + $0x768] sm:$0xff]
    %v425 = vld [vmem:[#allocation3 + $0x770] sm:$0xff]
    %v426 = vld [vmem:[#allocation3 + $0x778] sm:$0xff]
    %v427 = vld [vmem:[#allocation3 + $0x780] sm:$0xff]
    %v428 = vld [vmem:[#allocation3 + $0x788] sm:$0xff]
    %v429 = vld [vmem:[#allocation3 + $0x790] sm:$0xff]
    %v430 = vld [vmem:[#allocation3 + $0x798] sm:$0xff]
    %v431 = vld [vmem:[#allocation3 + $0x7a0] sm:$0xff]
    %v432 = vld [vmem:[#allocation3 + $0x7a8] sm:$0xff]
    %v433 = vld [vmem:[#allocation3 + $0x7b0] sm:$0xff]
    %v434 = vld [vmem:[#allocation3 + $0x7b8] sm:$0xff]
    %v435 = vld [vmem:[#allocation3 + $0x7c0] sm:$0xff]
    %v436 = vld [vmem:[#allocation3 + $0x7c8] sm:$0xff]
    %v437 = vld [vmem:[#allocation3 + $0x7d0] sm:$0xff]
    %v438 = vld [vmem:[#allocation3 + $0x7d8] sm:$0xff]
    %v439 = vld [vmem:[#allocation3 + $0x7e0] sm:$0xff]
    %v440 = vld [vmem:[#allocation3 + $0x7e8] sm:$0xff]
    %v441 = vld [vmem:[#allocation3 + $0x7f0] sm:$0xff]
    %v442 = vld [vmem:[#allocation3 + $0x7f8] sm:$0xff]
    %v443 = vld [vmem:[#allocation3 + $0x800] sm:$0xff]
    %v444 = vld [vmem:[#allocation3 + $0x808] sm:$0xff]
    %v445 = vld [vmem:[#allocation3 + $0x810] sm:$0xff]
    %v446 = vld [vmem:[#allocation3 + $0x818] sm:$0xff]
    %v447 = vld [vmem:[#allocation3 + $0x820] sm:$0xff]
    %v448 = vld [vmem:[#allocation3 + $0x828] sm:$0xff]
    %v449 = vld [vmem:[#allocation3 + $0x830] sm:$0xff]
    %v450 = vld [vmem:[#allocation3 + $0x838] sm:$0xff]
    %v451 = vld [vmem:[#allocation3 + $0x840] sm:$0xff]
    %v452 = vld [vmem:[#allocation3 + $0x848] sm:$0xff]
    %v453 = vld [vmem:[#allocation3 + $0x850] sm:$0xff]
    %v454 = vld [vmem:[#allocation3 + $0x858] sm:$0xff]
    %v455 = vld [vmem:[#allocation3 + $0x860] sm:$0xff]
    %v456 = vld [vmem:[#allocation3 + $0x868] sm:$0xff]
    %v457 = vld [vmem:[#allocation3 + $0x870] sm:$0xff]
    %v458 = vld [vmem:[#allocation3 + $0x878] sm:$0xff]
    %v459 = vld [vmem:[#allocation3 + $0x880] sm:$0xff]
    %v460 = vld [vmem:[#allocation3 + $0x888] sm:$0xff]
    %v461 = vld [vmem:[#allocation3 + $0x890] sm:$0xff]
    %v462 = vld [vmem:[#allocation3 + $0x898] sm:$0xff]
    %v463 = vld [vmem:[#allocation3 + $0x8a0] sm:$0xff]
    %v464 = vld [vmem:[#allocation3 + $0x8a8] sm:$0xff]
    %v465 = vld [vmem:[#allocation3 + $0x8b0] sm:$0xff]
    %v466 = vld [vmem:[#allocation3 + $0x8b8] sm:$0xff]
    %v467 = vld [vmem:[#allocation3 + $0x8c0] sm:$0xff]
    %v468 = vld [vmem:[#allocation3 + $0x8c8] sm:$0xff]
    %v469 = vld [vmem:[#allocation3 + $0x8d0] sm:$0xff]
    %v470 = vld [vmem:[#allocation3 + $0x8d8] sm:$0xff]
    %v471 = vld [vmem:[#allocation3 + $0x8e0] sm:$0xff]
    %v472 = vld [vmem:[#allocation3 + $0x8e8] sm:$0xff]
    %v473 = vld [vmem:[#allocation3 + $0x8f0] sm:$0xff]
    %v474 = vld [vmem:[#allocation3 + $0x8f8] sm:$0xff]
    %v475 = vld [vmem:[#allocation3 + $0x900] sm:$0xff]
    %v476 = vld [vmem:[#allocation3 + $0x908] sm:$0xff]
    %v477 = vld [vmem:[#allocation3 + $0x910] sm:$0xff]
    %v478 = vld [vmem:[#allocation3 + $0x918] sm:$0xff]
    %v479 = vld [vmem:[#allocation3 + $0x920] sm:$0xff]
    %v480 = vld [vmem:[#allocation3 + $0x928] sm:$0xff]
    %v481 = vld [vmem:[#allocation3 + $0x930] sm:$0xff]
    %v482 = vld [vmem:[#allocation3 + $0x938] sm:$0xff]
    %v483 = vld [vmem:[#allocation3 + $0x940] sm:$0xff]
    %v484 = vld [vmem:[#allocation3 + $0x948] sm:$0xff]
    %v485 = vld [vmem:[#allocation3 + $0x950] sm:$0xff]
    %v486 = vld [vmem:[#allocation3 + $0x958] sm:$0xff]
    %v487 = vld [vmem:[#allocation3 + $0x960] sm:$0xff]
    %v488 = vld [vmem:[#allocation3 + $0x968] sm:$0xff]
    %v489 = vld [vmem:[#allocation3 + $0x970] sm:$0xff]
    %v490 = vld [vmem:[#allocation3 + $0x978] sm:$0xff]
    %v491 = vld [vmem:[#allocation3 + $0x980] sm:$0xff]
    %v492 = vld [vmem:[#allocation3 + $0x988] sm:$0xff]
    %v493 = vld [vmem:[#allocation3 + $0x990] sm:$0xff]
    %v494 = vld [vmem:[#allocation3 + $0x998] sm:$0xff]
    %v495 = vld [vmem:[#allocation3 + $0x9a0] sm:$0xff]
    %v496 = vld [vmem:[#allocation3 + $0x9a8] sm:$0xff]
    %v497 = vld [vmem:[#allocation3 + $0x9b0] sm:$0xff]
    %v498 = vld [vmem:[#allocation3 + $0x9b8] sm:$0xff]
    %v499 = vld [vmem:[#allocation3 + $0x9c0] sm:$0xff]
    %v500 = vld [vmem:[#allocation3 + $0x9c8] sm:$0xff]
    %v501 = vld [vmem:[#allocation3 + $0x9d0] sm:$0xff]
    %v502 = vld [vmem:[#allocation3 + $0x9d8] sm:$0xff]
    %v503 = vld [vmem:[#allocation3 + $0x9e0] sm:$0xff]
    %v504 = vld [vmem:[#allocation3 + $0x9e8] sm:$0xff]
    %v505 = vld [vmem:[#allocation3 + $0x9f0] sm:$0xff]
    %v506 = vld [vmem:[#allocation3 + $0x9f8] sm:$0xff]
    %v507 = vld [vmem:[#allocation3 + $0xa00] sm:$0xff]
    %v508 = vld [vmem:[#allocation3 + $0xa08] sm:$0xff]
    %v509 = vld [vmem:[#allocation3 + $0xa10] sm:$0xff]
    %v510 = vld [vmem:[#allocation3 + $0xa18] sm:$0xff]
    %v511 = vld [vmem:[#allocation3 + $0xa20] sm:$0xff]
    %v512 = vld [vmem:[#allocation3 + $0xa28] sm:$0xff]
    %v513 = vld [vmem:[#allocation3 + $0xa30] sm:$0xff]
    %v514 = vld [vmem:[#allocation3 + $0xa38] sm:$0xff]
    %v515 = vld [vmem:[#allocation3 + $0xa40] sm:$0xff]
    %v516 = vld [vmem:[#allocation3 + $0xa48] sm:$0xff]
    %v517 = vld [vmem:[#allocation3 + $0xa50] sm:$0xff]
    %v518 = vld [vmem:[#allocation3 + $0xa58] sm:$0xff]
    %v519 = vld [vmem:[#allocation3 + $0xa60] sm:$0xff]
    %v520 = vld [vmem:[#allocation3 + $0xa68] sm:$0xff]
    %v521 = vld [vmem:[#allocation3 + $0xa70] sm:$0xff]
    %v522 = vld [vmem:[#allocation3 + $0xa78] sm:$0xff]
    %v523 = vld [vmem:[#allocation3 + $0xa80] sm:$0xff]
    %v524 = vld [vmem:[#allocation3 + $0xa88] sm:$0xff]
    %v525 = vld [vmem:[#allocation3 + $0xa90] sm:$0xff]
    %v526 = vld [vmem:[#allocation3 + $0xa98] sm:$0xff]
    %v527 = vld [vmem:[#allocation3 + $0xaa0] sm:$0xff]
    %v528 = vld [vmem:[#allocation3 + $0xaa8] sm:$0xff]
    %v529 = vld [vmem:[#allocation3 + $0xab0] sm:$0xff]
    %v530 = vld [vmem:[#allocation3 + $0xab8] sm:$0xff]
    %v531 = vld [vmem:[#allocation3 + $0xac0] sm:$0xff]
    %v532 = vld [vmem:[#allocation3 + $0xac8] sm:$0xff]
    %v533 = vld [vmem:[#allocation3 + $0xad0] sm:$0xff]
    %v534 = vld [vmem:[#allocation3 + $0xad8] sm:$0xff]
    %v535 = vld [vmem:[#allocation3 + $0xae0] sm:$0xff]
    %v536 = vld [vmem:[#allocation3 + $0xae8] sm:$0xff]
    %v537 = vld [vmem:[#allocation3 + $0xaf0] sm:$0xff]
    %v538 = vld [vmem:[#allocation3 + $0xaf8] sm:$0xff]
    %v539 = vld [vmem:[#allocation3 + $0xb00] sm:$0xff]
    %v540 = vld [vmem:[#allocation3 + $0xb08] sm:$0xff]
    %v541 = vld [vmem:[#allocation3 + $0xb10] sm:$0xff]
    %v542 = vld [vmem:[#allocation3 + $0xb18] sm:$0xff]
    %v543 = vld [vmem:[#allocation3 + $0xb20] sm:$0xff]
    %v544 = vld [vmem:[#allocation3 + $0xb28] sm:$0xff]
    %v545 = vld [vmem:[#allocation3 + $0xb30] sm:$0xff]
    %v546 = vld [vmem:[#allocation3 + $0xb38] sm:$0xff]
    %v547 = vld [vmem:[#allocation3 + $0xb40] sm:$0xff]
    %v548 = vld [vmem:[#allocation3 + $0xb48] sm:$0xff]
    %v549 = vld [vmem:[#allocation3 + $0xb50] sm:$0xff]
    %v550 = vld [vmem:[#allocation3 + $0xb58] sm:$0xff]
    %v551 = vld [vmem:[#allocation3 + $0xb60] sm:$0xff]
    %v552 = vld [vmem:[#allocation3 + $0xb68] sm:$0xff]
    %v553 = vld [vmem:[#allocation3 + $0xb70] sm:$0xff]
    %v554 = vld [vmem:[#allocation3 + $0xb78] sm:$0xff]
    %v555 = vld [vmem:[#allocation3 + $0xb80] sm:$0xff]
    %v556 = vld [vmem:[#allocation3 + $0xb88] sm:$0xff]
    %v557 = vld [vmem:[#allocation3 + $0xb90] sm:$0xff]
    %v558 = vld [vmem:[#allocation3 + $0xb98] sm:$0xff]
    %v559 = vld [vmem:[#allocation3 + $0xba0] sm:$0xff]
    %v560 = vld [vmem:[#allocation3 + $0xba8] sm:$0xff]
    %v561 = vld [vmem:[#allocation3 + $0xbb0] sm:$0xff]
    %v562 = vld [vmem:[#allocation3 + $0xbb8] sm:$0xff]
    %v563 = vld [vmem:[#allocation3 + $0xbc0] sm:$0xff]
    %v564 = vld [vmem:[#allocation3 + $0xbc8] sm:$0xff]
    %v565 = vld [vmem:[#allocation3 + $0xbd0] sm:$0xff]
    %v566 = vld [vmem:[#allocation3 + $0xbd8] sm:$0xff]
    %v567 = vld [vmem:[#allocation3 + $0xbe0] sm:$0xff]
    %v568 = vld [vmem:[#allocation3 + $0xbe8] sm:$0xff]
    %v569 = vld [vmem:[#allocation3 + $0xbf0] sm:$0xff]
    %v570 = vld [vmem:[#allocation3 + $0xbf8] sm:$0xff]
    %v571 = vld [vmem:[#allocation3 + $0xc00] sm:$0xff]
    %v572 = vld [vmem:[#allocation3 + $0xc08] sm:$0xff]
    %v573 = vld [vmem:[#allocation3 + $0xc10] sm:$0xff]
    %v574 = vld [vmem:[#allocation3 + $0xc18] sm:$0xff]
    %v575 = vld [vmem:[#allocation3 + $0xc20] sm:$0xff]
    %v576 = vld [vmem:[#allocation3 + $0xc28] sm:$0xff]
    %v577 = vld [vmem:[#allocation3 + $0xc30] sm:$0xff]
    %v578 = vld [vmem:[#allocation3 + $0xc38] sm:$0xff]
    %v579 = vld [vmem:[#allocation3 + $0xc40] sm:$0xff]
    %v580 = vld [vmem:[#allocation3 + $0xc48] sm:$0xff]
    %v581 = vld [vmem:[#allocation3 + $0xc50] sm:$0xff]
    %v582 = vld [vmem:[#allocation3 + $0xc58] sm:$0xff]
    %v583 = vld [vmem:[#allocation3 + $0xc60] sm:$0xff]
    %v584 = vld [vmem:[#allocation3 + $0xc68] sm:$0xff]
    %v585 = vld [vmem:[#allocation3 + $0xc70] sm:$0xff]
    %v586 = vld [vmem:[#allocation3 + $0xc78] sm:$0xff]
    %v587 = vld [vmem:[#allocation3 + $0xc80] sm:$0xff]
    %v588 = vld [vmem:[#allocation3 + $0xc88] sm:$0xff]
    %v589 = vld [vmem:[#allocation3 + $0xc90] sm:$0xff]
    %v590 = vld [vmem:[#allocation3 + $0xc98] sm:$0xff]
    %v591 = vld [vmem:[#allocation3 + $0xca0] sm:$0xff]
    %v592 = vld [vmem:[#allocation3 + $0xca8] sm:$0xff]
    %v593 = vld [vmem:[#allocation3 + $0xcb0] sm:$0xff]
    %v594 = vld [vmem:[#allocation3 + $0xcb8] sm:$0xff]
    %v595 = vld [vmem:[#allocation3 + $0xcc0] sm:$0xff]
    %v596 = vld [vmem:[#allocation3 + $0xcc8] sm:$0xff]
    %v597 = vld [vmem:[#allocation3 + $0xcd0] sm:$0xff]
    %v598 = vld [vmem:[#allocation3 + $0xcd8] sm:$0xff]
    %v599 = vld [vmem:[#allocation3 + $0xce0] sm:$0xff]
    %v600 = vld [vmem:[#allocation3 + $0xce8] sm:$0xff]
    %v601 = vld [vmem:[#allocation3 + $0xcf0] sm:$0xff]
    %v602 = vld [vmem:[#allocation3 + $0xcf8] sm:$0xff]
    %v603 = vld [vmem:[#allocation3 + $0xd00] sm:$0xff]
    %v604 = vld [vmem:[#allocation3 + $0xd08] sm:$0xff]
    %v605 = vld [vmem:[#allocation3 + $0xd10] sm:$0xff]
    %v606 = vld [vmem:[#allocation3 + $0xd18] sm:$0xff]
    %v607 = vld [vmem:[#allocation3 + $0xd20] sm:$0xff]
    %v608 = vld [vmem:[#allocation3 + $0xd28] sm:$0xff]
    %v609 = vld [vmem:[#allocation3 + $0xd30] sm:$0xff]
    %v610 = vld [vmem:[#allocation3 + $0xd38] sm:$0xff]
    %v611 = vld [vmem:[#allocation3 + $0xd40] sm:$0xff]
    %v612 = vld [vmem:[#allocation3 + $0xd48] sm:$0xff]
    %v613 = vld [vmem:[#allocation3 + $0xd50] sm:$0xff]
    %v614 = vld [vmem:[#allocation3 + $0xd58] sm:$0xff]
    %v615 = vld [vmem:[#allocation3 + $0xd60] sm:$0xff]
    %v616 = vld [vmem:[#allocation3 + $0xd68] sm:$0xff]
    %v617 = vld [vmem:[#allocation3 + $0xd70] sm:$0xff]
    %v618 = vld [vmem:[#allocation3 + $0xd78] sm:$0xff]
    %v619 = vld [vmem:[#allocation3 + $0xd80] sm:$0xff]
    %v620 = vld [vmem:[#allocation3 + $0xd88] sm:$0xff]
    %v621 = vld [vmem:[#allocation3 + $0xd90] sm:$0xff]
    %v622 = vld [vmem:[#allocation3 + $0xd98] sm:$0xff]
    %v623 = vld [vmem:[#allocation3 + $0xda0] sm:$0xff]
    %v624 = vld [vmem:[#allocation3 + $0xda8] sm:$0xff]
    %v625 = vld [vmem:[#allocation3 + $0xdb0] sm:$0xff]
    %v626 = vld [vmem:[#allocation3 + $0xdb8] sm:$0xff]
    %v627 = vld [vmem:[#allocation3 + $0xdc0] sm:$0xff]
    %v628 = vld [vmem:[#allocation3 + $0xdc8] sm:$0xff]
    %v629 = vld [vmem:[#allocation3 + $0xdd0] sm:$0xff]
    %v630 = vld [vmem:[#allocation3 + $0xdd8] sm:$0xff]
    %v631 = vld [vmem:[#allocation3 + $0xde0] sm:$0xff]
    %v632 = vld [vmem:[#allocation3 + $0xde8] sm:$0xff]
    %v633 = vld [vmem:[#allocation3 + $0xdf0] sm:$0xff]
    %v634 = vld [vmem:[#allocation3 + $0xdf8] sm:$0xff]
    %v635 = vld [vmem:[#allocation3 + $0xe00] sm:$0xff]
    %v636 = vld [vmem:[#allocation3 + $0xe08] sm:$0xff]
    %v637 = vld [vmem:[#allocation3 + $0xe10] sm:$0xff]
    %v638 = vld [vmem:[#allocation3 + $0xe18] sm:$0xff]
    %v639 = vld [vmem:[#allocation3 + $0xe20] sm:$0xff]
    %v640 = vld [vmem:[#allocation3 + $0xe28] sm:$0xff]
    %v641 = vld [vmem:[#allocation3 + $0xe30] sm:$0xff]
    %v642 = vld [vmem:[#allocation3 + $0xe38] sm:$0xff]
    %v643 = vld [vmem:[#allocation3 + $0xe40] sm:$0xff]
    %v644 = vld [vmem:[#allocation3 + $0xe48] sm:$0xff]
    %v645 = vld [vmem:[#allocation3 + $0xe50] sm:$0xff]
    %v646 = vld [vmem:[#allocation3 + $0xe58] sm:$0xff]
    %v647 = vld [vmem:[#allocation3 + $0xe60] sm:$0xff]
    %v648 = vld [vmem:[#allocation3 + $0xe68] sm:$0xff]
    %v649 = vld [vmem:[#allocation3 + $0xe70] sm:$0xff]
    %v650 = vld [vmem:[#allocation3 + $0xe78] sm:$0xff]
    %v651 = vld [vmem:[#allocation3 + $0xe80] sm:$0xff]
    %v652 = vld [vmem:[#allocation3 + $0xe88] sm:$0xff]
    %v653 = vld [vmem:[#allocation3 + $0xe90] sm:$0xff]
    %v654 = vld [vmem:[#allocation3 + $0xe98] sm:$0xff]
    %v655 = vld [vmem:[#allocation3 + $0xea0] sm:$0xff]
    %v656 = vld [vmem:[#allocation3 + $0xea8] sm:$0xff]
    %v657 = vld [vmem:[#allocation3 + $0xeb0] sm:$0xff]
    %v658 = vld [vmem:[#allocation3 + $0xeb8] sm:$0xff]
    %v659 = vld [vmem:[#allocation3 + $0xec0] sm:$0xff]
    %v660 = vld [vmem:[#allocation3 + $0xec8] sm:$0xff]
    %v661 = vld [vmem:[#allocation3 + $0xed0] sm:$0xff]
    %v662 = vld [vmem:[#allocation3 + $0xed8] sm:$0xff]
    %v663 = vld [vmem:[#allocation3 + $0xee0] sm:$0xff]
    %v664 = vld [vmem:[#allocation3 + $0xee8] sm:$0xff]
    %v665 = vld [vmem:[#allocation3 + $0xef0] sm:$0xff]
    %v666 = vld [vmem:[#allocation3 + $0xef8] sm:$0xff]
    %v667 = vld [vmem:[#allocation3 + $0xf00] sm:$0xff]
    %v668 = vld [vmem:[#allocation3 + $0xf08] sm:$0xff]
    %v669 = vld [vmem:[#allocation3 + $0xf10] sm:$0xff]
    %v670 = vld [vmem:[#allocation3 + $0xf18] sm:$0xff]
    %v671 = vld [vmem:[#allocation3 + $0xf20] sm:$0xff]
    %v672 = vld [vmem:[#allocation3 + $0xf28] sm:$0xff]
    %v673 = vld [vmem:[#allocation3 + $0xf30] sm:$0xff]
    %v674 = vld [vmem:[#allocation3 + $0xf38] sm:$0xff]
    %v675 = vld [vmem:[#allocation3 + $0xf40] sm:$0xff]
    %v676 = vld [vmem:[#allocation3 + $0xf48] sm:$0xff]
    %v677 = vld [vmem:[#allocation3 + $0xf50] sm:$0xff]
    %v678 = vld [vmem:[#allocation3 + $0xf58] sm:$0xff]
    %v679 = vld [vmem:[#allocation3 + $0xf60] sm:$0xff]
    %v680 = vld [vmem:[#allocation3 + $0xf68] sm:$0xff]
    %v681 = vld [vmem:[#allocation3 + $0xf70] sm:$0xff]
    %v682 = vld [vmem:[#allocation3 + $0xf78] sm:$0xff]
    %v683 = vld [vmem:[#allocation3 + $0xf80] sm:$0xff]
    %v684 = vld [vmem:[#allocation3 + $0xf88] sm:$0xff]
    %v685 = vld [vmem:[#allocation3 + $0xf90] sm:$0xff]
    %v686 = vld [vmem:[#allocation3 + $0xf98] sm:$0xff]
    %v687 = vld [vmem:[#allocation3 + $0xfa0] sm:$0xff]
    %v688 = vld [vmem:[#allocation3 + $0xfa8] sm:$0xff]
    %v689 = vld [vmem:[#allocation3 + $0xfb0] sm:$0xff]
    %v690 = vld [vmem:[#allocation3 + $0xfb8] sm:$0xff]
    %v691 = vld [vmem:[#allocation3 + $0xfc0] sm:$0xff]
    %v692 = vld [vmem:[#allocation3 + $0xfc8] sm:$0xff]
    %v693 = vld [vmem:[#allocation3 + $0xfd0] sm:$0xff]
    %v694 = vld [vmem:[#allocation3 + $0xfd8] sm:$0xff]
    %v695 = vld [vmem:[#allocation3 + $0xfe0] sm:$0xff]
    %v696 = vld [vmem:[#allocation3 + $0xfe8] sm:$0xff]
    %v697 = vld [vmem:[#allocation3 + $0xff0] sm:$0xff]
    %v698 = vld [vmem:[#allocation3 + $0xff8] sm:$0xff]
    %v699 = vld [vmem:[#allocation3 + $0x1000] sm:$0xff]
    %v700 = vld [vmem:[#allocation3 + $0x1008] sm:$0xff]
    %v701 = vld [vmem:[#allocation3 + $0x1010] sm:$0xff]
    %v702 = vld [vmem:[#allocation3 + $0x1018] sm:$0xff]
    %v703 = vld [vmem:[#allocation3 + $0x1020] sm:$0xff]
    %v704 = vld [vmem:[#allocation3 + $0x1028] sm:$0xff]
    %v705 = vld [vmem:[#allocation3 + $0x1030] sm:$0xff]
    %v706 = vld [vmem:[#allocation3 + $0x1038] sm:$0xff]
    %v707 = vld [vmem:[#allocation3 + $0x1040] sm:$0xff]
    %v708 = vld [vmem:[#allocation3 + $0x1048] sm:$0xff]
    %v709 = vld [vmem:[#allocation3 + $0x1050] sm:$0xff]
    %v710 = vld [vmem:[#allocation3 + $0x1058] sm:$0xff]
    %v711 = vld [vmem:[#allocation3 + $0x1060] sm:$0xff]
    %v712 = vld [vmem:[#allocation3 + $0x1068] sm:$0xff]
    %v713 = vld [vmem:[#allocation3 + $0x1070] sm:$0xff]
    %v714 = vld [vmem:[#allocation3 + $0x1078] sm:$0xff]
    %v715 = vld [vmem:[#allocation3 + $0x1080] sm:$0xff]
    %v716 = vld [vmem:[#allocation3 + $0x1088] sm:$0xff]
    %v717 = vld [vmem:[#allocation3 + $0x1090] sm:$0xff]
    %v718 = vld [vmem:[#allocation3 + $0x1098] sm:$0xff]
    %v719 = vld [vmem:[#allocation3 + $0x10a0] sm:$0xff]
    %v720 = vld [vmem:[#allocation3 + $0x10a8] sm:$0xff]
    %v721 = vld [vmem:[#allocation3 + $0x10b0] sm:$0xff]
    %v722 = vld [vmem:[#allocation3 + $0x10b8] sm:$0xff]
    %v723 = vld [vmem:[#allocation3 + $0x10c0] sm:$0xff]
    %v724 = vld [vmem:[#allocation3 + $0x10c8] sm:$0xff]
    %v725 = vld [vmem:[#allocation3 + $0x10d0] sm:$0xff]
    %v726 = vld [vmem:[#allocation3 + $0x10d8] sm:$0xff]
    %v727 = vld [vmem:[#allocation3 + $0x10e0] sm:$0xff]
    %v728 = vld [vmem:[#allocation3 + $0x10e8] sm:$0xff]
    %v729 = vld [vmem:[#allocation3 + $0x10f0] sm:$0xff]
    %v730 = vld [vmem:[#allocation3 + $0x10f8] sm:$0xff]
    %v731 = vld [vmem:[#allocation3 + $0x1100] sm:$0xff]
    %v732 = vld [vmem:[#allocation3 + $0x1108] sm:$0xff]
    %v733 = vld [vmem:[#allocation3 + $0x1110] sm:$0xff]
    %v734 = vld [vmem:[#allocation3 + $0x1118] sm:$0xff]
    %v735 = vld [vmem:[#allocation3 + $0x1120] sm:$0xff]
    %v736 = vld [vmem:[#allocation3 + $0x1128] sm:$0xff]
    %v737 = vld [vmem:[#allocation3 + $0x1130] sm:$0xff]
    %v738 = vld [vmem:[#allocation3 + $0x1138] sm:$0xff]
    %v739 = vld [vmem:[#allocation3 + $0x1140] sm:$0xff]
    %v740 = vld [vmem:[#allocation3 + $0x1148] sm:$0xff]
    %v741 = vld [vmem:[#allocation3 + $0x1150] sm:$0xff]
    %v742 = vld [vmem:[#allocation3 + $0x1158] sm:$0xff]
    %v743 = vld [vmem:[#allocation3 + $0x1160] sm:$0xff]
    %v744 = vld [vmem:[#allocation3 + $0x1168] sm:$0xff]
    %v745 = vld [vmem:[#allocation3 + $0x1170] sm:$0xff]
    %v746 = vld [vmem:[#allocation3 + $0x1178] sm:$0xff]
    %v747 = vld [vmem:[#allocation3 + $0x1180] sm:$0xff]
    %v748 = vld [vmem:[#allocation3 + $0x1188] sm:$0xff]
    %v749 = vld [vmem:[#allocation3 + $0x1190] sm:$0xff]
    %v750 = vld [vmem:[#allocation3 + $0x1198] sm:$0xff]
    %v751 = vld [vmem:[#allocation3 + $0x11a0] sm:$0xff]
    %v752 = vld [vmem:[#allocation3 + $0x11a8] sm:$0xff]
    %v753 = vld [vmem:[#allocation3 + $0x11b0] sm:$0xff]
    %v754 = vld [vmem:[#allocation3 + $0x11b8] sm:$0xff]
    %v755 = vld [vmem:[#allocation3 + $0x11c0] sm:$0xff]
    %v756 = vld [vmem:[#allocation3 + $0x11c8] sm:$0xff]
    %v757 = vld [vmem:[#allocation3 + $0x11d0] sm:$0xff]
    %v758 = vld [vmem:[#allocation3 + $0x11d8] sm:$0xff]
    %v759 = vld [vmem:[#allocation3 + $0x11e0] sm:$0xff]
    %v760 = vld [vmem:[#allocation3 + $0x11e8] sm:$0xff]
    %v761 = vld [vmem:[#allocation3 + $0x11f0] sm:$0xff]
    %v762 = vld [vmem:[#allocation3 + $0x11f8] sm:$0xff]
    %v763 = vld [vmem:[#allocation3 + $0x1200] sm:$0xff]
    %v764 = vld [vmem:[#allocation3 + $0x1208] sm:$0xff]
    %v765 = vld [vmem:[#allocation3 + $0x1210] sm:$0xff]
    %v766 = vld [vmem:[#allocation3 + $0x1218] sm:$0xff]
    %v767 = vld [vmem:[#allocation3 + $0x1220] sm:$0xff]
    %v768 = vld [vmem:[#allocation3 + $0x1228] sm:$0xff]
    %v769 = vld [vmem:[#allocation3 + $0x1230] sm:$0xff]
    %v770 = vld [vmem:[#allocation3 + $0x1238] sm:$0xff]
    %v771 = vld [vmem:[#allocation3 + $0x1240] sm:$0xff]
    %v772 = vld [vmem:[#allocation3 + $0x1248] sm:$0xff]
    %v773 = vld [vmem:[#allocation3 + $0x1250] sm:$0xff]
    %v774 = vld [vmem:[#allocation3 + $0x1258] sm:$0xff]
    %v775 = vld [vmem:[#allocation3 + $0x1260] sm:$0xff]
    %v776 = vld [vmem:[#allocation3 + $0x1268] sm:$0xff]
    %v777 = vld [vmem:[#allocation3 + $0x1270] sm:$0xff]
    %v778 = vld [vmem:[#allocation3 + $0x1278] sm:$0xff]
    %v779 = vld [vmem:[#allocation3 + $0x1280] sm:$0xff]
    %v780 = vld [vmem:[#allocation3 + $0x1288] sm:$0xff]
    %v781 = vld [vmem:[#allocation3 + $0x1290] sm:$0xff]
    %v782 = vld [vmem:[#allocation3 + $0x1298] sm:$0xff]
    %v783 = vld [vmem:[#allocation3 + $0x12a0] sm:$0xff]
    %v784 = vld [vmem:[#allocation3 + $0x12a8] sm:$0xff]
    %v785 = vld [vmem:[#allocation3 + $0x12b0] sm:$0xff]
    %v786 = vld [vmem:[#allocation3 + $0x12b8] sm:$0xff]
    %v787 = vld [vmem:[#allocation3 + $0x12c0] sm:$0xff]
    %v788 = vld [vmem:[#allocation3 + $0x12c8] sm:$0xff]
    %v789 = vld [vmem:[#allocation3 + $0x12d0] sm:$0xff]
    %v790 = vld [vmem:[#allocation3 + $0x12d8] sm:$0xff]
    %v791 = vld [vmem:[#allocation3 + $0x12e0] sm:$0xff]
    %v792 = vld [vmem:[#allocation3 + $0x12e8] sm:$0xff]
    %v793 = vld [vmem:[#allocation3 + $0x12f0] sm:$0xff]
    %v794 = vld [vmem:[#allocation3 + $0x12f8] sm:$0xff]
    %v795 = vld [vmem:[#allocation3 + $0x1300] sm:$0xff]
    %v796 = vld [vmem:[#allocation3 + $0x1308] sm:$0xff]
    %v797 = vld [vmem:[#allocation3 + $0x1310] sm:$0xff]
    %v798 = vld [vmem:[#allocation3 + $0x1318] sm:$0xff]
    %v799 = vld [vmem:[#allocation3 + $0x1320] sm:$0xff]
    %v800 = vld [vmem:[#allocation3 + $0x1328] sm:$0xff]
    %v801 = vld [vmem:[#allocation3 + $0x1330] sm:$0xff]
    %v802 = vld [vmem:[#allocation3 + $0x1338] sm:$0xff]
    %v803 = vld [vmem:[#allocation3 + $0x1340] sm:$0xff]
    %v804 = vld [vmem:[#allocation3 + $0x1348] sm:$0xff]
    %v805 = vld [vmem:[#allocation3 + $0x1350] sm:$0xff]
    %v806 = vld [vmem:[#allocation3 + $0x1358] sm:$0xff]
    %v807 = vld [vmem:[#allocation3 + $0x1360] sm:$0xff]
    %v808 = vld [vmem:[#allocation3 + $0x1368] sm:$0xff]
    %v809 = vld [vmem:[#allocation3 + $0x1370] sm:$0xff]
    %v810 = vld [vmem:[#allocation3 + $0x1378] sm:$0xff]
    %v811 = vld [vmem:[#allocation3 + $0x1380] sm:$0xff]
    %v812 = vld [vmem:[#allocation3 + $0x1388] sm:$0xff]
    %v813 = vld [vmem:[#allocation3 + $0x1390] sm:$0xff]
    %v814 = vld [vmem:[#allocation3 + $0x1398] sm:$0xff]
    %v815 = vld [vmem:[#allocation3 + $0x13a0] sm:$0xff]
    %v816 = vld [vmem:[#allocation3 + $0x13a8] sm:$0xff]
    %v817 = vld [vmem:[#allocation3 + $0x13b0] sm:$0xff]
    %v818 = vld [vmem:[#allocation3 + $0x13b8] sm:$0xff]
    %v819 = vld [vmem:[#allocation3 + $0x13c0] sm:$0xff]
    %v820 = vld [vmem:[#allocation3 + $0x13c8] sm:$0xff]
    %v821 = vld [vmem:[#allocation3 + $0x13d0] sm:$0xff]
    %v822 = vld [vmem:[#allocation3 + $0x13d8] sm:$0xff]
    %v823 = vld [vmem:[#allocation3 + $0x13e0] sm:$0xff]
    %v824 = vld [vmem:[#allocation3 + $0x13e8] sm:$0xff]
    %v825 = vld [vmem:[#allocation3 + $0x13f0] sm:$0xff]
    %v826 = vld [vmem:[#allocation3 + $0x13f8] sm:$0xff]
    %v827 = vld [vmem:[#allocation3 + $0x1400] sm:$0xff]
    %v828 = vld [vmem:[#allocation3 + $0x1408] sm:$0xff]
    %v829 = vld [vmem:[#allocation3 + $0x1410] sm:$0xff]
    %v830 = vld [vmem:[#allocation3 + $0x1418] sm:$0xff]
    %v831 = vld [vmem:[#allocation3 + $0x1420] sm:$0xff]
    %v832 = vld [vmem:[#allocation3 + $0x1428] sm:$0xff]
    %v833 = vld [vmem:[#allocation3 + $0x1430] sm:$0xff]
    %v834 = vld [vmem:[#allocation3 + $0x1438] sm:$0xff]
    %v835 = vld [vmem:[#allocation3 + $0x1440] sm:$0xff]
    %v836 = vld [vmem:[#allocation3 + $0x1448] sm:$0xff]
    %v837 = vld [vmem:[#allocation3 + $0x1450] sm:$0xff]
    %v838 = vld [vmem:[#allocation3 + $0x1458] sm:$0xff]
    %v839 = vld [vmem:[#allocation3 + $0x1460] sm:$0xff]
    %v840 = vld [vmem:[#allocation3 + $0x1468] sm:$0xff]
    %v841 = vld [vmem:[#allocation3 + $0x1470] sm:$0xff]
    %v842 = vld [vmem:[#allocation3 + $0x1478] sm:$0xff]
    %v843 = vld [vmem:[#allocation3 + $0x1480] sm:$0xff]
    %v844 = vld [vmem:[#allocation3 + $0x1488] sm:$0xff]
    %v845 = vld [vmem:[#allocation3 + $0x1490] sm:$0xff]
    %v846 = vld [vmem:[#allocation3 + $0x1498] sm:$0xff]
    %v847 = vld [vmem:[#allocation3 + $0x14a0] sm:$0xff]
    %v848 = vld [vmem:[#allocation3 + $0x14a8] sm:$0xff]
    %v849 = vld [vmem:[#allocation3 + $0x14b0] sm:$0xff]
    %v850 = vld [vmem:[#allocation3 + $0x14b8] sm:$0xff]
    %v851 = vld [vmem:[#allocation3 + $0x14c0] sm:$0xff]
    %v852 = vld [vmem:[#allocation3 + $0x14c8] sm:$0xff]
    %v853 = vld [vmem:[#allocation3 + $0x14d0] sm:$0xff]
    %v854 = vld [vmem:[#allocation3 + $0x14d8] sm:$0xff]
    %v855 = vld [vmem:[#allocation3 + $0x14e0] sm:$0xff]
    %v856 = vld [vmem:[#allocation3 + $0x14e8] sm:$0xff]
    %v857 = vld [vmem:[#allocation3 + $0x14f0] sm:$0xff]
    %v858 = vld [vmem:[#allocation3 + $0x14f8] sm:$0xff]
    %v859 = vld [vmem:[#allocation3 + $0x1500] sm:$0xff]
    %v860 = vld [vmem:[#allocation3 + $0x1508] sm:$0xff]
    %v861 = vld [vmem:[#allocation3 + $0x1510] sm:$0xff]
    %v862 = vld [vmem:[#allocation3 + $0x1518] sm:$0xff]
    %v863 = vld [vmem:[#allocation3 + $0x1520] sm:$0xff]
    %v864 = vld [vmem:[#allocation3 + $0x1528] sm:$0xff]
    %v865 = vld [vmem:[#allocation3 + $0x1530] sm:$0xff]
    %v866 = vld [vmem:[#allocation3 + $0x1538] sm:$0xff]
    %v867 = vld [vmem:[#allocation3 + $0x1540] sm:$0xff]
    %v868 = vld [vmem:[#allocation3 + $0x1548] sm:$0xff]
    %v869 = vld [vmem:[#allocation3 + $0x1550] sm:$0xff]
    %v870 = vld [vmem:[#allocation3 + $0x1558] sm:$0xff]
    %v871 = vld [vmem:[#allocation3 + $0x1560] sm:$0xff]
    %v872 = vld [vmem:[#allocation3 + $0x1568] sm:$0xff]
    %v873 = vld [vmem:[#allocation3 + $0x1570] sm:$0xff]
    %v874 = vld [vmem:[#allocation3 + $0x1578] sm:$0xff]
    %v875 = vld [vmem:[#allocation3 + $0x1580] sm:$0xff]
    %v876 = vld [vmem:[#allocation3 + $0x1588] sm:$0xff]
    %v877 = vld [vmem:[#allocation3 + $0x1590] sm:$0xff]
    %v878 = vld [vmem:[#allocation3 + $0x1598] sm:$0xff]
    %v879 = vld [vmem:[#allocation3 + $0x15a0] sm:$0xff]
    %v880 = vld [vmem:[#allocation3 + $0x15a8] sm:$0xff]
    %v881 = vld [vmem:[#allocation3 + $0x15b0] sm:$0xff]
    %v882 = vld [vmem:[#allocation3 + $0x15b8] sm:$0xff]
    %v883 = vld [vmem:[#allocation3 + $0x15c0] sm:$0xff]
    %v884 = vld [vmem:[#allocation3 + $0x15c8] sm:$0xff]
    %v885 = vld [vmem:[#allocation3 + $0x15d0] sm:$0xff]
    %v886 = vld [vmem:[#allocation3 + $0x15d8] sm:$0xff]
    %v887 = vld [vmem:[#allocation3 + $0x15e0] sm:$0xff]
    %v888 = vld [vmem:[#allocation3 + $0x15e8] sm:$0xff]
    %v889 = vld [vmem:[#allocation3 + $0x15f0] sm:$0xff]
    %v890 = vld [vmem:[#allocation3 + $0x15f8] sm:$0xff]
    %v891 = vld [vmem:[#allocation3 + $0x1600] sm:$0xff]
    %v892 = vld [vmem:[#allocation3 + $0x1608] sm:$0xff]
    %v893 = vld [vmem:[#allocation3 + $0x1610] sm:$0xff]
    %v894 = vld [vmem:[#allocation3 + $0x1618] sm:$0xff]
    %v895 = vld [vmem:[#allocation3 + $0x1620] sm:$0xff]
    %v896 = vld [vmem:[#allocation3 + $0x1628] sm:$0xff]
    %v897 = vld [vmem:[#allocation3 + $0x1630] sm:$0xff]
    %v898 = vld [vmem:[#allocation3 + $0x1638] sm:$0xff]
    %v899 = vld [vmem:[#allocation3 + $0x1640] sm:$0xff]
    %v900 = vld [vmem:[#allocation3 + $0x1648] sm:$0xff]
    %v901 = vld [vmem:[#allocation3 + $0x1650] sm:$0xff]
    %v902 = vld [vmem:[#allocation3 + $0x1658] sm:$0xff]
    %v903 = vld [vmem:[#allocation3 + $0x1660] sm:$0xff]
    %v904 = vld [vmem:[#allocation3 + $0x1668] sm:$0xff]
    %v905 = vld [vmem:[#allocation3 + $0x1670] sm:$0xff]
    %v906 = vld [vmem:[#allocation3 + $0x1678] sm:$0xff]
    %v907 = vld [vmem:[#allocation3 + $0x1680] sm:$0xff]
    %v908 = vld [vmem:[#allocation3 + $0x1688] sm:$0xff]
    %v909 = vld [vmem:[#allocation3 + $0x1690] sm:$0xff]
    %v910 = vld [vmem:[#allocation3 + $0x1698] sm:$0xff]
    %v911 = vld [vmem:[#allocation3 + $0x16a0] sm:$0xff]
    %v912 = vld [vmem:[#allocation3 + $0x16a8] sm:$0xff]
    %v913 = vld [vmem:[#allocation3 + $0x16b0] sm:$0xff]
    %v914 = vld [vmem:[#allocation3 + $0x16b8] sm:$0xff]
    %v915 = vld [vmem:[#allocation3 + $0x16c0] sm:$0xff]
    %v916 = vld [vmem:[#allocation3 + $0x16c8] sm:$0xff]
    %v917 = vld [vmem:[#allocation3 + $0x16d0] sm:$0xff]
    %v918 = vld [vmem:[#allocation3 + $0x16d8] sm:$0xff]
    %v919 = vld [vmem:[#allocation3 + $0x16e0] sm:$0xff]
    %v920 = vld [vmem:[#allocation3 + $0x16e8] sm:$0xff]
    %v921 = vld [vmem:[#allocation3 + $0x16f0] sm:$0xff]
    %v922 = vld [vmem:[#allocation3 + $0x16f8] sm:$0xff]
    %v923 = vld [vmem:[#allocation3 + $0x1700] sm:$0xff]
    %v924 = vld [vmem:[#allocation3 + $0x1708] sm:$0xff]
    %v925 = vld [vmem:[#allocation3 + $0x1710] sm:$0xff]
    %v926 = vld [vmem:[#allocation3 + $0x1718] sm:$0xff]
    %v927 = vld [vmem:[#allocation3 + $0x1720] sm:$0xff]
    %v928 = vld [vmem:[#allocation3 + $0x1728] sm:$0xff]
    %v929 = vld [vmem:[#allocation3 + $0x1730] sm:$0xff]
    %v930 = vld [vmem:[#allocation3 + $0x1738] sm:$0xff]
    %v931 = vld [vmem:[#allocation3 + $0x1740] sm:$0xff]
    %v932 = vld [vmem:[#allocation3 + $0x1748] sm:$0xff]
    %v933 = vld [vmem:[#allocation3 + $0x1750] sm:$0xff]
    %v934 = vld [vmem:[#allocation3 + $0x1758] sm:$0xff]
    %v935 = vld [vmem:[#allocation3 + $0x1760] sm:$0xff]
    %v936 = vld [vmem:[#allocation3 + $0x1768] sm:$0xff]
    %v937 = vld [vmem:[#allocation3 + $0x1770] sm:$0xff]
    %v938 = vld [vmem:[#allocation3 + $0x1778] sm:$0xff]
    %v939 = vld [vmem:[#allocation3 + $0x1780] sm:$0xff]
    %v940 = vld [vmem:[#allocation3 + $0x1788] sm:$0xff]
    %v941 = vld [vmem:[#allocation3 + $0x1790] sm:$0xff]
    %v942 = vld [vmem:[#allocation3 + $0x1798] sm:$0xff]
    %v943 = vld [vmem:[#allocation3 + $0x17a0] sm:$0xff]
    %v944 = vld [vmem:[#allocation3 + $0x17a8] sm:$0xff]
    %v945 = vld [vmem:[#allocation3 + $0x17b0] sm:$0xff]
    %v946 = vld [vmem:[#allocation3 + $0x17b8] sm:$0xff]
    %v947 = vld [vmem:[#allocation3 + $0x17c0] sm:$0xff]
    %v948 = vld [vmem:[#allocation3 + $0x17c8] sm:$0xff]
    %v949 = vld [vmem:[#allocation3 + $0x17d0] sm:$0xff]
    %v950 = vld [vmem:[#allocation3 + $0x17d8] sm:$0xff]
    %v951 = vld [vmem:[#allocation3 + $0x17e0] sm:$0xff]
    %v952 = vld [vmem:[#allocation3 + $0x17e8] sm:$0xff]
    %v953 = vld [vmem:[#allocation3 + $0x17f0] sm:$0xff]
    %v954 = vld [vmem:[#allocation3 + $0x17f8] sm:$0xff]
    %v955 = vld [vmem:[#allocation3 + $0x1800] sm:$0xff]
    %v956 = vld [vmem:[#allocation3 + $0x1808] sm:$0xff]
    %v957 = vld [vmem:[#allocation3 + $0x1810] sm:$0xff]
    %v958 = vld [vmem:[#allocation3 + $0x1818] sm:$0xff]
    %v959 = vld [vmem:[#allocation3 + $0x1820] sm:$0xff]
    %v960 = vld [vmem:[#allocation3 + $0x1828] sm:$0xff]
    %v961 = vld [vmem:[#allocation3 + $0x1830] sm:$0xff]
    %v962 = vld [vmem:[#allocation3 + $0x1838] sm:$0xff]
    %v963 = vld [vmem:[#allocation3 + $0x1840] sm:$0xff]
    %v964 = vld [vmem:[#allocation3 + $0x1848] sm:$0xff]
    %v965 = vld [vmem:[#allocation3 + $0x1850] sm:$0xff]
    %v966 = vld [vmem:[#allocation3 + $0x1858] sm:$0xff]
    %v967 = vld [vmem:[#allocation3 + $0x1860] sm:$0xff]
    %v968 = vld [vmem:[#allocation3 + $0x1868] sm:$0xff]
    %v969 = vld [vmem:[#allocation3 + $0x1870] sm:$0xff]
    %v970 = vld [vmem:[#allocation3 + $0x1878] sm:$0xff]
    %v971 = vld [vmem:[#allocation3 + $0x1880] sm:$0xff]
    %v972 = vld [vmem:[#allocation3 + $0x1888] sm:$0xff]
    %v973 = vld [vmem:[#allocation3 + $0x1890] sm:$0xff]
    %v974 = vld [vmem:[#allocation3 + $0x1898] sm:$0xff]
    %v975 = vld [vmem:[#allocation3 + $0x18a0] sm:$0xff]
    %v976 = vld [vmem:[#allocation3 + $0x18a8] sm:$0xff]
    %v977 = vld [vmem:[#allocation3 + $0x18b0] sm:$0xff]
    %v978 = vld [vmem:[#allocation3 + $0x18b8] sm:$0xff]
    %v979 = vld [vmem:[#allocation3 + $0x18c0] sm:$0xff]
    %v980 = vld [vmem:[#allocation3 + $0x18c8] sm:$0xff]
    %v981 = vld [vmem:[#allocation3 + $0x18d0] sm:$0xff]
    %v982 = vld [vmem:[#allocation3 + $0x18d8] sm:$0xff]
    %v983 = vld [vmem:[#allocation3 + $0x18e0] sm:$0xff]
    %v984 = vld [vmem:[#allocation3 + $0x18e8] sm:$0xff]
    %v985 = vld [vmem:[#allocation3 + $0x18f0] sm:$0xff]
    %v986 = vld [vmem:[#allocation3 + $0x18f8] sm:$0xff]
    %v987 = vld [vmem:[#allocation3 + $0x1900] sm:$0xff]
    %v988 = vld [vmem:[#allocation3 + $0x1908] sm:$0xff]
    %v989 = vld [vmem:[#allocation3 + $0x1910] sm:$0xff]
    %v990 = vld [vmem:[#allocation3 + $0x1918] sm:$0xff]
    %v991 = vld [vmem:[#allocation3 + $0x1920] sm:$0xff]
    %v992 = vld [vmem:[#allocation3 + $0x1928] sm:$0xff]
    %v993 = vld [vmem:[#allocation3 + $0x1930] sm:$0xff]
    %v994 = vld [vmem:[#allocation3 + $0x1938] sm:$0xff]
    %v995 = vld [vmem:[#allocation3 + $0x1940] sm:$0xff]
    %v996 = vld [vmem:[#allocation3 + $0x1948] sm:$0xff]
    %v997 = vld [vmem:[#allocation3 + $0x1950] sm:$0xff]
    %v998 = vld [vmem:[#allocation3 + $0x1958] sm:$0xff]
    %v999 = vld [vmem:[#allocation3 + $0x1960] sm:$0xff]
    %v1000 = vld [vmem:[#allocation3 + $0x1968] sm:$0xff]
    %v1001 = vld [vmem:[#allocation3 + $0x1970] sm:$0xff]
    %v1002 = vld [vmem:[#allocation3 + $0x1978] sm:$0xff]
    %v1003 = vld [vmem:[#allocation3 + $0x1980] sm:$0xff]
    %v1004 = vld [vmem:[#allocation3 + $0x1988] sm:$0xff]
    %v1005 = vld [vmem:[#allocation3 + $0x1990] sm:$0xff]
    %v1006 = vld [vmem:[#allocation3 + $0x1998] sm:$0xff]
    %v1007 = vld [vmem:[#allocation3 + $0x19a0] sm:$0xff]
    %v1008 = vld [vmem:[#allocation3 + $0x19a8] sm:$0xff]
    %v1009 = vld [vmem:[#allocation3 + $0x19b0] sm:$0xff]
    %v1010 = vld [vmem:[#allocation3 + $0x19b8] sm:$0xff]
    %v1011 = vld [vmem:[#allocation3 + $0x19c0] sm:$0xff]
    %v1012 = vld [vmem:[#allocation3 + $0x19c8] sm:$0xff]
    %v1013 = vld [vmem:[#allocation3 + $0x19d0] sm:$0xff]
    %v1014 = vld [vmem:[#allocation3 + $0x19d8] sm:$0xff]
    %v1015 = vld [vmem:[#allocation3 + $0x19e0] sm:$0xff]
    %v1016 = vld [vmem:[#allocation3 + $0x19e8] sm:$0xff]
    %v1017 = vld [vmem:[#allocation3 + $0x19f0] sm:$0xff]
    %v1018 = vld [vmem:[#allocation3 + $0x19f8] sm:$0xff]
    %v1019 = vld [vmem:[#allocation3 + $0x1a00] sm:$0xff]
    %v1020 = vld [vmem:[#allocation3 + $0x1a08] sm:$0xff]
    %v1021 = vld [vmem:[#allocation3 + $0x1a10] sm:$0xff]
    %v1022 = vld [vmem:[#allocation3 + $0x1a18] sm:$0xff]
    %v1023 = vld [vmem:[#allocation3 + $0x1a20] sm:$0xff]
    %v1024 = vld [vmem:[#allocation3 + $0x1a28] sm:$0xff]
    %v1025 = vld [vmem:[#allocation3 + $0x1a30] sm:$0xff]
    %v1026 = vld [vmem:[#allocation3 + $0x1a38] sm:$0xff]
    %v1027 = vld [vmem:[#allocation3 + $0x1a40] sm:$0xff]
    %v1028 = vld [vmem:[#allocation3 + $0x1a48] sm:$0xff]
    %v1029 = vld [vmem:[#allocation3 + $0x1a50] sm:$0xff]
    %v1030 = vld [vmem:[#allocation3 + $0x1a58] sm:$0xff]
    %v1031 = vld [vmem:[#allocation3 + $0x1a60] sm:$0xff]
    %v1032 = vld [vmem:[#allocation3 + $0x1a68] sm:$0xff]
    %v1033 = vld [vmem:[#allocation3 + $0x1a70] sm:$0xff]
    %v1034 = vld [vmem:[#allocation3 + $0x1a78] sm:$0xff]
    %v1035 = vld [vmem:[#allocation3 + $0x1a80] sm:$0xff]
    %v1036 = vld [vmem:[#allocation3 + $0x1a88] sm:$0xff]
    %v1037 = vld [vmem:[#allocation3 + $0x1a90] sm:$0xff]
    %v1038 = vld [vmem:[#allocation3 + $0x1a98] sm:$0xff]
    %v1039 = vld [vmem:[#allocation3 + $0x1aa0] sm:$0xff]
    %v1040 = vld [vmem:[#allocation3 + $0x1aa8] sm:$0xff]
    %v1041 = vld [vmem:[#allocation3 + $0x1ab0] sm:$0xff]
    %v1042 = vld [vmem:[#allocation3 + $0x1ab8] sm:$0xff]
    %v1043 = vld [vmem:[#allocation3 + $0x1ac0] sm:$0xff]
    %v1044 = vld [vmem:[#allocation3 + $0x1ac8] sm:$0xff]
    %v1045 = vld [vmem:[#allocation3 + $0x1ad0] sm:$0xff]
    %v1046 = vld [vmem:[#allocation3 + $0x1ad8] sm:$0xff]
    %v1047 = vld [vmem:[#allocation3 + $0x1ae0] sm:$0xff]
    %v1048 = vld [vmem:[#allocation3 + $0x1ae8] sm:$0xff]
    %v1049 = vld [vmem:[#allocation3 + $0x1af0] sm:$0xff]
    %v1050 = vld [vmem:[#allocation3 + $0x1af8] sm:$0xff]
    %v1051 = vld [vmem:[#allocation3 + $0x1b00] sm:$0xff]
    %v1052 = vld [vmem:[#allocation3 + $0x1b08] sm:$0xff]
    %v1053 = vld [vmem:[#allocation3 + $0x1b10] sm:$0xff]
    %v1054 = vld [vmem:[#allocation3 + $0x1b18] sm:$0xff]
    %v1055 = vld [vmem:[#allocation3 + $0x1b20] sm:$0xff]
    %v1056 = vld [vmem:[#allocation3 + $0x1b28] sm:$0xff]
    %v1057 = vld [vmem:[#allocation3 + $0x1b30] sm:$0xff]
    %v1058 = vld [vmem:[#allocation3 + $0x1b38] sm:$0xff]
    %v1059 = vld [vmem:[#allocation3 + $0x1b40] sm:$0xff]
    %v1060 = vld [vmem:[#allocation3 + $0x1b48] sm:$0xff]
    %v1061 = vld [vmem:[#allocation3 + $0x1b50] sm:$0xff]
    %v1062 = vld [vmem:[#allocation3 + $0x1b58] sm:$0xff]
    %v1063 = vld [vmem:[#allocation3 + $0x1b60] sm:$0xff]
    %v1064 = vld [vmem:[#allocation3 + $0x1b68] sm:$0xff]
    %v1065 = vld [vmem:[#allocation3 + $0x1b70] sm:$0xff]
    %v1066 = vld [vmem:[#allocation3 + $0x1b78] sm:$0xff]
    %v1067 = vld [vmem:[#allocation3 + $0x1b80] sm:$0xff]
    %v1068 = vld [vmem:[#allocation3 + $0x1b88] sm:$0xff]
    %v1069 = vld [vmem:[#allocation3 + $0x1b90] sm:$0xff]
    %v1070 = vld [vmem:[#allocation3 + $0x1b98] sm:$0xff]
    %v1071 = vld [vmem:[#allocation3 + $0x1ba0] sm:$0xff]
    %v1072 = vld [vmem:[#allocation3 + $0x1ba8] sm:$0xff]
    %v1073 = vld [vmem:[#allocation3 + $0x1bb0] sm:$0xff]
    %v1074 = vld [vmem:[#allocation3 + $0x1bb8] sm:$0xff]
    %v1075 = vld [vmem:[#allocation3 + $0x1bc0] sm:$0xff]
    %v1076 = vld [vmem:[#allocation3 + $0x1bc8] sm:$0xff]
    %v1077 = vld [vmem:[#allocation3 + $0x1bd0] sm:$0xff]
    %v1078 = vld [vmem:[#allocation3 + $0x1bd8] sm:$0xff]
    %v1079 = vld [vmem:[#allocation3 + $0x1be0] sm:$0xff]
    %v1080 = vld [vmem:[#allocation3 + $0x1be8] sm:$0xff]
    %v1081 = vld [vmem:[#allocation3 + $0x1bf0] sm:$0xff]
    %v1082 = vld [vmem:[#allocation3 + $0x1bf8] sm:$0xff]
    %v1083 = vld [vmem:[#allocation3 + $0x1c00] sm:$0xff]
    %v1084 = vld [vmem:[#allocation3 + $0x1c08] sm:$0xff]
    %v1085 = vld [vmem:[#allocation3 + $0x1c10] sm:$0xff]
    %v1086 = vld [vmem:[#allocation3 + $0x1c18] sm:$0xff]
    %v1087 = vld [vmem:[#allocation3 + $0x1c20] sm:$0xff]
    %v1088 = vld [vmem:[#allocation3 + $0x1c28] sm:$0xff]
    %v1089 = vld [vmem:[#allocation3 + $0x1c30] sm:$0xff]
    %v1090 = vld [vmem:[#allocation3 + $0x1c38] sm:$0xff]
    %v1091 = vld [vmem:[#allocation3 + $0x1c40] sm:$0xff]
    %v1092 = vld [vmem:[#allocation3 + $0x1c48] sm:$0xff]
    %v1093 = vld [vmem:[#allocation3 + $0x1c50] sm:$0xff]
    %v1094 = vld [vmem:[#allocation3 + $0x1c58] sm:$0xff]
    %v1095 = vld [vmem:[#allocation3 + $0x1c60] sm:$0xff]
    %v1096 = vld [vmem:[#allocation3 + $0x1c68] sm:$0xff]
    %v1097 = vld [vmem:[#allocation3 + $0x1c70] sm:$0xff]
    %v1098 = vld [vmem:[#allocation3 + $0x1c78] sm:$0xff]
    %v1099 = vld [vmem:[#allocation3 + $0x1c80] sm:$0xff]
    %v1100 = vld [vmem:[#allocation3 + $0x1c88] sm:$0xff]
    %v1101 = vld [vmem:[#allocation3 + $0x1c90] sm:$0xff]
    %v1102 = vld [vmem:[#allocation3 + $0x1c98] sm:$0xff]
    %v1103 = vld [vmem:[#allocation3 + $0x1ca0] sm:$0xff]
    %v1104 = vld [vmem:[#allocation3 + $0x1ca8] sm:$0xff]
    %v1105 = vld [vmem:[#allocation3 + $0x1cb0] sm:$0xff]
    %v1106 = vld [vmem:[#allocation3 + $0x1cb8] sm:$0xff]
    %v1107 = vld [vmem:[#allocation3 + $0x1cc0] sm:$0xff]
    %v1108 = vld [vmem:[#allocation3 + $0x1cc8] sm:$0xff]
    %v1109 = vld [vmem:[#allocation3 + $0x1cd0] sm:$0xff]
    %v1110 = vld [vmem:[#allocation3 + $0x1cd8] sm:$0xff]
    %v1111 = vld [vmem:[#allocation3 + $0x1ce0] sm:$0xff]
    %v1112 = vld [vmem:[#allocation3 + $0x1ce8] sm:$0xff]
    %v1113 = vld [vmem:[#allocation3 + $0x1cf0] sm:$0xff]
    %v1114 = vld [vmem:[#allocation3 + $0x1cf8] sm:$0xff]
    %v1115 = vld [vmem:[#allocation3 + $0x1d00] sm:$0xff]
    %v1116 = vld [vmem:[#allocation3 + $0x1d08] sm:$0xff]
    %v1117 = vld [vmem:[#allocation3 + $0x1d10] sm:$0xff]
    %v1118 = vld [vmem:[#allocation3 + $0x1d18] sm:$0xff]
    %v1119 = vld [vmem:[#allocation3 + $0x1d20] sm:$0xff]
    %v1120 = vld [vmem:[#allocation3 + $0x1d28] sm:$0xff]
    %v1121 = vld [vmem:[#allocation3 + $0x1d30] sm:$0xff]
    %v1122 = vld [vmem:[#allocation3 + $0x1d38] sm:$0xff]
    %v1123 = vld [vmem:[#allocation3 + $0x1d40] sm:$0xff]
    %v1124 = vld [vmem:[#allocation3 + $0x1d48] sm:$0xff]
    %v1125 = vld [vmem:[#allocation3 + $0x1d50] sm:$0xff]
    %v1126 = vld [vmem:[#allocation3 + $0x1d58] sm:$0xff]
    %v1127 = vld [vmem:[#allocation3 + $0x1d60] sm:$0xff]
    %v1128 = vld [vmem:[#allocation3 + $0x1d68] sm:$0xff]
    %v1129 = vld [vmem:[#allocation3 + $0x1d70] sm:$0xff]
    %v1130 = vld [vmem:[#allocation3 + $0x1d78] sm:$0xff]
    %v1131 = vld [vmem:[#allocation3 + $0x1d80] sm:$0xff]
    %v1132 = vld [vmem:[#allocation3 + $0x1d88] sm:$0xff]
    %v1133 = vld [vmem:[#allocation3 + $0x1d90] sm:$0xff]
    %v1134 = vld [vmem:[#allocation3 + $0x1d98] sm:$0xff]
    %v1135 = vld [vmem:[#allocation3 + $0x1da0] sm:$0xff]
    %v1136 = vld [vmem:[#allocation3 + $0x1da8] sm:$0xff]
    %v1137 = vld [vmem:[#allocation3 + $0x1db0] sm:$0xff]
    %v1138 = vld [vmem:[#allocation3 + $0x1db8] sm:$0xff]
    %v1139 = vld [vmem:[#allocation3 + $0x1dc0] sm:$0xff]
    %v1140 = vld [vmem:[#allocation3 + $0x1dc8] sm:$0xff]
    %v1141 = vld [vmem:[#allocation3 + $0x1dd0] sm:$0xff]
    %v1142 = vld [vmem:[#allocation3 + $0x1dd8] sm:$0xff]
    %v1143 = vld [vmem:[#allocation3 + $0x1de0] sm:$0xff]
    %v1144 = vld [vmem:[#allocation3 + $0x1de8] sm:$0xff]
    %v1145 = vld [vmem:[#allocation3 + $0x1df0] sm:$0xff]
    %v1146 = vld [vmem:[#allocation3 + $0x1df8] sm:$0xff]
    %v1147 = vld [vmem:[#allocation3 + $0x1e00] sm:$0xff]
    %v1148 = vld [vmem:[#allocation3 + $0x1e08] sm:$0xff]
    %v1149 = vld [vmem:[#allocation3 + $0x1e10] sm:$0xff]
    %v1150 = vld [vmem:[#allocation3 + $0x1e18] sm:$0xff]
    %v1151 = vld [vmem:[#allocation3 + $0x1e20] sm:$0xff]
    %v1152 = vld [vmem:[#allocation3 + $0x1e28] sm:$0xff]
    %v1153 = vld [vmem:[#allocation3 + $0x1e30] sm:$0xff]
    %v1154 = vld [vmem:[#allocation3 + $0x1e38] sm:$0xff]
    %v1155 = vld [vmem:[#allocation3 + $0x1e40] sm:$0xff]
    %v1156 = vld [vmem:[#allocation3 + $0x1e48] sm:$0xff]
    %v1157 = vld [vmem:[#allocation3 + $0x1e50] sm:$0xff]
    %v1158 = vld [vmem:[#allocation3 + $0x1e58] sm:$0xff]
    %v1159 = vld [vmem:[#allocation3 + $0x1e60] sm:$0xff]
    %v1160 = vld [vmem:[#allocation3 + $0x1e68] sm:$0xff]
    %v1161 = vld [vmem:[#allocation3 + $0x1e70] sm:$0xff]
    %v1162 = vld [vmem:[#allocation3 + $0x1e78] sm:$0xff]
    %v1163 = vld [vmem:[#allocation3 + $0x1e80] sm:$0xff]
    %v1164 = vld [vmem:[#allocation3 + $0x1e88] sm:$0xff]
    %v1165 = vld [vmem:[#allocation3 + $0x1e90] sm:$0xff]
    %v1166 = vld [vmem:[#allocation3 + $0x1e98] sm:$0xff]
    %v1167 = vld [vmem:[#allocation3 + $0x1ea0] sm:$0xff]
    %v1168 = vld [vmem:[#allocation3 + $0x1ea8] sm:$0xff]
    %v1169 = vld [vmem:[#allocation3 + $0x1eb0] sm:$0xff]
    %v1170 = vld [vmem:[#allocation3 + $0x1eb8] sm:$0xff]
    %v1171 = vld [vmem:[#allocation3 + $0x1ec0] sm:$0xff]
    %v1172 = vld [vmem:[#allocation3 + $0x1ec8] sm:$0xff]
    %v1173 = vld [vmem:[#allocation3 + $0x1ed0] sm:$0xff]
    %v1174 = vld [vmem:[#allocation3 + $0x1ed8] sm:$0xff]
    %v1175 = vld [vmem:[#allocation3 + $0x1ee0] sm:$0xff]
    %v1176 = vld [vmem:[#allocation3 + $0x1ee8] sm:$0xff]
    %v1177 = vld [vmem:[#allocation3 + $0x1ef0] sm:$0xff]
    %v1178 = vld [vmem:[#allocation3 + $0x1ef8] sm:$0xff]
    %v1179 = vld [vmem:[#allocation3 + $0x1f00] sm:$0xff]
    %v1180 = vld [vmem:[#allocation3 + $0x1f08] sm:$0xff]
    %v1181 = vld [vmem:[#allocation3 + $0x1f10] sm:$0xff]
    %v1182 = vld [vmem:[#allocation3 + $0x1f18] sm:$0xff]
    %v1183 = vld [vmem:[#allocation3 + $0x1f20] sm:$0xff]
    %v1184 = vld [vmem:[#allocation3 + $0x1f28] sm:$0xff]
    %v1185 = vld [vmem:[#allocation3 + $0x1f30] sm:$0xff]
    %v1186 = vld [vmem:[#allocation3 + $0x1f38] sm:$0xff]
    %v1187 = vld [vmem:[#allocation3 + $0x1f40] sm:$0xff]
    %v1188 = vld [vmem:[#allocation3 + $0x1f48] sm:$0xff]
    %v1189 = vld [vmem:[#allocation3 + $0x1f50] sm:$0xff]
    %v1190 = vld [vmem:[#allocation3 + $0x1f58] sm:$0xff]
    %v1191 = vld [vmem:[#allocation3 + $0x1f60] sm:$0xff]
    %v1192 = vld [vmem:[#allocation3 + $0x1f68] sm:$0xff]
    %v1193 = vld [vmem:[#allocation3 + $0x1f70] sm:$0xff]
    %v1194 = vld [vmem:[#allocation3 + $0x1f78] sm:$0xff]
    %v1195 = vld [vmem:[#allocation3 + $0x1f80] sm:$0xff]
    %v1196 = vld [vmem:[#allocation3 + $0x1f88] sm:$0xff]
    %v1197 = vld [vmem:[#allocation3 + $0x1f90] sm:$0xff]
    %v1198 = vld [vmem:[#allocation3 + $0x1f98] sm:$0xff]
    %v1199 = vld [vmem:[#allocation3 + $0x1fa0] sm:$0xff]
    %v1200 = vld [vmem:[#allocation3 + $0x1fa8] sm:$0xff]
    %v1201 = vld [vmem:[#allocation3 + $0x1fb0] sm:$0xff]
    %v1202 = vld [vmem:[#allocation3 + $0x1fb8] sm:$0xff]
    %v1203 = vld [vmem:[#allocation3 + $0x1fc0] sm:$0xff]
    %v1204 = vld [vmem:[#allocation3 + $0x1fc8] sm:$0xff]
    %v1205 = vld [vmem:[#allocation3 + $0x1fd0] sm:$0xff]
    %v1206 = vld [vmem:[#allocation3 + $0x1fd8] sm:$0xff]
    %v1207 = vld [vmem:[#allocation3 + $0x1fe0] sm:$0xff]
    %v1208 = vld [vmem:[#allocation3 + $0x1fe8] sm:$0xff]
    %v1209 = vld [vmem:[#allocation3 + $0x1ff0] sm:$0xff]
    %v1210 = vld [vmem:[#allocation3 + $0x1ff8] sm:$0xff]
    %v1211 = vld [vmem:[#allocation5] sm:$0xff]
    %v1213 = vlaneseq
    %v1214 = vshrl.u32 %v1213, 7
    %v1215 = vsub.s32 0, %v1214
    %v1216 = vrot.slane %v1211, %v1215
    %v1217 = vlaneseq
    %v1218 = vshrl.u32 %v1217, 7
    %v1219 = vsub.s32 1, %v1218
    %v1220 = vrot.slane %v1211, %v1219
    %v1221 = vlaneseq
    %v1222 = vshrl.u32 %v1221, 7
    %v1223 = vsub.s32 2, %v1222
    %v1224 = vrot.slane %v1211, %v1223
    %v1225 = vlaneseq
    %v1226 = vshrl.u32 %v1225, 7
    %v1227 = vsub.s32 3, %v1226
    %v1228 = vrot.slane %v1211, %v1227
    %v1229 = vlaneseq
    %v1230 = vshrl.u32 %v1229, 7
    %v1231 = vsub.s32 4, %v1230
    %v1232 = vrot.slane %v1211, %v1231
    %v1233 = vlaneseq
    %v1234 = vshrl.u32 %v1233, 7
    %v1235 = vsub.s32 5, %v1234
    %v1236 = vrot.slane %v1211, %v1235
    %v1237 = vlaneseq
    %v1238 = vshrl.u32 %v1237, 7
    %v1239 = vsub.s32 6, %v1238
    %v1240 = vrot.slane %v1211, %v1239
    %v1241 = vlaneseq
    %v1242 = vshrl.u32 %v1241, 7
    %v1243 = vsub.s32 7, %v1242
    %v1244 = vrot.slane %v1211, %v1243
    %v2277 = vunpack.c.l.b16 %v187
    %v2278 = vunpack.c.h.b16 %v187
    %v2279 = vunpack.c.l.b16 %v188
    %v2280 = vunpack.c.h.b16 %v188
    %v2281 = vunpack.c.l.b16 %v189
    %v2282 = vunpack.c.h.b16 %v189
    %v2283 = vunpack.c.l.b16 %v190
    %v2284 = vunpack.c.h.b16 %v190
    %v2285 = vunpack.c.l.b16 %v191
    %v2286 = vunpack.c.h.b16 %v191
    %v2287 = vunpack.c.l.b16 %v192
    %v2288 = vunpack.c.h.b16 %v192
    %v2289 = vunpack.c.l.b16 %v193
    %v2290 = vunpack.c.h.b16 %v193
    %v2291 = vunpack.c.l.b16 %v194
    %v2292 = vunpack.c.h.b16 %v194
    %v2293 = vunpack.c.l.b16 %v195
    %v2294 = vunpack.c.h.b16 %v195
    %v2295 = vunpack.c.l.b16 %v196
    %v2296 = vunpack.c.h.b16 %v196
    %v2297 = vunpack.c.l.b16 %v197
    %v2298 = vunpack.c.h.b16 %v197
    %v2299 = vunpack.c.l.b16 %v198
    %v2300 = vunpack.c.h.b16 %v198
    %v2301 = vunpack.c.l.b16 %v199
    %v2302 = vunpack.c.h.b16 %v199
    %v2303 = vunpack.c.l.b16 %v200
    %v2304 = vunpack.c.h.b16 %v200
    %v2305 = vunpack.c.l.b16 %v201
    %v2306 = vunpack.c.h.b16 %v201
    %v2307 = vunpack.c.l.b16 %v202
    %v2308 = vunpack.c.h.b16 %v202
    %v2309 = vunpack.c.l.b16 %v203
    %v2310 = vunpack.c.h.b16 %v203
    %v2311 = vunpack.c.l.b16 %v204
    %v2312 = vunpack.c.h.b16 %v204
    %v2313 = vunpack.c.l.b16 %v205
    %v2314 = vunpack.c.h.b16 %v205
    %v2315 = vunpack.c.l.b16 %v206
    %v2316 = vunpack.c.h.b16 %v206
    %v2317 = vunpack.c.l.b16 %v207
    %v2318 = vunpack.c.h.b16 %v207
    %v2319 = vunpack.c.l.b16 %v208
    %v2320 = vunpack.c.h.b16 %v208
    %v2321 = vunpack.c.l.b16 %v209
    %v2322 = vunpack.c.h.b16 %v209
    %v2323 = vunpack.c.l.b16 %v210
    %v2324 = vunpack.c.h.b16 %v210
    %v2325 = vunpack.c.l.b16 %v211
    %v2326 = vunpack.c.h.b16 %v211
    %v2327 = vunpack.c.l.b16 %v212
    %v2328 = vunpack.c.h.b16 %v212
    %v2329 = vunpack.c.l.b16 %v213
    %v2330 = vunpack.c.h.b16 %v213
    %v2331 = vunpack.c.l.b16 %v214
    %v2332 = vunpack.c.h.b16 %v214
    %v2333 = vunpack.c.l.b16 %v215
    %v2334 = vunpack.c.h.b16 %v215
    %v2335 = vunpack.c.l.b16 %v216
    %v2336 = vunpack.c.h.b16 %v216
    %v2337 = vunpack.c.l.b16 %v217
    %v2338 = vunpack.c.h.b16 %v217
    %v2339 = vunpack.c.l.b16 %v218
    %v2340 = vunpack.c.h.b16 %v218
    %v2341 = vunpack.c.l.b16 %v219
    %v2342 = vunpack.c.h.b16 %v219
    %v2343 = vunpack.c.l.b16 %v220
    %v2344 = vunpack.c.h.b16 %v220
    %v2345 = vunpack.c.l.b16 %v221
    %v2346 = vunpack.c.h.b16 %v221
    %v2347 = vunpack.c.l.b16 %v222
    %v2348 = vunpack.c.h.b16 %v222
    %v2349 = vunpack.c.l.b16 %v223
    %v2350 = vunpack.c.h.b16 %v223
    %v2351 = vunpack.c.l.b16 %v224
    %v2352 = vunpack.c.h.b16 %v224
    %v2353 = vunpack.c.l.b16 %v225
    %v2354 = vunpack.c.h.b16 %v225
    %v2355 = vunpack.c.l.b16 %v226
    %v2356 = vunpack.c.h.b16 %v226
    %v2357 = vunpack.c.l.b16 %v227
    %v2358 = vunpack.c.h.b16 %v227
    %v2359 = vunpack.c.l.b16 %v228
    %v2360 = vunpack.c.h.b16 %v228
    %v2361 = vunpack.c.l.b16 %v229
    %v2362 = vunpack.c.h.b16 %v229
    %v2363 = vunpack.c.l.b16 %v230
    %v2364 = vunpack.c.h.b16 %v230
    %v2365 = vunpack.c.l.b16 %v231
    %v2366 = vunpack.c.h.b16 %v231
    %v2367 = vunpack.c.l.b16 %v232
    %v2368 = vunpack.c.h.b16 %v232
    %v2369 = vunpack.c.l.b16 %v233
    %v2370 = vunpack.c.h.b16 %v233
    %v2371 = vunpack.c.l.b16 %v234
    %v2372 = vunpack.c.h.b16 %v234
    %v2373 = vunpack.c.l.b16 %v235
    %v2374 = vunpack.c.h.b16 %v235
    %v2375 = vunpack.c.l.b16 %v236
    %v2376 = vunpack.c.h.b16 %v236
    %v2377 = vunpack.c.l.b16 %v237
    %v2378 = vunpack.c.h.b16 %v237
    %v2379 = vunpack.c.l.b16 %v238
    %v2380 = vunpack.c.h.b16 %v238
    %v2381 = vunpack.c.l.b16 %v239
    %v2382 = vunpack.c.h.b16 %v239
    %v2383 = vunpack.c.l.b16 %v240
    %v2384 = vunpack.c.h.b16 %v240
    %v2385 = vunpack.c.l.b16 %v241
    %v2386 = vunpack.c.h.b16 %v241
    %v2387 = vunpack.c.l.b16 %v242
    %v2388 = vunpack.c.h.b16 %v242
    %v2389 = vunpack.c.l.b16 %v243
    %v2390 = vunpack.c.h.b16 %v243
    %v2391 = vunpack.c.l.b16 %v244
    %v2392 = vunpack.c.h.b16 %v244
    %v2393 = vunpack.c.l.b16 %v245
    %v2394 = vunpack.c.h.b16 %v245
    %v2395 = vunpack.c.l.b16 %v246
    %v2396 = vunpack.c.h.b16 %v246
    %v2397 = vunpack.c.l.b16 %v247
    %v2398 = vunpack.c.h.b16 %v247
    %v2399 = vunpack.c.l.b16 %v248
    %v2400 = vunpack.c.h.b16 %v248
    %v2401 = vunpack.c.l.b16 %v249
    %v2402 = vunpack.c.h.b16 %v249
    %v2403 = vunpack.c.l.b16 %v250
    %v2404 = vunpack.c.h.b16 %v250
    %v2405 = vunpack.c.l.b16 %v251
    %v2406 = vunpack.c.h.b16 %v251
    %v2407 = vunpack.c.l.b16 %v252
    %v2408 = vunpack.c.h.b16 %v252
    %v2409 = vunpack.c.l.b16 %v253
    %v2410 = vunpack.c.h.b16 %v253
    %v2411 = vunpack.c.l.b16 %v254
    %v2412 = vunpack.c.h.b16 %v254
    %v2413 = vunpack.c.l.b16 %v255
    %v2414 = vunpack.c.h.b16 %v255
    %v2415 = vunpack.c.l.b16 %v256
    %v2416 = vunpack.c.h.b16 %v256
    %v2417 = vunpack.c.l.b16 %v257
    %v2418 = vunpack.c.h.b16 %v257
    %v2419 = vunpack.c.l.b16 %v258
    %v2420 = vunpack.c.h.b16 %v258
    %v2421 = vunpack.c.l.b16 %v259
    %v2422 = vunpack.c.h.b16 %v259
    %v2423 = vunpack.c.l.b16 %v260
    %v2424 = vunpack.c.h.b16 %v260
    %v2425 = vunpack.c.l.b16 %v261
    %v2426 = vunpack.c.h.b16 %v261
    %v2427 = vunpack.c.l.b16 %v262
    %v2428 = vunpack.c.h.b16 %v262
    %v2429 = vunpack.c.l.b16 %v263
    %v2430 = vunpack.c.h.b16 %v263
    %v2431 = vunpack.c.l.b16 %v264
    %v2432 = vunpack.c.h.b16 %v264
    %v2433 = vunpack.c.l.b16 %v265
    %v2434 = vunpack.c.h.b16 %v265
    %v2435 = vunpack.c.l.b16 %v266
    %v2436 = vunpack.c.h.b16 %v266
    %v2437 = vunpack.c.l.b16 %v267
    %v2438 = vunpack.c.h.b16 %v267
    %v2439 = vunpack.c.l.b16 %v268
    %v2440 = vunpack.c.h.b16 %v268
    %v2441 = vunpack.c.l.b16 %v269
    %v2442 = vunpack.c.h.b16 %v269
    %v2443 = vunpack.c.l.b16 %v270
    %v2444 = vunpack.c.h.b16 %v270
    %v2445 = vunpack.c.l.b16 %v271
    %v2446 = vunpack.c.h.b16 %v271
    %v2447 = vunpack.c.l.b16 %v272
    %v2448 = vunpack.c.h.b16 %v272
    %v2449 = vunpack.c.l.b16 %v273
    %v2450 = vunpack.c.h.b16 %v273
    %v2451 = vunpack.c.l.b16 %v274
    %v2452 = vunpack.c.h.b16 %v274
    %v2453 = vunpack.c.l.b16 %v275
    %v2454 = vunpack.c.h.b16 %v275
    %v2455 = vunpack.c.l.b16 %v276
    %v2456 = vunpack.c.h.b16 %v276
    %v2457 = vunpack.c.l.b16 %v277
    %v2458 = vunpack.c.h.b16 %v277
    %v2459 = vunpack.c.l.b16 %v278
    %v2460 = vunpack.c.h.b16 %v278
    %v2461 = vunpack.c.l.b16 %v279
    %v2462 = vunpack.c.h.b16 %v279
    %v2463 = vunpack.c.l.b16 %v280
    %v2464 = vunpack.c.h.b16 %v280
    %v2465 = vunpack.c.l.b16 %v281
    %v2466 = vunpack.c.h.b16 %v281
    %v2467 = vunpack.c.l.b16 %v282
    %v2468 = vunpack.c.h.b16 %v282
    %v2469 = vunpack.c.l.b16 %v283
    %v2470 = vunpack.c.h.b16 %v283
    %v2471 = vunpack.c.l.b16 %v284
    %v2472 = vunpack.c.h.b16 %v284
    %v2473 = vunpack.c.l.b16 %v285
    %v2474 = vunpack.c.h.b16 %v285
    %v2475 = vunpack.c.l.b16 %v286
    %v2476 = vunpack.c.h.b16 %v286
    %v2477 = vunpack.c.l.b16 %v287
    %v2478 = vunpack.c.h.b16 %v287
    %v2479 = vunpack.c.l.b16 %v288
    %v2480 = vunpack.c.h.b16 %v288
    %v2481 = vunpack.c.l.b16 %v289
    %v2482 = vunpack.c.h.b16 %v289
    %v2483 = vunpack.c.l.b16 %v290
    %v2484 = vunpack.c.h.b16 %v290
    %v2485 = vunpack.c.l.b16 %v291
    %v2486 = vunpack.c.h.b16 %v291
    %v2487 = vunpack.c.l.b16 %v292
    %v2488 = vunpack.c.h.b16 %v292
    %v2489 = vunpack.c.l.b16 %v293
    %v2490 = vunpack.c.h.b16 %v293
    %v2491 = vunpack.c.l.b16 %v294
    %v2492 = vunpack.c.h.b16 %v294
    %v2493 = vunpack.c.l.b16 %v295
    %v2494 = vunpack.c.h.b16 %v295
    %v2495 = vunpack.c.l.b16 %v296
    %v2496 = vunpack.c.h.b16 %v296
    %v2497 = vunpack.c.l.b16 %v297
    %v2498 = vunpack.c.h.b16 %v297
    %v2499 = vunpack.c.l.b16 %v298
    %v2500 = vunpack.c.h.b16 %v298
    %v2501 = vunpack.c.l.b16 %v299
    %v2502 = vunpack.c.h.b16 %v299
    %v2503 = vunpack.c.l.b16 %v300
    %v2504 = vunpack.c.h.b16 %v300
    %v2505 = vunpack.c.l.b16 %v301
    %v2506 = vunpack.c.h.b16 %v301
    %v2507 = vunpack.c.l.b16 %v302
    %v2508 = vunpack.c.h.b16 %v302
    %v2509 = vunpack.c.l.b16 %v303
    %v2510 = vunpack.c.h.b16 %v303
    %v2511 = vunpack.c.l.b16 %v304
    %v2512 = vunpack.c.h.b16 %v304
    %v2513 = vunpack.c.l.b16 %v305
    %v2514 = vunpack.c.h.b16 %v305
    %v2515 = vunpack.c.l.b16 %v306
    %v2516 = vunpack.c.h.b16 %v306
    %v2517 = vunpack.c.l.b16 %v307
    %v2518 = vunpack.c.h.b16 %v307
    %v2519 = vunpack.c.l.b16 %v308
    %v2520 = vunpack.c.h.b16 %v308
    %v2521 = vunpack.c.l.b16 %v309
    %v2522 = vunpack.c.h.b16 %v309
    %v2523 = vunpack.c.l.b16 %v310
    %v2524 = vunpack.c.h.b16 %v310
    %v2525 = vunpack.c.l.b16 %v311
    %v2526 = vunpack.c.h.b16 %v311
    %v2527 = vunpack.c.l.b16 %v312
    %v2528 = vunpack.c.h.b16 %v312
    %v2529 = vunpack.c.l.b16 %v313
    %v2530 = vunpack.c.h.b16 %v313
    %v2531 = vunpack.c.l.b16 %v314
    %v2532 = vunpack.c.h.b16 %v314
    %v2533 = vunpack.c.l.b16 %v315
    %v2534 = vunpack.c.h.b16 %v315
    %v2535 = vunpack.c.l.b16 %v316
    %v2536 = vunpack.c.h.b16 %v316
    %v2537 = vunpack.c.l.b16 %v317
    %v2538 = vunpack.c.h.b16 %v317
    %v2539 = vunpack.c.l.b16 %v318
    %v2540 = vunpack.c.h.b16 %v318
    %v2541 = vunpack.c.l.b16 %v319
    %v2542 = vunpack.c.h.b16 %v319
    %v2543 = vunpack.c.l.b16 %v320
    %v2544 = vunpack.c.h.b16 %v320
    %v2545 = vunpack.c.l.b16 %v321
    %v2546 = vunpack.c.h.b16 %v321
    %v2547 = vunpack.c.l.b16 %v322
    %v2548 = vunpack.c.h.b16 %v322
    %v2549 = vunpack.c.l.b16 %v323
    %v2550 = vunpack.c.h.b16 %v323
    %v2551 = vunpack.c.l.b16 %v324
    %v2552 = vunpack.c.h.b16 %v324
    %v2553 = vunpack.c.l.b16 %v325
    %v2554 = vunpack.c.h.b16 %v325
    %v2555 = vunpack.c.l.b16 %v326
    %v2556 = vunpack.c.h.b16 %v326
    %v2557 = vunpack.c.l.b16 %v327
    %v2558 = vunpack.c.h.b16 %v327
    %v2559 = vunpack.c.l.b16 %v328
    %v2560 = vunpack.c.h.b16 %v328
    %v2561 = vunpack.c.l.b16 %v329
    %v2562 = vunpack.c.h.b16 %v329
    %v2563 = vunpack.c.l.b16 %v330
    %v2564 = vunpack.c.h.b16 %v330
    %v2565 = vunpack.c.l.b16 %v331
    %v2566 = vunpack.c.h.b16 %v331
    %v2567 = vunpack.c.l.b16 %v332
    %v2568 = vunpack.c.h.b16 %v332
    %v2569 = vunpack.c.l.b16 %v333
    %v2570 = vunpack.c.h.b16 %v333
    %v2571 = vunpack.c.l.b16 %v334
    %v2572 = vunpack.c.h.b16 %v334
    %v2573 = vunpack.c.l.b16 %v335
    %v2574 = vunpack.c.h.b16 %v335
    %v2575 = vunpack.c.l.b16 %v336
    %v2576 = vunpack.c.h.b16 %v336
    %v2577 = vunpack.c.l.b16 %v337
    %v2578 = vunpack.c.h.b16 %v337
    %v2579 = vunpack.c.l.b16 %v338
    %v2580 = vunpack.c.h.b16 %v338
    %v2581 = vunpack.c.l.b16 %v339
    %v2582 = vunpack.c.h.b16 %v339
    %v2583 = vunpack.c.l.b16 %v340
    %v2584 = vunpack.c.h.b16 %v340
    %v2585 = vunpack.c.l.b16 %v341
    %v2586 = vunpack.c.h.b16 %v341
    %v2587 = vunpack.c.l.b16 %v342
    %v2588 = vunpack.c.h.b16 %v342
    %v2589 = vunpack.c.l.b16 %v343
    %v2590 = vunpack.c.h.b16 %v343
    %v2591 = vunpack.c.l.b16 %v344
    %v2592 = vunpack.c.h.b16 %v344
    %v2593 = vunpack.c.l.b16 %v345
    %v2594 = vunpack.c.h.b16 %v345
    %v2595 = vunpack.c.l.b16 %v346
    %v2596 = vunpack.c.h.b16 %v346
    %v2597 = vunpack.c.l.b16 %v347
    %v2598 = vunpack.c.h.b16 %v347
    %v2599 = vunpack.c.l.b16 %v348
    %v2600 = vunpack.c.h.b16 %v348
    %v2601 = vunpack.c.l.b16 %v349
    %v2602 = vunpack.c.h.b16 %v349
    %v2603 = vunpack.c.l.b16 %v350
    %v2604 = vunpack.c.h.b16 %v350
    %v2605 = vunpack.c.l.b16 %v351
    %v2606 = vunpack.c.h.b16 %v351
    %v2607 = vunpack.c.l.b16 %v352
    %v2608 = vunpack.c.h.b16 %v352
    %v2609 = vunpack.c.l.b16 %v353
    %v2610 = vunpack.c.h.b16 %v353
    %v2611 = vunpack.c.l.b16 %v354
    %v2612 = vunpack.c.h.b16 %v354
    %v2613 = vunpack.c.l.b16 %v355
    %v2614 = vunpack.c.h.b16 %v355
    %v2615 = vunpack.c.l.b16 %v356
    %v2616 = vunpack.c.h.b16 %v356
    %v2617 = vunpack.c.l.b16 %v357
    %v2618 = vunpack.c.h.b16 %v357
    %v2619 = vunpack.c.l.b16 %v358
    %v2620 = vunpack.c.h.b16 %v358
    %v2621 = vunpack.c.l.b16 %v359
    %v2622 = vunpack.c.h.b16 %v359
    %v2623 = vunpack.c.l.b16 %v360
    %v2624 = vunpack.c.h.b16 %v360
    %v2625 = vunpack.c.l.b16 %v361
    %v2626 = vunpack.c.h.b16 %v361
    %v2627 = vunpack.c.l.b16 %v362
    %v2628 = vunpack.c.h.b16 %v362
    %v2629 = vunpack.c.l.b16 %v363
    %v2630 = vunpack.c.h.b16 %v363
    %v2631 = vunpack.c.l.b16 %v364
    %v2632 = vunpack.c.h.b16 %v364
    %v2633 = vunpack.c.l.b16 %v365
    %v2634 = vunpack.c.h.b16 %v365
    %v2635 = vunpack.c.l.b16 %v366
    %v2636 = vunpack.c.h.b16 %v366
    %v2637 = vunpack.c.l.b16 %v367
    %v2638 = vunpack.c.h.b16 %v367
    %v2639 = vunpack.c.l.b16 %v368
    %v2640 = vunpack.c.h.b16 %v368
    %v2641 = vunpack.c.l.b16 %v369
    %v2642 = vunpack.c.h.b16 %v369
    %v2643 = vunpack.c.l.b16 %v370
    %v2644 = vunpack.c.h.b16 %v370
    %v2645 = vunpack.c.l.b16 %v371
    %v2646 = vunpack.c.h.b16 %v371
    %v2647 = vunpack.c.l.b16 %v372
    %v2648 = vunpack.c.h.b16 %v372
    %v2649 = vunpack.c.l.b16 %v373
    %v2650 = vunpack.c.h.b16 %v373
    %v2651 = vunpack.c.l.b16 %v374
    %v2652 = vunpack.c.h.b16 %v374
    %v2653 = vunpack.c.l.b16 %v375
    %v2654 = vunpack.c.h.b16 %v375
    %v2655 = vunpack.c.l.b16 %v376
    %v2656 = vunpack.c.h.b16 %v376
    %v2657 = vunpack.c.l.b16 %v377
    %v2658 = vunpack.c.h.b16 %v377
    %v2659 = vunpack.c.l.b16 %v378
    %v2660 = vunpack.c.h.b16 %v378
    %v2661 = vunpack.c.l.b16 %v379
    %v2662 = vunpack.c.h.b16 %v379
    %v2663 = vunpack.c.l.b16 %v380
    %v2664 = vunpack.c.h.b16 %v380
    %v2665 = vunpack.c.l.b16 %v381
    %v2666 = vunpack.c.h.b16 %v381
    %v2667 = vunpack.c.l.b16 %v382
    %v2668 = vunpack.c.h.b16 %v382
    %v2669 = vunpack.c.l.b16 %v383
    %v2670 = vunpack.c.h.b16 %v383
    %v2671 = vunpack.c.l.b16 %v384
    %v2672 = vunpack.c.h.b16 %v384
    %v2673 = vunpack.c.l.b16 %v385
    %v2674 = vunpack.c.h.b16 %v385
    %v2675 = vunpack.c.l.b16 %v386
    %v2676 = vunpack.c.h.b16 %v386
    %v2677 = vunpack.c.l.b16 %v387
    %v2678 = vunpack.c.h.b16 %v387
    %v2679 = vunpack.c.l.b16 %v388
    %v2680 = vunpack.c.h.b16 %v388
    %v2681 = vunpack.c.l.b16 %v389
    %v2682 = vunpack.c.h.b16 %v389
    %v2683 = vunpack.c.l.b16 %v390
    %v2684 = vunpack.c.h.b16 %v390
    %v2685 = vunpack.c.l.b16 %v391
    %v2686 = vunpack.c.h.b16 %v391
    %v2687 = vunpack.c.l.b16 %v392
    %v2688 = vunpack.c.h.b16 %v392
    %v2689 = vunpack.c.l.b16 %v393
    %v2690 = vunpack.c.h.b16 %v393
    %v2691 = vunpack.c.l.b16 %v394
    %v2692 = vunpack.c.h.b16 %v394
    %v2693 = vunpack.c.l.b16 %v395
    %v2694 = vunpack.c.h.b16 %v395
    %v2695 = vunpack.c.l.b16 %v396
    %v2696 = vunpack.c.h.b16 %v396
    %v2697 = vunpack.c.l.b16 %v397
    %v2698 = vunpack.c.h.b16 %v397
    %v2699 = vunpack.c.l.b16 %v398
    %v2700 = vunpack.c.h.b16 %v398
    %v2701 = vunpack.c.l.b16 %v399
    %v2702 = vunpack.c.h.b16 %v399
    %v2703 = vunpack.c.l.b16 %v400
    %v2704 = vunpack.c.h.b16 %v400
    %v2705 = vunpack.c.l.b16 %v401
    %v2706 = vunpack.c.h.b16 %v401
    %v2707 = vunpack.c.l.b16 %v402
    %v2708 = vunpack.c.h.b16 %v402
    %v2709 = vunpack.c.l.b16 %v403
    %v2710 = vunpack.c.h.b16 %v403
    %v2711 = vunpack.c.l.b16 %v404
    %v2712 = vunpack.c.h.b16 %v404
    %v2713 = vunpack.c.l.b16 %v405
    %v2714 = vunpack.c.h.b16 %v405
    %v2715 = vunpack.c.l.b16 %v406
    %v2716 = vunpack.c.h.b16 %v406
    %v2717 = vunpack.c.l.b16 %v407
    %v2718 = vunpack.c.h.b16 %v407
    %v2719 = vunpack.c.l.b16 %v408
    %v2720 = vunpack.c.h.b16 %v408
    %v2721 = vunpack.c.l.b16 %v409
    %v2722 = vunpack.c.h.b16 %v409
    %v2723 = vunpack.c.l.b16 %v410
    %v2724 = vunpack.c.h.b16 %v410
    %v2725 = vunpack.c.l.b16 %v411
    %v2726 = vunpack.c.h.b16 %v411
    %v2727 = vunpack.c.l.b16 %v412
    %v2728 = vunpack.c.h.b16 %v412
    %v2729 = vunpack.c.l.b16 %v413
    %v2730 = vunpack.c.h.b16 %v413
    %v2731 = vunpack.c.l.b16 %v414
    %v2732 = vunpack.c.h.b16 %v414
    %v2733 = vunpack.c.l.b16 %v415
    %v2734 = vunpack.c.h.b16 %v415
    %v2735 = vunpack.c.l.b16 %v416
    %v2736 = vunpack.c.h.b16 %v416
    %v2737 = vunpack.c.l.b16 %v417
    %v2738 = vunpack.c.h.b16 %v417
    %v2739 = vunpack.c.l.b16 %v418
    %v2740 = vunpack.c.h.b16 %v418
    %v2741 = vunpack.c.l.b16 %v419
    %v2742 = vunpack.c.h.b16 %v419
    %v2743 = vunpack.c.l.b16 %v420
    %v2744 = vunpack.c.h.b16 %v420
    %v2745 = vunpack.c.l.b16 %v421
    %v2746 = vunpack.c.h.b16 %v421
    %v2747 = vunpack.c.l.b16 %v422
    %v2748 = vunpack.c.h.b16 %v422
    %v2749 = vunpack.c.l.b16 %v423
    %v2750 = vunpack.c.h.b16 %v423
    %v2751 = vunpack.c.l.b16 %v424
    %v2752 = vunpack.c.h.b16 %v424
    %v2753 = vunpack.c.l.b16 %v425
    %v2754 = vunpack.c.h.b16 %v425
    %v2755 = vunpack.c.l.b16 %v426
    %v2756 = vunpack.c.h.b16 %v426
    %v2757 = vunpack.c.l.b16 %v427
    %v2758 = vunpack.c.h.b16 %v427
    %v2759 = vunpack.c.l.b16 %v428
    %v2760 = vunpack.c.h.b16 %v428
    %v2761 = vunpack.c.l.b16 %v429
    %v2762 = vunpack.c.h.b16 %v429
    %v2763 = vunpack.c.l.b16 %v430
    %v2764 = vunpack.c.h.b16 %v430
    %v2765 = vunpack.c.l.b16 %v431
    %v2766 = vunpack.c.h.b16 %v431
    %v2767 = vunpack.c.l.b16 %v432
    %v2768 = vunpack.c.h.b16 %v432
    %v2769 = vunpack.c.l.b16 %v433
    %v2770 = vunpack.c.h.b16 %v433
    %v2771 = vunpack.c.l.b16 %v434
    %v2772 = vunpack.c.h.b16 %v434
    %v2773 = vunpack.c.l.b16 %v435
    %v2774 = vunpack.c.h.b16 %v435
    %v2775 = vunpack.c.l.b16 %v436
    %v2776 = vunpack.c.h.b16 %v436
    %v2777 = vunpack.c.l.b16 %v437
    %v2778 = vunpack.c.h.b16 %v437
    %v2779 = vunpack.c.l.b16 %v438
    %v2780 = vunpack.c.h.b16 %v438
    %v2781 = vunpack.c.l.b16 %v439
    %v2782 = vunpack.c.h.b16 %v439
    %v2783 = vunpack.c.l.b16 %v440
    %v2784 = vunpack.c.h.b16 %v440
    %v2785 = vunpack.c.l.b16 %v441
    %v2786 = vunpack.c.h.b16 %v441
    %v2787 = vunpack.c.l.b16 %v442
    %v2788 = vunpack.c.h.b16 %v442
    %v2789 = vunpack.c.l.b16 %v443
    %v2790 = vunpack.c.h.b16 %v443
    %v2791 = vunpack.c.l.b16 %v444
    %v2792 = vunpack.c.h.b16 %v444
    %v2793 = vunpack.c.l.b16 %v445
    %v2794 = vunpack.c.h.b16 %v445
    %v2795 = vunpack.c.l.b16 %v446
    %v2796 = vunpack.c.h.b16 %v446
    %v2797 = vunpack.c.l.b16 %v447
    %v2798 = vunpack.c.h.b16 %v447
    %v2799 = vunpack.c.l.b16 %v448
    %v2800 = vunpack.c.h.b16 %v448
    %v2801 = vunpack.c.l.b16 %v449
    %v2802 = vunpack.c.h.b16 %v449
    %v2803 = vunpack.c.l.b16 %v450
    %v2804 = vunpack.c.h.b16 %v450
    %v2805 = vunpack.c.l.b16 %v451
    %v2806 = vunpack.c.h.b16 %v451
    %v2807 = vunpack.c.l.b16 %v452
    %v2808 = vunpack.c.h.b16 %v452
    %v2809 = vunpack.c.l.b16 %v453
    %v2810 = vunpack.c.h.b16 %v453
    %v2811 = vunpack.c.l.b16 %v454
    %v2812 = vunpack.c.h.b16 %v454
    %v2813 = vunpack.c.l.b16 %v455
    %v2814 = vunpack.c.h.b16 %v455
    %v2815 = vunpack.c.l.b16 %v456
    %v2816 = vunpack.c.h.b16 %v456
    %v2817 = vunpack.c.l.b16 %v457
    %v2818 = vunpack.c.h.b16 %v457
    %v2819 = vunpack.c.l.b16 %v458
    %v2820 = vunpack.c.h.b16 %v458
    %v2821 = vunpack.c.l.b16 %v459
    %v2822 = vunpack.c.h.b16 %v459
    %v2823 = vunpack.c.l.b16 %v460
    %v2824 = vunpack.c.h.b16 %v460
    %v2825 = vunpack.c.l.b16 %v461
    %v2826 = vunpack.c.h.b16 %v461
    %v2827 = vunpack.c.l.b16 %v462
    %v2828 = vunpack.c.h.b16 %v462
    %v2829 = vunpack.c.l.b16 %v463
    %v2830 = vunpack.c.h.b16 %v463
    %v2831 = vunpack.c.l.b16 %v464
    %v2832 = vunpack.c.h.b16 %v464
    %v2833 = vunpack.c.l.b16 %v465
    %v2834 = vunpack.c.h.b16 %v465
    %v2835 = vunpack.c.l.b16 %v466
    %v2836 = vunpack.c.h.b16 %v466
    %v2837 = vunpack.c.l.b16 %v467
    %v2838 = vunpack.c.h.b16 %v467
    %v2839 = vunpack.c.l.b16 %v468
    %v2840 = vunpack.c.h.b16 %v468
    %v2841 = vunpack.c.l.b16 %v469
    %v2842 = vunpack.c.h.b16 %v469
    %v2843 = vunpack.c.l.b16 %v470
    %v2844 = vunpack.c.h.b16 %v470
    %v2845 = vunpack.c.l.b16 %v471
    %v2846 = vunpack.c.h.b16 %v471
    %v2847 = vunpack.c.l.b16 %v472
    %v2848 = vunpack.c.h.b16 %v472
    %v2849 = vunpack.c.l.b16 %v473
    %v2850 = vunpack.c.h.b16 %v473
    %v2851 = vunpack.c.l.b16 %v474
    %v2852 = vunpack.c.h.b16 %v474
    %v2853 = vunpack.c.l.b16 %v475
    %v2854 = vunpack.c.h.b16 %v475
    %v2855 = vunpack.c.l.b16 %v476
    %v2856 = vunpack.c.h.b16 %v476
    %v2857 = vunpack.c.l.b16 %v477
    %v2858 = vunpack.c.h.b16 %v477
    %v2859 = vunpack.c.l.b16 %v478
    %v2860 = vunpack.c.h.b16 %v478
    %v2861 = vunpack.c.l.b16 %v479
    %v2862 = vunpack.c.h.b16 %v479
    %v2863 = vunpack.c.l.b16 %v480
    %v2864 = vunpack.c.h.b16 %v480
    %v2865 = vunpack.c.l.b16 %v481
    %v2866 = vunpack.c.h.b16 %v481
    %v2867 = vunpack.c.l.b16 %v482
    %v2868 = vunpack.c.h.b16 %v482
    %v2869 = vunpack.c.l.b16 %v483
    %v2870 = vunpack.c.h.b16 %v483
    %v2871 = vunpack.c.l.b16 %v484
    %v2872 = vunpack.c.h.b16 %v484
    %v2873 = vunpack.c.l.b16 %v485
    %v2874 = vunpack.c.h.b16 %v485
    %v2875 = vunpack.c.l.b16 %v486
    %v2876 = vunpack.c.h.b16 %v486
    %v2877 = vunpack.c.l.b16 %v487
    %v2878 = vunpack.c.h.b16 %v487
    %v2879 = vunpack.c.l.b16 %v488
    %v2880 = vunpack.c.h.b16 %v488
    %v2881 = vunpack.c.l.b16 %v489
    %v2882 = vunpack.c.h.b16 %v489
    %v2883 = vunpack.c.l.b16 %v490
    %v2884 = vunpack.c.h.b16 %v490
    %v2885 = vunpack.c.l.b16 %v491
    %v2886 = vunpack.c.h.b16 %v491
    %v2887 = vunpack.c.l.b16 %v492
    %v2888 = vunpack.c.h.b16 %v492
    %v2889 = vunpack.c.l.b16 %v493
    %v2890 = vunpack.c.h.b16 %v493
    %v2891 = vunpack.c.l.b16 %v494
    %v2892 = vunpack.c.h.b16 %v494
    %v2893 = vunpack.c.l.b16 %v495
    %v2894 = vunpack.c.h.b16 %v495
    %v2895 = vunpack.c.l.b16 %v496
    %v2896 = vunpack.c.h.b16 %v496
    %v2897 = vunpack.c.l.b16 %v497
    %v2898 = vunpack.c.h.b16 %v497
    %v2899 = vunpack.c.l.b16 %v498
    %v2900 = vunpack.c.h.b16 %v498
    %v2901 = vunpack.c.l.b16 %v499
    %v2902 = vunpack.c.h.b16 %v499
    %v2903 = vunpack.c.l.b16 %v500
    %v2904 = vunpack.c.h.b16 %v500
    %v2905 = vunpack.c.l.b16 %v501
    %v2906 = vunpack.c.h.b16 %v501
    %v2907 = vunpack.c.l.b16 %v502
    %v2908 = vunpack.c.h.b16 %v502
    %v2909 = vunpack.c.l.b16 %v503
    %v2910 = vunpack.c.h.b16 %v503
    %v2911 = vunpack.c.l.b16 %v504
    %v2912 = vunpack.c.h.b16 %v504
    %v2913 = vunpack.c.l.b16 %v505
    %v2914 = vunpack.c.h.b16 %v505
    %v2915 = vunpack.c.l.b16 %v506
    %v2916 = vunpack.c.h.b16 %v506
    %v2917 = vunpack.c.l.b16 %v507
    %v2918 = vunpack.c.h.b16 %v507
    %v2919 = vunpack.c.l.b16 %v508
    %v2920 = vunpack.c.h.b16 %v508
    %v2921 = vunpack.c.l.b16 %v509
    %v2922 = vunpack.c.h.b16 %v509
    %v2923 = vunpack.c.l.b16 %v510
    %v2924 = vunpack.c.h.b16 %v510
    %v2925 = vunpack.c.l.b16 %v511
    %v2926 = vunpack.c.h.b16 %v511
    %v2927 = vunpack.c.l.b16 %v512
    %v2928 = vunpack.c.h.b16 %v512
    %v2929 = vunpack.c.l.b16 %v513
    %v2930 = vunpack.c.h.b16 %v513
    %v2931 = vunpack.c.l.b16 %v514
    %v2932 = vunpack.c.h.b16 %v514
    %v2933 = vunpack.c.l.b16 %v515
    %v2934 = vunpack.c.h.b16 %v515
    %v2935 = vunpack.c.l.b16 %v516
    %v2936 = vunpack.c.h.b16 %v516
    %v2937 = vunpack.c.l.b16 %v517
    %v2938 = vunpack.c.h.b16 %v517
    %v2939 = vunpack.c.l.b16 %v518
    %v2940 = vunpack.c.h.b16 %v518
    %v2941 = vunpack.c.l.b16 %v519
    %v2942 = vunpack.c.h.b16 %v519
    %v2943 = vunpack.c.l.b16 %v520
    %v2944 = vunpack.c.h.b16 %v520
    %v2945 = vunpack.c.l.b16 %v521
    %v2946 = vunpack.c.h.b16 %v521
    %v2947 = vunpack.c.l.b16 %v522
    %v2948 = vunpack.c.h.b16 %v522
    %v2949 = vunpack.c.l.b16 %v523
    %v2950 = vunpack.c.h.b16 %v523
    %v2951 = vunpack.c.l.b16 %v524
    %v2952 = vunpack.c.h.b16 %v524
    %v2953 = vunpack.c.l.b16 %v525
    %v2954 = vunpack.c.h.b16 %v525
    %v2955 = vunpack.c.l.b16 %v526
    %v2956 = vunpack.c.h.b16 %v526
    %v2957 = vunpack.c.l.b16 %v527
    %v2958 = vunpack.c.h.b16 %v527
    %v2959 = vunpack.c.l.b16 %v528
    %v2960 = vunpack.c.h.b16 %v528
    %v2961 = vunpack.c.l.b16 %v529
    %v2962 = vunpack.c.h.b16 %v529
    %v2963 = vunpack.c.l.b16 %v530
    %v2964 = vunpack.c.h.b16 %v530
    %v2965 = vunpack.c.l.b16 %v531
    %v2966 = vunpack.c.h.b16 %v531
    %v2967 = vunpack.c.l.b16 %v532
    %v2968 = vunpack.c.h.b16 %v532
    %v2969 = vunpack.c.l.b16 %v533
    %v2970 = vunpack.c.h.b16 %v533
    %v2971 = vunpack.c.l.b16 %v534
    %v2972 = vunpack.c.h.b16 %v534
    %v2973 = vunpack.c.l.b16 %v535
    %v2974 = vunpack.c.h.b16 %v535
    %v2975 = vunpack.c.l.b16 %v536
    %v2976 = vunpack.c.h.b16 %v536
    %v2977 = vunpack.c.l.b16 %v537
    %v2978 = vunpack.c.h.b16 %v537
    %v2979 = vunpack.c.l.b16 %v538
    %v2980 = vunpack.c.h.b16 %v538
    %v2981 = vunpack.c.l.b16 %v539
    %v2982 = vunpack.c.h.b16 %v539
    %v2983 = vunpack.c.l.b16 %v540
    %v2984 = vunpack.c.h.b16 %v540
    %v2985 = vunpack.c.l.b16 %v541
    %v2986 = vunpack.c.h.b16 %v541
    %v2987 = vunpack.c.l.b16 %v542
    %v2988 = vunpack.c.h.b16 %v542
    %v2989 = vunpack.c.l.b16 %v543
    %v2990 = vunpack.c.h.b16 %v543
    %v2991 = vunpack.c.l.b16 %v544
    %v2992 = vunpack.c.h.b16 %v544
    %v2993 = vunpack.c.l.b16 %v545
    %v2994 = vunpack.c.h.b16 %v545
    %v2995 = vunpack.c.l.b16 %v546
    %v2996 = vunpack.c.h.b16 %v546
    %v2997 = vunpack.c.l.b16 %v547
    %v2998 = vunpack.c.h.b16 %v547
    %v2999 = vunpack.c.l.b16 %v548
    %v3000 = vunpack.c.h.b16 %v548
    %v3001 = vunpack.c.l.b16 %v549
    %v3002 = vunpack.c.h.b16 %v549
    %v3003 = vunpack.c.l.b16 %v550
    %v3004 = vunpack.c.h.b16 %v550
    %v3005 = vunpack.c.l.b16 %v551
    %v3006 = vunpack.c.h.b16 %v551
    %v3007 = vunpack.c.l.b16 %v552
    %v3008 = vunpack.c.h.b16 %v552
    %v3009 = vunpack.c.l.b16 %v553
    %v3010 = vunpack.c.h.b16 %v553
    %v3011 = vunpack.c.l.b16 %v554
    %v3012 = vunpack.c.h.b16 %v554
    %v3013 = vunpack.c.l.b16 %v555
    %v3014 = vunpack.c.h.b16 %v555
    %v3015 = vunpack.c.l.b16 %v556
    %v3016 = vunpack.c.h.b16 %v556
    %v3017 = vunpack.c.l.b16 %v557
    %v3018 = vunpack.c.h.b16 %v557
    %v3019 = vunpack.c.l.b16 %v558
    %v3020 = vunpack.c.h.b16 %v558
    %v3021 = vunpack.c.l.b16 %v559
    %v3022 = vunpack.c.h.b16 %v559
    %v3023 = vunpack.c.l.b16 %v560
    %v3024 = vunpack.c.h.b16 %v560
    %v3025 = vunpack.c.l.b16 %v561
    %v3026 = vunpack.c.h.b16 %v561
    %v3027 = vunpack.c.l.b16 %v562
    %v3028 = vunpack.c.h.b16 %v562
    %v3029 = vunpack.c.l.b16 %v563
    %v3030 = vunpack.c.h.b16 %v563
    %v3031 = vunpack.c.l.b16 %v564
    %v3032 = vunpack.c.h.b16 %v564
    %v3033 = vunpack.c.l.b16 %v565
    %v3034 = vunpack.c.h.b16 %v565
    %v3035 = vunpack.c.l.b16 %v566
    %v3036 = vunpack.c.h.b16 %v566
    %v3037 = vunpack.c.l.b16 %v567
    %v3038 = vunpack.c.h.b16 %v567
    %v3039 = vunpack.c.l.b16 %v568
    %v3040 = vunpack.c.h.b16 %v568
    %v3041 = vunpack.c.l.b16 %v569
    %v3042 = vunpack.c.h.b16 %v569
    %v3043 = vunpack.c.l.b16 %v570
    %v3044 = vunpack.c.h.b16 %v570
    %v3045 = vunpack.c.l.b16 %v571
    %v3046 = vunpack.c.h.b16 %v571
    %v3047 = vunpack.c.l.b16 %v572
    %v3048 = vunpack.c.h.b16 %v572
    %v3049 = vunpack.c.l.b16 %v573
    %v3050 = vunpack.c.h.b16 %v573
    %v3051 = vunpack.c.l.b16 %v574
    %v3052 = vunpack.c.h.b16 %v574
    %v3053 = vunpack.c.l.b16 %v575
    %v3054 = vunpack.c.h.b16 %v575
    %v3055 = vunpack.c.l.b16 %v576
    %v3056 = vunpack.c.h.b16 %v576
    %v3057 = vunpack.c.l.b16 %v577
    %v3058 = vunpack.c.h.b16 %v577
    %v3059 = vunpack.c.l.b16 %v578
    %v3060 = vunpack.c.h.b16 %v578
    %v3061 = vunpack.c.l.b16 %v579
    %v3062 = vunpack.c.h.b16 %v579
    %v3063 = vunpack.c.l.b16 %v580
    %v3064 = vunpack.c.h.b16 %v580
    %v3065 = vunpack.c.l.b16 %v581
    %v3066 = vunpack.c.h.b16 %v581
    %v3067 = vunpack.c.l.b16 %v582
    %v3068 = vunpack.c.h.b16 %v582
    %v3069 = vunpack.c.l.b16 %v583
    %v3070 = vunpack.c.h.b16 %v583
    %v3071 = vunpack.c.l.b16 %v584
    %v3072 = vunpack.c.h.b16 %v584
    %v3073 = vunpack.c.l.b16 %v585
    %v3074 = vunpack.c.h.b16 %v585
    %v3075 = vunpack.c.l.b16 %v586
    %v3076 = vunpack.c.h.b16 %v586
    %v3077 = vunpack.c.l.b16 %v587
    %v3078 = vunpack.c.h.b16 %v587
    %v3079 = vunpack.c.l.b16 %v588
    %v3080 = vunpack.c.h.b16 %v588
    %v3081 = vunpack.c.l.b16 %v589
    %v3082 = vunpack.c.h.b16 %v589
    %v3083 = vunpack.c.l.b16 %v590
    %v3084 = vunpack.c.h.b16 %v590
    %v3085 = vunpack.c.l.b16 %v591
    %v3086 = vunpack.c.h.b16 %v591
    %v3087 = vunpack.c.l.b16 %v592
    %v3088 = vunpack.c.h.b16 %v592
    %v3089 = vunpack.c.l.b16 %v593
    %v3090 = vunpack.c.h.b16 %v593
    %v3091 = vunpack.c.l.b16 %v594
    %v3092 = vunpack.c.h.b16 %v594
    %v3093 = vunpack.c.l.b16 %v595
    %v3094 = vunpack.c.h.b16 %v595
    %v3095 = vunpack.c.l.b16 %v596
    %v3096 = vunpack.c.h.b16 %v596
    %v3097 = vunpack.c.l.b16 %v597
    %v3098 = vunpack.c.h.b16 %v597
    %v3099 = vunpack.c.l.b16 %v598
    %v3100 = vunpack.c.h.b16 %v598
    %v3101 = vunpack.c.l.b16 %v599
    %v3102 = vunpack.c.h.b16 %v599
    %v3103 = vunpack.c.l.b16 %v600
    %v3104 = vunpack.c.h.b16 %v600
    %v3105 = vunpack.c.l.b16 %v601
    %v3106 = vunpack.c.h.b16 %v601
    %v3107 = vunpack.c.l.b16 %v602
    %v3108 = vunpack.c.h.b16 %v602
    %v3109 = vunpack.c.l.b16 %v603
    %v3110 = vunpack.c.h.b16 %v603
    %v3111 = vunpack.c.l.b16 %v604
    %v3112 = vunpack.c.h.b16 %v604
    %v3113 = vunpack.c.l.b16 %v605
    %v3114 = vunpack.c.h.b16 %v605
    %v3115 = vunpack.c.l.b16 %v606
    %v3116 = vunpack.c.h.b16 %v606
    %v3117 = vunpack.c.l.b16 %v607
    %v3118 = vunpack.c.h.b16 %v607
    %v3119 = vunpack.c.l.b16 %v608
    %v3120 = vunpack.c.h.b16 %v608
    %v3121 = vunpack.c.l.b16 %v609
    %v3122 = vunpack.c.h.b16 %v609
    %v3123 = vunpack.c.l.b16 %v610
    %v3124 = vunpack.c.h.b16 %v610
    %v3125 = vunpack.c.l.b16 %v611
    %v3126 = vunpack.c.h.b16 %v611
    %v3127 = vunpack.c.l.b16 %v612
    %v3128 = vunpack.c.h.b16 %v612
    %v3129 = vunpack.c.l.b16 %v613
    %v3130 = vunpack.c.h.b16 %v613
    %v3131 = vunpack.c.l.b16 %v614
    %v3132 = vunpack.c.h.b16 %v614
    %v3133 = vunpack.c.l.b16 %v615
    %v3134 = vunpack.c.h.b16 %v615
    %v3135 = vunpack.c.l.b16 %v616
    %v3136 = vunpack.c.h.b16 %v616
    %v3137 = vunpack.c.l.b16 %v617
    %v3138 = vunpack.c.h.b16 %v617
    %v3139 = vunpack.c.l.b16 %v618
    %v3140 = vunpack.c.h.b16 %v618
    %v3141 = vunpack.c.l.b16 %v619
    %v3142 = vunpack.c.h.b16 %v619
    %v3143 = vunpack.c.l.b16 %v620
    %v3144 = vunpack.c.h.b16 %v620
    %v3145 = vunpack.c.l.b16 %v621
    %v3146 = vunpack.c.h.b16 %v621
    %v3147 = vunpack.c.l.b16 %v622
    %v3148 = vunpack.c.h.b16 %v622
    %v3149 = vunpack.c.l.b16 %v623
    %v3150 = vunpack.c.h.b16 %v623
    %v3151 = vunpack.c.l.b16 %v624
    %v3152 = vunpack.c.h.b16 %v624
    %v3153 = vunpack.c.l.b16 %v625
    %v3154 = vunpack.c.h.b16 %v625
    %v3155 = vunpack.c.l.b16 %v626
    %v3156 = vunpack.c.h.b16 %v626
    %v3157 = vunpack.c.l.b16 %v627
    %v3158 = vunpack.c.h.b16 %v627
    %v3159 = vunpack.c.l.b16 %v628
    %v3160 = vunpack.c.h.b16 %v628
    %v3161 = vunpack.c.l.b16 %v629
    %v3162 = vunpack.c.h.b16 %v629
    %v3163 = vunpack.c.l.b16 %v630
    %v3164 = vunpack.c.h.b16 %v630
    %v3165 = vunpack.c.l.b16 %v631
    %v3166 = vunpack.c.h.b16 %v631
    %v3167 = vunpack.c.l.b16 %v632
    %v3168 = vunpack.c.h.b16 %v632
    %v3169 = vunpack.c.l.b16 %v633
    %v3170 = vunpack.c.h.b16 %v633
    %v3171 = vunpack.c.l.b16 %v634
    %v3172 = vunpack.c.h.b16 %v634
    %v3173 = vunpack.c.l.b16 %v635
    %v3174 = vunpack.c.h.b16 %v635
    %v3175 = vunpack.c.l.b16 %v636
    %v3176 = vunpack.c.h.b16 %v636
    %v3177 = vunpack.c.l.b16 %v637
    %v3178 = vunpack.c.h.b16 %v637
    %v3179 = vunpack.c.l.b16 %v638
    %v3180 = vunpack.c.h.b16 %v638
    %v3181 = vunpack.c.l.b16 %v639
    %v3182 = vunpack.c.h.b16 %v639
    %v3183 = vunpack.c.l.b16 %v640
    %v3184 = vunpack.c.h.b16 %v640
    %v3185 = vunpack.c.l.b16 %v641
    %v3186 = vunpack.c.h.b16 %v641
    %v3187 = vunpack.c.l.b16 %v642
    %v3188 = vunpack.c.h.b16 %v642
    %v3189 = vunpack.c.l.b16 %v643
    %v3190 = vunpack.c.h.b16 %v643
    %v3191 = vunpack.c.l.b16 %v644
    %v3192 = vunpack.c.h.b16 %v644
    %v3193 = vunpack.c.l.b16 %v645
    %v3194 = vunpack.c.h.b16 %v645
    %v3195 = vunpack.c.l.b16 %v646
    %v3196 = vunpack.c.h.b16 %v646
    %v3197 = vunpack.c.l.b16 %v647
    %v3198 = vunpack.c.h.b16 %v647
    %v3199 = vunpack.c.l.b16 %v648
    %v3200 = vunpack.c.h.b16 %v648
    %v3201 = vunpack.c.l.b16 %v649
    %v3202 = vunpack.c.h.b16 %v649
    %v3203 = vunpack.c.l.b16 %v650
    %v3204 = vunpack.c.h.b16 %v650
    %v3205 = vunpack.c.l.b16 %v651
    %v3206 = vunpack.c.h.b16 %v651
    %v3207 = vunpack.c.l.b16 %v652
    %v3208 = vunpack.c.h.b16 %v652
    %v3209 = vunpack.c.l.b16 %v653
    %v3210 = vunpack.c.h.b16 %v653
    %v3211 = vunpack.c.l.b16 %v654
    %v3212 = vunpack.c.h.b16 %v654
    %v3213 = vunpack.c.l.b16 %v655
    %v3214 = vunpack.c.h.b16 %v655
    %v3215 = vunpack.c.l.b16 %v656
    %v3216 = vunpack.c.h.b16 %v656
    %v3217 = vunpack.c.l.b16 %v657
    %v3218 = vunpack.c.h.b16 %v657
    %v3219 = vunpack.c.l.b16 %v658
    %v3220 = vunpack.c.h.b16 %v658
    %v3221 = vunpack.c.l.b16 %v659
    %v3222 = vunpack.c.h.b16 %v659
    %v3223 = vunpack.c.l.b16 %v660
    %v3224 = vunpack.c.h.b16 %v660
    %v3225 = vunpack.c.l.b16 %v661
    %v3226 = vunpack.c.h.b16 %v661
    %v3227 = vunpack.c.l.b16 %v662
    %v3228 = vunpack.c.h.b16 %v662
    %v3229 = vunpack.c.l.b16 %v663
    %v3230 = vunpack.c.h.b16 %v663
    %v3231 = vunpack.c.l.b16 %v664
    %v3232 = vunpack.c.h.b16 %v664
    %v3233 = vunpack.c.l.b16 %v665
    %v3234 = vunpack.c.h.b16 %v665
    %v3235 = vunpack.c.l.b16 %v666
    %v3236 = vunpack.c.h.b16 %v666
    %v3237 = vunpack.c.l.b16 %v667
    %v3238 = vunpack.c.h.b16 %v667
    %v3239 = vunpack.c.l.b16 %v668
    %v3240 = vunpack.c.h.b16 %v668
    %v3241 = vunpack.c.l.b16 %v669
    %v3242 = vunpack.c.h.b16 %v669
    %v3243 = vunpack.c.l.b16 %v670
    %v3244 = vunpack.c.h.b16 %v670
    %v3245 = vunpack.c.l.b16 %v671
    %v3246 = vunpack.c.h.b16 %v671
    %v3247 = vunpack.c.l.b16 %v672
    %v3248 = vunpack.c.h.b16 %v672
    %v3249 = vunpack.c.l.b16 %v673
    %v3250 = vunpack.c.h.b16 %v673
    %v3251 = vunpack.c.l.b16 %v674
    %v3252 = vunpack.c.h.b16 %v674
    %v3253 = vunpack.c.l.b16 %v675
    %v3254 = vunpack.c.h.b16 %v675
    %v3255 = vunpack.c.l.b16 %v676
    %v3256 = vunpack.c.h.b16 %v676
    %v3257 = vunpack.c.l.b16 %v677
    %v3258 = vunpack.c.h.b16 %v677
    %v3259 = vunpack.c.l.b16 %v678
    %v3260 = vunpack.c.h.b16 %v678
    %v3261 = vunpack.c.l.b16 %v679
    %v3262 = vunpack.c.h.b16 %v679
    %v3263 = vunpack.c.l.b16 %v680
    %v3264 = vunpack.c.h.b16 %v680
    %v3265 = vunpack.c.l.b16 %v681
    %v3266 = vunpack.c.h.b16 %v681
    %v3267 = vunpack.c.l.b16 %v682
    %v3268 = vunpack.c.h.b16 %v682
    %v3269 = vunpack.c.l.b16 %v683
    %v3270 = vunpack.c.h.b16 %v683
    %v3271 = vunpack.c.l.b16 %v684
    %v3272 = vunpack.c.h.b16 %v684
    %v3273 = vunpack.c.l.b16 %v685
    %v3274 = vunpack.c.h.b16 %v685
    %v3275 = vunpack.c.l.b16 %v686
    %v3276 = vunpack.c.h.b16 %v686
    %v3277 = vunpack.c.l.b16 %v687
    %v3278 = vunpack.c.h.b16 %v687
    %v3279 = vunpack.c.l.b16 %v688
    %v3280 = vunpack.c.h.b16 %v688
    %v3281 = vunpack.c.l.b16 %v689
    %v3282 = vunpack.c.h.b16 %v689
    %v3283 = vunpack.c.l.b16 %v690
    %v3284 = vunpack.c.h.b16 %v690
    %v3285 = vunpack.c.l.b16 %v691
    %v3286 = vunpack.c.h.b16 %v691
    %v3287 = vunpack.c.l.b16 %v692
    %v3288 = vunpack.c.h.b16 %v692
    %v3289 = vunpack.c.l.b16 %v693
    %v3290 = vunpack.c.h.b16 %v693
    %v3291 = vunpack.c.l.b16 %v694
    %v3292 = vunpack.c.h.b16 %v694
    %v3293 = vunpack.c.l.b16 %v695
    %v3294 = vunpack.c.h.b16 %v695
    %v3295 = vunpack.c.l.b16 %v696
    %v3296 = vunpack.c.h.b16 %v696
    %v3297 = vunpack.c.l.b16 %v697
    %v3298 = vunpack.c.h.b16 %v697
    %v3299 = vunpack.c.l.b16 %v698
    %v3300 = vunpack.c.h.b16 %v698
    %v3301 = vunpack.c.l.b16 %v699
    %v3302 = vunpack.c.h.b16 %v699
    %v3303 = vunpack.c.l.b16 %v700
    %v3304 = vunpack.c.h.b16 %v700
    %v3305 = vunpack.c.l.b16 %v701
    %v3306 = vunpack.c.h.b16 %v701
    %v3307 = vunpack.c.l.b16 %v702
    %v3308 = vunpack.c.h.b16 %v702
    %v3309 = vunpack.c.l.b16 %v703
    %v3310 = vunpack.c.h.b16 %v703
    %v3311 = vunpack.c.l.b16 %v704
    %v3312 = vunpack.c.h.b16 %v704
    %v3313 = vunpack.c.l.b16 %v705
    %v3314 = vunpack.c.h.b16 %v705
    %v3315 = vunpack.c.l.b16 %v706
    %v3316 = vunpack.c.h.b16 %v706
    %v3317 = vunpack.c.l.b16 %v707
    %v3318 = vunpack.c.h.b16 %v707
    %v3319 = vunpack.c.l.b16 %v708
    %v3320 = vunpack.c.h.b16 %v708
    %v3321 = vunpack.c.l.b16 %v709
    %v3322 = vunpack.c.h.b16 %v709
    %v3323 = vunpack.c.l.b16 %v710
    %v3324 = vunpack.c.h.b16 %v710
    %v3325 = vunpack.c.l.b16 %v711
    %v3326 = vunpack.c.h.b16 %v711
    %v3327 = vunpack.c.l.b16 %v712
    %v3328 = vunpack.c.h.b16 %v712
    %v3329 = vunpack.c.l.b16 %v713
    %v3330 = vunpack.c.h.b16 %v713
    %v3331 = vunpack.c.l.b16 %v714
    %v3332 = vunpack.c.h.b16 %v714
    %v3333 = vunpack.c.l.b16 %v715
    %v3334 = vunpack.c.h.b16 %v715
    %v3335 = vunpack.c.l.b16 %v716
    %v3336 = vunpack.c.h.b16 %v716
    %v3337 = vunpack.c.l.b16 %v717
    %v3338 = vunpack.c.h.b16 %v717
    %v3339 = vunpack.c.l.b16 %v718
    %v3340 = vunpack.c.h.b16 %v718
    %v3341 = vunpack.c.l.b16 %v719
    %v3342 = vunpack.c.h.b16 %v719
    %v3343 = vunpack.c.l.b16 %v720
    %v3344 = vunpack.c.h.b16 %v720
    %v3345 = vunpack.c.l.b16 %v721
    %v3346 = vunpack.c.h.b16 %v721
    %v3347 = vunpack.c.l.b16 %v722
    %v3348 = vunpack.c.h.b16 %v722
    %v3349 = vunpack.c.l.b16 %v723
    %v3350 = vunpack.c.h.b16 %v723
    %v3351 = vunpack.c.l.b16 %v724
    %v3352 = vunpack.c.h.b16 %v724
    %v3353 = vunpack.c.l.b16 %v725
    %v3354 = vunpack.c.h.b16 %v725
    %v3355 = vunpack.c.l.b16 %v726
    %v3356 = vunpack.c.h.b16 %v726
    %v3357 = vunpack.c.l.b16 %v727
    %v3358 = vunpack.c.h.b16 %v727
    %v3359 = vunpack.c.l.b16 %v728
    %v3360 = vunpack.c.h.b16 %v728
    %v3361 = vunpack.c.l.b16 %v729
    %v3362 = vunpack.c.h.b16 %v729
    %v3363 = vunpack.c.l.b16 %v730
    %v3364 = vunpack.c.h.b16 %v730
    %v3365 = vunpack.c.l.b16 %v731
    %v3366 = vunpack.c.h.b16 %v731
    %v3367 = vunpack.c.l.b16 %v732
    %v3368 = vunpack.c.h.b16 %v732
    %v3369 = vunpack.c.l.b16 %v733
    %v3370 = vunpack.c.h.b16 %v733
    %v3371 = vunpack.c.l.b16 %v734
    %v3372 = vunpack.c.h.b16 %v734
    %v3373 = vunpack.c.l.b16 %v735
    %v3374 = vunpack.c.h.b16 %v735
    %v3375 = vunpack.c.l.b16 %v736
    %v3376 = vunpack.c.h.b16 %v736
    %v3377 = vunpack.c.l.b16 %v737
    %v3378 = vunpack.c.h.b16 %v737
    %v3379 = vunpack.c.l.b16 %v738
    %v3380 = vunpack.c.h.b16 %v738
    %v3381 = vunpack.c.l.b16 %v739
    %v3382 = vunpack.c.h.b16 %v739
    %v3383 = vunpack.c.l.b16 %v740
    %v3384 = vunpack.c.h.b16 %v740
    %v3385 = vunpack.c.l.b16 %v741
    %v3386 = vunpack.c.h.b16 %v741
    %v3387 = vunpack.c.l.b16 %v742
    %v3388 = vunpack.c.h.b16 %v742
    %v3389 = vunpack.c.l.b16 %v743
    %v3390 = vunpack.c.h.b16 %v743
    %v3391 = vunpack.c.l.b16 %v744
    %v3392 = vunpack.c.h.b16 %v744
    %v3393 = vunpack.c.l.b16 %v745
    %v3394 = vunpack.c.h.b16 %v745
    %v3395 = vunpack.c.l.b16 %v746
    %v3396 = vunpack.c.h.b16 %v746
    %v3397 = vunpack.c.l.b16 %v747
    %v3398 = vunpack.c.h.b16 %v747
    %v3399 = vunpack.c.l.b16 %v748
    %v3400 = vunpack.c.h.b16 %v748
    %v3401 = vunpack.c.l.b16 %v749
    %v3402 = vunpack.c.h.b16 %v749
    %v3403 = vunpack.c.l.b16 %v750
    %v3404 = vunpack.c.h.b16 %v750
    %v3405 = vunpack.c.l.b16 %v751
    %v3406 = vunpack.c.h.b16 %v751
    %v3407 = vunpack.c.l.b16 %v752
    %v3408 = vunpack.c.h.b16 %v752
    %v3409 = vunpack.c.l.b16 %v753
    %v3410 = vunpack.c.h.b16 %v753
    %v3411 = vunpack.c.l.b16 %v754
    %v3412 = vunpack.c.h.b16 %v754
    %v3413 = vunpack.c.l.b16 %v755
    %v3414 = vunpack.c.h.b16 %v755
    %v3415 = vunpack.c.l.b16 %v756
    %v3416 = vunpack.c.h.b16 %v756
    %v3417 = vunpack.c.l.b16 %v757
    %v3418 = vunpack.c.h.b16 %v757
    %v3419 = vunpack.c.l.b16 %v758
    %v3420 = vunpack.c.h.b16 %v758
    %v3421 = vunpack.c.l.b16 %v759
    %v3422 = vunpack.c.h.b16 %v759
    %v3423 = vunpack.c.l.b16 %v760
    %v3424 = vunpack.c.h.b16 %v760
    %v3425 = vunpack.c.l.b16 %v761
    %v3426 = vunpack.c.h.b16 %v761
    %v3427 = vunpack.c.l.b16 %v762
    %v3428 = vunpack.c.h.b16 %v762
    %v3429 = vunpack.c.l.b16 %v763
    %v3430 = vunpack.c.h.b16 %v763
    %v3431 = vunpack.c.l.b16 %v764
    %v3432 = vunpack.c.h.b16 %v764
    %v3433 = vunpack.c.l.b16 %v765
    %v3434 = vunpack.c.h.b16 %v765
    %v3435 = vunpack.c.l.b16 %v766
    %v3436 = vunpack.c.h.b16 %v766
    %v3437 = vunpack.c.l.b16 %v767
    %v3438 = vunpack.c.h.b16 %v767
    %v3439 = vunpack.c.l.b16 %v768
    %v3440 = vunpack.c.h.b16 %v768
    %v3441 = vunpack.c.l.b16 %v769
    %v3442 = vunpack.c.h.b16 %v769
    %v3443 = vunpack.c.l.b16 %v770
    %v3444 = vunpack.c.h.b16 %v770
    %v3445 = vunpack.c.l.b16 %v771
    %v3446 = vunpack.c.h.b16 %v771
    %v3447 = vunpack.c.l.b16 %v772
    %v3448 = vunpack.c.h.b16 %v772
    %v3449 = vunpack.c.l.b16 %v773
    %v3450 = vunpack.c.h.b16 %v773
    %v3451 = vunpack.c.l.b16 %v774
    %v3452 = vunpack.c.h.b16 %v774
    %v3453 = vunpack.c.l.b16 %v775
    %v3454 = vunpack.c.h.b16 %v775
    %v3455 = vunpack.c.l.b16 %v776
    %v3456 = vunpack.c.h.b16 %v776
    %v3457 = vunpack.c.l.b16 %v777
    %v3458 = vunpack.c.h.b16 %v777
    %v3459 = vunpack.c.l.b16 %v778
    %v3460 = vunpack.c.h.b16 %v778
    %v3461 = vunpack.c.l.b16 %v779
    %v3462 = vunpack.c.h.b16 %v779
    %v3463 = vunpack.c.l.b16 %v780
    %v3464 = vunpack.c.h.b16 %v780
    %v3465 = vunpack.c.l.b16 %v781
    %v3466 = vunpack.c.h.b16 %v781
    %v3467 = vunpack.c.l.b16 %v782
    %v3468 = vunpack.c.h.b16 %v782
    %v3469 = vunpack.c.l.b16 %v783
    %v3470 = vunpack.c.h.b16 %v783
    %v3471 = vunpack.c.l.b16 %v784
    %v3472 = vunpack.c.h.b16 %v784
    %v3473 = vunpack.c.l.b16 %v785
    %v3474 = vunpack.c.h.b16 %v785
    %v3475 = vunpack.c.l.b16 %v786
    %v3476 = vunpack.c.h.b16 %v786
    %v3477 = vunpack.c.l.b16 %v787
    %v3478 = vunpack.c.h.b16 %v787
    %v3479 = vunpack.c.l.b16 %v788
    %v3480 = vunpack.c.h.b16 %v788
    %v3481 = vunpack.c.l.b16 %v789
    %v3482 = vunpack.c.h.b16 %v789
    %v3483 = vunpack.c.l.b16 %v790
    %v3484 = vunpack.c.h.b16 %v790
    %v3485 = vunpack.c.l.b16 %v791
    %v3486 = vunpack.c.h.b16 %v791
    %v3487 = vunpack.c.l.b16 %v792
    %v3488 = vunpack.c.h.b16 %v792
    %v3489 = vunpack.c.l.b16 %v793
    %v3490 = vunpack.c.h.b16 %v793
    %v3491 = vunpack.c.l.b16 %v794
    %v3492 = vunpack.c.h.b16 %v794
    %v3493 = vunpack.c.l.b16 %v795
    %v3494 = vunpack.c.h.b16 %v795
    %v3495 = vunpack.c.l.b16 %v796
    %v3496 = vunpack.c.h.b16 %v796
    %v3497 = vunpack.c.l.b16 %v797
    %v3498 = vunpack.c.h.b16 %v797
    %v3499 = vunpack.c.l.b16 %v798
    %v3500 = vunpack.c.h.b16 %v798
    %v3501 = vunpack.c.l.b16 %v799
    %v3502 = vunpack.c.h.b16 %v799
    %v3503 = vunpack.c.l.b16 %v800
    %v3504 = vunpack.c.h.b16 %v800
    %v3505 = vunpack.c.l.b16 %v801
    %v3506 = vunpack.c.h.b16 %v801
    %v3507 = vunpack.c.l.b16 %v802
    %v3508 = vunpack.c.h.b16 %v802
    %v3509 = vunpack.c.l.b16 %v803
    %v3510 = vunpack.c.h.b16 %v803
    %v3511 = vunpack.c.l.b16 %v804
    %v3512 = vunpack.c.h.b16 %v804
    %v3513 = vunpack.c.l.b16 %v805
    %v3514 = vunpack.c.h.b16 %v805
    %v3515 = vunpack.c.l.b16 %v806
    %v3516 = vunpack.c.h.b16 %v806
    %v3517 = vunpack.c.l.b16 %v807
    %v3518 = vunpack.c.h.b16 %v807
    %v3519 = vunpack.c.l.b16 %v808
    %v3520 = vunpack.c.h.b16 %v808
    %v3521 = vunpack.c.l.b16 %v809
    %v3522 = vunpack.c.h.b16 %v809
    %v3523 = vunpack.c.l.b16 %v810
    %v3524 = vunpack.c.h.b16 %v810
    %v3525 = vunpack.c.l.b16 %v811
    %v3526 = vunpack.c.h.b16 %v811
    %v3527 = vunpack.c.l.b16 %v812
    %v3528 = vunpack.c.h.b16 %v812
    %v3529 = vunpack.c.l.b16 %v813
    %v3530 = vunpack.c.h.b16 %v813
    %v3531 = vunpack.c.l.b16 %v814
    %v3532 = vunpack.c.h.b16 %v814
    %v3533 = vunpack.c.l.b16 %v815
    %v3534 = vunpack.c.h.b16 %v815
    %v3535 = vunpack.c.l.b16 %v816
    %v3536 = vunpack.c.h.b16 %v816
    %v3537 = vunpack.c.l.b16 %v817
    %v3538 = vunpack.c.h.b16 %v817
    %v3539 = vunpack.c.l.b16 %v818
    %v3540 = vunpack.c.h.b16 %v818
    %v3541 = vunpack.c.l.b16 %v819
    %v3542 = vunpack.c.h.b16 %v819
    %v3543 = vunpack.c.l.b16 %v820
    %v3544 = vunpack.c.h.b16 %v820
    %v3545 = vunpack.c.l.b16 %v821
    %v3546 = vunpack.c.h.b16 %v821
    %v3547 = vunpack.c.l.b16 %v822
    %v3548 = vunpack.c.h.b16 %v822
    %v3549 = vunpack.c.l.b16 %v823
    %v3550 = vunpack.c.h.b16 %v823
    %v3551 = vunpack.c.l.b16 %v824
    %v3552 = vunpack.c.h.b16 %v824
    %v3553 = vunpack.c.l.b16 %v825
    %v3554 = vunpack.c.h.b16 %v825
    %v3555 = vunpack.c.l.b16 %v826
    %v3556 = vunpack.c.h.b16 %v826
    %v3557 = vunpack.c.l.b16 %v827
    %v3558 = vunpack.c.h.b16 %v827
    %v3559 = vunpack.c.l.b16 %v828
    %v3560 = vunpack.c.h.b16 %v828
    %v3561 = vunpack.c.l.b16 %v829
    %v3562 = vunpack.c.h.b16 %v829
    %v3563 = vunpack.c.l.b16 %v830
    %v3564 = vunpack.c.h.b16 %v830
    %v3565 = vunpack.c.l.b16 %v831
    %v3566 = vunpack.c.h.b16 %v831
    %v3567 = vunpack.c.l.b16 %v832
    %v3568 = vunpack.c.h.b16 %v832
    %v3569 = vunpack.c.l.b16 %v833
    %v3570 = vunpack.c.h.b16 %v833
    %v3571 = vunpack.c.l.b16 %v834
    %v3572 = vunpack.c.h.b16 %v834
    %v3573 = vunpack.c.l.b16 %v835
    %v3574 = vunpack.c.h.b16 %v835
    %v3575 = vunpack.c.l.b16 %v836
    %v3576 = vunpack.c.h.b16 %v836
    %v3577 = vunpack.c.l.b16 %v837
    %v3578 = vunpack.c.h.b16 %v837
    %v3579 = vunpack.c.l.b16 %v838
    %v3580 = vunpack.c.h.b16 %v838
    %v3581 = vunpack.c.l.b16 %v839
    %v3582 = vunpack.c.h.b16 %v839
    %v3583 = vunpack.c.l.b16 %v840
    %v3584 = vunpack.c.h.b16 %v840
    %v3585 = vunpack.c.l.b16 %v841
    %v3586 = vunpack.c.h.b16 %v841
    %v3587 = vunpack.c.l.b16 %v842
    %v3588 = vunpack.c.h.b16 %v842
    %v3589 = vunpack.c.l.b16 %v843
    %v3590 = vunpack.c.h.b16 %v843
    %v3591 = vunpack.c.l.b16 %v844
    %v3592 = vunpack.c.h.b16 %v844
    %v3593 = vunpack.c.l.b16 %v845
    %v3594 = vunpack.c.h.b16 %v845
    %v3595 = vunpack.c.l.b16 %v846
    %v3596 = vunpack.c.h.b16 %v846
    %v3597 = vunpack.c.l.b16 %v847
    %v3598 = vunpack.c.h.b16 %v847
    %v3599 = vunpack.c.l.b16 %v848
    %v3600 = vunpack.c.h.b16 %v848
    %v3601 = vunpack.c.l.b16 %v849
    %v3602 = vunpack.c.h.b16 %v849
    %v3603 = vunpack.c.l.b16 %v850
    %v3604 = vunpack.c.h.b16 %v850
    %v3605 = vunpack.c.l.b16 %v851
    %v3606 = vunpack.c.h.b16 %v851
    %v3607 = vunpack.c.l.b16 %v852
    %v3608 = vunpack.c.h.b16 %v852
    %v3609 = vunpack.c.l.b16 %v853
    %v3610 = vunpack.c.h.b16 %v853
    %v3611 = vunpack.c.l.b16 %v854
    %v3612 = vunpack.c.h.b16 %v854
    %v3613 = vunpack.c.l.b16 %v855
    %v3614 = vunpack.c.h.b16 %v855
    %v3615 = vunpack.c.l.b16 %v856
    %v3616 = vunpack.c.h.b16 %v856
    %v3617 = vunpack.c.l.b16 %v857
    %v3618 = vunpack.c.h.b16 %v857
    %v3619 = vunpack.c.l.b16 %v858
    %v3620 = vunpack.c.h.b16 %v858
    %v3621 = vunpack.c.l.b16 %v859
    %v3622 = vunpack.c.h.b16 %v859
    %v3623 = vunpack.c.l.b16 %v860
    %v3624 = vunpack.c.h.b16 %v860
    %v3625 = vunpack.c.l.b16 %v861
    %v3626 = vunpack.c.h.b16 %v861
    %v3627 = vunpack.c.l.b16 %v862
    %v3628 = vunpack.c.h.b16 %v862
    %v3629 = vunpack.c.l.b16 %v863
    %v3630 = vunpack.c.h.b16 %v863
    %v3631 = vunpack.c.l.b16 %v864
    %v3632 = vunpack.c.h.b16 %v864
    %v3633 = vunpack.c.l.b16 %v865
    %v3634 = vunpack.c.h.b16 %v865
    %v3635 = vunpack.c.l.b16 %v866
    %v3636 = vunpack.c.h.b16 %v866
    %v3637 = vunpack.c.l.b16 %v867
    %v3638 = vunpack.c.h.b16 %v867
    %v3639 = vunpack.c.l.b16 %v868
    %v3640 = vunpack.c.h.b16 %v868
    %v3641 = vunpack.c.l.b16 %v869
    %v3642 = vunpack.c.h.b16 %v869
    %v3643 = vunpack.c.l.b16 %v870
    %v3644 = vunpack.c.h.b16 %v870
    %v3645 = vunpack.c.l.b16 %v871
    %v3646 = vunpack.c.h.b16 %v871
    %v3647 = vunpack.c.l.b16 %v872
    %v3648 = vunpack.c.h.b16 %v872
    %v3649 = vunpack.c.l.b16 %v873
    %v3650 = vunpack.c.h.b16 %v873
    %v3651 = vunpack.c.l.b16 %v874
    %v3652 = vunpack.c.h.b16 %v874
    %v3653 = vunpack.c.l.b16 %v875
    %v3654 = vunpack.c.h.b16 %v875
    %v3655 = vunpack.c.l.b16 %v876
    %v3656 = vunpack.c.h.b16 %v876
    %v3657 = vunpack.c.l.b16 %v877
    %v3658 = vunpack.c.h.b16 %v877
    %v3659 = vunpack.c.l.b16 %v878
    %v3660 = vunpack.c.h.b16 %v878
    %v3661 = vunpack.c.l.b16 %v879
    %v3662 = vunpack.c.h.b16 %v879
    %v3663 = vunpack.c.l.b16 %v880
    %v3664 = vunpack.c.h.b16 %v880
    %v3665 = vunpack.c.l.b16 %v881
    %v3666 = vunpack.c.h.b16 %v881
    %v3667 = vunpack.c.l.b16 %v882
    %v3668 = vunpack.c.h.b16 %v882
    %v3669 = vunpack.c.l.b16 %v883
    %v3670 = vunpack.c.h.b16 %v883
    %v3671 = vunpack.c.l.b16 %v884
    %v3672 = vunpack.c.h.b16 %v884
    %v3673 = vunpack.c.l.b16 %v885
    %v3674 = vunpack.c.h.b16 %v885
    %v3675 = vunpack.c.l.b16 %v886
    %v3676 = vunpack.c.h.b16 %v886
    %v3677 = vunpack.c.l.b16 %v887
    %v3678 = vunpack.c.h.b16 %v887
    %v3679 = vunpack.c.l.b16 %v888
    %v3680 = vunpack.c.h.b16 %v888
    %v3681 = vunpack.c.l.b16 %v889
    %v3682 = vunpack.c.h.b16 %v889
    %v3683 = vunpack.c.l.b16 %v890
    %v3684 = vunpack.c.h.b16 %v890
    %v3685 = vunpack.c.l.b16 %v891
    %v3686 = vunpack.c.h.b16 %v891
    %v3687 = vunpack.c.l.b16 %v892
    %v3688 = vunpack.c.h.b16 %v892
    %v3689 = vunpack.c.l.b16 %v893
    %v3690 = vunpack.c.h.b16 %v893
    %v3691 = vunpack.c.l.b16 %v894
    %v3692 = vunpack.c.h.b16 %v894
    %v3693 = vunpack.c.l.b16 %v895
    %v3694 = vunpack.c.h.b16 %v895
    %v3695 = vunpack.c.l.b16 %v896
    %v3696 = vunpack.c.h.b16 %v896
    %v3697 = vunpack.c.l.b16 %v897
    %v3698 = vunpack.c.h.b16 %v897
    %v3699 = vunpack.c.l.b16 %v898
    %v3700 = vunpack.c.h.b16 %v898
    %v3701 = vunpack.c.l.b16 %v899
    %v3702 = vunpack.c.h.b16 %v899
    %v3703 = vunpack.c.l.b16 %v900
    %v3704 = vunpack.c.h.b16 %v900
    %v3705 = vunpack.c.l.b16 %v901
    %v3706 = vunpack.c.h.b16 %v901
    %v3707 = vunpack.c.l.b16 %v902
    %v3708 = vunpack.c.h.b16 %v902
    %v3709 = vunpack.c.l.b16 %v903
    %v3710 = vunpack.c.h.b16 %v903
    %v3711 = vunpack.c.l.b16 %v904
    %v3712 = vunpack.c.h.b16 %v904
    %v3713 = vunpack.c.l.b16 %v905
    %v3714 = vunpack.c.h.b16 %v905
    %v3715 = vunpack.c.l.b16 %v906
    %v3716 = vunpack.c.h.b16 %v906
    %v3717 = vunpack.c.l.b16 %v907
    %v3718 = vunpack.c.h.b16 %v907
    %v3719 = vunpack.c.l.b16 %v908
    %v3720 = vunpack.c.h.b16 %v908
    %v3721 = vunpack.c.l.b16 %v909
    %v3722 = vunpack.c.h.b16 %v909
    %v3723 = vunpack.c.l.b16 %v910
    %v3724 = vunpack.c.h.b16 %v910
    %v3725 = vunpack.c.l.b16 %v911
    %v3726 = vunpack.c.h.b16 %v911
    %v3727 = vunpack.c.l.b16 %v912
    %v3728 = vunpack.c.h.b16 %v912
    %v3729 = vunpack.c.l.b16 %v913
    %v3730 = vunpack.c.h.b16 %v913
    %v3731 = vunpack.c.l.b16 %v914
    %v3732 = vunpack.c.h.b16 %v914
    %v3733 = vunpack.c.l.b16 %v915
    %v3734 = vunpack.c.h.b16 %v915
    %v3735 = vunpack.c.l.b16 %v916
    %v3736 = vunpack.c.h.b16 %v916
    %v3737 = vunpack.c.l.b16 %v917
    %v3738 = vunpack.c.h.b16 %v917
    %v3739 = vunpack.c.l.b16 %v918
    %v3740 = vunpack.c.h.b16 %v918
    %v3741 = vunpack.c.l.b16 %v919
    %v3742 = vunpack.c.h.b16 %v919
    %v3743 = vunpack.c.l.b16 %v920
    %v3744 = vunpack.c.h.b16 %v920
    %v3745 = vunpack.c.l.b16 %v921
    %v3746 = vunpack.c.h.b16 %v921
    %v3747 = vunpack.c.l.b16 %v922
    %v3748 = vunpack.c.h.b16 %v922
    %v3749 = vunpack.c.l.b16 %v923
    %v3750 = vunpack.c.h.b16 %v923
    %v3751 = vunpack.c.l.b16 %v924
    %v3752 = vunpack.c.h.b16 %v924
    %v3753 = vunpack.c.l.b16 %v925
    %v3754 = vunpack.c.h.b16 %v925
    %v3755 = vunpack.c.l.b16 %v926
    %v3756 = vunpack.c.h.b16 %v926
    %v3757 = vunpack.c.l.b16 %v927
    %v3758 = vunpack.c.h.b16 %v927
    %v3759 = vunpack.c.l.b16 %v928
    %v3760 = vunpack.c.h.b16 %v928
    %v3761 = vunpack.c.l.b16 %v929
    %v3762 = vunpack.c.h.b16 %v929
    %v3763 = vunpack.c.l.b16 %v930
    %v3764 = vunpack.c.h.b16 %v930
    %v3765 = vunpack.c.l.b16 %v931
    %v3766 = vunpack.c.h.b16 %v931
    %v3767 = vunpack.c.l.b16 %v932
    %v3768 = vunpack.c.h.b16 %v932
    %v3769 = vunpack.c.l.b16 %v933
    %v3770 = vunpack.c.h.b16 %v933
    %v3771 = vunpack.c.l.b16 %v934
    %v3772 = vunpack.c.h.b16 %v934
    %v3773 = vunpack.c.l.b16 %v935
    %v3774 = vunpack.c.h.b16 %v935
    %v3775 = vunpack.c.l.b16 %v936
    %v3776 = vunpack.c.h.b16 %v936
    %v3777 = vunpack.c.l.b16 %v937
    %v3778 = vunpack.c.h.b16 %v937
    %v3779 = vunpack.c.l.b16 %v938
    %v3780 = vunpack.c.h.b16 %v938
    %v3781 = vunpack.c.l.b16 %v939
    %v3782 = vunpack.c.h.b16 %v939
    %v3783 = vunpack.c.l.b16 %v940
    %v3784 = vunpack.c.h.b16 %v940
    %v3785 = vunpack.c.l.b16 %v941
    %v3786 = vunpack.c.h.b16 %v941
    %v3787 = vunpack.c.l.b16 %v942
    %v3788 = vunpack.c.h.b16 %v942
    %v3789 = vunpack.c.l.b16 %v943
    %v3790 = vunpack.c.h.b16 %v943
    %v3791 = vunpack.c.l.b16 %v944
    %v3792 = vunpack.c.h.b16 %v944
    %v3793 = vunpack.c.l.b16 %v945
    %v3794 = vunpack.c.h.b16 %v945
    %v3795 = vunpack.c.l.b16 %v946
    %v3796 = vunpack.c.h.b16 %v946
    %v3797 = vunpack.c.l.b16 %v947
    %v3798 = vunpack.c.h.b16 %v947
    %v3799 = vunpack.c.l.b16 %v948
    %v3800 = vunpack.c.h.b16 %v948
    %v3801 = vunpack.c.l.b16 %v949
    %v3802 = vunpack.c.h.b16 %v949
    %v3803 = vunpack.c.l.b16 %v950
    %v3804 = vunpack.c.h.b16 %v950
    %v3805 = vunpack.c.l.b16 %v951
    %v3806 = vunpack.c.h.b16 %v951
    %v3807 = vunpack.c.l.b16 %v952
    %v3808 = vunpack.c.h.b16 %v952
    %v3809 = vunpack.c.l.b16 %v953
    %v3810 = vunpack.c.h.b16 %v953
    %v3811 = vunpack.c.l.b16 %v954
    %v3812 = vunpack.c.h.b16 %v954
    %v3813 = vunpack.c.l.b16 %v955
    %v3814 = vunpack.c.h.b16 %v955
    %v3815 = vunpack.c.l.b16 %v956
    %v3816 = vunpack.c.h.b16 %v956
    %v3817 = vunpack.c.l.b16 %v957
    %v3818 = vunpack.c.h.b16 %v957
    %v3819 = vunpack.c.l.b16 %v958
    %v3820 = vunpack.c.h.b16 %v958
    %v3821 = vunpack.c.l.b16 %v959
    %v3822 = vunpack.c.h.b16 %v959
    %v3823 = vunpack.c.l.b16 %v960
    %v3824 = vunpack.c.h.b16 %v960
    %v3825 = vunpack.c.l.b16 %v961
    %v3826 = vunpack.c.h.b16 %v961
    %v3827 = vunpack.c.l.b16 %v962
    %v3828 = vunpack.c.h.b16 %v962
    %v3829 = vunpack.c.l.b16 %v963
    %v3830 = vunpack.c.h.b16 %v963
    %v3831 = vunpack.c.l.b16 %v964
    %v3832 = vunpack.c.h.b16 %v964
    %v3833 = vunpack.c.l.b16 %v965
    %v3834 = vunpack.c.h.b16 %v965
    %v3835 = vunpack.c.l.b16 %v966
    %v3836 = vunpack.c.h.b16 %v966
    %v3837 = vunpack.c.l.b16 %v967
    %v3838 = vunpack.c.h.b16 %v967
    %v3839 = vunpack.c.l.b16 %v968
    %v3840 = vunpack.c.h.b16 %v968
    %v3841 = vunpack.c.l.b16 %v969
    %v3842 = vunpack.c.h.b16 %v969
    %v3843 = vunpack.c.l.b16 %v970
    %v3844 = vunpack.c.h.b16 %v970
    %v3845 = vunpack.c.l.b16 %v971
    %v3846 = vunpack.c.h.b16 %v971
    %v3847 = vunpack.c.l.b16 %v972
    %v3848 = vunpack.c.h.b16 %v972
    %v3849 = vunpack.c.l.b16 %v973
    %v3850 = vunpack.c.h.b16 %v973
    %v3851 = vunpack.c.l.b16 %v974
    %v3852 = vunpack.c.h.b16 %v974
    %v3853 = vunpack.c.l.b16 %v975
    %v3854 = vunpack.c.h.b16 %v975
    %v3855 = vunpack.c.l.b16 %v976
    %v3856 = vunpack.c.h.b16 %v976
    %v3857 = vunpack.c.l.b16 %v977
    %v3858 = vunpack.c.h.b16 %v977
    %v3859 = vunpack.c.l.b16 %v978
    %v3860 = vunpack.c.h.b16 %v978
    %v3861 = vunpack.c.l.b16 %v979
    %v3862 = vunpack.c.h.b16 %v979
    %v3863 = vunpack.c.l.b16 %v980
    %v3864 = vunpack.c.h.b16 %v980
    %v3865 = vunpack.c.l.b16 %v981
    %v3866 = vunpack.c.h.b16 %v981
    %v3867 = vunpack.c.l.b16 %v982
    %v3868 = vunpack.c.h.b16 %v982
    %v3869 = vunpack.c.l.b16 %v983
    %v3870 = vunpack.c.h.b16 %v983
    %v3871 = vunpack.c.l.b16 %v984
    %v3872 = vunpack.c.h.b16 %v984
    %v3873 = vunpack.c.l.b16 %v985
    %v3874 = vunpack.c.h.b16 %v985
    %v3875 = vunpack.c.l.b16 %v986
    %v3876 = vunpack.c.h.b16 %v986
    %v3877 = vunpack.c.l.b16 %v987
    %v3878 = vunpack.c.h.b16 %v987
    %v3879 = vunpack.c.l.b16 %v988
    %v3880 = vunpack.c.h.b16 %v988
    %v3881 = vunpack.c.l.b16 %v989
    %v3882 = vunpack.c.h.b16 %v989
    %v3883 = vunpack.c.l.b16 %v990
    %v3884 = vunpack.c.h.b16 %v990
    %v3885 = vunpack.c.l.b16 %v991
    %v3886 = vunpack.c.h.b16 %v991
    %v3887 = vunpack.c.l.b16 %v992
    %v3888 = vunpack.c.h.b16 %v992
    %v3889 = vunpack.c.l.b16 %v993
    %v3890 = vunpack.c.h.b16 %v993
    %v3891 = vunpack.c.l.b16 %v994
    %v3892 = vunpack.c.h.b16 %v994
    %v3893 = vunpack.c.l.b16 %v995
    %v3894 = vunpack.c.h.b16 %v995
    %v3895 = vunpack.c.l.b16 %v996
    %v3896 = vunpack.c.h.b16 %v996
    %v3897 = vunpack.c.l.b16 %v997
    %v3898 = vunpack.c.h.b16 %v997
    %v3899 = vunpack.c.l.b16 %v998
    %v3900 = vunpack.c.h.b16 %v998
    %v3901 = vunpack.c.l.b16 %v999
    %v3902 = vunpack.c.h.b16 %v999
    %v3903 = vunpack.c.l.b16 %v1000
    %v3904 = vunpack.c.h.b16 %v1000
    %v3905 = vunpack.c.l.b16 %v1001
    %v3906 = vunpack.c.h.b16 %v1001
    %v3907 = vunpack.c.l.b16 %v1002
    %v3908 = vunpack.c.h.b16 %v1002
    %v3909 = vunpack.c.l.b16 %v1003
    %v3910 = vunpack.c.h.b16 %v1003
    %v3911 = vunpack.c.l.b16 %v1004
    %v3912 = vunpack.c.h.b16 %v1004
    %v3913 = vunpack.c.l.b16 %v1005
    %v3914 = vunpack.c.h.b16 %v1005
    %v3915 = vunpack.c.l.b16 %v1006
    %v3916 = vunpack.c.h.b16 %v1006
    %v3917 = vunpack.c.l.b16 %v1007
    %v3918 = vunpack.c.h.b16 %v1007
    %v3919 = vunpack.c.l.b16 %v1008
    %v3920 = vunpack.c.h.b16 %v1008
    %v3921 = vunpack.c.l.b16 %v1009
    %v3922 = vunpack.c.h.b16 %v1009
    %v3923 = vunpack.c.l.b16 %v1010
    %v3924 = vunpack.c.h.b16 %v1010
    %v3925 = vunpack.c.l.b16 %v1011
    %v3926 = vunpack.c.h.b16 %v1011
    %v3927 = vunpack.c.l.b16 %v1012
    %v3928 = vunpack.c.h.b16 %v1012
    %v3929 = vunpack.c.l.b16 %v1013
    %v3930 = vunpack.c.h.b16 %v1013
    %v3931 = vunpack.c.l.b16 %v1014
    %v3932 = vunpack.c.h.b16 %v1014
    %v3933 = vunpack.c.l.b16 %v1015
    %v3934 = vunpack.c.h.b16 %v1015
    %v3935 = vunpack.c.l.b16 %v1016
    %v3936 = vunpack.c.h.b16 %v1016
    %v3937 = vunpack.c.l.b16 %v1017
    %v3938 = vunpack.c.h.b16 %v1017
    %v3939 = vunpack.c.l.b16 %v1018
    %v3940 = vunpack.c.h.b16 %v1018
    %v3941 = vunpack.c.l.b16 %v1019
    %v3942 = vunpack.c.h.b16 %v1019
    %v3943 = vunpack.c.l.b16 %v1020
    %v3944 = vunpack.c.h.b16 %v1020
    %v3945 = vunpack.c.l.b16 %v1021
    %v3946 = vunpack.c.h.b16 %v1021
    %v3947 = vunpack.c.l.b16 %v1022
    %v3948 = vunpack.c.h.b16 %v1022
    %v3949 = vunpack.c.l.b16 %v1023
    %v3950 = vunpack.c.h.b16 %v1023
    %v3951 = vunpack.c.l.b16 %v1024
    %v3952 = vunpack.c.h.b16 %v1024
    %v3953 = vunpack.c.l.b16 %v1025
    %v3954 = vunpack.c.h.b16 %v1025
    %v3955 = vunpack.c.l.b16 %v1026
    %v3956 = vunpack.c.h.b16 %v1026
    %v3957 = vunpack.c.l.b16 %v1027
    %v3958 = vunpack.c.h.b16 %v1027
    %v3959 = vunpack.c.l.b16 %v1028
    %v3960 = vunpack.c.h.b16 %v1028
    %v3961 = vunpack.c.l.b16 %v1029
    %v3962 = vunpack.c.h.b16 %v1029
    %v3963 = vunpack.c.l.b16 %v1030
    %v3964 = vunpack.c.h.b16 %v1030
    %v3965 = vunpack.c.l.b16 %v1031
    %v3966 = vunpack.c.h.b16 %v1031
    %v3967 = vunpack.c.l.b16 %v1032
    %v3968 = vunpack.c.h.b16 %v1032
    %v3969 = vunpack.c.l.b16 %v1033
    %v3970 = vunpack.c.h.b16 %v1033
    %v3971 = vunpack.c.l.b16 %v1034
    %v3972 = vunpack.c.h.b16 %v1034
    %v3973 = vunpack.c.l.b16 %v1035
    %v3974 = vunpack.c.h.b16 %v1035
    %v3975 = vunpack.c.l.b16 %v1036
    %v3976 = vunpack.c.h.b16 %v1036
    %v3977 = vunpack.c.l.b16 %v1037
    %v3978 = vunpack.c.h.b16 %v1037
    %v3979 = vunpack.c.l.b16 %v1038
    %v3980 = vunpack.c.h.b16 %v1038
    %v3981 = vunpack.c.l.b16 %v1039
    %v3982 = vunpack.c.h.b16 %v1039
    %v3983 = vunpack.c.l.b16 %v1040
    %v3984 = vunpack.c.h.b16 %v1040
    %v3985 = vunpack.c.l.b16 %v1041
    %v3986 = vunpack.c.h.b16 %v1041
    %v3987 = vunpack.c.l.b16 %v1042
    %v3988 = vunpack.c.h.b16 %v1042
    %v3989 = vunpack.c.l.b16 %v1043
    %v3990 = vunpack.c.h.b16 %v1043
    %v3991 = vunpack.c.l.b16 %v1044
    %v3992 = vunpack.c.h.b16 %v1044
    %v3993 = vunpack.c.l.b16 %v1045
    %v3994 = vunpack.c.h.b16 %v1045
    %v3995 = vunpack.c.l.b16 %v1046
    %v3996 = vunpack.c.h.b16 %v1046
    %v3997 = vunpack.c.l.b16 %v1047
    %v3998 = vunpack.c.h.b16 %v1047
    %v3999 = vunpack.c.l.b16 %v1048
    %v4000 = vunpack.c.h.b16 %v1048
    %v4001 = vunpack.c.l.b16 %v1049
    %v4002 = vunpack.c.h.b16 %v1049
    %v4003 = vunpack.c.l.b16 %v1050
    %v4004 = vunpack.c.h.b16 %v1050
    %v4005 = vunpack.c.l.b16 %v1051
    %v4006 = vunpack.c.h.b16 %v1051
    %v4007 = vunpack.c.l.b16 %v1052
    %v4008 = vunpack.c.h.b16 %v1052
    %v4009 = vunpack.c.l.b16 %v1053
    %v4010 = vunpack.c.h.b16 %v1053
    %v4011 = vunpack.c.l.b16 %v1054
    %v4012 = vunpack.c.h.b16 %v1054
    %v4013 = vunpack.c.l.b16 %v1055
    %v4014 = vunpack.c.h.b16 %v1055
    %v4015 = vunpack.c.l.b16 %v1056
    %v4016 = vunpack.c.h.b16 %v1056
    %v4017 = vunpack.c.l.b16 %v1057
    %v4018 = vunpack.c.h.b16 %v1057
    %v4019 = vunpack.c.l.b16 %v1058
    %v4020 = vunpack.c.h.b16 %v1058
    %v4021 = vunpack.c.l.b16 %v1059
    %v4022 = vunpack.c.h.b16 %v1059
    %v4023 = vunpack.c.l.b16 %v1060
    %v4024 = vunpack.c.h.b16 %v1060
    %v4025 = vunpack.c.l.b16 %v1061
    %v4026 = vunpack.c.h.b16 %v1061
    %v4027 = vunpack.c.l.b16 %v1062
    %v4028 = vunpack.c.h.b16 %v1062
    %v4029 = vunpack.c.l.b16 %v1063
    %v4030 = vunpack.c.h.b16 %v1063
    %v4031 = vunpack.c.l.b16 %v1064
    %v4032 = vunpack.c.h.b16 %v1064
    %v4033 = vunpack.c.l.b16 %v1065
    %v4034 = vunpack.c.h.b16 %v1065
    %v4035 = vunpack.c.l.b16 %v1066
    %v4036 = vunpack.c.h.b16 %v1066
    %v4037 = vunpack.c.l.b16 %v1067
    %v4038 = vunpack.c.h.b16 %v1067
    %v4039 = vunpack.c.l.b16 %v1068
    %v4040 = vunpack.c.h.b16 %v1068
    %v4041 = vunpack.c.l.b16 %v1069
    %v4042 = vunpack.c.h.b16 %v1069
    %v4043 = vunpack.c.l.b16 %v1070
    %v4044 = vunpack.c.h.b16 %v1070
    %v4045 = vunpack.c.l.b16 %v1071
    %v4046 = vunpack.c.h.b16 %v1071
    %v4047 = vunpack.c.l.b16 %v1072
    %v4048 = vunpack.c.h.b16 %v1072
    %v4049 = vunpack.c.l.b16 %v1073
    %v4050 = vunpack.c.h.b16 %v1073
    %v4051 = vunpack.c.l.b16 %v1074
    %v4052 = vunpack.c.h.b16 %v1074
    %v4053 = vunpack.c.l.b16 %v1075
    %v4054 = vunpack.c.h.b16 %v1075
    %v4055 = vunpack.c.l.b16 %v1076
    %v4056 = vunpack.c.h.b16 %v1076
    %v4057 = vunpack.c.l.b16 %v1077
    %v4058 = vunpack.c.h.b16 %v1077
    %v4059 = vunpack.c.l.b16 %v1078
    %v4060 = vunpack.c.h.b16 %v1078
    %v4061 = vunpack.c.l.b16 %v1079
    %v4062 = vunpack.c.h.b16 %v1079
    %v4063 = vunpack.c.l.b16 %v1080
    %v4064 = vunpack.c.h.b16 %v1080
    %v4065 = vunpack.c.l.b16 %v1081
    %v4066 = vunpack.c.h.b16 %v1081
    %v4067 = vunpack.c.l.b16 %v1082
    %v4068 = vunpack.c.h.b16 %v1082
    %v4069 = vunpack.c.l.b16 %v1083
    %v4070 = vunpack.c.h.b16 %v1083
    %v4071 = vunpack.c.l.b16 %v1084
    %v4072 = vunpack.c.h.b16 %v1084
    %v4073 = vunpack.c.l.b16 %v1085
    %v4074 = vunpack.c.h.b16 %v1085
    %v4075 = vunpack.c.l.b16 %v1086
    %v4076 = vunpack.c.h.b16 %v1086
    %v4077 = vunpack.c.l.b16 %v1087
    %v4078 = vunpack.c.h.b16 %v1087
    %v4079 = vunpack.c.l.b16 %v1088
    %v4080 = vunpack.c.h.b16 %v1088
    %v4081 = vunpack.c.l.b16 %v1089
    %v4082 = vunpack.c.h.b16 %v1089
    %v4083 = vunpack.c.l.b16 %v1090
    %v4084 = vunpack.c.h.b16 %v1090
    %v4085 = vunpack.c.l.b16 %v1091
    %v4086 = vunpack.c.h.b16 %v1091
    %v4087 = vunpack.c.l.b16 %v1092
    %v4088 = vunpack.c.h.b16 %v1092
    %v4089 = vunpack.c.l.b16 %v1093
    %v4090 = vunpack.c.h.b16 %v1093
    %v4091 = vunpack.c.l.b16 %v1094
    %v4092 = vunpack.c.h.b16 %v1094
    %v4093 = vunpack.c.l.b16 %v1095
    %v4094 = vunpack.c.h.b16 %v1095
    %v4095 = vunpack.c.l.b16 %v1096
    %v4096 = vunpack.c.h.b16 %v1096
    %v4097 = vunpack.c.l.b16 %v1097
    %v4098 = vunpack.c.h.b16 %v1097
    %v4099 = vunpack.c.l.b16 %v1098
    %v4100 = vunpack.c.h.b16 %v1098
    %v4101 = vunpack.c.l.b16 %v1099
    %v4102 = vunpack.c.h.b16 %v1099
    %v4103 = vunpack.c.l.b16 %v1100
    %v4104 = vunpack.c.h.b16 %v1100
    %v4105 = vunpack.c.l.b16 %v1101
    %v4106 = vunpack.c.h.b16 %v1101
    %v4107 = vunpack.c.l.b16 %v1102
    %v4108 = vunpack.c.h.b16 %v1102
    %v4109 = vunpack.c.l.b16 %v1103
    %v4110 = vunpack.c.h.b16 %v1103
    %v4111 = vunpack.c.l.b16 %v1104
    %v4112 = vunpack.c.h.b16 %v1104
    %v4113 = vunpack.c.l.b16 %v1105
    %v4114 = vunpack.c.h.b16 %v1105
    %v4115 = vunpack.c.l.b16 %v1106
    %v4116 = vunpack.c.h.b16 %v1106
    %v4117 = vunpack.c.l.b16 %v1107
    %v4118 = vunpack.c.h.b16 %v1107
    %v4119 = vunpack.c.l.b16 %v1108
    %v4120 = vunpack.c.h.b16 %v1108
    %v4121 = vunpack.c.l.b16 %v1109
    %v4122 = vunpack.c.h.b16 %v1109
    %v4123 = vunpack.c.l.b16 %v1110
    %v4124 = vunpack.c.h.b16 %v1110
    %v4125 = vunpack.c.l.b16 %v1111
    %v4126 = vunpack.c.h.b16 %v1111
    %v4127 = vunpack.c.l.b16 %v1112
    %v4128 = vunpack.c.h.b16 %v1112
    %v4129 = vunpack.c.l.b16 %v1113
    %v4130 = vunpack.c.h.b16 %v1113
    %v4131 = vunpack.c.l.b16 %v1114
    %v4132 = vunpack.c.h.b16 %v1114
    %v4133 = vunpack.c.l.b16 %v1115
    %v4134 = vunpack.c.h.b16 %v1115
    %v4135 = vunpack.c.l.b16 %v1116
    %v4136 = vunpack.c.h.b16 %v1116
    %v4137 = vunpack.c.l.b16 %v1117
    %v4138 = vunpack.c.h.b16 %v1117
    %v4139 = vunpack.c.l.b16 %v1118
    %v4140 = vunpack.c.h.b16 %v1118
    %v4141 = vunpack.c.l.b16 %v1119
    %v4142 = vunpack.c.h.b16 %v1119
    %v4143 = vunpack.c.l.b16 %v1120
    %v4144 = vunpack.c.h.b16 %v1120
    %v4145 = vunpack.c.l.b16 %v1121
    %v4146 = vunpack.c.h.b16 %v1121
    %v4147 = vunpack.c.l.b16 %v1122
    %v4148 = vunpack.c.h.b16 %v1122
    %v4149 = vunpack.c.l.b16 %v1123
    %v4150 = vunpack.c.h.b16 %v1123
    %v4151 = vunpack.c.l.b16 %v1124
    %v4152 = vunpack.c.h.b16 %v1124
    %v4153 = vunpack.c.l.b16 %v1125
    %v4154 = vunpack.c.h.b16 %v1125
    %v4155 = vunpack.c.l.b16 %v1126
    %v4156 = vunpack.c.h.b16 %v1126
    %v4157 = vunpack.c.l.b16 %v1127
    %v4158 = vunpack.c.h.b16 %v1127
    %v4159 = vunpack.c.l.b16 %v1128
    %v4160 = vunpack.c.h.b16 %v1128
    %v4161 = vunpack.c.l.b16 %v1129
    %v4162 = vunpack.c.h.b16 %v1129
    %v4163 = vunpack.c.l.b16 %v1130
    %v4164 = vunpack.c.h.b16 %v1130
    %v4165 = vunpack.c.l.b16 %v1131
    %v4166 = vunpack.c.h.b16 %v1131
    %v4167 = vunpack.c.l.b16 %v1132
    %v4168 = vunpack.c.h.b16 %v1132
    %v4169 = vunpack.c.l.b16 %v1133
    %v4170 = vunpack.c.h.b16 %v1133
    %v4171 = vunpack.c.l.b16 %v1134
    %v4172 = vunpack.c.h.b16 %v1134
    %v4173 = vunpack.c.l.b16 %v1135
    %v4174 = vunpack.c.h.b16 %v1135
    %v4175 = vunpack.c.l.b16 %v1136
    %v4176 = vunpack.c.h.b16 %v1136
    %v4177 = vunpack.c.l.b16 %v1137
    %v4178 = vunpack.c.h.b16 %v1137
    %v4179 = vunpack.c.l.b16 %v1138
    %v4180 = vunpack.c.h.b16 %v1138
    %v4181 = vunpack.c.l.b16 %v1139
    %v4182 = vunpack.c.h.b16 %v1139
    %v4183 = vunpack.c.l.b16 %v1140
    %v4184 = vunpack.c.h.b16 %v1140
    %v4185 = vunpack.c.l.b16 %v1141
    %v4186 = vunpack.c.h.b16 %v1141
    %v4187 = vunpack.c.l.b16 %v1142
    %v4188 = vunpack.c.h.b16 %v1142
    %v4189 = vunpack.c.l.b16 %v1143
    %v4190 = vunpack.c.h.b16 %v1143
    %v4191 = vunpack.c.l.b16 %v1144
    %v4192 = vunpack.c.h.b16 %v1144
    %v4193 = vunpack.c.l.b16 %v1145
    %v4194 = vunpack.c.h.b16 %v1145
    %v4195 = vunpack.c.l.b16 %v1146
    %v4196 = vunpack.c.h.b16 %v1146
    %v4197 = vunpack.c.l.b16 %v1147
    %v4198 = vunpack.c.h.b16 %v1147
    %v4199 = vunpack.c.l.b16 %v1148
    %v4200 = vunpack.c.h.b16 %v1148
    %v4201 = vunpack.c.l.b16 %v1149
    %v4202 = vunpack.c.h.b16 %v1149
    %v4203 = vunpack.c.l.b16 %v1150
    %v4204 = vunpack.c.h.b16 %v1150
    %v4205 = vunpack.c.l.b16 %v1151
    %v4206 = vunpack.c.h.b16 %v1151
    %v4207 = vunpack.c.l.b16 %v1152
    %v4208 = vunpack.c.h.b16 %v1152
    %v4209 = vunpack.c.l.b16 %v1153
    %v4210 = vunpack.c.h.b16 %v1153
    %v4211 = vunpack.c.l.b16 %v1154
    %v4212 = vunpack.c.h.b16 %v1154
    %v4213 = vunpack.c.l.b16 %v1155
    %v4214 = vunpack.c.h.b16 %v1155
    %v4215 = vunpack.c.l.b16 %v1156
    %v4216 = vunpack.c.h.b16 %v1156
    %v4217 = vunpack.c.l.b16 %v1157
    %v4218 = vunpack.c.h.b16 %v1157
    %v4219 = vunpack.c.l.b16 %v1158
    %v4220 = vunpack.c.h.b16 %v1158
    %v4221 = vunpack.c.l.b16 %v1159
    %v4222 = vunpack.c.h.b16 %v1159
    %v4223 = vunpack.c.l.b16 %v1160
    %v4224 = vunpack.c.h.b16 %v1160
    %v4225 = vunpack.c.l.b16 %v1161
    %v4226 = vunpack.c.h.b16 %v1161
    %v4227 = vunpack.c.l.b16 %v1162
    %v4228 = vunpack.c.h.b16 %v1162
    %v4229 = vunpack.c.l.b16 %v1163
    %v4230 = vunpack.c.h.b16 %v1163
    %v4231 = vunpack.c.l.b16 %v1164
    %v4232 = vunpack.c.h.b16 %v1164
    %v4233 = vunpack.c.l.b16 %v1165
    %v4234 = vunpack.c.h.b16 %v1165
    %v4235 = vunpack.c.l.b16 %v1166
    %v4236 = vunpack.c.h.b16 %v1166
    %v4237 = vunpack.c.l.b16 %v1167
    %v4238 = vunpack.c.h.b16 %v1167
    %v4239 = vunpack.c.l.b16 %v1168
    %v4240 = vunpack.c.h.b16 %v1168
    %v4241 = vunpack.c.l.b16 %v1169
    %v4242 = vunpack.c.h.b16 %v1169
    %v4243 = vunpack.c.l.b16 %v1170
    %v4244 = vunpack.c.h.b16 %v1170
    %v4245 = vunpack.c.l.b16 %v1171
    %v4246 = vunpack.c.h.b16 %v1171
    %v4247 = vunpack.c.l.b16 %v1172
    %v4248 = vunpack.c.h.b16 %v1172
    %v4249 = vunpack.c.l.b16 %v1173
    %v4250 = vunpack.c.h.b16 %v1173
    %v4251 = vunpack.c.l.b16 %v1174
    %v4252 = vunpack.c.h.b16 %v1174
    %v4253 = vunpack.c.l.b16 %v1175
    %v4254 = vunpack.c.h.b16 %v1175
    %v4255 = vunpack.c.l.b16 %v1176
    %v4256 = vunpack.c.h.b16 %v1176
    %v4257 = vunpack.c.l.b16 %v1177
    %v4258 = vunpack.c.h.b16 %v1177
    %v4259 = vunpack.c.l.b16 %v1178
    %v4260 = vunpack.c.h.b16 %v1178
    %v4261 = vunpack.c.l.b16 %v1179
    %v4262 = vunpack.c.h.b16 %v1179
    %v4263 = vunpack.c.l.b16 %v1180
    %v4264 = vunpack.c.h.b16 %v1180
    %v4265 = vunpack.c.l.b16 %v1181
    %v4266 = vunpack.c.h.b16 %v1181
    %v4267 = vunpack.c.l.b16 %v1182
    %v4268 = vunpack.c.h.b16 %v1182
    %v4269 = vunpack.c.l.b16 %v1183
    %v4270 = vunpack.c.h.b16 %v1183
    %v4271 = vunpack.c.l.b16 %v1184
    %v4272 = vunpack.c.h.b16 %v1184
    %v4273 = vunpack.c.l.b16 %v1185
    %v4274 = vunpack.c.h.b16 %v1185
    %v4275 = vunpack.c.l.b16 %v1186
    %v4276 = vunpack.c.h.b16 %v1186
    %v4277 = vunpack.c.l.b16 %v1187
    %v4278 = vunpack.c.h.b16 %v1187
    %v4279 = vunpack.c.l.b16 %v1188
    %v4280 = vunpack.c.h.b16 %v1188
    %v4281 = vunpack.c.l.b16 %v1189
    %v4282 = vunpack.c.h.b16 %v1189
    %v4283 = vunpack.c.l.b16 %v1190
    %v4284 = vunpack.c.h.b16 %v1190
    %v4285 = vunpack.c.l.b16 %v1191
    %v4286 = vunpack.c.h.b16 %v1191
    %v4287 = vunpack.c.l.b16 %v1192
    %v4288 = vunpack.c.h.b16 %v1192
    %v4289 = vunpack.c.l.b16 %v1193
    %v4290 = vunpack.c.h.b16 %v1193
    %v4291 = vunpack.c.l.b16 %v1194
    %v4292 = vunpack.c.h.b16 %v1194
    %v4293 = vunpack.c.l.b16 %v1195
    %v4294 = vunpack.c.h.b16 %v1195
    %v4295 = vunpack.c.l.b16 %v1196
    %v4296 = vunpack.c.h.b16 %v1196
    %v4297 = vunpack.c.l.b16 %v1197
    %v4298 = vunpack.c.h.b16 %v1197
    %v4299 = vunpack.c.l.b16 %v1198
    %v4300 = vunpack.c.h.b16 %v1198
    %v4301 = vunpack.c.l.b16 %v1199
    %v4302 = vunpack.c.h.b16 %v1199
    %v4303 = vunpack.c.l.b16 %v1200
    %v4304 = vunpack.c.h.b16 %v1200
    %v4305 = vunpack.c.l.b16 %v1201
    %v4306 = vunpack.c.h.b16 %v1201
    %v4307 = vunpack.c.l.b16 %v1202
    %v4308 = vunpack.c.h.b16 %v1202
    %v4309 = vunpack.c.l.b16 %v1203
    %v4310 = vunpack.c.h.b16 %v1203
    %v4311 = vunpack.c.l.b16 %v1204
    %v4312 = vunpack.c.h.b16 %v1204
    %v4313 = vunpack.c.l.b16 %v1205
    %v4314 = vunpack.c.h.b16 %v1205
    %v4315 = vunpack.c.l.b16 %v1206
    %v4316 = vunpack.c.h.b16 %v1206
    %v4317 = vunpack.c.l.b16 %v1207
    %v4318 = vunpack.c.h.b16 %v1207
    %v4319 = vunpack.c.l.b16 %v1208
    %v4320 = vunpack.c.h.b16 %v1208
    %v4321 = vunpack.c.l.b16 %v1209
    %v4322 = vunpack.c.h.b16 %v1209
    %v4323 = vunpack.c.l.b16 %v1210
    %v4324 = vunpack.c.h.b16 %v1210
    %v4325 = vpack.c.b16 %v2285, %v2277
    %v4326 = vpack.c.b16 %v2286, %v2278
    %v4327 = vpack.c.b16 %v2287, %v2279
    %v4328 = vpack.c.b16 %v2288, %v2280
    %v4329 = vpack.c.b16 %v2289, %v2281
    %v4330 = vpack.c.b16 %v2290, %v2282
    %v4331 = vpack.c.b16 %v2291, %v2283
    %v4332 = vpack.c.b16 %v2292, %v2284
    %v4333 = vpack.c.b16 %v2301, %v2293
    %v4334 = vpack.c.b16 %v2302, %v2294
    %v4335 = vpack.c.b16 %v2303, %v2295
    %v4336 = vpack.c.b16 %v2304, %v2296
    %v4337 = vpack.c.b16 %v2305, %v2297
    %v4338 = vpack.c.b16 %v2306, %v2298
    %v4339 = vpack.c.b16 %v2307, %v2299
    %v4340 = vpack.c.b16 %v2308, %v2300
    %v4341 = vpack.c.b16 %v2317, %v2309
    %v4342 = vpack.c.b16 %v2318, %v2310
    %v4343 = vpack.c.b16 %v2319, %v2311
    %v4344 = vpack.c.b16 %v2320, %v2312
    %v4345 = vpack.c.b16 %v2321, %v2313
    %v4346 = vpack.c.b16 %v2322, %v2314
    %v4347 = vpack.c.b16 %v2323, %v2315
    %v4348 = vpack.c.b16 %v2324, %v2316
    %v4349 = vpack.c.b16 %v2333, %v2325
    %v4350 = vpack.c.b16 %v2334, %v2326
    %v4351 = vpack.c.b16 %v2335, %v2327
    %v4352 = vpack.c.b16 %v2336, %v2328
    %v4353 = vpack.c.b16 %v2337, %v2329
    %v4354 = vpack.c.b16 %v2338, %v2330
    %v4355 = vpack.c.b16 %v2339, %v2331
    %v4356 = vpack.c.b16 %v2340, %v2332
    %v4357 = vpack.c.b16 %v2349, %v2341
    %v4358 = vpack.c.b16 %v2350, %v2342
    %v4359 = vpack.c.b16 %v2351, %v2343
    %v4360 = vpack.c.b16 %v2352, %v2344
    %v4361 = vpack.c.b16 %v2353, %v2345
    %v4362 = vpack.c.b16 %v2354, %v2346
    %v4363 = vpack.c.b16 %v2355, %v2347
    %v4364 = vpack.c.b16 %v2356, %v2348
    %v4365 = vpack.c.b16 %v2365, %v2357
    %v4366 = vpack.c.b16 %v2366, %v2358
    %v4367 = vpack.c.b16 %v2367, %v2359
    %v4368 = vpack.c.b16 %v2368, %v2360
    %v4369 = vpack.c.b16 %v2369, %v2361
    %v4370 = vpack.c.b16 %v2370, %v2362
    %v4371 = vpack.c.b16 %v2371, %v2363
    %v4372 = vpack.c.b16 %v2372, %v2364
    %v4373 = vpack.c.b16 %v2381, %v2373
    %v4374 = vpack.c.b16 %v2382, %v2374
    %v4375 = vpack.c.b16 %v2383, %v2375
    %v4376 = vpack.c.b16 %v2384, %v2376
    %v4377 = vpack.c.b16 %v2385, %v2377
    %v4378 = vpack.c.b16 %v2386, %v2378
    %v4379 = vpack.c.b16 %v2387, %v2379
    %v4380 = vpack.c.b16 %v2388, %v2380
    %v4381 = vpack.c.b16 %v2397, %v2389
    %v4382 = vpack.c.b16 %v2398, %v2390
    %v4383 = vpack.c.b16 %v2399, %v2391
    %v4384 = vpack.c.b16 %v2400, %v2392
    %v4385 = vpack.c.b16 %v2401, %v2393
    %v4386 = vpack.c.b16 %v2402, %v2394
    %v4387 = vpack.c.b16 %v2403, %v2395
    %v4388 = vpack.c.b16 %v2404, %v2396
    %v4389 = vpack.c.b16 %v2413, %v2405
    %v4390 = vpack.c.b16 %v2414, %v2406
    %v4391 = vpack.c.b16 %v2415, %v2407
    %v4392 = vpack.c.b16 %v2416, %v2408
    %v4393 = vpack.c.b16 %v2417, %v2409
    %v4394 = vpack.c.b16 %v2418, %v2410
    %v4395 = vpack.c.b16 %v2419, %v2411
    %v4396 = vpack.c.b16 %v2420, %v2412
    %v4397 = vpack.c.b16 %v2429, %v2421
    %v4398 = vpack.c.b16 %v2430, %v2422
    %v4399 = vpack.c.b16 %v2431, %v2423
    %v4400 = vpack.c.b16 %v2432, %v2424
    %v4401 = vpack.c.b16 %v2433, %v2425
    %v4402 = vpack.c.b16 %v2434, %v2426
    %v4403 = vpack.c.b16 %v2435, %v2427
    %v4404 = vpack.c.b16 %v2436, %v2428
    %v4405 = vpack.c.b16 %v2445, %v2437
    %v4406 = vpack.c.b16 %v2446, %v2438
    %v4407 = vpack.c.b16 %v2447, %v2439
    %v4408 = vpack.c.b16 %v2448, %v2440
    %v4409 = vpack.c.b16 %v2449, %v2441
    %v4410 = vpack.c.b16 %v2450, %v2442
    %v4411 = vpack.c.b16 %v2451, %v2443
    %v4412 = vpack.c.b16 %v2452, %v2444
    %v4413 = vpack.c.b16 %v2461, %v2453
    %v4414 = vpack.c.b16 %v2462, %v2454
    %v4415 = vpack.c.b16 %v2463, %v2455
    %v4416 = vpack.c.b16 %v2464, %v2456
    %v4417 = vpack.c.b16 %v2465, %v2457
    %v4418 = vpack.c.b16 %v2466, %v2458
    %v4419 = vpack.c.b16 %v2467, %v2459
    %v4420 = vpack.c.b16 %v2468, %v2460
    %v4421 = vpack.c.b16 %v2477, %v2469
    %v4422 = vpack.c.b16 %v2478, %v2470
    %v4423 = vpack.c.b16 %v2479, %v2471
    %v4424 = vpack.c.b16 %v2480, %v2472
    %v4425 = vpack.c.b16 %v2481, %v2473
    %v4426 = vpack.c.b16 %v2482, %v2474
    %v4427 = vpack.c.b16 %v2483, %v2475
    %v4428 = vpack.c.b16 %v2484, %v2476
    %v4429 = vpack.c.b16 %v2493, %v2485
    %v4430 = vpack.c.b16 %v2494, %v2486
    %v4431 = vpack.c.b16 %v2495, %v2487
    %v4432 = vpack.c.b16 %v2496, %v2488
    %v4433 = vpack.c.b16 %v2497, %v2489
    %v4434 = vpack.c.b16 %v2498, %v2490
    %v4435 = vpack.c.b16 %v2499, %v2491
    %v4436 = vpack.c.b16 %v2500, %v2492
    %v4437 = vpack.c.b16 %v2509, %v2501
    %v4438 = vpack.c.b16 %v2510, %v2502
    %v4439 = vpack.c.b16 %v2511, %v2503
    %v4440 = vpack.c.b16 %v2512, %v2504
    %v4441 = vpack.c.b16 %v2513, %v2505
    %v4442 = vpack.c.b16 %v2514, %v2506
    %v4443 = vpack.c.b16 %v2515, %v2507
    %v4444 = vpack.c.b16 %v2516, %v2508
    %v4445 = vpack.c.b16 %v2525, %v2517
    %v4446 = vpack.c.b16 %v2526, %v2518
    %v4447 = vpack.c.b16 %v2527, %v2519
    %v4448 = vpack.c.b16 %v2528, %v2520
    %v4449 = vpack.c.b16 %v2529, %v2521
    %v4450 = vpack.c.b16 %v2530, %v2522
    %v4451 = vpack.c.b16 %v2531, %v2523
    %v4452 = vpack.c.b16 %v2532, %v2524
    %v4453 = vpack.c.b16 %v2541, %v2533
    %v4454 = vpack.c.b16 %v2542, %v2534
    %v4455 = vpack.c.b16 %v2543, %v2535
    %v4456 = vpack.c.b16 %v2544, %v2536
    %v4457 = vpack.c.b16 %v2545, %v2537
    %v4458 = vpack.c.b16 %v2546, %v2538
    %v4459 = vpack.c.b16 %v2547, %v2539
    %v4460 = vpack.c.b16 %v2548, %v2540
    %v4461 = vpack.c.b16 %v2557, %v2549
    %v4462 = vpack.c.b16 %v2558, %v2550
    %v4463 = vpack.c.b16 %v2559, %v2551
    %v4464 = vpack.c.b16 %v2560, %v2552
    %v4465 = vpack.c.b16 %v2561, %v2553
    %v4466 = vpack.c.b16 %v2562, %v2554
    %v4467 = vpack.c.b16 %v2563, %v2555
    %v4468 = vpack.c.b16 %v2564, %v2556
    %v4469 = vpack.c.b16 %v2573, %v2565
    %v4470 = vpack.c.b16 %v2574, %v2566
    %v4471 = vpack.c.b16 %v2575, %v2567
    %v4472 = vpack.c.b16 %v2576, %v2568
    %v4473 = vpack.c.b16 %v2577, %v2569
    %v4474 = vpack.c.b16 %v2578, %v2570
    %v4475 = vpack.c.b16 %v2579, %v2571
    %v4476 = vpack.c.b16 %v2580, %v2572
    %v4477 = vpack.c.b16 %v2589, %v2581
    %v4478 = vpack.c.b16 %v2590, %v2582
    %v4479 = vpack.c.b16 %v2591, %v2583
    %v4480 = vpack.c.b16 %v2592, %v2584
    %v4481 = vpack.c.b16 %v2593, %v2585
    %v4482 = vpack.c.b16 %v2594, %v2586
    %v4483 = vpack.c.b16 %v2595, %v2587
    %v4484 = vpack.c.b16 %v2596, %v2588
    %v4485 = vpack.c.b16 %v2605, %v2597
    %v4486 = vpack.c.b16 %v2606, %v2598
    %v4487 = vpack.c.b16 %v2607, %v2599
    %v4488 = vpack.c.b16 %v2608, %v2600
    %v4489 = vpack.c.b16 %v2609, %v2601
    %v4490 = vpack.c.b16 %v2610, %v2602
    %v4491 = vpack.c.b16 %v2611, %v2603
    %v4492 = vpack.c.b16 %v2612, %v2604
    %v4493 = vpack.c.b16 %v2621, %v2613
    %v4494 = vpack.c.b16 %v2622, %v2614
    %v4495 = vpack.c.b16 %v2623, %v2615
    %v4496 = vpack.c.b16 %v2624, %v2616
    %v4497 = vpack.c.b16 %v2625, %v2617
    %v4498 = vpack.c.b16 %v2626, %v2618
    %v4499 = vpack.c.b16 %v2627, %v2619
    %v4500 = vpack.c.b16 %v2628, %v2620
    %v4501 = vpack.c.b16 %v2637, %v2629
    %v4502 = vpack.c.b16 %v2638, %v2630
    %v4503 = vpack.c.b16 %v2639, %v2631
    %v4504 = vpack.c.b16 %v2640, %v2632
    %v4505 = vpack.c.b16 %v2641, %v2633
    %v4506 = vpack.c.b16 %v2642, %v2634
    %v4507 = vpack.c.b16 %v2643, %v2635
    %v4508 = vpack.c.b16 %v2644, %v2636
    %v4509 = vpack.c.b16 %v2653, %v2645
    %v4510 = vpack.c.b16 %v2654, %v2646
    %v4511 = vpack.c.b16 %v2655, %v2647
    %v4512 = vpack.c.b16 %v2656, %v2648
    %v4513 = vpack.c.b16 %v2657, %v2649
    %v4514 = vpack.c.b16 %v2658, %v2650
    %v4515 = vpack.c.b16 %v2659, %v2651
    %v4516 = vpack.c.b16 %v2660, %v2652
    %v4517 = vpack.c.b16 %v2669, %v2661
    %v4518 = vpack.c.b16 %v2670, %v2662
    %v4519 = vpack.c.b16 %v2671, %v2663
    %v4520 = vpack.c.b16 %v2672, %v2664
    %v4521 = vpack.c.b16 %v2673, %v2665
    %v4522 = vpack.c.b16 %v2674, %v2666
    %v4523 = vpack.c.b16 %v2675, %v2667
    %v4524 = vpack.c.b16 %v2676, %v2668
    %v4525 = vpack.c.b16 %v2685, %v2677
    %v4526 = vpack.c.b16 %v2686, %v2678
    %v4527 = vpack.c.b16 %v2687, %v2679
    %v4528 = vpack.c.b16 %v2688, %v2680
    %v4529 = vpack.c.b16 %v2689, %v2681
    %v4530 = vpack.c.b16 %v2690, %v2682
    %v4531 = vpack.c.b16 %v2691, %v2683
    %v4532 = vpack.c.b16 %v2692, %v2684
    %v4533 = vpack.c.b16 %v2701, %v2693
    %v4534 = vpack.c.b16 %v2702, %v2694
    %v4535 = vpack.c.b16 %v2703, %v2695
    %v4536 = vpack.c.b16 %v2704, %v2696
    %v4537 = vpack.c.b16 %v2705, %v2697
    %v4538 = vpack.c.b16 %v2706, %v2698
    %v4539 = vpack.c.b16 %v2707, %v2699
    %v4540 = vpack.c.b16 %v2708, %v2700
    %v4541 = vpack.c.b16 %v2717, %v2709
    %v4542 = vpack.c.b16 %v2718, %v2710
    %v4543 = vpack.c.b16 %v2719, %v2711
    %v4544 = vpack.c.b16 %v2720, %v2712
    %v4545 = vpack.c.b16 %v2721, %v2713
    %v4546 = vpack.c.b16 %v2722, %v2714
    %v4547 = vpack.c.b16 %v2723, %v2715
    %v4548 = vpack.c.b16 %v2724, %v2716
    %v4549 = vpack.c.b16 %v2733, %v2725
    %v4550 = vpack.c.b16 %v2734, %v2726
    %v4551 = vpack.c.b16 %v2735, %v2727
    %v4552 = vpack.c.b16 %v2736, %v2728
    %v4553 = vpack.c.b16 %v2737, %v2729
    %v4554 = vpack.c.b16 %v2738, %v2730
    %v4555 = vpack.c.b16 %v2739, %v2731
    %v4556 = vpack.c.b16 %v2740, %v2732
    %v4557 = vpack.c.b16 %v2749, %v2741
    %v4558 = vpack.c.b16 %v2750, %v2742
    %v4559 = vpack.c.b16 %v2751, %v2743
    %v4560 = vpack.c.b16 %v2752, %v2744
    %v4561 = vpack.c.b16 %v2753, %v2745
    %v4562 = vpack.c.b16 %v2754, %v2746
    %v4563 = vpack.c.b16 %v2755, %v2747
    %v4564 = vpack.c.b16 %v2756, %v2748
    %v4565 = vpack.c.b16 %v2765, %v2757
    %v4566 = vpack.c.b16 %v2766, %v2758
    %v4567 = vpack.c.b16 %v2767, %v2759
    %v4568 = vpack.c.b16 %v2768, %v2760
    %v4569 = vpack.c.b16 %v2769, %v2761
    %v4570 = vpack.c.b16 %v2770, %v2762
    %v4571 = vpack.c.b16 %v2771, %v2763
    %v4572 = vpack.c.b16 %v2772, %v2764
    %v4573 = vpack.c.b16 %v2781, %v2773
    %v4574 = vpack.c.b16 %v2782, %v2774
    %v4575 = vpack.c.b16 %v2783, %v2775
    %v4576 = vpack.c.b16 %v2784, %v2776
    %v4577 = vpack.c.b16 %v2785, %v2777
    %v4578 = vpack.c.b16 %v2786, %v2778
    %v4579 = vpack.c.b16 %v2787, %v2779
    %v4580 = vpack.c.b16 %v2788, %v2780
    %v4581 = vpack.c.b16 %v2797, %v2789
    %v4582 = vpack.c.b16 %v2798, %v2790
    %v4583 = vpack.c.b16 %v2799, %v2791
    %v4584 = vpack.c.b16 %v2800, %v2792
    %v4585 = vpack.c.b16 %v2801, %v2793
    %v4586 = vpack.c.b16 %v2802, %v2794
    %v4587 = vpack.c.b16 %v2803, %v2795
    %v4588 = vpack.c.b16 %v2804, %v2796
    %v4589 = vpack.c.b16 %v2813, %v2805
    %v4590 = vpack.c.b16 %v2814, %v2806
    %v4591 = vpack.c.b16 %v2815, %v2807
    %v4592 = vpack.c.b16 %v2816, %v2808
    %v4593 = vpack.c.b16 %v2817, %v2809
    %v4594 = vpack.c.b16 %v2818, %v2810
    %v4595 = vpack.c.b16 %v2819, %v2811
    %v4596 = vpack.c.b16 %v2820, %v2812
    %v4597 = vpack.c.b16 %v2829, %v2821
    %v4598 = vpack.c.b16 %v2830, %v2822
    %v4599 = vpack.c.b16 %v2831, %v2823
    %v4600 = vpack.c.b16 %v2832, %v2824
    %v4601 = vpack.c.b16 %v2833, %v2825
    %v4602 = vpack.c.b16 %v2834, %v2826
    %v4603 = vpack.c.b16 %v2835, %v2827
    %v4604 = vpack.c.b16 %v2836, %v2828
    %v4605 = vpack.c.b16 %v2845, %v2837
    %v4606 = vpack.c.b16 %v2846, %v2838
    %v4607 = vpack.c.b16 %v2847, %v2839
    %v4608 = vpack.c.b16 %v2848, %v2840
    %v4609 = vpack.c.b16 %v2849, %v2841
    %v4610 = vpack.c.b16 %v2850, %v2842
    %v4611 = vpack.c.b16 %v2851, %v2843
    %v4612 = vpack.c.b16 %v2852, %v2844
    %v4613 = vpack.c.b16 %v2861, %v2853
    %v4614 = vpack.c.b16 %v2862, %v2854
    %v4615 = vpack.c.b16 %v2863, %v2855
    %v4616 = vpack.c.b16 %v2864, %v2856
    %v4617 = vpack.c.b16 %v2865, %v2857
    %v4618 = vpack.c.b16 %v2866, %v2858
    %v4619 = vpack.c.b16 %v2867, %v2859
    %v4620 = vpack.c.b16 %v2868, %v2860
    %v4621 = vpack.c.b16 %v2877, %v2869
    %v4622 = vpack.c.b16 %v2878, %v2870
    %v4623 = vpack.c.b16 %v2879, %v2871
    %v4624 = vpack.c.b16 %v2880, %v2872
    %v4625 = vpack.c.b16 %v2881, %v2873
    %v4626 = vpack.c.b16 %v2882, %v2874
    %v4627 = vpack.c.b16 %v2883, %v2875
    %v4628 = vpack.c.b16 %v2884, %v2876
    %v4629 = vpack.c.b16 %v2893, %v2885
    %v4630 = vpack.c.b16 %v2894, %v2886
    %v4631 = vpack.c.b16 %v2895, %v2887
    %v4632 = vpack.c.b16 %v2896, %v2888
    %v4633 = vpack.c.b16 %v2897, %v2889
    %v4634 = vpack.c.b16 %v2898, %v2890
    %v4635 = vpack.c.b16 %v2899, %v2891
    %v4636 = vpack.c.b16 %v2900, %v2892
    %v4637 = vpack.c.b16 %v2909, %v2901
    %v4638 = vpack.c.b16 %v2910, %v2902
    %v4639 = vpack.c.b16 %v2911, %v2903
    %v4640 = vpack.c.b16 %v2912, %v2904
    %v4641 = vpack.c.b16 %v2913, %v2905
    %v4642 = vpack.c.b16 %v2914, %v2906
    %v4643 = vpack.c.b16 %v2915, %v2907
    %v4644 = vpack.c.b16 %v2916, %v2908
    %v4645 = vpack.c.b16 %v2925, %v2917
    %v4646 = vpack.c.b16 %v2926, %v2918
    %v4647 = vpack.c.b16 %v2927, %v2919
    %v4648 = vpack.c.b16 %v2928, %v2920
    %v4649 = vpack.c.b16 %v2929, %v2921
    %v4650 = vpack.c.b16 %v2930, %v2922
    %v4651 = vpack.c.b16 %v2931, %v2923
    %v4652 = vpack.c.b16 %v2932, %v2924
    %v4653 = vpack.c.b16 %v2941, %v2933
    %v4654 = vpack.c.b16 %v2942, %v2934
    %v4655 = vpack.c.b16 %v2943, %v2935
    %v4656 = vpack.c.b16 %v2944, %v2936
    %v4657 = vpack.c.b16 %v2945, %v2937
    %v4658 = vpack.c.b16 %v2946, %v2938
    %v4659 = vpack.c.b16 %v2947, %v2939
    %v4660 = vpack.c.b16 %v2948, %v2940
    %v4661 = vpack.c.b16 %v2957, %v2949
    %v4662 = vpack.c.b16 %v2958, %v2950
    %v4663 = vpack.c.b16 %v2959, %v2951
    %v4664 = vpack.c.b16 %v2960, %v2952
    %v4665 = vpack.c.b16 %v2961, %v2953
    %v4666 = vpack.c.b16 %v2962, %v2954
    %v4667 = vpack.c.b16 %v2963, %v2955
    %v4668 = vpack.c.b16 %v2964, %v2956
    %v4669 = vpack.c.b16 %v2973, %v2965
    %v4670 = vpack.c.b16 %v2974, %v2966
    %v4671 = vpack.c.b16 %v2975, %v2967
    %v4672 = vpack.c.b16 %v2976, %v2968
    %v4673 = vpack.c.b16 %v2977, %v2969
    %v4674 = vpack.c.b16 %v2978, %v2970
    %v4675 = vpack.c.b16 %v2979, %v2971
    %v4676 = vpack.c.b16 %v2980, %v2972
    %v4677 = vpack.c.b16 %v2989, %v2981
    %v4678 = vpack.c.b16 %v2990, %v2982
    %v4679 = vpack.c.b16 %v2991, %v2983
    %v4680 = vpack.c.b16 %v2992, %v2984
    %v4681 = vpack.c.b16 %v2993, %v2985
    %v4682 = vpack.c.b16 %v2994, %v2986
    %v4683 = vpack.c.b16 %v2995, %v2987
    %v4684 = vpack.c.b16 %v2996, %v2988
    %v4685 = vpack.c.b16 %v3005, %v2997
    %v4686 = vpack.c.b16 %v3006, %v2998
    %v4687 = vpack.c.b16 %v3007, %v2999
    %v4688 = vpack.c.b16 %v3008, %v3000
    %v4689 = vpack.c.b16 %v3009, %v3001
    %v4690 = vpack.c.b16 %v3010, %v3002
    %v4691 = vpack.c.b16 %v3011, %v3003
    %v4692 = vpack.c.b16 %v3012, %v3004
    %v4693 = vpack.c.b16 %v3021, %v3013
    %v4694 = vpack.c.b16 %v3022, %v3014
    %v4695 = vpack.c.b16 %v3023, %v3015
    %v4696 = vpack.c.b16 %v3024, %v3016
    %v4697 = vpack.c.b16 %v3025, %v3017
    %v4698 = vpack.c.b16 %v3026, %v3018
    %v4699 = vpack.c.b16 %v3027, %v3019
    %v4700 = vpack.c.b16 %v3028, %v3020
    %v4701 = vpack.c.b16 %v3037, %v3029
    %v4702 = vpack.c.b16 %v3038, %v3030
    %v4703 = vpack.c.b16 %v3039, %v3031
    %v4704 = vpack.c.b16 %v3040, %v3032
    %v4705 = vpack.c.b16 %v3041, %v3033
    %v4706 = vpack.c.b16 %v3042, %v3034
    %v4707 = vpack.c.b16 %v3043, %v3035
    %v4708 = vpack.c.b16 %v3044, %v3036
    %v4709 = vpack.c.b16 %v3053, %v3045
    %v4710 = vpack.c.b16 %v3054, %v3046
    %v4711 = vpack.c.b16 %v3055, %v3047
    %v4712 = vpack.c.b16 %v3056, %v3048
    %v4713 = vpack.c.b16 %v3057, %v3049
    %v4714 = vpack.c.b16 %v3058, %v3050
    %v4715 = vpack.c.b16 %v3059, %v3051
    %v4716 = vpack.c.b16 %v3060, %v3052
    %v4717 = vpack.c.b16 %v3069, %v3061
    %v4718 = vpack.c.b16 %v3070, %v3062
    %v4719 = vpack.c.b16 %v3071, %v3063
    %v4720 = vpack.c.b16 %v3072, %v3064
    %v4721 = vpack.c.b16 %v3073, %v3065
    %v4722 = vpack.c.b16 %v3074, %v3066
    %v4723 = vpack.c.b16 %v3075, %v3067
    %v4724 = vpack.c.b16 %v3076, %v3068
    %v4725 = vpack.c.b16 %v3085, %v3077
    %v4726 = vpack.c.b16 %v3086, %v3078
    %v4727 = vpack.c.b16 %v3087, %v3079
    %v4728 = vpack.c.b16 %v3088, %v3080
    %v4729 = vpack.c.b16 %v3089, %v3081
    %v4730 = vpack.c.b16 %v3090, %v3082
    %v4731 = vpack.c.b16 %v3091, %v3083
    %v4732 = vpack.c.b16 %v3092, %v3084
    %v4733 = vpack.c.b16 %v3101, %v3093
    %v4734 = vpack.c.b16 %v3102, %v3094
    %v4735 = vpack.c.b16 %v3103, %v3095
    %v4736 = vpack.c.b16 %v3104, %v3096
    %v4737 = vpack.c.b16 %v3105, %v3097
    %v4738 = vpack.c.b16 %v3106, %v3098
    %v4739 = vpack.c.b16 %v3107, %v3099
    %v4740 = vpack.c.b16 %v3108, %v3100
    %v4741 = vpack.c.b16 %v3117, %v3109
    %v4742 = vpack.c.b16 %v3118, %v3110
    %v4743 = vpack.c.b16 %v3119, %v3111
    %v4744 = vpack.c.b16 %v3120, %v3112
    %v4745 = vpack.c.b16 %v3121, %v3113
    %v4746 = vpack.c.b16 %v3122, %v3114
    %v4747 = vpack.c.b16 %v3123, %v3115
    %v4748 = vpack.c.b16 %v3124, %v3116
    %v4749 = vpack.c.b16 %v3133, %v3125
    %v4750 = vpack.c.b16 %v3134, %v3126
    %v4751 = vpack.c.b16 %v3135, %v3127
    %v4752 = vpack.c.b16 %v3136, %v3128
    %v4753 = vpack.c.b16 %v3137, %v3129
    %v4754 = vpack.c.b16 %v3138, %v3130
    %v4755 = vpack.c.b16 %v3139, %v3131
    %v4756 = vpack.c.b16 %v3140, %v3132
    %v4757 = vpack.c.b16 %v3149, %v3141
    %v4758 = vpack.c.b16 %v3150, %v3142
    %v4759 = vpack.c.b16 %v3151, %v3143
    %v4760 = vpack.c.b16 %v3152, %v3144
    %v4761 = vpack.c.b16 %v3153, %v3145
    %v4762 = vpack.c.b16 %v3154, %v3146
    %v4763 = vpack.c.b16 %v3155, %v3147
    %v4764 = vpack.c.b16 %v3156, %v3148
    %v4765 = vpack.c.b16 %v3165, %v3157
    %v4766 = vpack.c.b16 %v3166, %v3158
    %v4767 = vpack.c.b16 %v3167, %v3159
    %v4768 = vpack.c.b16 %v3168, %v3160
    %v4769 = vpack.c.b16 %v3169, %v3161
    %v4770 = vpack.c.b16 %v3170, %v3162
    %v4771 = vpack.c.b16 %v3171, %v3163
    %v4772 = vpack.c.b16 %v3172, %v3164
    %v4773 = vpack.c.b16 %v3181, %v3173
    %v4774 = vpack.c.b16 %v3182, %v3174
    %v4775 = vpack.c.b16 %v3183, %v3175
    %v4776 = vpack.c.b16 %v3184, %v3176
    %v4777 = vpack.c.b16 %v3185, %v3177
    %v4778 = vpack.c.b16 %v3186, %v3178
    %v4779 = vpack.c.b16 %v3187, %v3179
    %v4780 = vpack.c.b16 %v3188, %v3180
    %v4781 = vpack.c.b16 %v3197, %v3189
    %v4782 = vpack.c.b16 %v3198, %v3190
    %v4783 = vpack.c.b16 %v3199, %v3191
    %v4784 = vpack.c.b16 %v3200, %v3192
    %v4785 = vpack.c.b16 %v3201, %v3193
    %v4786 = vpack.c.b16 %v3202, %v3194
    %v4787 = vpack.c.b16 %v3203, %v3195
    %v4788 = vpack.c.b16 %v3204, %v3196
    %v4789 = vpack.c.b16 %v3213, %v3205
    %v4790 = vpack.c.b16 %v3214, %v3206
    %v4791 = vpack.c.b16 %v3215, %v3207
    %v4792 = vpack.c.b16 %v3216, %v3208
    %v4793 = vpack.c.b16 %v3217, %v3209
    %v4794 = vpack.c.b16 %v3218, %v3210
    %v4795 = vpack.c.b16 %v3219, %v3211
    %v4796 = vpack.c.b16 %v3220, %v3212
    %v4797 = vpack.c.b16 %v3229, %v3221
    %v4798 = vpack.c.b16 %v3230, %v3222
    %v4799 = vpack.c.b16 %v3231, %v3223
    %v4800 = vpack.c.b16 %v3232, %v3224
    %v4801 = vpack.c.b16 %v3233, %v3225
    %v4802 = vpack.c.b16 %v3234, %v3226
    %v4803 = vpack.c.b16 %v3235, %v3227
    %v4804 = vpack.c.b16 %v3236, %v3228
    %v4805 = vpack.c.b16 %v3245, %v3237
    %v4806 = vpack.c.b16 %v3246, %v3238
    %v4807 = vpack.c.b16 %v3247, %v3239
    %v4808 = vpack.c.b16 %v3248, %v3240
    %v4809 = vpack.c.b16 %v3249, %v3241
    %v4810 = vpack.c.b16 %v3250, %v3242
    %v4811 = vpack.c.b16 %v3251, %v3243
    %v4812 = vpack.c.b16 %v3252, %v3244
    %v4813 = vpack.c.b16 %v3261, %v3253
    %v4814 = vpack.c.b16 %v3262, %v3254
    %v4815 = vpack.c.b16 %v3263, %v3255
    %v4816 = vpack.c.b16 %v3264, %v3256
    %v4817 = vpack.c.b16 %v3265, %v3257
    %v4818 = vpack.c.b16 %v3266, %v3258
    %v4819 = vpack.c.b16 %v3267, %v3259
    %v4820 = vpack.c.b16 %v3268, %v3260
    %v4821 = vpack.c.b16 %v3277, %v3269
    %v4822 = vpack.c.b16 %v3278, %v3270
    %v4823 = vpack.c.b16 %v3279, %v3271
    %v4824 = vpack.c.b16 %v3280, %v3272
    %v4825 = vpack.c.b16 %v3281, %v3273
    %v4826 = vpack.c.b16 %v3282, %v3274
    %v4827 = vpack.c.b16 %v3283, %v3275
    %v4828 = vpack.c.b16 %v3284, %v3276
    %v4829 = vpack.c.b16 %v3293, %v3285
    %v4830 = vpack.c.b16 %v3294, %v3286
    %v4831 = vpack.c.b16 %v3295, %v3287
    %v4832 = vpack.c.b16 %v3296, %v3288
    %v4833 = vpack.c.b16 %v3297, %v3289
    %v4834 = vpack.c.b16 %v3298, %v3290
    %v4835 = vpack.c.b16 %v3299, %v3291
    %v4836 = vpack.c.b16 %v3300, %v3292
    %v4837 = vpack.c.b16 %v3309, %v3301
    %v4838 = vpack.c.b16 %v3310, %v3302
    %v4839 = vpack.c.b16 %v3311, %v3303
    %v4840 = vpack.c.b16 %v3312, %v3304
    %v4841 = vpack.c.b16 %v3313, %v3305
    %v4842 = vpack.c.b16 %v3314, %v3306
    %v4843 = vpack.c.b16 %v3315, %v3307
    %v4844 = vpack.c.b16 %v3316, %v3308
    %v4845 = vpack.c.b16 %v3325, %v3317
    %v4846 = vpack.c.b16 %v3326, %v3318
    %v4847 = vpack.c.b16 %v3327, %v3319
    %v4848 = vpack.c.b16 %v3328, %v3320
    %v4849 = vpack.c.b16 %v3329, %v3321
    %v4850 = vpack.c.b16 %v3330, %v3322
    %v4851 = vpack.c.b16 %v3331, %v3323
    %v4852 = vpack.c.b16 %v3332, %v3324
    %v4853 = vpack.c.b16 %v3341, %v3333
    %v4854 = vpack.c.b16 %v3342, %v3334
    %v4855 = vpack.c.b16 %v3343, %v3335
    %v4856 = vpack.c.b16 %v3344, %v3336
    %v4857 = vpack.c.b16 %v3345, %v3337
    %v4858 = vpack.c.b16 %v3346, %v3338
    %v4859 = vpack.c.b16 %v3347, %v3339
    %v4860 = vpack.c.b16 %v3348, %v3340
    %v4861 = vpack.c.b16 %v3357, %v3349
    %v4862 = vpack.c.b16 %v3358, %v3350
    %v4863 = vpack.c.b16 %v3359, %v3351
    %v4864 = vpack.c.b16 %v3360, %v3352
    %v4865 = vpack.c.b16 %v3361, %v3353
    %v4866 = vpack.c.b16 %v3362, %v3354
    %v4867 = vpack.c.b16 %v3363, %v3355
    %v4868 = vpack.c.b16 %v3364, %v3356
    %v4869 = vpack.c.b16 %v3373, %v3365
    %v4870 = vpack.c.b16 %v3374, %v3366
    %v4871 = vpack.c.b16 %v3375, %v3367
    %v4872 = vpack.c.b16 %v3376, %v3368
    %v4873 = vpack.c.b16 %v3377, %v3369
    %v4874 = vpack.c.b16 %v3378, %v3370
    %v4875 = vpack.c.b16 %v3379, %v3371
    %v4876 = vpack.c.b16 %v3380, %v3372
    %v4877 = vpack.c.b16 %v3389, %v3381
    %v4878 = vpack.c.b16 %v3390, %v3382
    %v4879 = vpack.c.b16 %v3391, %v3383
    %v4880 = vpack.c.b16 %v3392, %v3384
    %v4881 = vpack.c.b16 %v3393, %v3385
    %v4882 = vpack.c.b16 %v3394, %v3386
    %v4883 = vpack.c.b16 %v3395, %v3387
    %v4884 = vpack.c.b16 %v3396, %v3388
    %v4885 = vpack.c.b16 %v3405, %v3397
    %v4886 = vpack.c.b16 %v3406, %v3398
    %v4887 = vpack.c.b16 %v3407, %v3399
    %v4888 = vpack.c.b16 %v3408, %v3400
    %v4889 = vpack.c.b16 %v3409, %v3401
    %v4890 = vpack.c.b16 %v3410, %v3402
    %v4891 = vpack.c.b16 %v3411, %v3403
    %v4892 = vpack.c.b16 %v3412, %v3404
    %v4893 = vpack.c.b16 %v3421, %v3413
    %v4894 = vpack.c.b16 %v3422, %v3414
    %v4895 = vpack.c.b16 %v3423, %v3415
    %v4896 = vpack.c.b16 %v3424, %v3416
    %v4897 = vpack.c.b16 %v3425, %v3417
    %v4898 = vpack.c.b16 %v3426, %v3418
    %v4899 = vpack.c.b16 %v3427, %v3419
    %v4900 = vpack.c.b16 %v3428, %v3420
    %v4901 = vpack.c.b16 %v3437, %v3429
    %v4902 = vpack.c.b16 %v3438, %v3430
    %v4903 = vpack.c.b16 %v3439, %v3431
    %v4904 = vpack.c.b16 %v3440, %v3432
    %v4905 = vpack.c.b16 %v3441, %v3433
    %v4906 = vpack.c.b16 %v3442, %v3434
    %v4907 = vpack.c.b16 %v3443, %v3435
    %v4908 = vpack.c.b16 %v3444, %v3436
    %v4909 = vpack.c.b16 %v3453, %v3445
    %v4910 = vpack.c.b16 %v3454, %v3446
    %v4911 = vpack.c.b16 %v3455, %v3447
    %v4912 = vpack.c.b16 %v3456, %v3448
    %v4913 = vpack.c.b16 %v3457, %v3449
    %v4914 = vpack.c.b16 %v3458, %v3450
    %v4915 = vpack.c.b16 %v3459, %v3451
    %v4916 = vpack.c.b16 %v3460, %v3452
    %v4917 = vpack.c.b16 %v3469, %v3461
    %v4918 = vpack.c.b16 %v3470, %v3462
    %v4919 = vpack.c.b16 %v3471, %v3463
    %v4920 = vpack.c.b16 %v3472, %v3464
    %v4921 = vpack.c.b16 %v3473, %v3465
    %v4922 = vpack.c.b16 %v3474, %v3466
    %v4923 = vpack.c.b16 %v3475, %v3467
    %v4924 = vpack.c.b16 %v3476, %v3468
    %v4925 = vpack.c.b16 %v3485, %v3477
    %v4926 = vpack.c.b16 %v3486, %v3478
    %v4927 = vpack.c.b16 %v3487, %v3479
    %v4928 = vpack.c.b16 %v3488, %v3480
    %v4929 = vpack.c.b16 %v3489, %v3481
    %v4930 = vpack.c.b16 %v3490, %v3482
    %v4931 = vpack.c.b16 %v3491, %v3483
    %v4932 = vpack.c.b16 %v3492, %v3484
    %v4933 = vpack.c.b16 %v3501, %v3493
    %v4934 = vpack.c.b16 %v3502, %v3494
    %v4935 = vpack.c.b16 %v3503, %v3495
    %v4936 = vpack.c.b16 %v3504, %v3496
    %v4937 = vpack.c.b16 %v3505, %v3497
    %v4938 = vpack.c.b16 %v3506, %v3498
    %v4939 = vpack.c.b16 %v3507, %v3499
    %v4940 = vpack.c.b16 %v3508, %v3500
    %v4941 = vpack.c.b16 %v3517, %v3509
    %v4942 = vpack.c.b16 %v3518, %v3510
    %v4943 = vpack.c.b16 %v3519, %v3511
    %v4944 = vpack.c.b16 %v3520, %v3512
    %v4945 = vpack.c.b16 %v3521, %v3513
    %v4946 = vpack.c.b16 %v3522, %v3514
    %v4947 = vpack.c.b16 %v3523, %v3515
    %v4948 = vpack.c.b16 %v3524, %v3516
    %v4949 = vpack.c.b16 %v3533, %v3525
    %v4950 = vpack.c.b16 %v3534, %v3526
    %v4951 = vpack.c.b16 %v3535, %v3527
    %v4952 = vpack.c.b16 %v3536, %v3528
    %v4953 = vpack.c.b16 %v3537, %v3529
    %v4954 = vpack.c.b16 %v3538, %v3530
    %v4955 = vpack.c.b16 %v3539, %v3531
    %v4956 = vpack.c.b16 %v3540, %v3532
    %v4957 = vpack.c.b16 %v3549, %v3541
    %v4958 = vpack.c.b16 %v3550, %v3542
    %v4959 = vpack.c.b16 %v3551, %v3543
    %v4960 = vpack.c.b16 %v3552, %v3544
    %v4961 = vpack.c.b16 %v3553, %v3545
    %v4962 = vpack.c.b16 %v3554, %v3546
    %v4963 = vpack.c.b16 %v3555, %v3547
    %v4964 = vpack.c.b16 %v3556, %v3548
    %v4965 = vpack.c.b16 %v3565, %v3557
    %v4966 = vpack.c.b16 %v3566, %v3558
    %v4967 = vpack.c.b16 %v3567, %v3559
    %v4968 = vpack.c.b16 %v3568, %v3560
    %v4969 = vpack.c.b16 %v3569, %v3561
    %v4970 = vpack.c.b16 %v3570, %v3562
    %v4971 = vpack.c.b16 %v3571, %v3563
    %v4972 = vpack.c.b16 %v3572, %v3564
    %v4973 = vpack.c.b16 %v3581, %v3573
    %v4974 = vpack.c.b16 %v3582, %v3574
    %v4975 = vpack.c.b16 %v3583, %v3575
    %v4976 = vpack.c.b16 %v3584, %v3576
    %v4977 = vpack.c.b16 %v3585, %v3577
    %v4978 = vpack.c.b16 %v3586, %v3578
    %v4979 = vpack.c.b16 %v3587, %v3579
    %v4980 = vpack.c.b16 %v3588, %v3580
    %v4981 = vpack.c.b16 %v3597, %v3589
    %v4982 = vpack.c.b16 %v3598, %v3590
    %v4983 = vpack.c.b16 %v3599, %v3591
    %v4984 = vpack.c.b16 %v3600, %v3592
    %v4985 = vpack.c.b16 %v3601, %v3593
    %v4986 = vpack.c.b16 %v3602, %v3594
    %v4987 = vpack.c.b16 %v3603, %v3595
    %v4988 = vpack.c.b16 %v3604, %v3596
    %v4989 = vpack.c.b16 %v3613, %v3605
    %v4990 = vpack.c.b16 %v3614, %v3606
    %v4991 = vpack.c.b16 %v3615, %v3607
    %v4992 = vpack.c.b16 %v3616, %v3608
    %v4993 = vpack.c.b16 %v3617, %v3609
    %v4994 = vpack.c.b16 %v3618, %v3610
    %v4995 = vpack.c.b16 %v3619, %v3611
    %v4996 = vpack.c.b16 %v3620, %v3612
    %v4997 = vpack.c.b16 %v3629, %v3621
    %v4998 = vpack.c.b16 %v3630, %v3622
    %v4999 = vpack.c.b16 %v3631, %v3623
    %v5000 = vpack.c.b16 %v3632, %v3624
    %v5001 = vpack.c.b16 %v3633, %v3625
    %v5002 = vpack.c.b16 %v3634, %v3626
    %v5003 = vpack.c.b16 %v3635, %v3627
    %v5004 = vpack.c.b16 %v3636, %v3628
    %v5005 = vpack.c.b16 %v3645, %v3637
    %v5006 = vpack.c.b16 %v3646, %v3638
    %v5007 = vpack.c.b16 %v3647, %v3639
    %v5008 = vpack.c.b16 %v3648, %v3640
    %v5009 = vpack.c.b16 %v3649, %v3641
    %v5010 = vpack.c.b16 %v3650, %v3642
    %v5011 = vpack.c.b16 %v3651, %v3643
    %v5012 = vpack.c.b16 %v3652, %v3644
    %v5013 = vpack.c.b16 %v3661, %v3653
    %v5014 = vpack.c.b16 %v3662, %v3654
    %v5015 = vpack.c.b16 %v3663, %v3655
    %v5016 = vpack.c.b16 %v3664, %v3656
    %v5017 = vpack.c.b16 %v3665, %v3657
    %v5018 = vpack.c.b16 %v3666, %v3658
    %v5019 = vpack.c.b16 %v3667, %v3659
    %v5020 = vpack.c.b16 %v3668, %v3660
    %v5021 = vpack.c.b16 %v3677, %v3669
    %v5022 = vpack.c.b16 %v3678, %v3670
    %v5023 = vpack.c.b16 %v3679, %v3671
    %v5024 = vpack.c.b16 %v3680, %v3672
    %v5025 = vpack.c.b16 %v3681, %v3673
    %v5026 = vpack.c.b16 %v3682, %v3674
    %v5027 = vpack.c.b16 %v3683, %v3675
    %v5028 = vpack.c.b16 %v3684, %v3676
    %v5029 = vpack.c.b16 %v3693, %v3685
    %v5030 = vpack.c.b16 %v3694, %v3686
    %v5031 = vpack.c.b16 %v3695, %v3687
    %v5032 = vpack.c.b16 %v3696, %v3688
    %v5033 = vpack.c.b16 %v3697, %v3689
    %v5034 = vpack.c.b16 %v3698, %v3690
    %v5035 = vpack.c.b16 %v3699, %v3691
    %v5036 = vpack.c.b16 %v3700, %v3692
    %v5037 = vpack.c.b16 %v3709, %v3701
    %v5038 = vpack.c.b16 %v3710, %v3702
    %v5039 = vpack.c.b16 %v3711, %v3703
    %v5040 = vpack.c.b16 %v3712, %v3704
    %v5041 = vpack.c.b16 %v3713, %v3705
    %v5042 = vpack.c.b16 %v3714, %v3706
    %v5043 = vpack.c.b16 %v3715, %v3707
    %v5044 = vpack.c.b16 %v3716, %v3708
    %v5045 = vpack.c.b16 %v3725, %v3717
    %v5046 = vpack.c.b16 %v3726, %v3718
    %v5047 = vpack.c.b16 %v3727, %v3719
    %v5048 = vpack.c.b16 %v3728, %v3720
    %v5049 = vpack.c.b16 %v3729, %v3721
    %v5050 = vpack.c.b16 %v3730, %v3722
    %v5051 = vpack.c.b16 %v3731, %v3723
    %v5052 = vpack.c.b16 %v3732, %v3724
    %v5053 = vpack.c.b16 %v3741, %v3733
    %v5054 = vpack.c.b16 %v3742, %v3734
    %v5055 = vpack.c.b16 %v3743, %v3735
    %v5056 = vpack.c.b16 %v3744, %v3736
    %v5057 = vpack.c.b16 %v3745, %v3737
    %v5058 = vpack.c.b16 %v3746, %v3738
    %v5059 = vpack.c.b16 %v3747, %v3739
    %v5060 = vpack.c.b16 %v3748, %v3740
    %v5061 = vpack.c.b16 %v3757, %v3749
    %v5062 = vpack.c.b16 %v3758, %v3750
    %v5063 = vpack.c.b16 %v3759, %v3751
    %v5064 = vpack.c.b16 %v3760, %v3752
    %v5065 = vpack.c.b16 %v3761, %v3753
    %v5066 = vpack.c.b16 %v3762, %v3754
    %v5067 = vpack.c.b16 %v3763, %v3755
    %v5068 = vpack.c.b16 %v3764, %v3756
    %v5069 = vpack.c.b16 %v3773, %v3765
    %v5070 = vpack.c.b16 %v3774, %v3766
    %v5071 = vpack.c.b16 %v3775, %v3767
    %v5072 = vpack.c.b16 %v3776, %v3768
    %v5073 = vpack.c.b16 %v3777, %v3769
    %v5074 = vpack.c.b16 %v3778, %v3770
    %v5075 = vpack.c.b16 %v3779, %v3771
    %v5076 = vpack.c.b16 %v3780, %v3772
    %v5077 = vpack.c.b16 %v3789, %v3781
    %v5078 = vpack.c.b16 %v3790, %v3782
    %v5079 = vpack.c.b16 %v3791, %v3783
    %v5080 = vpack.c.b16 %v3792, %v3784
    %v5081 = vpack.c.b16 %v3793, %v3785
    %v5082 = vpack.c.b16 %v3794, %v3786
    %v5083 = vpack.c.b16 %v3795, %v3787
    %v5084 = vpack.c.b16 %v3796, %v3788
    %v5085 = vpack.c.b16 %v3805, %v3797
    %v5086 = vpack.c.b16 %v3806, %v3798
    %v5087 = vpack.c.b16 %v3807, %v3799
    %v5088 = vpack.c.b16 %v3808, %v3800
    %v5089 = vpack.c.b16 %v3809, %v3801
    %v5090 = vpack.c.b16 %v3810, %v3802
    %v5091 = vpack.c.b16 %v3811, %v3803
    %v5092 = vpack.c.b16 %v3812, %v3804
    %v5093 = vpack.c.b16 %v3821, %v3813
    %v5094 = vpack.c.b16 %v3822, %v3814
    %v5095 = vpack.c.b16 %v3823, %v3815
    %v5096 = vpack.c.b16 %v3824, %v3816
    %v5097 = vpack.c.b16 %v3825, %v3817
    %v5098 = vpack.c.b16 %v3826, %v3818
    %v5099 = vpack.c.b16 %v3827, %v3819
    %v5100 = vpack.c.b16 %v3828, %v3820
    %v5101 = vpack.c.b16 %v3837, %v3829
    %v5102 = vpack.c.b16 %v3838, %v3830
    %v5103 = vpack.c.b16 %v3839, %v3831
    %v5104 = vpack.c.b16 %v3840, %v3832
    %v5105 = vpack.c.b16 %v3841, %v3833
    %v5106 = vpack.c.b16 %v3842, %v3834
    %v5107 = vpack.c.b16 %v3843, %v3835
    %v5108 = vpack.c.b16 %v3844, %v3836
    %v5109 = vpack.c.b16 %v3853, %v3845
    %v5110 = vpack.c.b16 %v3854, %v3846
    %v5111 = vpack.c.b16 %v3855, %v3847
    %v5112 = vpack.c.b16 %v3856, %v3848
    %v5113 = vpack.c.b16 %v3857, %v3849
    %v5114 = vpack.c.b16 %v3858, %v3850
    %v5115 = vpack.c.b16 %v3859, %v3851
    %v5116 = vpack.c.b16 %v3860, %v3852
    %v5117 = vpack.c.b16 %v3869, %v3861
    %v5118 = vpack.c.b16 %v3870, %v3862
    %v5119 = vpack.c.b16 %v3871, %v3863
    %v5120 = vpack.c.b16 %v3872, %v3864
    %v5121 = vpack.c.b16 %v3873, %v3865
    %v5122 = vpack.c.b16 %v3874, %v3866
    %v5123 = vpack.c.b16 %v3875, %v3867
    %v5124 = vpack.c.b16 %v3876, %v3868
    %v5125 = vpack.c.b16 %v3885, %v3877
    %v5126 = vpack.c.b16 %v3886, %v3878
    %v5127 = vpack.c.b16 %v3887, %v3879
    %v5128 = vpack.c.b16 %v3888, %v3880
    %v5129 = vpack.c.b16 %v3889, %v3881
    %v5130 = vpack.c.b16 %v3890, %v3882
    %v5131 = vpack.c.b16 %v3891, %v3883
    %v5132 = vpack.c.b16 %v3892, %v3884
    %v5133 = vpack.c.b16 %v3901, %v3893
    %v5134 = vpack.c.b16 %v3902, %v3894
    %v5135 = vpack.c.b16 %v3903, %v3895
    %v5136 = vpack.c.b16 %v3904, %v3896
    %v5137 = vpack.c.b16 %v3905, %v3897
    %v5138 = vpack.c.b16 %v3906, %v3898
    %v5139 = vpack.c.b16 %v3907, %v3899
    %v5140 = vpack.c.b16 %v3908, %v3900
    %v5141 = vpack.c.b16 %v3917, %v3909
    %v5142 = vpack.c.b16 %v3918, %v3910
    %v5143 = vpack.c.b16 %v3919, %v3911
    %v5144 = vpack.c.b16 %v3920, %v3912
    %v5145 = vpack.c.b16 %v3921, %v3913
    %v5146 = vpack.c.b16 %v3922, %v3914
    %v5147 = vpack.c.b16 %v3923, %v3915
    %v5148 = vpack.c.b16 %v3924, %v3916
    %v5149 = vpack.c.b16 %v3933, %v3925
    %v5150 = vpack.c.b16 %v3934, %v3926
    %v5151 = vpack.c.b16 %v3935, %v3927
    %v5152 = vpack.c.b16 %v3936, %v3928
    %v5153 = vpack.c.b16 %v3937, %v3929
    %v5154 = vpack.c.b16 %v3938, %v3930
    %v5155 = vpack.c.b16 %v3939, %v3931
    %v5156 = vpack.c.b16 %v3940, %v3932
    %v5157 = vpack.c.b16 %v3949, %v3941
    %v5158 = vpack.c.b16 %v3950, %v3942
    %v5159 = vpack.c.b16 %v3951, %v3943
    %v5160 = vpack.c.b16 %v3952, %v3944
    %v5161 = vpack.c.b16 %v3953, %v3945
    %v5162 = vpack.c.b16 %v3954, %v3946
    %v5163 = vpack.c.b16 %v3955, %v3947
    %v5164 = vpack.c.b16 %v3956, %v3948
    %v5165 = vpack.c.b16 %v3965, %v3957
    %v5166 = vpack.c.b16 %v3966, %v3958
    %v5167 = vpack.c.b16 %v3967, %v3959
    %v5168 = vpack.c.b16 %v3968, %v3960
    %v5169 = vpack.c.b16 %v3969, %v3961
    %v5170 = vpack.c.b16 %v3970, %v3962
    %v5171 = vpack.c.b16 %v3971, %v3963
    %v5172 = vpack.c.b16 %v3972, %v3964
    %v5173 = vpack.c.b16 %v3981, %v3973
    %v5174 = vpack.c.b16 %v3982, %v3974
    %v5175 = vpack.c.b16 %v3983, %v3975
    %v5176 = vpack.c.b16 %v3984, %v3976
    %v5177 = vpack.c.b16 %v3985, %v3977
    %v5178 = vpack.c.b16 %v3986, %v3978
    %v5179 = vpack.c.b16 %v3987, %v3979
    %v5180 = vpack.c.b16 %v3988, %v3980
    %v5181 = vpack.c.b16 %v3997, %v3989
    %v5182 = vpack.c.b16 %v3998, %v3990
    %v5183 = vpack.c.b16 %v3999, %v3991
    %v5184 = vpack.c.b16 %v4000, %v3992
    %v5185 = vpack.c.b16 %v4001, %v3993
    %v5186 = vpack.c.b16 %v4002, %v3994
    %v5187 = vpack.c.b16 %v4003, %v3995
    %v5188 = vpack.c.b16 %v4004, %v3996
    %v5189 = vpack.c.b16 %v4013, %v4005
    %v5190 = vpack.c.b16 %v4014, %v4006
    %v5191 = vpack.c.b16 %v4015, %v4007
    %v5192 = vpack.c.b16 %v4016, %v4008
    %v5193 = vpack.c.b16 %v4017, %v4009
    %v5194 = vpack.c.b16 %v4018, %v4010
    %v5195 = vpack.c.b16 %v4019, %v4011
    %v5196 = vpack.c.b16 %v4020, %v4012
    %v5197 = vpack.c.b16 %v4029, %v4021
    %v5198 = vpack.c.b16 %v4030, %v4022
    %v5199 = vpack.c.b16 %v4031, %v4023
    %v5200 = vpack.c.b16 %v4032, %v4024
    %v5201 = vpack.c.b16 %v4033, %v4025
    %v5202 = vpack.c.b16 %v4034, %v4026
    %v5203 = vpack.c.b16 %v4035, %v4027
    %v5204 = vpack.c.b16 %v4036, %v4028
    %v5205 = vpack.c.b16 %v4045, %v4037
    %v5206 = vpack.c.b16 %v4046, %v4038
    %v5207 = vpack.c.b16 %v4047, %v4039
    %v5208 = vpack.c.b16 %v4048, %v4040
    %v5209 = vpack.c.b16 %v4049, %v4041
    %v5210 = vpack.c.b16 %v4050, %v4042
    %v5211 = vpack.c.b16 %v4051, %v4043
    %v5212 = vpack.c.b16 %v4052, %v4044
    %v5213 = vpack.c.b16 %v4061, %v4053
    %v5214 = vpack.c.b16 %v4062, %v4054
    %v5215 = vpack.c.b16 %v4063, %v4055
    %v5216 = vpack.c.b16 %v4064, %v4056
    %v5217 = vpack.c.b16 %v4065, %v4057
    %v5218 = vpack.c.b16 %v4066, %v4058
    %v5219 = vpack.c.b16 %v4067, %v4059
    %v5220 = vpack.c.b16 %v4068, %v4060
    %v5221 = vpack.c.b16 %v4077, %v4069
    %v5222 = vpack.c.b16 %v4078, %v4070
    %v5223 = vpack.c.b16 %v4079, %v4071
    %v5224 = vpack.c.b16 %v4080, %v4072
    %v5225 = vpack.c.b16 %v4081, %v4073
    %v5226 = vpack.c.b16 %v4082, %v4074
    %v5227 = vpack.c.b16 %v4083, %v4075
    %v5228 = vpack.c.b16 %v4084, %v4076
    %v5229 = vpack.c.b16 %v4093, %v4085
    %v5230 = vpack.c.b16 %v4094, %v4086
    %v5231 = vpack.c.b16 %v4095, %v4087
    %v5232 = vpack.c.b16 %v4096, %v4088
    %v5233 = vpack.c.b16 %v4097, %v4089
    %v5234 = vpack.c.b16 %v4098, %v4090
    %v5235 = vpack.c.b16 %v4099, %v4091
    %v5236 = vpack.c.b16 %v4100, %v4092
    %v5237 = vpack.c.b16 %v4109, %v4101
    %v5238 = vpack.c.b16 %v4110, %v4102
    %v5239 = vpack.c.b16 %v4111, %v4103
    %v5240 = vpack.c.b16 %v4112, %v4104
    %v5241 = vpack.c.b16 %v4113, %v4105
    %v5242 = vpack.c.b16 %v4114, %v4106
    %v5243 = vpack.c.b16 %v4115, %v4107
    %v5244 = vpack.c.b16 %v4116, %v4108
    %v5245 = vpack.c.b16 %v4125, %v4117
    %v5246 = vpack.c.b16 %v4126, %v4118
    %v5247 = vpack.c.b16 %v4127, %v4119
    %v5248 = vpack.c.b16 %v4128, %v4120
    %v5249 = vpack.c.b16 %v4129, %v4121
    %v5250 = vpack.c.b16 %v4130, %v4122
    %v5251 = vpack.c.b16 %v4131, %v4123
    %v5252 = vpack.c.b16 %v4132, %v4124
    %v5253 = vpack.c.b16 %v4141, %v4133
    %v5254 = vpack.c.b16 %v4142, %v4134
    %v5255 = vpack.c.b16 %v4143, %v4135
    %v5256 = vpack.c.b16 %v4144, %v4136
    %v5257 = vpack.c.b16 %v4145, %v4137
    %v5258 = vpack.c.b16 %v4146, %v4138
    %v5259 = vpack.c.b16 %v4147, %v4139
    %v5260 = vpack.c.b16 %v4148, %v4140
    %v5261 = vpack.c.b16 %v4157, %v4149
    %v5262 = vpack.c.b16 %v4158, %v4150
    %v5263 = vpack.c.b16 %v4159, %v4151
    %v5264 = vpack.c.b16 %v4160, %v4152
    %v5265 = vpack.c.b16 %v4161, %v4153
    %v5266 = vpack.c.b16 %v4162, %v4154
    %v5267 = vpack.c.b16 %v4163, %v4155
    %v5268 = vpack.c.b16 %v4164, %v4156
    %v5269 = vpack.c.b16 %v4173, %v4165
    %v5270 = vpack.c.b16 %v4174, %v4166
    %v5271 = vpack.c.b16 %v4175, %v4167
    %v5272 = vpack.c.b16 %v4176, %v4168
    %v5273 = vpack.c.b16 %v4177, %v4169
    %v5274 = vpack.c.b16 %v4178, %v4170
    %v5275 = vpack.c.b16 %v4179, %v4171
    %v5276 = vpack.c.b16 %v4180, %v4172
    %v5277 = vpack.c.b16 %v4189, %v4181
    %v5278 = vpack.c.b16 %v4190, %v4182
    %v5279 = vpack.c.b16 %v4191, %v4183
    %v5280 = vpack.c.b16 %v4192, %v4184
    %v5281 = vpack.c.b16 %v4193, %v4185
    %v5282 = vpack.c.b16 %v4194, %v4186
    %v5283 = vpack.c.b16 %v4195, %v4187
    %v5284 = vpack.c.b16 %v4196, %v4188
    %v5285 = vpack.c.b16 %v4205, %v4197
    %v5286 = vpack.c.b16 %v4206, %v4198
    %v5287 = vpack.c.b16 %v4207, %v4199
    %v5288 = vpack.c.b16 %v4208, %v4200
    %v5289 = vpack.c.b16 %v4209, %v4201
    %v5290 = vpack.c.b16 %v4210, %v4202
    %v5291 = vpack.c.b16 %v4211, %v4203
    %v5292 = vpack.c.b16 %v4212, %v4204
    %v5293 = vpack.c.b16 %v4221, %v4213
    %v5294 = vpack.c.b16 %v4222, %v4214
    %v5295 = vpack.c.b16 %v4223, %v4215
    %v5296 = vpack.c.b16 %v4224, %v4216
    %v5297 = vpack.c.b16 %v4225, %v4217
    %v5298 = vpack.c.b16 %v4226, %v4218
    %v5299 = vpack.c.b16 %v4227, %v4219
    %v5300 = vpack.c.b16 %v4228, %v4220
    %v5301 = vpack.c.b16 %v4237, %v4229
    %v5302 = vpack.c.b16 %v4238, %v4230
    %v5303 = vpack.c.b16 %v4239, %v4231
    %v5304 = vpack.c.b16 %v4240, %v4232
    %v5305 = vpack.c.b16 %v4241, %v4233
    %v5306 = vpack.c.b16 %v4242, %v4234
    %v5307 = vpack.c.b16 %v4243, %v4235
    %v5308 = vpack.c.b16 %v4244, %v4236
    %v5309 = vpack.c.b16 %v4253, %v4245
    %v5310 = vpack.c.b16 %v4254, %v4246
    %v5311 = vpack.c.b16 %v4255, %v4247
    %v5312 = vpack.c.b16 %v4256, %v4248
    %v5313 = vpack.c.b16 %v4257, %v4249
    %v5314 = vpack.c.b16 %v4258, %v4250
    %v5315 = vpack.c.b16 %v4259, %v4251
    %v5316 = vpack.c.b16 %v4260, %v4252
    %v5317 = vpack.c.b16 %v4269, %v4261
    %v5318 = vpack.c.b16 %v4270, %v4262
    %v5319 = vpack.c.b16 %v4271, %v4263
    %v5320 = vpack.c.b16 %v4272, %v4264
    %v5321 = vpack.c.b16 %v4273, %v4265
    %v5322 = vpack.c.b16 %v4274, %v4266
    %v5323 = vpack.c.b16 %v4275, %v4267
    %v5324 = vpack.c.b16 %v4276, %v4268
    %v5325 = vpack.c.b16 %v4285, %v4277
    %v5326 = vpack.c.b16 %v4286, %v4278
    %v5327 = vpack.c.b16 %v4287, %v4279
    %v5328 = vpack.c.b16 %v4288, %v4280
    %v5329 = vpack.c.b16 %v4289, %v4281
    %v5330 = vpack.c.b16 %v4290, %v4282
    %v5331 = vpack.c.b16 %v4291, %v4283
    %v5332 = vpack.c.b16 %v4292, %v4284
    %v5333 = vpack.c.b16 %v4301, %v4293
    %v5334 = vpack.c.b16 %v4302, %v4294
    %v5335 = vpack.c.b16 %v4303, %v4295
    %v5336 = vpack.c.b16 %v4304, %v4296
    %v5337 = vpack.c.b16 %v4305, %v4297
    %v5338 = vpack.c.b16 %v4306, %v4298
    %v5339 = vpack.c.b16 %v4307, %v4299
    %v5340 = vpack.c.b16 %v4308, %v4300
    %v5341 = vpack.c.b16 %v4317, %v4309
    %v5342 = vpack.c.b16 %v4318, %v4310
    %v5343 = vpack.c.b16 %v4319, %v4311
    %v5344 = vpack.c.b16 %v4320, %v4312
    %v5345 = vpack.c.b16 %v4321, %v4313
    %v5346 = vpack.c.b16 %v4322, %v4314
    %v5347 = vpack.c.b16 %v4323, %v4315
    %v5348 = vpack.c.b16 %v4324, %v4316
    %6373 = vmatprep.subr.bf16.mxu0 %v4382
    %6374 = vmatpush1.bf16.msra.mxu0 %v4381
    %6375 = vmatprep.subr.bf16.mxu0 %v4374
    %6376 = vmatpush1.bf16.msra.mxu0 %v4373
    %6377 = vmatprep.subr.bf16.mxu0 %v4366
    %6378 = vmatpush1.bf16.msra.mxu0 %v4365
    %6379 = vmatprep.subr.bf16.mxu0 %v4358
    %6380 = vmatpush1.bf16.msra.mxu0 %v4357
    %6381 = vmatprep.subr.bf16.mxu0 %v4350
    %6382 = vmatpush1.bf16.msra.mxu0 %v4349
    %6383 = vmatprep.subr.bf16.mxu0 %v4342
    %6384 = vmatpush1.bf16.msra.mxu0 %v4341
    %6385 = vmatprep.subr.bf16.mxu0 %v4334
    %6386 = vmatpush1.bf16.msra.mxu0 %v4333
    %6387 = vmatprep.subr.bf16.mxu0 %v4326
    %6388 = vmatpush1.bf16.msra.mxu0 %v4325
    %6389 = vmatprep.subr.bf16.mxu0 %v4446
    %6390 = vmatpush2.bf16.msra.mxu0 %v4445
    %6391 = vmatprep.subr.bf16.mxu0 %v4438
    %6392 = vmatpush2.bf16.msra.mxu0 %v4437
    %6393 = vmatprep.subr.bf16.mxu0 %v4430
    %6394 = vmatpush2.bf16.msra.mxu0 %v4429
    %6395 = vmatprep.subr.bf16.mxu0 %v4422
    %6396 = vmatpush2.bf16.msra.mxu0 %v4421
    %6397 = vmatprep.subr.bf16.mxu0 %v4414
    %6398 = vmatpush2.bf16.msra.mxu0 %v4413
    %6399 = vmatprep.subr.bf16.mxu0 %v4406
    %6400 = vmatpush2.bf16.msra.mxu0 %v4405
    %6401 = vmatprep.subr.bf16.mxu0 %v4398
    %6402 = vmatpush2.bf16.msra.mxu0 %v4397
    %6403 = vmatprep.subr.bf16.mxu0 %v4390
    %6404 = vmatpush2.bf16.msra.mxu0 %v4389
    %6405 = vmatprep.mubr.bf16.mxu0 %v172
    %6406 = vmatmul.mubr.bf16.gmra.mxu0 %v171
    %v6407 = vpop.f32.mrf.mxu0
    %v6408 = vadd.f32 %v1216, %v6407
    %v6409 = vpop.f32.mrf.mxu0
    %v6410 = vadd.f32 %v1220, %v6409
    %v6411 = vpop.f32.mrf.mxu0
    %v6412 = vpop.f32.mrf.mxu0
    %6413 = vdwg.mxu0
    %6414 = vmatprep.subr.bf16.mxu0 %v4510
    %6415 = vmatpush1.bf16.msra.mxu0 %v4509
    %6416 = vmatprep.subr.bf16.mxu0 %v4502
    %6417 = vmatpush1.bf16.msra.mxu0 %v4501
    %6418 = vmatprep.subr.bf16.mxu0 %v4494
    %6419 = vmatpush1.bf16.msra.mxu0 %v4493
    %6420 = vmatprep.subr.bf16.mxu0 %v4486
    %6421 = vmatpush1.bf16.msra.mxu0 %v4485
    %6422 = vmatprep.subr.bf16.mxu0 %v4478
    %6423 = vmatpush1.bf16.msra.mxu0 %v4477
    %6424 = vmatprep.subr.bf16.mxu0 %v4470
    %6425 = vmatpush1.bf16.msra.mxu0 %v4469
    %6426 = vmatprep.subr.bf16.mxu0 %v4462
    %6427 = vmatpush1.bf16.msra.mxu0 %v4461
    %6428 = vmatprep.subr.bf16.mxu0 %v4454
    %6429 = vmatpush1.bf16.msra.mxu0 %v4453
    %6430 = vmatprep.subr.bf16.mxu0 %v4574
    %6431 = vmatpush2.bf16.msra.mxu0 %v4573
    %6432 = vmatprep.subr.bf16.mxu0 %v4566
    %6433 = vmatpush2.bf16.msra.mxu0 %v4565
    %6434 = vmatprep.subr.bf16.mxu0 %v4558
    %6435 = vmatpush2.bf16.msra.mxu0 %v4557
    %6436 = vmatprep.subr.bf16.mxu0 %v4550
    %6437 = vmatpush2.bf16.msra.mxu0 %v4549
    %6438 = vmatprep.subr.bf16.mxu0 %v4542
    %6439 = vmatpush2.bf16.msra.mxu0 %v4541
    %6440 = vmatprep.subr.bf16.mxu0 %v4534
    %6441 = vmatpush2.bf16.msra.mxu0 %v4533
    %6442 = vmatprep.subr.bf16.mxu0 %v4526
    %6443 = vmatpush2.bf16.msra.mxu0 %v4525
    %6444 = vmatprep.subr.bf16.mxu0 %v4518
    %6445 = vmatpush2.bf16.msra.mxu0 %v4517
    %6446 = vmatprep.mubr.bf16.mxu0 %v174
    %6447 = vmatmul.mubr.bf16.gmra.mxu0 %v173
    %v6448 = vpop.f32.mrf.mxu0
    %v6449 = vadd.f32 %v6408, %v6448
    %v6450 = vpop.f32.mrf.mxu0
    %v6451 = vadd.f32 %v6410, %v6450
    %v6452 = vpop.f32.mrf.mxu0
    %v6453 = vpop.f32.mrf.mxu0
    %6454 = vdwg.mxu0
    %6455 = vmatprep.subr.bf16.mxu0 %v4638
    %6456 = vmatpush1.bf16.msra.mxu0 %v4637
    %6457 = vmatprep.subr.bf16.mxu0 %v4630
    %6458 = vmatpush1.bf16.msra.mxu0 %v4629
    %6459 = vmatprep.subr.bf16.mxu0 %v4622
    %6460 = vmatpush1.bf16.msra.mxu0 %v4621
    %6461 = vmatprep.subr.bf16.mxu0 %v4614
    %6462 = vmatpush1.bf16.msra.mxu0 %v4613
    %6463 = vmatprep.subr.bf16.mxu0 %v4606
    %6464 = vmatpush1.bf16.msra.mxu0 %v4605
    %6465 = vmatprep.subr.bf16.mxu0 %v4598
    %6466 = vmatpush1.bf16.msra.mxu0 %v4597
    %6467 = vmatprep.subr.bf16.mxu0 %v4590
    %6468 = vmatpush1.bf16.msra.mxu0 %v4589
    %6469 = vmatprep.subr.bf16.mxu0 %v4582
    %6470 = vmatpush1.bf16.msra.mxu0 %v4581
    %6471 = vmatprep.subr.bf16.mxu0 %v4702
    %6472 = vmatpush2.bf16.msra.mxu0 %v4701
    %6473 = vmatprep.subr.bf16.mxu0 %v4694
    %6474 = vmatpush2.bf16.msra.mxu0 %v4693
    %6475 = vmatprep.subr.bf16.mxu0 %v4686
    %6476 = vmatpush2.bf16.msra.mxu0 %v4685
    %6477 = vmatprep.subr.bf16.mxu0 %v4678
    %6478 = vmatpush2.bf16.msra.mxu0 %v4677
    %6479 = vmatprep.subr.bf16.mxu0 %v4670
    %6480 = vmatpush2.bf16.msra.mxu0 %v4669
    %6481 = vmatprep.subr.bf16.mxu0 %v4662
    %6482 = vmatpush2.bf16.msra.mxu0 %v4661
    %6483 = vmatprep.subr.bf16.mxu0 %v4654
    %6484 = vmatpush2.bf16.msra.mxu0 %v4653
    %6485 = vmatprep.subr.bf16.mxu0 %v4646
    %6486 = vmatpush2.bf16.msra.mxu0 %v4645
    %6487 = vmatprep.mubr.bf16.mxu0 %v176
    %6488 = vmatmul.mubr.bf16.gmra.mxu0 %v175
    %v6489 = vpop.f32.mrf.mxu0
    %v6490 = vadd.f32 %v6449, %v6489
    %v6491 = vpop.f32.mrf.mxu0
    %v6492 = vadd.f32 %v6451, %v6491
    %v6493 = vpop.f32.mrf.mxu0
    %v6494 = vpop.f32.mrf.mxu0
    %6495 = vdwg.mxu0
    %6496 = vmatprep.subr.bf16.mxu0 %v4766
    %6497 = vmatpush1.bf16.msra.mxu0 %v4765
    %6498 = vmatprep.subr.bf16.mxu0 %v4758
    %6499 = vmatpush1.bf16.msra.mxu0 %v4757
    %6500 = vmatprep.subr.bf16.mxu0 %v4750
    %6501 = vmatpush1.bf16.msra.mxu0 %v4749
    %6502 = vmatprep.subr.bf16.mxu0 %v4742
    %6503 = vmatpush1.bf16.msra.mxu0 %v4741
    %6504 = vmatprep.subr.bf16.mxu0 %v4734
    %6505 = vmatpush1.bf16.msra.mxu0 %v4733
    %6506 = vmatprep.subr.bf16.mxu0 %v4726
    %6507 = vmatpush1.bf16.msra.mxu0 %v4725
    %6508 = vmatprep.subr.bf16.mxu0 %v4718
    %6509 = vmatpush1.bf16.msra.mxu0 %v4717
    %6510 = vmatprep.subr.bf16.mxu0 %v4710
    %6511 = vmatpush1.bf16.msra.mxu0 %v4709
    %6512 = vmatprep.subr.bf16.mxu0 %v4830
    %6513 = vmatpush2.bf16.msra.mxu0 %v4829
    %6514 = vmatprep.subr.bf16.mxu0 %v4822
    %6515 = vmatpush2.bf16.msra.mxu0 %v4821
    %6516 = vmatprep.subr.bf16.mxu0 %v4814
    %6517 = vmatpush2.bf16.msra.mxu0 %v4813
    %6518 = vmatprep.subr.bf16.mxu0 %v4806
    %6519 = vmatpush2.bf16.msra.mxu0 %v4805
    %6520 = vmatprep.subr.bf16.mxu0 %v4798
    %6521 = vmatpush2.bf16.msra.mxu0 %v4797
    %6522 = vmatprep.subr.bf16.mxu0 %v4790
    %6523 = vmatpush2.bf16.msra.mxu0 %v4789
    %6524 = vmatprep.subr.bf16.mxu0 %v4782
    %6525 = vmatpush2.bf16.msra.mxu0 %v4781
    %6526 = vmatprep.subr.bf16.mxu0 %v4774
    %6527 = vmatpush2.bf16.msra.mxu0 %v4773
    %6528 = vmatprep.mubr.bf16.mxu0 %v178
    %6529 = vmatmul.mubr.bf16.gmra.mxu0 %v177
    %v6530 = vpop.f32.mrf.mxu0
    %v6531 = vadd.f32 %v6490, %v6530
    %v6532 = vpop.f32.mrf.mxu0
    %v6533 = vadd.f32 %v6492, %v6532
    %v6534 = vpop.f32.mrf.mxu0
    %v6535 = vpop.f32.mrf.mxu0
    %6536 = vdwg.mxu0
    %6537 = vmatprep.subr.bf16.mxu0 %v4894
    %6538 = vmatpush1.bf16.msra.mxu0 %v4893
    %6539 = vmatprep.subr.bf16.mxu0 %v4886
    %6540 = vmatpush1.bf16.msra.mxu0 %v4885
    %6541 = vmatprep.subr.bf16.mxu0 %v4878
    %6542 = vmatpush1.bf16.msra.mxu0 %v4877
    %6543 = vmatprep.subr.bf16.mxu0 %v4870
    %6544 = vmatpush1.bf16.msra.mxu0 %v4869
    %6545 = vmatprep.subr.bf16.mxu0 %v4862
    %6546 = vmatpush1.bf16.msra.mxu0 %v4861
    %6547 = vmatprep.subr.bf16.mxu0 %v4854
    %6548 = vmatpush1.bf16.msra.mxu0 %v4853
    %6549 = vmatprep.subr.bf16.mxu0 %v4846
    %6550 = vmatpush1.bf16.msra.mxu0 %v4845
    %6551 = vmatprep.subr.bf16.mxu0 %v4838
    %6552 = vmatpush1.bf16.msra.mxu0 %v4837
    %6553 = vmatprep.subr.bf16.mxu0 %v4958
    %6554 = vmatpush2.bf16.msra.mxu0 %v4957
    %6555 = vmatprep.subr.bf16.mxu0 %v4950
    %6556 = vmatpush2.bf16.msra.mxu0 %v4949
    %6557 = vmatprep.subr.bf16.mxu0 %v4942
    %6558 = vmatpush2.bf16.msra.mxu0 %v4941
    %6559 = vmatprep.subr.bf16.mxu0 %v4934
    %6560 = vmatpush2.bf16.msra.mxu0 %v4933
    %6561 = vmatprep.subr.bf16.mxu0 %v4926
    %6562 = vmatpush2.bf16.msra.mxu0 %v4925
    %6563 = vmatprep.subr.bf16.mxu0 %v4918
    %6564 = vmatpush2.bf16.msra.mxu0 %v4917
    %6565 = vmatprep.subr.bf16.mxu0 %v4910
    %6566 = vmatpush2.bf16.msra.mxu0 %v4909
    %6567 = vmatprep.subr.bf16.mxu0 %v4902
    %6568 = vmatpush2.bf16.msra.mxu0 %v4901
    %6569 = vmatprep.mubr.bf16.mxu0 %v180
    %6570 = vmatmul.mubr.bf16.gmra.mxu0 %v179
    %v6571 = vpop.f32.mrf.mxu0
    %v6572 = vadd.f32 %v6531, %v6571
    %v6573 = vpop.f32.mrf.mxu0
    %v6574 = vadd.f32 %v6533, %v6573
    %v6575 = vpop.f32.mrf.mxu0
    %v6576 = vpop.f32.mrf.mxu0
    %6577 = vdwg.mxu0
    %6578 = vmatprep.subr.bf16.mxu0 %v5022
    %6579 = vmatpush1.bf16.msra.mxu0 %v5021
    %6580 = vmatprep.subr.bf16.mxu0 %v5014
    %6581 = vmatpush1.bf16.msra.mxu0 %v5013
    %6582 = vmatprep.subr.bf16.mxu0 %v5006
    %6583 = vmatpush1.bf16.msra.mxu0 %v5005
    %6584 = vmatprep.subr.bf16.mxu0 %v4998
    %6585 = vmatpush1.bf16.msra.mxu0 %v4997
    %6586 = vmatprep.subr.bf16.mxu0 %v4990
    %6587 = vmatpush1.bf16.msra.mxu0 %v4989
    %6588 = vmatprep.subr.bf16.mxu0 %v4982
    %6589 = vmatpush1.bf16.msra.mxu0 %v4981
    %6590 = vmatprep.subr.bf16.mxu0 %v4974
    %6591 = vmatpush1.bf16.msra.mxu0 %v4973
    %6592 = vmatprep.subr.bf16.mxu0 %v4966
    %6593 = vmatpush1.bf16.msra.mxu0 %v4965
    %6594 = vmatprep.subr.bf16.mxu0 %v5086
    %6595 = vmatpush2.bf16.msra.mxu0 %v5085
    %6596 = vmatprep.subr.bf16.mxu0 %v5078
    %6597 = vmatpush2.bf16.msra.mxu0 %v5077
    %6598 = vmatprep.subr.bf16.mxu0 %v5070
    %6599 = vmatpush2.bf16.msra.mxu0 %v5069
    %6600 = vmatprep.subr.bf16.mxu0 %v5062
    %6601 = vmatpush2.bf16.msra.mxu0 %v5061
    %6602 = vmatprep.subr.bf16.mxu0 %v5054
    %6603 = vmatpush2.bf16.msra.mxu0 %v5053
    %6604 = vmatprep.subr.bf16.mxu0 %v5046
    %6605 = vmatpush2.bf16.msra.mxu0 %v5045
    %6606 = vmatprep.subr.bf16.mxu0 %v5038
    %6607 = vmatpush2.bf16.msra.mxu0 %v5037
    %6608 = vmatprep.subr.bf16.mxu0 %v5030
    %6609 = vmatpush2.bf16.msra.mxu0 %v5029
    %6610 = vmatprep.mubr.bf16.mxu0 %v182
    %6611 = vmatmul.mubr.bf16.gmra.mxu0 %v181
    %v6612 = vpop.f32.mrf.mxu0
    %v6613 = vadd.f32 %v6572, %v6612
    %v6614 = vpop.f32.mrf.mxu0
    %v6615 = vadd.f32 %v6574, %v6614
    %v6616 = vpop.f32.mrf.mxu0
    %v6617 = vpop.f32.mrf.mxu0
    %6618 = vdwg.mxu0
    %6619 = vmatprep.subr.bf16.mxu0 %v5150
    %6620 = vmatpush1.bf16.msra.mxu0 %v5149
    %6621 = vmatprep.subr.bf16.mxu0 %v5142
    %6622 = vmatpush1.bf16.msra.mxu0 %v5141
    %6623 = vmatprep.subr.bf16.mxu0 %v5134
    %6624 = vmatpush1.bf16.msra.mxu0 %v5133
    %6625 = vmatprep.subr.bf16.mxu0 %v5126
    %6626 = vmatpush1.bf16.msra.mxu0 %v5125
    %6627 = vmatprep.subr.bf16.mxu0 %v5118
    %6628 = vmatpush1.bf16.msra.mxu0 %v5117
    %6629 = vmatprep.subr.bf16.mxu0 %v5110
    %6630 = vmatpush1.bf16.msra.mxu0 %v5109
    %6631 = vmatprep.subr.bf16.mxu0 %v5102
    %6632 = vmatpush1.bf16.msra.mxu0 %v5101
    %6633 = vmatprep.subr.bf16.mxu0 %v5094
    %6634 = vmatpush1.bf16.msra.mxu0 %v5093
    %6635 = vmatprep.subr.bf16.mxu0 %v5214
    %6636 = vmatpush2.bf16.msra.mxu0 %v5213
    %6637 = vmatprep.subr.bf16.mxu0 %v5206
    %6638 = vmatpush2.bf16.msra.mxu0 %v5205
    %6639 = vmatprep.subr.bf16.mxu0 %v5198
    %6640 = vmatpush2.bf16.msra.mxu0 %v5197
    %6641 = vmatprep.subr.bf16.mxu0 %v5190
    %6642 = vmatpush2.bf16.msra.mxu0 %v5189
    %6643 = vmatprep.subr.bf16.mxu0 %v5182
    %6644 = vmatpush2.bf16.msra.mxu0 %v5181
    %6645 = vmatprep.subr.bf16.mxu0 %v5174
    %6646 = vmatpush2.bf16.msra.mxu0 %v5173
    %6647 = vmatprep.subr.bf16.mxu0 %v5166
    %6648 = vmatpush2.bf16.msra.mxu0 %v5165
    %6649 = vmatprep.subr.bf16.mxu0 %v5158
    %6650 = vmatpush2.bf16.msra.mxu0 %v5157
    %6651 = vmatprep.mubr.bf16.mxu0 %v184
    %6652 = vmatmul.mubr.bf16.gmra.mxu0 %v183
    %v6653 = vpop.f32.mrf.mxu0
    %v6654 = vadd.f32 %v6613, %v6653
    %v6655 = vpop.f32.mrf.mxu0
    %v6656 = vadd.f32 %v6615, %v6655
    %v6657 = vpop.f32.mrf.mxu0
    %v6658 = vpop.f32.mrf.mxu0
    %6659 = vdwg.mxu0
    %6660 = vmatprep.subr.bf16.mxu0 %v5278
    %6661 = vmatpush1.bf16.msra.mxu0 %v5277
    %6662 = vmatprep.subr.bf16.mxu0 %v5270
    %6663 = vmatpush1.bf16.msra.mxu0 %v5269
    %6664 = vmatprep.subr.bf16.mxu0 %v5262
    %6665 = vmatpush1.bf16.msra.mxu0 %v5261
    %6666 = vmatprep.subr.bf16.mxu0 %v5254
    %6667 = vmatpush1.bf16.msra.mxu0 %v5253
    %6668 = vmatprep.subr.bf16.mxu0 %v5246
    %6669 = vmatpush1.bf16.msra.mxu0 %v5245
    %6670 = vmatprep.subr.bf16.mxu0 %v5238
    %6671 = vmatpush1.bf16.msra.mxu0 %v5237
    %6672 = vmatprep.subr.bf16.mxu0 %v5230
    %6673 = vmatpush1.bf16.msra.mxu0 %v5229
    %6674 = vmatprep.subr.bf16.mxu0 %v5222
    %6675 = vmatpush1.bf16.msra.mxu0 %v5221
    %6676 = vmatprep.subr.bf16.mxu0 %v5342
    %6677 = vmatpush2.bf16.msra.mxu0 %v5341
    %6678 = vmatprep.subr.bf16.mxu0 %v5334
    %6679 = vmatpush2.bf16.msra.mxu0 %v5333
    %6680 = vmatprep.subr.bf16.mxu0 %v5326
    %6681 = vmatpush2.bf16.msra.mxu0 %v5325
    %6682 = vmatprep.subr.bf16.mxu0 %v5318
    %6683 = vmatpush2.bf16.msra.mxu0 %v5317
    %6684 = vmatprep.subr.bf16.mxu0 %v5310
    %6685 = vmatpush2.bf16.msra.mxu0 %v5309
    %6686 = vmatprep.subr.bf16.mxu0 %v5302
    %6687 = vmatpush2.bf16.msra.mxu0 %v5301
    %6688 = vmatprep.subr.bf16.mxu0 %v5294
    %6689 = vmatpush2.bf16.msra.mxu0 %v5293
    %6690 = vmatprep.subr.bf16.mxu0 %v5286
    %6691 = vmatpush2.bf16.msra.mxu0 %v5285
    %6692 = vmatprep.mubr.bf16.mxu0 %v186
    %6693 = vmatmul.mubr.bf16.gmra.mxu0 %v185
    %v6694 = vpop.f32.mrf.mxu0
    %v6695 = vadd.f32 %v6654, %v6694
    %v6696 = vpop.f32.mrf.mxu0
    %v6697 = vadd.f32 %v6656, %v6696
    %v6698 = vpop.f32.mrf.mxu0
    %v6699 = vpop.f32.mrf.mxu0
    %6700 = vdwg.mxu0
    %6701 = vmatprep.subr.bf16.mxu0 %v4384
    %6702 = vmatpush1.bf16.msra.mxu0 %v4383
    %6703 = vmatprep.subr.bf16.mxu0 %v4376
    %6704 = vmatpush1.bf16.msra.mxu0 %v4375
    %6705 = vmatprep.subr.bf16.mxu0 %v4368
    %6706 = vmatpush1.bf16.msra.mxu0 %v4367
    %6707 = vmatprep.subr.bf16.mxu0 %v4360
    %6708 = vmatpush1.bf16.msra.mxu0 %v4359
    %6709 = vmatprep.subr.bf16.mxu0 %v4352
    %6710 = vmatpush1.bf16.msra.mxu0 %v4351
    %6711 = vmatprep.subr.bf16.mxu0 %v4344
    %6712 = vmatpush1.bf16.msra.mxu0 %v4343
    %6713 = vmatprep.subr.bf16.mxu0 %v4336
    %6714 = vmatpush1.bf16.msra.mxu0 %v4335
    %6715 = vmatprep.subr.bf16.mxu0 %v4328
    %6716 = vmatpush1.bf16.msra.mxu0 %v4327
    %6717 = vmatprep.subr.bf16.mxu0 %v4448
    %6718 = vmatpush2.bf16.msra.mxu0 %v4447
    %6719 = vmatprep.subr.bf16.mxu0 %v4440
    %6720 = vmatpush2.bf16.msra.mxu0 %v4439
    %6721 = vmatprep.subr.bf16.mxu0 %v4432
    %6722 = vmatpush2.bf16.msra.mxu0 %v4431
    %6723 = vmatprep.subr.bf16.mxu0 %v4424
    %6724 = vmatpush2.bf16.msra.mxu0 %v4423
    %6725 = vmatprep.subr.bf16.mxu0 %v4416
    %6726 = vmatpush2.bf16.msra.mxu0 %v4415
    %6727 = vmatprep.subr.bf16.mxu0 %v4408
    %6728 = vmatpush2.bf16.msra.mxu0 %v4407
    %6729 = vmatprep.subr.bf16.mxu0 %v4400
    %6730 = vmatpush2.bf16.msra.mxu0 %v4399
    %6731 = vmatprep.subr.bf16.mxu0 %v4392
    %6732 = vmatpush2.bf16.msra.mxu0 %v4391
    %6733 = vmatprep.mubr.bf16.mxu0 %v172
    %6734 = vmatmul.mubr.bf16.gmra.mxu0 %v171
    %v6735 = vpop.f32.mrf.mxu0
    %v6736 = vadd.f32 %v1224, %v6735
    %v6737 = vpop.f32.mrf.mxu0
    %v6738 = vadd.f32 %v1228, %v6737
    %v6739 = vpop.f32.mrf.mxu0
    %v6740 = vpop.f32.mrf.mxu0
    %6741 = vdwg.mxu0
    %6742 = vmatprep.subr.bf16.mxu0 %v4512
    %6743 = vmatpush1.bf16.msra.mxu0 %v4511
    %6744 = vmatprep.subr.bf16.mxu0 %v4504
    %6745 = vmatpush1.bf16.msra.mxu0 %v4503
    %6746 = vmatprep.subr.bf16.mxu0 %v4496
    %6747 = vmatpush1.bf16.msra.mxu0 %v4495
    %6748 = vmatprep.subr.bf16.mxu0 %v4488
    %6749 = vmatpush1.bf16.msra.mxu0 %v4487
    %6750 = vmatprep.subr.bf16.mxu0 %v4480
    %6751 = vmatpush1.bf16.msra.mxu0 %v4479
    %6752 = vmatprep.subr.bf16.mxu0 %v4472
    %6753 = vmatpush1.bf16.msra.mxu0 %v4471
    %6754 = vmatprep.subr.bf16.mxu0 %v4464
    %6755 = vmatpush1.bf16.msra.mxu0 %v4463
    %6756 = vmatprep.subr.bf16.mxu0 %v4456
    %6757 = vmatpush1.bf16.msra.mxu0 %v4455
    %6758 = vmatprep.subr.bf16.mxu0 %v4576
    %6759 = vmatpush2.bf16.msra.mxu0 %v4575
    %6760 = vmatprep.subr.bf16.mxu0 %v4568
    %6761 = vmatpush2.bf16.msra.mxu0 %v4567
    %6762 = vmatprep.subr.bf16.mxu0 %v4560
    %6763 = vmatpush2.bf16.msra.mxu0 %v4559
    %6764 = vmatprep.subr.bf16.mxu0 %v4552
    %6765 = vmatpush2.bf16.msra.mxu0 %v4551
    %6766 = vmatprep.subr.bf16.mxu0 %v4544
    %6767 = vmatpush2.bf16.msra.mxu0 %v4543
    %6768 = vmatprep.subr.bf16.mxu0 %v4536
    %6769 = vmatpush2.bf16.msra.mxu0 %v4535
    %6770 = vmatprep.subr.bf16.mxu0 %v4528
    %6771 = vmatpush2.bf16.msra.mxu0 %v4527
    %6772 = vmatprep.subr.bf16.mxu0 %v4520
    %6773 = vmatpush2.bf16.msra.mxu0 %v4519
    %6774 = vmatprep.mubr.bf16.mxu0 %v174
    %6775 = vmatmul.mubr.bf16.gmra.mxu0 %v173
    %v6776 = vpop.f32.mrf.mxu0
    %v6777 = vadd.f32 %v6736, %v6776
    %v6778 = vpop.f32.mrf.mxu0
    %v6779 = vadd.f32 %v6738, %v6778
    %v6780 = vpop.f32.mrf.mxu0
    %v6781 = vpop.f32.mrf.mxu0
    %6782 = vdwg.mxu0
    %6783 = vmatprep.subr.bf16.mxu0 %v4640
    %6784 = vmatpush1.bf16.msra.mxu0 %v4639
    %6785 = vmatprep.subr.bf16.mxu0 %v4632
    %6786 = vmatpush1.bf16.msra.mxu0 %v4631
    %6787 = vmatprep.subr.bf16.mxu0 %v4624
    %6788 = vmatpush1.bf16.msra.mxu0 %v4623
    %6789 = vmatprep.subr.bf16.mxu0 %v4616
    %6790 = vmatpush1.bf16.msra.mxu0 %v4615
    %6791 = vmatprep.subr.bf16.mxu0 %v4608
    %6792 = vmatpush1.bf16.msra.mxu0 %v4607
    %6793 = vmatprep.subr.bf16.mxu0 %v4600
    %6794 = vmatpush1.bf16.msra.mxu0 %v4599
    %6795 = vmatprep.subr.bf16.mxu0 %v4592
    %6796 = vmatpush1.bf16.msra.mxu0 %v4591
    %6797 = vmatprep.subr.bf16.mxu0 %v4584
    %6798 = vmatpush1.bf16.msra.mxu0 %v4583
    %6799 = vmatprep.subr.bf16.mxu0 %v4704
    %6800 = vmatpush2.bf16.msra.mxu0 %v4703
    %6801 = vmatprep.subr.bf16.mxu0 %v4696
    %6802 = vmatpush2.bf16.msra.mxu0 %v4695
    %6803 = vmatprep.subr.bf16.mxu0 %v4688
    %6804 = vmatpush2.bf16.msra.mxu0 %v4687
    %6805 = vmatprep.subr.bf16.mxu0 %v4680
    %6806 = vmatpush2.bf16.msra.mxu0 %v4679
    %6807 = vmatprep.subr.bf16.mxu0 %v4672
    %6808 = vmatpush2.bf16.msra.mxu0 %v4671
    %6809 = vmatprep.subr.bf16.mxu0 %v4664
    %6810 = vmatpush2.bf16.msra.mxu0 %v4663
    %6811 = vmatprep.subr.bf16.mxu0 %v4656
    %6812 = vmatpush2.bf16.msra.mxu0 %v4655
    %6813 = vmatprep.subr.bf16.mxu0 %v4648
    %6814 = vmatpush2.bf16.msra.mxu0 %v4647
    %6815 = vmatprep.mubr.bf16.mxu0 %v176
    %6816 = vmatmul.mubr.bf16.gmra.mxu0 %v175
    %v6817 = vpop.f32.mrf.mxu0
    %v6818 = vadd.f32 %v6777, %v6817
    %v6819 = vpop.f32.mrf.mxu0
    %v6820 = vadd.f32 %v6779, %v6819
    %v6821 = vpop.f32.mrf.mxu0
    %v6822 = vpop.f32.mrf.mxu0
    %6823 = vdwg.mxu0
    %6824 = vmatprep.subr.bf16.mxu0 %v4768
    %6825 = vmatpush1.bf16.msra.mxu0 %v4767
    %6826 = vmatprep.subr.bf16.mxu0 %v4760
    %6827 = vmatpush1.bf16.msra.mxu0 %v4759
    %6828 = vmatprep.subr.bf16.mxu0 %v4752
    %6829 = vmatpush1.bf16.msra.mxu0 %v4751
    %6830 = vmatprep.subr.bf16.mxu0 %v4744
    %6831 = vmatpush1.bf16.msra.mxu0 %v4743
    %6832 = vmatprep.subr.bf16.mxu0 %v4736
    %6833 = vmatpush1.bf16.msra.mxu0 %v4735
    %6834 = vmatprep.subr.bf16.mxu0 %v4728
    %6835 = vmatpush1.bf16.msra.mxu0 %v4727
    %6836 = vmatprep.subr.bf16.mxu0 %v4720
    %6837 = vmatpush1.bf16.msra.mxu0 %v4719
    %6838 = vmatprep.subr.bf16.mxu0 %v4712
    %6839 = vmatpush1.bf16.msra.mxu0 %v4711
    %6840 = vmatprep.subr.bf16.mxu0 %v4832
    %6841 = vmatpush2.bf16.msra.mxu0 %v4831
    %6842 = vmatprep.subr.bf16.mxu0 %v4824
    %6843 = vmatpush2.bf16.msra.mxu0 %v4823
    %6844 = vmatprep.subr.bf16.mxu0 %v4816
    %6845 = vmatpush2.bf16.msra.mxu0 %v4815
    %6846 = vmatprep.subr.bf16.mxu0 %v4808
    %6847 = vmatpush2.bf16.msra.mxu0 %v4807
    %6848 = vmatprep.subr.bf16.mxu0 %v4800
    %6849 = vmatpush2.bf16.msra.mxu0 %v4799
    %6850 = vmatprep.subr.bf16.mxu0 %v4792
    %6851 = vmatpush2.bf16.msra.mxu0 %v4791
    %6852 = vmatprep.subr.bf16.mxu0 %v4784
    %6853 = vmatpush2.bf16.msra.mxu0 %v4783
    %6854 = vmatprep.subr.bf16.mxu0 %v4776
    %6855 = vmatpush2.bf16.msra.mxu0 %v4775
    %6856 = vmatprep.mubr.bf16.mxu0 %v178
    %6857 = vmatmul.mubr.bf16.gmra.mxu0 %v177
    %v6858 = vpop.f32.mrf.mxu0
    %v6859 = vadd.f32 %v6818, %v6858
    %v6860 = vpop.f32.mrf.mxu0
    %v6861 = vadd.f32 %v6820, %v6860
    %v6862 = vpop.f32.mrf.mxu0
    %v6863 = vpop.f32.mrf.mxu0
    %6864 = vdwg.mxu0
    %6865 = vmatprep.subr.bf16.mxu0 %v4896
    %6866 = vmatpush1.bf16.msra.mxu0 %v4895
    %6867 = vmatprep.subr.bf16.mxu0 %v4888
    %6868 = vmatpush1.bf16.msra.mxu0 %v4887
    %6869 = vmatprep.subr.bf16.mxu0 %v4880
    %6870 = vmatpush1.bf16.msra.mxu0 %v4879
    %6871 = vmatprep.subr.bf16.mxu0 %v4872
    %6872 = vmatpush1.bf16.msra.mxu0 %v4871
    %6873 = vmatprep.subr.bf16.mxu0 %v4864
    %6874 = vmatpush1.bf16.msra.mxu0 %v4863
    %6875 = vmatprep.subr.bf16.mxu0 %v4856
    %6876 = vmatpush1.bf16.msra.mxu0 %v4855
    %6877 = vmatprep.subr.bf16.mxu0 %v4848
    %6878 = vmatpush1.bf16.msra.mxu0 %v4847
    %6879 = vmatprep.subr.bf16.mxu0 %v4840
    %6880 = vmatpush1.bf16.msra.mxu0 %v4839
    %6881 = vmatprep.subr.bf16.mxu0 %v4960
    %6882 = vmatpush2.bf16.msra.mxu0 %v4959
    %6883 = vmatprep.subr.bf16.mxu0 %v4952
    %6884 = vmatpush2.bf16.msra.mxu0 %v4951
    %6885 = vmatprep.subr.bf16.mxu0 %v4944
    %6886 = vmatpush2.bf16.msra.mxu0 %v4943
    %6887 = vmatprep.subr.bf16.mxu0 %v4936
    %6888 = vmatpush2.bf16.msra.mxu0 %v4935
    %6889 = vmatprep.subr.bf16.mxu0 %v4928
    %6890 = vmatpush2.bf16.msra.mxu0 %v4927
    %6891 = vmatprep.subr.bf16.mxu0 %v4920
    %6892 = vmatpush2.bf16.msra.mxu0 %v4919
    %6893 = vmatprep.subr.bf16.mxu0 %v4912
    %6894 = vmatpush2.bf16.msra.mxu0 %v4911
    %6895 = vmatprep.subr.bf16.mxu0 %v4904
    %6896 = vmatpush2.bf16.msra.mxu0 %v4903
    %6897 = vmatprep.mubr.bf16.mxu0 %v180
    %6898 = vmatmul.mubr.bf16.gmra.mxu0 %v179
    %v6899 = vpop.f32.mrf.mxu0
    %v6900 = vadd.f32 %v6859, %v6899
    %v6901 = vpop.f32.mrf.mxu0
    %v6902 = vadd.f32 %v6861, %v6901
    %v6903 = vpop.f32.mrf.mxu0
    %v6904 = vpop.f32.mrf.mxu0
    %6905 = vdwg.mxu0
    %6906 = vmatprep.subr.bf16.mxu0 %v5024
    %6907 = vmatpush1.bf16.msra.mxu0 %v5023
    %6908 = vmatprep.subr.bf16.mxu0 %v5016
    %6909 = vmatpush1.bf16.msra.mxu0 %v5015
    %6910 = vmatprep.subr.bf16.mxu0 %v5008
    %6911 = vmatpush1.bf16.msra.mxu0 %v5007
    %6912 = vmatprep.subr.bf16.mxu0 %v5000
    %6913 = vmatpush1.bf16.msra.mxu0 %v4999
    %6914 = vmatprep.subr.bf16.mxu0 %v4992
    %6915 = vmatpush1.bf16.msra.mxu0 %v4991
    %6916 = vmatprep.subr.bf16.mxu0 %v4984
    %6917 = vmatpush1.bf16.msra.mxu0 %v4983
    %6918 = vmatprep.subr.bf16.mxu0 %v4976
    %6919 = vmatpush1.bf16.msra.mxu0 %v4975
    %6920 = vmatprep.subr.bf16.mxu0 %v4968
    %6921 = vmatpush1.bf16.msra.mxu0 %v4967
    %6922 = vmatprep.subr.bf16.mxu0 %v5088
    %6923 = vmatpush2.bf16.msra.mxu0 %v5087
    %6924 = vmatprep.subr.bf16.mxu0 %v5080
    %6925 = vmatpush2.bf16.msra.mxu0 %v5079
    %6926 = vmatprep.subr.bf16.mxu0 %v5072
    %6927 = vmatpush2.bf16.msra.mxu0 %v5071
    %6928 = vmatprep.subr.bf16.mxu0 %v5064
    %6929 = vmatpush2.bf16.msra.mxu0 %v5063
    %6930 = vmatprep.subr.bf16.mxu0 %v5056
    %6931 = vmatpush2.bf16.msra.mxu0 %v5055
    %6932 = vmatprep.subr.bf16.mxu0 %v5048
    %6933 = vmatpush2.bf16.msra.mxu0 %v5047
    %6934 = vmatprep.subr.bf16.mxu0 %v5040
    %6935 = vmatpush2.bf16.msra.mxu0 %v5039
    %6936 = vmatprep.subr.bf16.mxu0 %v5032
    %6937 = vmatpush2.bf16.msra.mxu0 %v5031
    %6938 = vmatprep.mubr.bf16.mxu0 %v182
    %6939 = vmatmul.mubr.bf16.gmra.mxu0 %v181
    %v6940 = vpop.f32.mrf.mxu0
    %v6941 = vadd.f32 %v6900, %v6940
    %v6942 = vpop.f32.mrf.mxu0
    %v6943 = vadd.f32 %v6902, %v6942
    %v6944 = vpop.f32.mrf.mxu0
    %v6945 = vpop.f32.mrf.mxu0
    %6946 = vdwg.mxu0
    %6947 = vmatprep.subr.bf16.mxu0 %v5152
    %6948 = vmatpush1.bf16.msra.mxu0 %v5151
    %6949 = vmatprep.subr.bf16.mxu0 %v5144
    %6950 = vmatpush1.bf16.msra.mxu0 %v5143
    %6951 = vmatprep.subr.bf16.mxu0 %v5136
    %6952 = vmatpush1.bf16.msra.mxu0 %v5135
    %6953 = vmatprep.subr.bf16.mxu0 %v5128
    %6954 = vmatpush1.bf16.msra.mxu0 %v5127
    %6955 = vmatprep.subr.bf16.mxu0 %v5120
    %6956 = vmatpush1.bf16.msra.mxu0 %v5119
    %6957 = vmatprep.subr.bf16.mxu0 %v5112
    %6958 = vmatpush1.bf16.msra.mxu0 %v5111
    %6959 = vmatprep.subr.bf16.mxu0 %v5104
    %6960 = vmatpush1.bf16.msra.mxu0 %v5103
    %6961 = vmatprep.subr.bf16.mxu0 %v5096
    %6962 = vmatpush1.bf16.msra.mxu0 %v5095
    %6963 = vmatprep.subr.bf16.mxu0 %v5216
    %6964 = vmatpush2.bf16.msra.mxu0 %v5215
    %6965 = vmatprep.subr.bf16.mxu0 %v5208
    %6966 = vmatpush2.bf16.msra.mxu0 %v5207
    %6967 = vmatprep.subr.bf16.mxu0 %v5200
    %6968 = vmatpush2.bf16.msra.mxu0 %v5199
    %6969 = vmatprep.subr.bf16.mxu0 %v5192
    %6970 = vmatpush2.bf16.msra.mxu0 %v5191
    %6971 = vmatprep.subr.bf16.mxu0 %v5184
    %6972 = vmatpush2.bf16.msra.mxu0 %v5183
    %6973 = vmatprep.subr.bf16.mxu0 %v5176
    %6974 = vmatpush2.bf16.msra.mxu0 %v5175
    %6975 = vmatprep.subr.bf16.mxu0 %v5168
    %6976 = vmatpush2.bf16.msra.mxu0 %v5167
    %6977 = vmatprep.subr.bf16.mxu0 %v5160
    %6978 = vmatpush2.bf16.msra.mxu0 %v5159
    %6979 = vmatprep.mubr.bf16.mxu0 %v184
    %6980 = vmatmul.mubr.bf16.gmra.mxu0 %v183
    %v6981 = vpop.f32.mrf.mxu0
    %v6982 = vadd.f32 %v6941, %v6981
    %v6983 = vpop.f32.mrf.mxu0
    %v6984 = vadd.f32 %v6943, %v6983
    %v6985 = vpop.f32.mrf.mxu0
    %v6986 = vpop.f32.mrf.mxu0
    %6987 = vdwg.mxu0
    %6988 = vmatprep.subr.bf16.mxu0 %v5280
    %6989 = vmatpush1.bf16.msra.mxu0 %v5279
    %6990 = vmatprep.subr.bf16.mxu0 %v5272
    %6991 = vmatpush1.bf16.msra.mxu0 %v5271
    %6992 = vmatprep.subr.bf16.mxu0 %v5264
    %6993 = vmatpush1.bf16.msra.mxu0 %v5263
    %6994 = vmatprep.subr.bf16.mxu0 %v5256
    %6995 = vmatpush1.bf16.msra.mxu0 %v5255
    %6996 = vmatprep.subr.bf16.mxu0 %v5248
    %6997 = vmatpush1.bf16.msra.mxu0 %v5247
    %6998 = vmatprep.subr.bf16.mxu0 %v5240
    %6999 = vmatpush1.bf16.msra.mxu0 %v5239
    %7000 = vmatprep.subr.bf16.mxu0 %v5232
    %7001 = vmatpush1.bf16.msra.mxu0 %v5231
    %7002 = vmatprep.subr.bf16.mxu0 %v5224
    %7003 = vmatpush1.bf16.msra.mxu0 %v5223
    %7004 = vmatprep.subr.bf16.mxu0 %v5344
    %7005 = vmatpush2.bf16.msra.mxu0 %v5343
    %7006 = vmatprep.subr.bf16.mxu0 %v5336
    %7007 = vmatpush2.bf16.msra.mxu0 %v5335
    %7008 = vmatprep.subr.bf16.mxu0 %v5328
    %7009 = vmatpush2.bf16.msra.mxu0 %v5327
    %7010 = vmatprep.subr.bf16.mxu0 %v5320
    %7011 = vmatpush2.bf16.msra.mxu0 %v5319
    %7012 = vmatprep.subr.bf16.mxu0 %v5312
    %7013 = vmatpush2.bf16.msra.mxu0 %v5311
    %7014 = vmatprep.subr.bf16.mxu0 %v5304
    %7015 = vmatpush2.bf16.msra.mxu0 %v5303
    %7016 = vmatprep.subr.bf16.mxu0 %v5296
    %7017 = vmatpush2.bf16.msra.mxu0 %v5295
    %7018 = vmatprep.subr.bf16.mxu0 %v5288
    %7019 = vmatpush2.bf16.msra.mxu0 %v5287
    %7020 = vmatprep.mubr.bf16.mxu0 %v186
    %7021 = vmatmul.mubr.bf16.gmra.mxu0 %v185
    %v7022 = vpop.f32.mrf.mxu0
    %v7023 = vadd.f32 %v6982, %v7022
    %v7024 = vpop.f32.mrf.mxu0
    %v7025 = vadd.f32 %v6984, %v7024
    %v7026 = vpop.f32.mrf.mxu0
    %v7027 = vpop.f32.mrf.mxu0
    %7028 = vdwg.mxu0
    %7029 = vmatprep.subr.bf16.mxu0 %v4386
    %7030 = vmatpush1.bf16.msra.mxu0 %v4385
    %7031 = vmatprep.subr.bf16.mxu0 %v4378
    %7032 = vmatpush1.bf16.msra.mxu0 %v4377
    %7033 = vmatprep.subr.bf16.mxu0 %v4370
    %7034 = vmatpush1.bf16.msra.mxu0 %v4369
    %7035 = vmatprep.subr.bf16.mxu0 %v4362
    %7036 = vmatpush1.bf16.msra.mxu0 %v4361
    %7037 = vmatprep.subr.bf16.mxu0 %v4354
    %7038 = vmatpush1.bf16.msra.mxu0 %v4353
    %7039 = vmatprep.subr.bf16.mxu0 %v4346
    %7040 = vmatpush1.bf16.msra.mxu0 %v4345
    %7041 = vmatprep.subr.bf16.mxu0 %v4338
    %7042 = vmatpush1.bf16.msra.mxu0 %v4337
    %7043 = vmatprep.subr.bf16.mxu0 %v4330
    %7044 = vmatpush1.bf16.msra.mxu0 %v4329
    %7045 = vmatprep.subr.bf16.mxu0 %v4450
    %7046 = vmatpush2.bf16.msra.mxu0 %v4449
    %7047 = vmatprep.subr.bf16.mxu0 %v4442
    %7048 = vmatpush2.bf16.msra.mxu0 %v4441
    %7049 = vmatprep.subr.bf16.mxu0 %v4434
    %7050 = vmatpush2.bf16.msra.mxu0 %v4433
    %7051 = vmatprep.subr.bf16.mxu0 %v4426
    %7052 = vmatpush2.bf16.msra.mxu0 %v4425
    %7053 = vmatprep.subr.bf16.mxu0 %v4418
    %7054 = vmatpush2.bf16.msra.mxu0 %v4417
    %7055 = vmatprep.subr.bf16.mxu0 %v4410
    %7056 = vmatpush2.bf16.msra.mxu0 %v4409
    %7057 = vmatprep.subr.bf16.mxu0 %v4402
    %7058 = vmatpush2.bf16.msra.mxu0 %v4401
    %7059 = vmatprep.subr.bf16.mxu0 %v4394
    %7060 = vmatpush2.bf16.msra.mxu0 %v4393
    %7061 = vmatprep.mubr.bf16.mxu0 %v172
    %7062 = vmatmul.mubr.bf16.gmra.mxu0 %v171
    %v7063 = vpop.f32.mrf.mxu0
    %v7064 = vadd.f32 %v1232, %v7063
    %v7065 = vpop.f32.mrf.mxu0
    %v7066 = vadd.f32 %v1236, %v7065
    %v7067 = vpop.f32.mrf.mxu0
    %v7068 = vpop.f32.mrf.mxu0
    %7069 = vdwg.mxu0
    %7070 = vmatprep.subr.bf16.mxu0 %v4514
    %7071 = vmatpush1.bf16.msra.mxu0 %v4513
    %7072 = vmatprep.subr.bf16.mxu0 %v4506
    %7073 = vmatpush1.bf16.msra.mxu0 %v4505
    %7074 = vmatprep.subr.bf16.mxu0 %v4498
    %7075 = vmatpush1.bf16.msra.mxu0 %v4497
    %7076 = vmatprep.subr.bf16.mxu0 %v4490
    %7077 = vmatpush1.bf16.msra.mxu0 %v4489
    %7078 = vmatprep.subr.bf16.mxu0 %v4482
    %7079 = vmatpush1.bf16.msra.mxu0 %v4481
    %7080 = vmatprep.subr.bf16.mxu0 %v4474
    %7081 = vmatpush1.bf16.msra.mxu0 %v4473
    %7082 = vmatprep.subr.bf16.mxu0 %v4466
    %7083 = vmatpush1.bf16.msra.mxu0 %v4465
    %7084 = vmatprep.subr.bf16.mxu0 %v4458
    %7085 = vmatpush1.bf16.msra.mxu0 %v4457
    %7086 = vmatprep.subr.bf16.mxu0 %v4578
    %7087 = vmatpush2.bf16.msra.mxu0 %v4577
    %7088 = vmatprep.subr.bf16.mxu0 %v4570
    %7089 = vmatpush2.bf16.msra.mxu0 %v4569
    %7090 = vmatprep.subr.bf16.mxu0 %v4562
    %7091 = vmatpush2.bf16.msra.mxu0 %v4561
    %7092 = vmatprep.subr.bf16.mxu0 %v4554
    %7093 = vmatpush2.bf16.msra.mxu0 %v4553
    %7094 = vmatprep.subr.bf16.mxu0 %v4546
    %7095 = vmatpush2.bf16.msra.mxu0 %v4545
    %7096 = vmatprep.subr.bf16.mxu0 %v4538
    %7097 = vmatpush2.bf16.msra.mxu0 %v4537
    %7098 = vmatprep.subr.bf16.mxu0 %v4530
    %7099 = vmatpush2.bf16.msra.mxu0 %v4529
    %7100 = vmatprep.subr.bf16.mxu0 %v4522
    %7101 = vmatpush2.bf16.msra.mxu0 %v4521
    %7102 = vmatprep.mubr.bf16.mxu0 %v174
    %7103 = vmatmul.mubr.bf16.gmra.mxu0 %v173
    %v7104 = vpop.f32.mrf.mxu0
    %v7105 = vadd.f32 %v7064, %v7104
    %v7106 = vpop.f32.mrf.mxu0
    %v7107 = vadd.f32 %v7066, %v7106
    %v7108 = vpop.f32.mrf.mxu0
    %v7109 = vpop.f32.mrf.mxu0
    %7110 = vdwg.mxu0
    %7111 = vmatprep.subr.bf16.mxu0 %v4642
    %7112 = vmatpush1.bf16.msra.mxu0 %v4641
    %7113 = vmatprep.subr.bf16.mxu0 %v4634
    %7114 = vmatpush1.bf16.msra.mxu0 %v4633
    %7115 = vmatprep.subr.bf16.mxu0 %v4626
    %7116 = vmatpush1.bf16.msra.mxu0 %v4625
    %7117 = vmatprep.subr.bf16.mxu0 %v4618
    %7118 = vmatpush1.bf16.msra.mxu0 %v4617
    %7119 = vmatprep.subr.bf16.mxu0 %v4610
    %7120 = vmatpush1.bf16.msra.mxu0 %v4609
    %7121 = vmatprep.subr.bf16.mxu0 %v4602
    %7122 = vmatpush1.bf16.msra.mxu0 %v4601
    %7123 = vmatprep.subr.bf16.mxu0 %v4594
    %7124 = vmatpush1.bf16.msra.mxu0 %v4593
    %7125 = vmatprep.subr.bf16.mxu0 %v4586
    %7126 = vmatpush1.bf16.msra.mxu0 %v4585
    %7127 = vmatprep.subr.bf16.mxu0 %v4706
    %7128 = vmatpush2.bf16.msra.mxu0 %v4705
    %7129 = vmatprep.subr.bf16.mxu0 %v4698
    %7130 = vmatpush2.bf16.msra.mxu0 %v4697
    %7131 = vmatprep.subr.bf16.mxu0 %v4690
    %7132 = vmatpush2.bf16.msra.mxu0 %v4689
    %7133 = vmatprep.subr.bf16.mxu0 %v4682
    %7134 = vmatpush2.bf16.msra.mxu0 %v4681
    %7135 = vmatprep.subr.bf16.mxu0 %v4674
    %7136 = vmatpush2.bf16.msra.mxu0 %v4673
    %7137 = vmatprep.subr.bf16.mxu0 %v4666
    %7138 = vmatpush2.bf16.msra.mxu0 %v4665
    %7139 = vmatprep.subr.bf16.mxu0 %v4658
    %7140 = vmatpush2.bf16.msra.mxu0 %v4657
    %7141 = vmatprep.subr.bf16.mxu0 %v4650
    %7142 = vmatpush2.bf16.msra.mxu0 %v4649
    %7143 = vmatprep.mubr.bf16.mxu0 %v176
    %7144 = vmatmul.mubr.bf16.gmra.mxu0 %v175
    %v7145 = vpop.f32.mrf.mxu0
    %v7146 = vadd.f32 %v7105, %v7145
    %v7147 = vpop.f32.mrf.mxu0
    %v7148 = vadd.f32 %v7107, %v7147
    %v7149 = vpop.f32.mrf.mxu0
    %v7150 = vpop.f32.mrf.mxu0
    %7151 = vdwg.mxu0
    %7152 = vmatprep.subr.bf16.mxu0 %v4770
    %7153 = vmatpush1.bf16.msra.mxu0 %v4769
    %7154 = vmatprep.subr.bf16.mxu0 %v4762
    %7155 = vmatpush1.bf16.msra.mxu0 %v4761
    %7156 = vmatprep.subr.bf16.mxu0 %v4754
    %7157 = vmatpush1.bf16.msra.mxu0 %v4753
    %7158 = vmatprep.subr.bf16.mxu0 %v4746
    %7159 = vmatpush1.bf16.msra.mxu0 %v4745
    %7160 = vmatprep.subr.bf16.mxu0 %v4738
    %7161 = vmatpush1.bf16.msra.mxu0 %v4737
    %7162 = vmatprep.subr.bf16.mxu0 %v4730
    %7163 = vmatpush1.bf16.msra.mxu0 %v4729
    %7164 = vmatprep.subr.bf16.mxu0 %v4722
    %7165 = vmatpush1.bf16.msra.mxu0 %v4721
    %7166 = vmatprep.subr.bf16.mxu0 %v4714
    %7167 = vmatpush1.bf16.msra.mxu0 %v4713
    %7168 = vmatprep.subr.bf16.mxu0 %v4834
    %7169 = vmatpush2.bf16.msra.mxu0 %v4833
    %7170 = vmatprep.subr.bf16.mxu0 %v4826
    %7171 = vmatpush2.bf16.msra.mxu0 %v4825
    %7172 = vmatprep.subr.bf16.mxu0 %v4818
    %7173 = vmatpush2.bf16.msra.mxu0 %v4817
    %7174 = vmatprep.subr.bf16.mxu0 %v4810
    %7175 = vmatpush2.bf16.msra.mxu0 %v4809
    %7176 = vmatprep.subr.bf16.mxu0 %v4802
    %7177 = vmatpush2.bf16.msra.mxu0 %v4801
    %7178 = vmatprep.subr.bf16.mxu0 %v4794
    %7179 = vmatpush2.bf16.msra.mxu0 %v4793
    %7180 = vmatprep.subr.bf16.mxu0 %v4786
    %7181 = vmatpush2.bf16.msra.mxu0 %v4785
    %7182 = vmatprep.subr.bf16.mxu0 %v4778
    %7183 = vmatpush2.bf16.msra.mxu0 %v4777
    %7184 = vmatprep.mubr.bf16.mxu0 %v178
    %7185 = vmatmul.mubr.bf16.gmra.mxu0 %v177
    %v7186 = vpop.f32.mrf.mxu0
    %v7187 = vadd.f32 %v7146, %v7186
    %v7188 = vpop.f32.mrf.mxu0
    %v7189 = vadd.f32 %v7148, %v7188
    %v7190 = vpop.f32.mrf.mxu0
    %v7191 = vpop.f32.mrf.mxu0
    %7192 = vdwg.mxu0
    %7193 = vmatprep.subr.bf16.mxu0 %v4898
    %7194 = vmatpush1.bf16.msra.mxu0 %v4897
    %7195 = vmatprep.subr.bf16.mxu0 %v4890
    %7196 = vmatpush1.bf16.msra.mxu0 %v4889
    %7197 = vmatprep.subr.bf16.mxu0 %v4882
    %7198 = vmatpush1.bf16.msra.mxu0 %v4881
    %7199 = vmatprep.subr.bf16.mxu0 %v4874
    %7200 = vmatpush1.bf16.msra.mxu0 %v4873
    %7201 = vmatprep.subr.bf16.mxu0 %v4866
    %7202 = vmatpush1.bf16.msra.mxu0 %v4865
    %7203 = vmatprep.subr.bf16.mxu0 %v4858
    %7204 = vmatpush1.bf16.msra.mxu0 %v4857
    %7205 = vmatprep.subr.bf16.mxu0 %v4850
    %7206 = vmatpush1.bf16.msra.mxu0 %v4849
    %7207 = vmatprep.subr.bf16.mxu0 %v4842
    %7208 = vmatpush1.bf16.msra.mxu0 %v4841
    %7209 = vmatprep.subr.bf16.mxu0 %v4962
    %7210 = vmatpush2.bf16.msra.mxu0 %v4961
    %7211 = vmatprep.subr.bf16.mxu0 %v4954
    %7212 = vmatpush2.bf16.msra.mxu0 %v4953
    %7213 = vmatprep.subr.bf16.mxu0 %v4946
    %7214 = vmatpush2.bf16.msra.mxu0 %v4945
    %7215 = vmatprep.subr.bf16.mxu0 %v4938
    %7216 = vmatpush2.bf16.msra.mxu0 %v4937
    %7217 = vmatprep.subr.bf16.mxu0 %v4930
    %7218 = vmatpush2.bf16.msra.mxu0 %v4929
    %7219 = vmatprep.subr.bf16.mxu0 %v4922
    %7220 = vmatpush2.bf16.msra.mxu0 %v4921
    %7221 = vmatprep.subr.bf16.mxu0 %v4914
    %7222 = vmatpush2.bf16.msra.mxu0 %v4913
    %7223 = vmatprep.subr.bf16.mxu0 %v4906
    %7224 = vmatpush2.bf16.msra.mxu0 %v4905
    %7225 = vmatprep.mubr.bf16.mxu0 %v180
    %7226 = vmatmul.mubr.bf16.gmra.mxu0 %v179
    %v7227 = vpop.f32.mrf.mxu0
    %v7228 = vadd.f32 %v7187, %v7227
    %v7229 = vpop.f32.mrf.mxu0
    %v7230 = vadd.f32 %v7189, %v7229
    %v7231 = vpop.f32.mrf.mxu0
    %v7232 = vpop.f32.mrf.mxu0
    %7233 = vdwg.mxu0
    %7234 = vmatprep.subr.bf16.mxu0 %v5026
    %7235 = vmatpush1.bf16.msra.mxu0 %v5025
    %7236 = vmatprep.subr.bf16.mxu0 %v5018
    %7237 = vmatpush1.bf16.msra.mxu0 %v5017
    %7238 = vmatprep.subr.bf16.mxu0 %v5010
    %7239 = vmatpush1.bf16.msra.mxu0 %v5009
    %7240 = vmatprep.subr.bf16.mxu0 %v5002
    %7241 = vmatpush1.bf16.msra.mxu0 %v5001
    %7242 = vmatprep.subr.bf16.mxu0 %v4994
    %7243 = vmatpush1.bf16.msra.mxu0 %v4993
    %7244 = vmatprep.subr.bf16.mxu0 %v4986
    %7245 = vmatpush1.bf16.msra.mxu0 %v4985
    %7246 = vmatprep.subr.bf16.mxu0 %v4978
    %7247 = vmatpush1.bf16.msra.mxu0 %v4977
    %7248 = vmatprep.subr.bf16.mxu0 %v4970
    %7249 = vmatpush1.bf16.msra.mxu0 %v4969
    %7250 = vmatprep.subr.bf16.mxu0 %v5090
    %7251 = vmatpush2.bf16.msra.mxu0 %v5089
    %7252 = vmatprep.subr.bf16.mxu0 %v5082
    %7253 = vmatpush2.bf16.msra.mxu0 %v5081
    %7254 = vmatprep.subr.bf16.mxu0 %v5074
    %7255 = vmatpush2.bf16.msra.mxu0 %v5073
    %7256 = vmatprep.subr.bf16.mxu0 %v5066
    %7257 = vmatpush2.bf16.msra.mxu0 %v5065
    %7258 = vmatprep.subr.bf16.mxu0 %v5058
    %7259 = vmatpush2.bf16.msra.mxu0 %v5057
    %7260 = vmatprep.subr.bf16.mxu0 %v5050
    %7261 = vmatpush2.bf16.msra.mxu0 %v5049
    %7262 = vmatprep.subr.bf16.mxu0 %v5042
    %7263 = vmatpush2.bf16.msra.mxu0 %v5041
    %7264 = vmatprep.subr.bf16.mxu0 %v5034
    %7265 = vmatpush2.bf16.msra.mxu0 %v5033
    %7266 = vmatprep.mubr.bf16.mxu0 %v182
    %7267 = vmatmul.mubr.bf16.gmra.mxu0 %v181
    %v7268 = vpop.f32.mrf.mxu0
    %v7269 = vadd.f32 %v7228, %v7268
    %v7270 = vpop.f32.mrf.mxu0
    %v7271 = vadd.f32 %v7230, %v7270
    %v7272 = vpop.f32.mrf.mxu0
    %v7273 = vpop.f32.mrf.mxu0
    %7274 = vdwg.mxu0
    %7275 = vmatprep.subr.bf16.mxu0 %v5154
    %7276 = vmatpush1.bf16.msra.mxu0 %v5153
    %7277 = vmatprep.subr.bf16.mxu0 %v5146
    %7278 = vmatpush1.bf16.msra.mxu0 %v5145
    %7279 = vmatprep.subr.bf16.mxu0 %v5138
    %7280 = vmatpush1.bf16.msra.mxu0 %v5137
    %7281 = vmatprep.subr.bf16.mxu0 %v5130
    %7282 = vmatpush1.bf16.msra.mxu0 %v5129
    %7283 = vmatprep.subr.bf16.mxu0 %v5122
    %7284 = vmatpush1.bf16.msra.mxu0 %v5121
    %7285 = vmatprep.subr.bf16.mxu0 %v5114
    %7286 = vmatpush1.bf16.msra.mxu0 %v5113
    %7287 = vmatprep.subr.bf16.mxu0 %v5106
    %7288 = vmatpush1.bf16.msra.mxu0 %v5105
    %7289 = vmatprep.subr.bf16.mxu0 %v5098
    %7290 = vmatpush1.bf16.msra.mxu0 %v5097
    %7291 = vmatprep.subr.bf16.mxu0 %v5218
    %7292 = vmatpush2.bf16.msra.mxu0 %v5217
    %7293 = vmatprep.subr.bf16.mxu0 %v5210
    %7294 = vmatpush2.bf16.msra.mxu0 %v5209
    %7295 = vmatprep.subr.bf16.mxu0 %v5202
    %7296 = vmatpush2.bf16.msra.mxu0 %v5201
    %7297 = vmatprep.subr.bf16.mxu0 %v5194
    %7298 = vmatpush2.bf16.msra.mxu0 %v5193
    %7299 = vmatprep.subr.bf16.mxu0 %v5186
    %7300 = vmatpush2.bf16.msra.mxu0 %v5185
    %7301 = vmatprep.subr.bf16.mxu0 %v5178
    %7302 = vmatpush2.bf16.msra.mxu0 %v5177
    %7303 = vmatprep.subr.bf16.mxu0 %v5170
    %7304 = vmatpush2.bf16.msra.mxu0 %v5169
    %7305 = vmatprep.subr.bf16.mxu0 %v5162
    %7306 = vmatpush2.bf16.msra.mxu0 %v5161
    %7307 = vmatprep.mubr.bf16.mxu0 %v184
    %7308 = vmatmul.mubr.bf16.gmra.mxu0 %v183
    %v7309 = vpop.f32.mrf.mxu0
    %v7310 = vadd.f32 %v7269, %v7309
    %v7311 = vpop.f32.mrf.mxu0
    %v7312 = vadd.f32 %v7271, %v7311
    %v7313 = vpop.f32.mrf.mxu0
    %v7314 = vpop.f32.mrf.mxu0
    %7315 = vdwg.mxu0
    %7316 = vmatprep.subr.bf16.mxu0 %v5282
    %7317 = vmatpush1.bf16.msra.mxu0 %v5281
    %7318 = vmatprep.subr.bf16.mxu0 %v5274
    %7319 = vmatpush1.bf16.msra.mxu0 %v5273
    %7320 = vmatprep.subr.bf16.mxu0 %v5266
    %7321 = vmatpush1.bf16.msra.mxu0 %v5265
    %7322 = vmatprep.subr.bf16.mxu0 %v5258
    %7323 = vmatpush1.bf16.msra.mxu0 %v5257
    %7324 = vmatprep.subr.bf16.mxu0 %v5250
    %7325 = vmatpush1.bf16.msra.mxu0 %v5249
    %7326 = vmatprep.subr.bf16.mxu0 %v5242
    %7327 = vmatpush1.bf16.msra.mxu0 %v5241
    %7328 = vmatprep.subr.bf16.mxu0 %v5234
    %7329 = vmatpush1.bf16.msra.mxu0 %v5233
    %7330 = vmatprep.subr.bf16.mxu0 %v5226
    %7331 = vmatpush1.bf16.msra.mxu0 %v5225
    %7332 = vmatprep.subr.bf16.mxu0 %v5346
    %7333 = vmatpush2.bf16.msra.mxu0 %v5345
    %7334 = vmatprep.subr.bf16.mxu0 %v5338
    %7335 = vmatpush2.bf16.msra.mxu0 %v5337
    %7336 = vmatprep.subr.bf16.mxu0 %v5330
    %7337 = vmatpush2.bf16.msra.mxu0 %v5329
    %7338 = vmatprep.subr.bf16.mxu0 %v5322
    %7339 = vmatpush2.bf16.msra.mxu0 %v5321
    %7340 = vmatprep.subr.bf16.mxu0 %v5314
    %7341 = vmatpush2.bf16.msra.mxu0 %v5313
    %7342 = vmatprep.subr.bf16.mxu0 %v5306
    %7343 = vmatpush2.bf16.msra.mxu0 %v5305
    %7344 = vmatprep.subr.bf16.mxu0 %v5298
    %7345 = vmatpush2.bf16.msra.mxu0 %v5297
    %7346 = vmatprep.subr.bf16.mxu0 %v5290
    %7347 = vmatpush2.bf16.msra.mxu0 %v5289
    %7348 = vmatprep.mubr.bf16.mxu0 %v186
    %7349 = vmatmul.mubr.bf16.gmra.mxu0 %v185
    %v7350 = vpop.f32.mrf.mxu0
    %v7351 = vadd.f32 %v7310, %v7350
    %v7352 = vpop.f32.mrf.mxu0
    %v7353 = vadd.f32 %v7312, %v7352
    %v7354 = vpop.f32.mrf.mxu0
    %v7355 = vpop.f32.mrf.mxu0
    %7356 = vdwg.mxu0
    %7357 = vmatprep.subr.bf16.mxu0 %v4388
    %7358 = vmatpush1.bf16.msra.mxu0 %v4387
    %7359 = vmatprep.subr.bf16.mxu0 %v4380
    %7360 = vmatpush1.bf16.msra.mxu0 %v4379
    %7361 = vmatprep.subr.bf16.mxu0 %v4372
    %7362 = vmatpush1.bf16.msra.mxu0 %v4371
    %7363 = vmatprep.subr.bf16.mxu0 %v4364
    %7364 = vmatpush1.bf16.msra.mxu0 %v4363
    %7365 = vmatprep.subr.bf16.mxu0 %v4356
    %7366 = vmatpush1.bf16.msra.mxu0 %v4355
    %7367 = vmatprep.subr.bf16.mxu0 %v4348
    %7368 = vmatpush1.bf16.msra.mxu0 %v4347
    %7369 = vmatprep.subr.bf16.mxu0 %v4340
    %7370 = vmatpush1.bf16.msra.mxu0 %v4339
    %7371 = vmatprep.subr.bf16.mxu0 %v4332
    %7372 = vmatpush1.bf16.msra.mxu0 %v4331
    %7373 = vmatprep.subr.bf16.mxu0 %v4452
    %7374 = vmatpush2.bf16.msra.mxu0 %v4451
    %7375 = vmatprep.subr.bf16.mxu0 %v4444
    %7376 = vmatpush2.bf16.msra.mxu0 %v4443
    %7377 = vmatprep.subr.bf16.mxu0 %v4436
    %7378 = vmatpush2.bf16.msra.mxu0 %v4435
    %7379 = vmatprep.subr.bf16.mxu0 %v4428
    %7380 = vmatpush2.bf16.msra.mxu0 %v4427
    %7381 = vmatprep.subr.bf16.mxu0 %v4420
    %7382 = vmatpush2.bf16.msra.mxu0 %v4419
    %7383 = vmatprep.subr.bf16.mxu0 %v4412
    %7384 = vmatpush2.bf16.msra.mxu0 %v4411
    %7385 = vmatprep.subr.bf16.mxu0 %v4404
    %7386 = vmatpush2.bf16.msra.mxu0 %v4403
    %7387 = vmatprep.subr.bf16.mxu0 %v4396
    %7388 = vmatpush2.bf16.msra.mxu0 %v4395
    %7389 = vmatprep.mubr.bf16.mxu0 %v172
    %7390 = vmatmul.mubr.bf16.gmra.mxu0 %v171
    %v7391 = vpop.f32.mrf.mxu0
    %v7392 = vadd.f32 %v1240, %v7391
    %v7393 = vpop.f32.mrf.mxu0
    %v7394 = vadd.f32 %v1244, %v7393
    %v7395 = vpop.f32.mrf.mxu0
    %v7396 = vpop.f32.mrf.mxu0
    %7397 = vdwg.mxu0
    %7398 = vmatprep.subr.bf16.mxu0 %v4516
    %7399 = vmatpush1.bf16.msra.mxu0 %v4515
    %7400 = vmatprep.subr.bf16.mxu0 %v4508
    %7401 = vmatpush1.bf16.msra.mxu0 %v4507
    %7402 = vmatprep.subr.bf16.mxu0 %v4500
    %7403 = vmatpush1.bf16.msra.mxu0 %v4499
    %7404 = vmatprep.subr.bf16.mxu0 %v4492
    %7405 = vmatpush1.bf16.msra.mxu0 %v4491
    %7406 = vmatprep.subr.bf16.mxu0 %v4484
    %7407 = vmatpush1.bf16.msra.mxu0 %v4483
    %7408 = vmatprep.subr.bf16.mxu0 %v4476
    %7409 = vmatpush1.bf16.msra.mxu0 %v4475
    %7410 = vmatprep.subr.bf16.mxu0 %v4468
    %7411 = vmatpush1.bf16.msra.mxu0 %v4467
    %7412 = vmatprep.subr.bf16.mxu0 %v4460
    %7413 = vmatpush1.bf16.msra.mxu0 %v4459
    %7414 = vmatprep.subr.bf16.mxu0 %v4580
    %7415 = vmatpush2.bf16.msra.mxu0 %v4579
    %7416 = vmatprep.subr.bf16.mxu0 %v4572
    %7417 = vmatpush2.bf16.msra.mxu0 %v4571
    %7418 = vmatprep.subr.bf16.mxu0 %v4564
    %7419 = vmatpush2.bf16.msra.mxu0 %v4563
    %7420 = vmatprep.subr.bf16.mxu0 %v4556
    %7421 = vmatpush2.bf16.msra.mxu0 %v4555
    %7422 = vmatprep.subr.bf16.mxu0 %v4548
    %7423 = vmatpush2.bf16.msra.mxu0 %v4547
    %7424 = vmatprep.subr.bf16.mxu0 %v4540
    %7425 = vmatpush2.bf16.msra.mxu0 %v4539
    %7426 = vmatprep.subr.bf16.mxu0 %v4532
    %7427 = vmatpush2.bf16.msra.mxu0 %v4531
    %7428 = vmatprep.subr.bf16.mxu0 %v4524
    %7429 = vmatpush2.bf16.msra.mxu0 %v4523
    %7430 = vmatprep.mubr.bf16.mxu0 %v174
    %7431 = vmatmul.mubr.bf16.gmra.mxu0 %v173
    %v7432 = vpop.f32.mrf.mxu0
    %v7433 = vadd.f32 %v7392, %v7432
    %v7434 = vpop.f32.mrf.mxu0
    %v7435 = vadd.f32 %v7394, %v7434
    %v7436 = vpop.f32.mrf.mxu0
    %v7437 = vpop.f32.mrf.mxu0
    %7438 = vdwg.mxu0
    %7439 = vmatprep.subr.bf16.mxu0 %v4644
    %7440 = vmatpush1.bf16.msra.mxu0 %v4643
    %7441 = vmatprep.subr.bf16.mxu0 %v4636
    %7442 = vmatpush1.bf16.msra.mxu0 %v4635
    %7443 = vmatprep.subr.bf16.mxu0 %v4628
    %7444 = vmatpush1.bf16.msra.mxu0 %v4627
    %7445 = vmatprep.subr.bf16.mxu0 %v4620
    %7446 = vmatpush1.bf16.msra.mxu0 %v4619
    %7447 = vmatprep.subr.bf16.mxu0 %v4612
    %7448 = vmatpush1.bf16.msra.mxu0 %v4611
    %7449 = vmatprep.subr.bf16.mxu0 %v4604
    %7450 = vmatpush1.bf16.msra.mxu0 %v4603
    %7451 = vmatprep.subr.bf16.mxu0 %v4596
    %7452 = vmatpush1.bf16.msra.mxu0 %v4595
    %7453 = vmatprep.subr.bf16.mxu0 %v4588
    %7454 = vmatpush1.bf16.msra.mxu0 %v4587
    %7455 = vmatprep.subr.bf16.mxu0 %v4708
    %7456 = vmatpush2.bf16.msra.mxu0 %v4707
    %7457 = vmatprep.subr.bf16.mxu0 %v4700
    %7458 = vmatpush2.bf16.msra.mxu0 %v4699
    %7459 = vmatprep.subr.bf16.mxu0 %v4692
    %7460 = vmatpush2.bf16.msra.mxu0 %v4691
    %7461 = vmatprep.subr.bf16.mxu0 %v4684
    %7462 = vmatpush2.bf16.msra.mxu0 %v4683
    %7463 = vmatprep.subr.bf16.mxu0 %v4676
    %7464 = vmatpush2.bf16.msra.mxu0 %v4675
    %7465 = vmatprep.subr.bf16.mxu0 %v4668
    %7466 = vmatpush2.bf16.msra.mxu0 %v4667
    %7467 = vmatprep.subr.bf16.mxu0 %v4660
    %7468 = vmatpush2.bf16.msra.mxu0 %v4659
    %7469 = vmatprep.subr.bf16.mxu0 %v4652
    %7470 = vmatpush2.bf16.msra.mxu0 %v4651
    %7471 = vmatprep.mubr.bf16.mxu0 %v176
    %7472 = vmatmul.mubr.bf16.gmra.mxu0 %v175
    %v7473 = vpop.f32.mrf.mxu0
    %v7474 = vadd.f32 %v7433, %v7473
    %v7475 = vpop.f32.mrf.mxu0
    %v7476 = vadd.f32 %v7435, %v7475
    %v7477 = vpop.f32.mrf.mxu0
    %v7478 = vpop.f32.mrf.mxu0
    %7479 = vdwg.mxu0
    %7480 = vmatprep.subr.bf16.mxu0 %v4772
    %7481 = vmatpush1.bf16.msra.mxu0 %v4771
    %7482 = vmatprep.subr.bf16.mxu0 %v4764
    %7483 = vmatpush1.bf16.msra.mxu0 %v4763
    %7484 = vmatprep.subr.bf16.mxu0 %v4756
    %7485 = vmatpush1.bf16.msra.mxu0 %v4755
    %7486 = vmatprep.subr.bf16.mxu0 %v4748
    %7487 = vmatpush1.bf16.msra.mxu0 %v4747
    %7488 = vmatprep.subr.bf16.mxu0 %v4740
    %7489 = vmatpush1.bf16.msra.mxu0 %v4739
    %7490 = vmatprep.subr.bf16.mxu0 %v4732
    %7491 = vmatpush1.bf16.msra.mxu0 %v4731
    %7492 = vmatprep.subr.bf16.mxu0 %v4724
    %7493 = vmatpush1.bf16.msra.mxu0 %v4723
    %7494 = vmatprep.subr.bf16.mxu0 %v4716
    %7495 = vmatpush1.bf16.msra.mxu0 %v4715
    %7496 = vmatprep.subr.bf16.mxu0 %v4836
    %7497 = vmatpush2.bf16.msra.mxu0 %v4835
    %7498 = vmatprep.subr.bf16.mxu0 %v4828
    %7499 = vmatpush2.bf16.msra.mxu0 %v4827
    %7500 = vmatprep.subr.bf16.mxu0 %v4820
    %7501 = vmatpush2.bf16.msra.mxu0 %v4819
    %7502 = vmatprep.subr.bf16.mxu0 %v4812
    %7503 = vmatpush2.bf16.msra.mxu0 %v4811
    %7504 = vmatprep.subr.bf16.mxu0 %v4804
    %7505 = vmatpush2.bf16.msra.mxu0 %v4803
    %7506 = vmatprep.subr.bf16.mxu0 %v4796
    %7507 = vmatpush2.bf16.msra.mxu0 %v4795
    %7508 = vmatprep.subr.bf16.mxu0 %v4788
    %7509 = vmatpush2.bf16.msra.mxu0 %v4787
    %7510 = vmatprep.subr.bf16.mxu0 %v4780
    %7511 = vmatpush2.bf16.msra.mxu0 %v4779
    %7512 = vmatprep.mubr.bf16.mxu0 %v178
    %7513 = vmatmul.mubr.bf16.gmra.mxu0 %v177
    %v7514 = vpop.f32.mrf.mxu0
    %v7515 = vadd.f32 %v7474, %v7514
    %v7516 = vpop.f32.mrf.mxu0
    %v7517 = vadd.f32 %v7476, %v7516
    %v7518 = vpop.f32.mrf.mxu0
    %v7519 = vpop.f32.mrf.mxu0
    %7520 = vdwg.mxu0
    %7521 = vmatprep.subr.bf16.mxu0 %v4900
    %7522 = vmatpush1.bf16.msra.mxu0 %v4899
    %7523 = vmatprep.subr.bf16.mxu0 %v4892
    %7524 = vmatpush1.bf16.msra.mxu0 %v4891
    %7525 = vmatprep.subr.bf16.mxu0 %v4884
    %7526 = vmatpush1.bf16.msra.mxu0 %v4883
    %7527 = vmatprep.subr.bf16.mxu0 %v4876
    %7528 = vmatpush1.bf16.msra.mxu0 %v4875
    %7529 = vmatprep.subr.bf16.mxu0 %v4868
    %7530 = vmatpush1.bf16.msra.mxu0 %v4867
    %7531 = vmatprep.subr.bf16.mxu0 %v4860
    %7532 = vmatpush1.bf16.msra.mxu0 %v4859
    %7533 = vmatprep.subr.bf16.mxu0 %v4852
    %7534 = vmatpush1.bf16.msra.mxu0 %v4851
    %7535 = vmatprep.subr.bf16.mxu0 %v4844
    %7536 = vmatpush1.bf16.msra.mxu0 %v4843
    %7537 = vmatprep.subr.bf16.mxu0 %v4964
    %7538 = vmatpush2.bf16.msra.mxu0 %v4963
    %7539 = vmatprep.subr.bf16.mxu0 %v4956
    %7540 = vmatpush2.bf16.msra.mxu0 %v4955
    %7541 = vmatprep.subr.bf16.mxu0 %v4948
    %7542 = vmatpush2.bf16.msra.mxu0 %v4947
    %7543 = vmatprep.subr.bf16.mxu0 %v4940
    %7544 = vmatpush2.bf16.msra.mxu0 %v4939
    %7545 = vmatprep.subr.bf16.mxu0 %v4932
    %7546 = vmatpush2.bf16.msra.mxu0 %v4931
    %7547 = vmatprep.subr.bf16.mxu0 %v4924
    %7548 = vmatpush2.bf16.msra.mxu0 %v4923
    %7549 = vmatprep.subr.bf16.mxu0 %v4916
    %7550 = vmatpush2.bf16.msra.mxu0 %v4915
    %7551 = vmatprep.subr.bf16.mxu0 %v4908
    %7552 = vmatpush2.bf16.msra.mxu0 %v4907
    %7553 = vmatprep.mubr.bf16.mxu0 %v180
    %7554 = vmatmul.mubr.bf16.gmra.mxu0 %v179
    %v7555 = vpop.f32.mrf.mxu0
    %v7556 = vadd.f32 %v7515, %v7555
    %v7557 = vpop.f32.mrf.mxu0
    %v7558 = vadd.f32 %v7517, %v7557
    %v7559 = vpop.f32.mrf.mxu0
    %v7560 = vpop.f32.mrf.mxu0
    %7561 = vdwg.mxu0
    %7562 = vmatprep.subr.bf16.mxu0 %v5028
    %7563 = vmatpush1.bf16.msra.mxu0 %v5027
    %7564 = vmatprep.subr.bf16.mxu0 %v5020
    %7565 = vmatpush1.bf16.msra.mxu0 %v5019
    %7566 = vmatprep.subr.bf16.mxu0 %v5012
    %7567 = vmatpush1.bf16.msra.mxu0 %v5011
    %7568 = vmatprep.subr.bf16.mxu0 %v5004
    %7569 = vmatpush1.bf16.msra.mxu0 %v5003
    %7570 = vmatprep.subr.bf16.mxu0 %v4996
    %7571 = vmatpush1.bf16.msra.mxu0 %v4995
    %7572 = vmatprep.subr.bf16.mxu0 %v4988
    %7573 = vmatpush1.bf16.msra.mxu0 %v4987
    %7574 = vmatprep.subr.bf16.mxu0 %v4980
    %7575 = vmatpush1.bf16.msra.mxu0 %v4979
    %7576 = vmatprep.subr.bf16.mxu0 %v4972
    %7577 = vmatpush1.bf16.msra.mxu0 %v4971
    %7578 = vmatprep.subr.bf16.mxu0 %v5092
    %7579 = vmatpush2.bf16.msra.mxu0 %v5091
    %7580 = vmatprep.subr.bf16.mxu0 %v5084
    %7581 = vmatpush2.bf16.msra.mxu0 %v5083
    %7582 = vmatprep.subr.bf16.mxu0 %v5076
    %7583 = vmatpush2.bf16.msra.mxu0 %v5075
    %7584 = vmatprep.subr.bf16.mxu0 %v5068
    %7585 = vmatpush2.bf16.msra.mxu0 %v5067
    %7586 = vmatprep.subr.bf16.mxu0 %v5060
    %7587 = vmatpush2.bf16.msra.mxu0 %v5059
    %7588 = vmatprep.subr.bf16.mxu0 %v5052
    %7589 = vmatpush2.bf16.msra.mxu0 %v5051
    %7590 = vmatprep.subr.bf16.mxu0 %v5044
    %7591 = vmatpush2.bf16.msra.mxu0 %v5043
    %7592 = vmatprep.subr.bf16.mxu0 %v5036
    %7593 = vmatpush2.bf16.msra.mxu0 %v5035
    %7594 = vmatprep.mubr.bf16.mxu0 %v182
    %7595 = vmatmul.mubr.bf16.gmra.mxu0 %v181
    %v7596 = vpop.f32.mrf.mxu0
    %v7597 = vadd.f32 %v7556, %v7596
    %v7598 = vpop.f32.mrf.mxu0
    %v7599 = vadd.f32 %v7558, %v7598
    %v7600 = vpop.f32.mrf.mxu0
    %v7601 = vpop.f32.mrf.mxu0
    %7602 = vdwg.mxu0
    %7603 = vmatprep.subr.bf16.mxu0 %v5156
    %7604 = vmatpush1.bf16.msra.mxu0 %v5155
    %7605 = vmatprep.subr.bf16.mxu0 %v5148
    %7606 = vmatpush1.bf16.msra.mxu0 %v5147
    %7607 = vmatprep.subr.bf16.mxu0 %v5140
    %7608 = vmatpush1.bf16.msra.mxu0 %v5139
    %7609 = vmatprep.subr.bf16.mxu0 %v5132
    %7610 = vmatpush1.bf16.msra.mxu0 %v5131
    %7611 = vmatprep.subr.bf16.mxu0 %v5124
    %7612 = vmatpush1.bf16.msra.mxu0 %v5123
    %7613 = vmatprep.subr.bf16.mxu0 %v5116
    %7614 = vmatpush1.bf16.msra.mxu0 %v5115
    %7615 = vmatprep.subr.bf16.mxu0 %v5108
    %7616 = vmatpush1.bf16.msra.mxu0 %v5107
    %7617 = vmatprep.subr.bf16.mxu0 %v5100
    %7618 = vmatpush1.bf16.msra.mxu0 %v5099
    %7619 = vmatprep.subr.bf16.mxu0 %v5220
    %7620 = vmatpush2.bf16.msra.mxu0 %v5219
    %7621 = vmatprep.subr.bf16.mxu0 %v5212
    %7622 = vmatpush2.bf16.msra.mxu0 %v5211
    %7623 = vmatprep.subr.bf16.mxu0 %v5204
    %7624 = vmatpush2.bf16.msra.mxu0 %v5203
    %7625 = vmatprep.subr.bf16.mxu0 %v5196
    %7626 = vmatpush2.bf16.msra.mxu0 %v5195
    %7627 = vmatprep.subr.bf16.mxu0 %v5188
    %7628 = vmatpush2.bf16.msra.mxu0 %v5187
    %7629 = vmatprep.subr.bf16.mxu0 %v5180
    %7630 = vmatpush2.bf16.msra.mxu0 %v5179
    %7631 = vmatprep.subr.bf16.mxu0 %v5172
    %7632 = vmatpush2.bf16.msra.mxu0 %v5171
    %7633 = vmatprep.subr.bf16.mxu0 %v5164
    %7634 = vmatpush2.bf16.msra.mxu0 %v5163
    %7635 = vmatprep.mubr.bf16.mxu0 %v184
    %7636 = vmatmul.mubr.bf16.gmra.mxu0 %v183
    %v7637 = vpop.f32.mrf.mxu0
    %v7638 = vadd.f32 %v7597, %v7637
    %v7639 = vpop.f32.mrf.mxu0
    %v7640 = vadd.f32 %v7599, %v7639
    %v7641 = vpop.f32.mrf.mxu0
    %v7642 = vpop.f32.mrf.mxu0
    %7643 = vdwg.mxu0
    %7644 = vmatprep.subr.bf16.mxu0 %v5284
    %7645 = vmatpush1.bf16.msra.mxu0 %v5283
    %7646 = vmatprep.subr.bf16.mxu0 %v5276
    %7647 = vmatpush1.bf16.msra.mxu0 %v5275
    %7648 = vmatprep.subr.bf16.mxu0 %v5268
    %7649 = vmatpush1.bf16.msra.mxu0 %v5267
    %7650 = vmatprep.subr.bf16.mxu0 %v5260
    %7651 = vmatpush1.bf16.msra.mxu0 %v5259
    %7652 = vmatprep.subr.bf16.mxu0 %v5252
    %7653 = vmatpush1.bf16.msra.mxu0 %v5251
    %7654 = vmatprep.subr.bf16.mxu0 %v5244
    %7655 = vmatpush1.bf16.msra.mxu0 %v5243
    %7656 = vmatprep.subr.bf16.mxu0 %v5236
    %7657 = vmatpush1.bf16.msra.mxu0 %v5235
    %7658 = vmatprep.subr.bf16.mxu0 %v5228
    %7659 = vmatpush1.bf16.msra.mxu0 %v5227
    %7660 = vmatprep.subr.bf16.mxu0 %v5348
    %7661 = vmatpush2.bf16.msra.mxu0 %v5347
    %7662 = vmatprep.subr.bf16.mxu0 %v5340
    %7663 = vmatpush2.bf16.msra.mxu0 %v5339
    %7664 = vmatprep.subr.bf16.mxu0 %v5332
    %7665 = vmatpush2.bf16.msra.mxu0 %v5331
    %7666 = vmatprep.subr.bf16.mxu0 %v5324
    %7667 = vmatpush2.bf16.msra.mxu0 %v5323
    %7668 = vmatprep.subr.bf16.mxu0 %v5316
    %7669 = vmatpush2.bf16.msra.mxu0 %v5315
    %7670 = vmatprep.subr.bf16.mxu0 %v5308
    %7671 = vmatpush2.bf16.msra.mxu0 %v5307
    %7672 = vmatprep.subr.bf16.mxu0 %v5300
    %7673 = vmatpush2.bf16.msra.mxu0 %v5299
    %7674 = vmatprep.subr.bf16.mxu0 %v5292
    %7675 = vmatpush2.bf16.msra.mxu0 %v5291
    %7676 = vmatprep.mubr.bf16.mxu0 %v186
    %7677 = vmatmul.mubr.bf16.gmra.mxu0 %v185
    %v7678 = vpop.f32.mrf.mxu0
    %v7679 = vadd.f32 %v7638, %v7678
    %v7680 = vpop.f32.mrf.mxu0
    %v7681 = vadd.f32 %v7640, %v7680
    %v7682 = vpop.f32.mrf.mxu0
    %v7683 = vpop.f32.mrf.mxu0
    %7684 = vdwg.mxu0
    %v7685 = vmax.f32 %v6695, 0.0
    %v7686 = vmax.f32 %v6697, 0.0
    %v7687 = vmax.f32 %v7023, 0.0
    %v7688 = vmax.f32 %v7025, 0.0
    %v7689 = vmax.f32 %v7351, 0.0
    %v7690 = vmax.f32 %v7353, 0.0
    %v7691 = vmax.f32 %v7679, 0.0
    %v7692 = vmax.f32 %v7681, 0.0
    %v7693 = vpack.c.bf16 %v7685, %v7685
    %v7694 = vpack.c.bf16 %v7686, %v7686
    %v7695 = vpack.c.bf16 %v7687, %v7687
    %v7696 = vpack.c.bf16 %v7688, %v7688
    %v7697 = vld [vmem:[#allocation7] sm:$0xff]
    %v7698 = vld [vmem:[#allocation7 + $0x8] sm:$0xff]
    %v7699 = vld [vmem:[#allocation7 + $0x10] sm:$0xff]
    %v7700 = vld [vmem:[#allocation7 + $0x18] sm:$0xff]
    %v7701 = vld [vmem:[#allocation7 + $0x20] sm:$0xff]
    %v7702 = vld [vmem:[#allocation7 + $0x28] sm:$0xff]
    %v7703 = vld [vmem:[#allocation7 + $0x30] sm:$0xff]
    %v7704 = vld [vmem:[#allocation7 + $0x38] sm:$0xff]
    %v7705 = vld [vmem:[#allocation7 + $0x40] sm:$0xff]
    %v7706 = vld [vmem:[#allocation7 + $0x48] sm:$0xff]
    %v7707 = vld [vmem:[#allocation7 + $0x50] sm:$0xff]
    %v7708 = vld [vmem:[#allocation7 + $0x58] sm:$0xff]
    %v7709 = vld [vmem:[#allocation7 + $0x60] sm:$0xff]
    %v7710 = vld [vmem:[#allocation7 + $0x68] sm:$0xff]
    %v7711 = vld [vmem:[#allocation7 + $0x70] sm:$0xff]
    %v7712 = vld [vmem:[#allocation7 + $0x78] sm:$0xff]
    %v7713 = vld [vmem:[#allocation7 + $0x80] sm:$0xff]
    %v7714 = vld [vmem:[#allocation7 + $0x88] sm:$0xff]
    %v7715 = vld [vmem:[#allocation7 + $0x90] sm:$0xff]
    %v7716 = vld [vmem:[#allocation7 + $0x98] sm:$0xff]
    %v7717 = vld [vmem:[#allocation7 + $0xa0] sm:$0xff]
    %v7718 = vld [vmem:[#allocation7 + $0xa8] sm:$0xff]
    %v7719 = vld [vmem:[#allocation7 + $0xb0] sm:$0xff]
    %v7720 = vld [vmem:[#allocation7 + $0xb8] sm:$0xff]
    %v7721 = vld [vmem:[#allocation7 + $0xc0] sm:$0xff]
    %v7722 = vld [vmem:[#allocation7 + $0xc8] sm:$0xff]
    %v7723 = vld [vmem:[#allocation7 + $0xd0] sm:$0xff]
    %v7724 = vld [vmem:[#allocation7 + $0xd8] sm:$0xff]
    %v7725 = vld [vmem:[#allocation7 + $0xe0] sm:$0xff]
    %v7726 = vld [vmem:[#allocation7 + $0xe8] sm:$0xff]
    %v7727 = vld [vmem:[#allocation7 + $0xf0] sm:$0xff]
    %v7728 = vld [vmem:[#allocation7 + $0xf8] sm:$0xff]
    %v7729 = vld [vmem:[#allocation7 + $0x100] sm:$0xff]
    %v7730 = vld [vmem:[#allocation7 + $0x108] sm:$0xff]
    %v7731 = vld [vmem:[#allocation7 + $0x110] sm:$0xff]
    %v7732 = vld [vmem:[#allocation7 + $0x118] sm:$0xff]
    %v7733 = vld [vmem:[#allocation7 + $0x120] sm:$0xff]
    %v7734 = vld [vmem:[#allocation7 + $0x128] sm:$0xff]
    %v7735 = vld [vmem:[#allocation7 + $0x130] sm:$0xff]
    %v7736 = vld [vmem:[#allocation7 + $0x138] sm:$0xff]
    %v7737 = vld [vmem:[#allocation7 + $0x140] sm:$0xff]
    %v7738 = vld [vmem:[#allocation7 + $0x148] sm:$0xff]
    %v7739 = vld [vmem:[#allocation7 + $0x150] sm:$0xff]
    %v7740 = vld [vmem:[#allocation7 + $0x158] sm:$0xff]
    %v7741 = vld [vmem:[#allocation7 + $0x160] sm:$0xff]
    %v7742 = vld [vmem:[#allocation7 + $0x168] sm:$0xff]
    %v7743 = vld [vmem:[#allocation7 + $0x170] sm:$0xff]
    %v7744 = vld [vmem:[#allocation7 + $0x178] sm:$0xff]
    %v7745 = vld [vmem:[#allocation7 + $0x180] sm:$0xff]
    %v7746 = vld [vmem:[#allocation7 + $0x188] sm:$0xff]
    %v7747 = vld [vmem:[#allocation7 + $0x190] sm:$0xff]
    %v7748 = vld [vmem:[#allocation7 + $0x198] sm:$0xff]
    %v7749 = vld [vmem:[#allocation7 + $0x1a0] sm:$0xff]
    %v7750 = vld [vmem:[#allocation7 + $0x1a8] sm:$0xff]
    %v7751 = vld [vmem:[#allocation7 + $0x1b0] sm:$0xff]
    %v7752 = vld [vmem:[#allocation7 + $0x1b8] sm:$0xff]
    %v7753 = vld [vmem:[#allocation7 + $0x1c0] sm:$0xff]
    %v7754 = vld [vmem:[#allocation7 + $0x1c8] sm:$0xff]
    %v7755 = vld [vmem:[#allocation7 + $0x1d0] sm:$0xff]
    %v7756 = vld [vmem:[#allocation7 + $0x1d8] sm:$0xff]
    %v7757 = vld [vmem:[#allocation7 + $0x1e0] sm:$0xff]
    %v7758 = vld [vmem:[#allocation7 + $0x1e8] sm:$0xff]
    %v7759 = vld [vmem:[#allocation7 + $0x1f0] sm:$0xff]
    %v7760 = vld [vmem:[#allocation7 + $0x1f8] sm:$0xff]
    %v7761 = vld [vmem:[#allocation7 + $0x200] sm:$0xff]
    %v7762 = vld [vmem:[#allocation7 + $0x208] sm:$0xff]
    %v7763 = vld [vmem:[#allocation7 + $0x210] sm:$0xff]
    %v7764 = vld [vmem:[#allocation7 + $0x218] sm:$0xff]
    %v7765 = vld [vmem:[#allocation7 + $0x220] sm:$0xff]
    %v7766 = vld [vmem:[#allocation7 + $0x228] sm:$0xff]
    %v7767 = vld [vmem:[#allocation7 + $0x230] sm:$0xff]
    %v7768 = vld [vmem:[#allocation7 + $0x238] sm:$0xff]
    %v7769 = vld [vmem:[#allocation7 + $0x240] sm:$0xff]
    %v7770 = vld [vmem:[#allocation7 + $0x248] sm:$0xff]
    %v7771 = vld [vmem:[#allocation7 + $0x250] sm:$0xff]
    %v7772 = vld [vmem:[#allocation7 + $0x258] sm:$0xff]
    %v7773 = vld [vmem:[#allocation7 + $0x260] sm:$0xff]
    %v7774 = vld [vmem:[#allocation7 + $0x268] sm:$0xff]
    %v7775 = vld [vmem:[#allocation7 + $0x270] sm:$0xff]
    %v7776 = vld [vmem:[#allocation7 + $0x278] sm:$0xff]
    %v7777 = vld [vmem:[#allocation7 + $0x280] sm:$0xff]
    %v7778 = vld [vmem:[#allocation7 + $0x288] sm:$0xff]
    %v7779 = vld [vmem:[#allocation7 + $0x290] sm:$0xff]
    %v7780 = vld [vmem:[#allocation7 + $0x298] sm:$0xff]
    %v7781 = vld [vmem:[#allocation7 + $0x2a0] sm:$0xff]
    %v7782 = vld [vmem:[#allocation7 + $0x2a8] sm:$0xff]
    %v7783 = vld [vmem:[#allocation7 + $0x2b0] sm:$0xff]
    %v7784 = vld [vmem:[#allocation7 + $0x2b8] sm:$0xff]
    %v7785 = vld [vmem:[#allocation7 + $0x2c0] sm:$0xff]
    %v7786 = vld [vmem:[#allocation7 + $0x2c8] sm:$0xff]
    %v7787 = vld [vmem:[#allocation7 + $0x2d0] sm:$0xff]
    %v7788 = vld [vmem:[#allocation7 + $0x2d8] sm:$0xff]
    %v7789 = vld [vmem:[#allocation7 + $0x2e0] sm:$0xff]
    %v7790 = vld [vmem:[#allocation7 + $0x2e8] sm:$0xff]
    %v7791 = vld [vmem:[#allocation7 + $0x2f0] sm:$0xff]
    %v7792 = vld [vmem:[#allocation7 + $0x2f8] sm:$0xff]
    %v7793 = vld [vmem:[#allocation7 + $0x300] sm:$0xff]
    %v7794 = vld [vmem:[#allocation7 + $0x308] sm:$0xff]
    %v7795 = vld [vmem:[#allocation7 + $0x310] sm:$0xff]
    %v7796 = vld [vmem:[#allocation7 + $0x318] sm:$0xff]
    %v7797 = vld [vmem:[#allocation7 + $0x320] sm:$0xff]
    %v7798 = vld [vmem:[#allocation7 + $0x328] sm:$0xff]
    %v7799 = vld [vmem:[#allocation7 + $0x330] sm:$0xff]
    %v7800 = vld [vmem:[#allocation7 + $0x338] sm:$0xff]
    %v7801 = vld [vmem:[#allocation7 + $0x340] sm:$0xff]
    %v7802 = vld [vmem:[#allocation7 + $0x348] sm:$0xff]
    %v7803 = vld [vmem:[#allocation7 + $0x350] sm:$0xff]
    %v7804 = vld [vmem:[#allocation7 + $0x358] sm:$0xff]
    %v7805 = vld [vmem:[#allocation7 + $0x360] sm:$0xff]
    %v7806 = vld [vmem:[#allocation7 + $0x368] sm:$0xff]
    %v7807 = vld [vmem:[#allocation7 + $0x370] sm:$0xff]
    %v7808 = vld [vmem:[#allocation7 + $0x378] sm:$0xff]
    %v7809 = vld [vmem:[#allocation7 + $0x380] sm:$0xff]
    %v7810 = vld [vmem:[#allocation7 + $0x388] sm:$0xff]
    %v7811 = vld [vmem:[#allocation7 + $0x390] sm:$0xff]
    %v7812 = vld [vmem:[#allocation7 + $0x398] sm:$0xff]
    %v7813 = vld [vmem:[#allocation7 + $0x3a0] sm:$0xff]
    %v7814 = vld [vmem:[#allocation7 + $0x3a8] sm:$0xff]
    %v7815 = vld [vmem:[#allocation7 + $0x3b0] sm:$0xff]
    %v7816 = vld [vmem:[#allocation7 + $0x3b8] sm:$0xff]
    %v7817 = vld [vmem:[#allocation7 + $0x3c0] sm:$0xff]
    %v7818 = vld [vmem:[#allocation7 + $0x3c8] sm:$0xff]
    %v7819 = vld [vmem:[#allocation7 + $0x3d0] sm:$0xff]
    %v7820 = vld [vmem:[#allocation7 + $0x3d8] sm:$0xff]
    %v7821 = vld [vmem:[#allocation7 + $0x3e0] sm:$0xff]
    %v7822 = vld [vmem:[#allocation7 + $0x3e8] sm:$0xff]
    %v7823 = vld [vmem:[#allocation7 + $0x3f0] sm:$0xff]
    %v7824 = vld [vmem:[#allocation7 + $0x3f8] sm:$0xff]
    %v7825 = vld [vmem:[#allocation8] sm:$0xf]
    %v7827 = vlaneseq
    %v7828 = vshrl.u32 %v7827, 7
    %v7829 = vsub.s32 0, %v7828
    %v7830 = vrot.slane %v7825, %v7829
    %v7831 = vlaneseq
    %v7832 = vshrl.u32 %v7831, 7
    %v7833 = vsub.s32 1, %v7832
    %v7834 = vrot.slane %v7825, %v7833
    %v7835 = vlaneseq
    %v7836 = vshrl.u32 %v7835, 7
    %v7837 = vsub.s32 2, %v7836
    %v7838 = vrot.slane %v7825, %v7837
    %v7839 = vlaneseq
    %v7840 = vshrl.u32 %v7839, 7
    %v7841 = vsub.s32 3, %v7840
    %v7842 = vrot.slane %v7825, %v7841
    %v7975 = vunpack.c.l.b16 %v7697
    %v7976 = vunpack.c.h.b16 %v7697
    %v7977 = vunpack.c.l.b16 %v7698
    %v7978 = vunpack.c.h.b16 %v7698
    %v7979 = vunpack.c.l.b16 %v7699
    %v7980 = vunpack.c.h.b16 %v7699
    %v7981 = vunpack.c.l.b16 %v7700
    %v7982 = vunpack.c.h.b16 %v7700
    %v7983 = vunpack.c.l.b16 %v7701
    %v7984 = vunpack.c.h.b16 %v7701
    %v7985 = vunpack.c.l.b16 %v7702
    %v7986 = vunpack.c.h.b16 %v7702
    %v7987 = vunpack.c.l.b16 %v7703
    %v7988 = vunpack.c.h.b16 %v7703
    %v7989 = vunpack.c.l.b16 %v7704
    %v7990 = vunpack.c.h.b16 %v7704
    %v7991 = vunpack.c.l.b16 %v7705
    %v7992 = vunpack.c.h.b16 %v7705
    %v7993 = vunpack.c.l.b16 %v7706
    %v7994 = vunpack.c.h.b16 %v7706
    %v7995 = vunpack.c.l.b16 %v7707
    %v7996 = vunpack.c.h.b16 %v7707
    %v7997 = vunpack.c.l.b16 %v7708
    %v7998 = vunpack.c.h.b16 %v7708
    %v7999 = vunpack.c.l.b16 %v7709
    %v8000 = vunpack.c.h.b16 %v7709
    %v8001 = vunpack.c.l.b16 %v7710
    %v8002 = vunpack.c.h.b16 %v7710
    %v8003 = vunpack.c.l.b16 %v7711
    %v8004 = vunpack.c.h.b16 %v7711
    %v8005 = vunpack.c.l.b16 %v7712
    %v8006 = vunpack.c.h.b16 %v7712
    %v8007 = vunpack.c.l.b16 %v7713
    %v8008 = vunpack.c.h.b16 %v7713
    %v8009 = vunpack.c.l.b16 %v7714
    %v8010 = vunpack.c.h.b16 %v7714
    %v8011 = vunpack.c.l.b16 %v7715
    %v8012 = vunpack.c.h.b16 %v7715
    %v8013 = vunpack.c.l.b16 %v7716
    %v8014 = vunpack.c.h.b16 %v7716
    %v8015 = vunpack.c.l.b16 %v7717
    %v8016 = vunpack.c.h.b16 %v7717
    %v8017 = vunpack.c.l.b16 %v7718
    %v8018 = vunpack.c.h.b16 %v7718
    %v8019 = vunpack.c.l.b16 %v7719
    %v8020 = vunpack.c.h.b16 %v7719
    %v8021 = vunpack.c.l.b16 %v7720
    %v8022 = vunpack.c.h.b16 %v7720
    %v8023 = vunpack.c.l.b16 %v7721
    %v8024 = vunpack.c.h.b16 %v7721
    %v8025 = vunpack.c.l.b16 %v7722
    %v8026 = vunpack.c.h.b16 %v7722
    %v8027 = vunpack.c.l.b16 %v7723
    %v8028 = vunpack.c.h.b16 %v7723
    %v8029 = vunpack.c.l.b16 %v7724
    %v8030 = vunpack.c.h.b16 %v7724
    %v8031 = vunpack.c.l.b16 %v7725
    %v8032 = vunpack.c.h.b16 %v7725
    %v8033 = vunpack.c.l.b16 %v7726
    %v8034 = vunpack.c.h.b16 %v7726
    %v8035 = vunpack.c.l.b16 %v7727
    %v8036 = vunpack.c.h.b16 %v7727
    %v8037 = vunpack.c.l.b16 %v7728
    %v8038 = vunpack.c.h.b16 %v7728
    %v8039 = vunpack.c.l.b16 %v7729
    %v8040 = vunpack.c.h.b16 %v7729
    %v8041 = vunpack.c.l.b16 %v7730
    %v8042 = vunpack.c.h.b16 %v7730
    %v8043 = vunpack.c.l.b16 %v7731
    %v8044 = vunpack.c.h.b16 %v7731
    %v8045 = vunpack.c.l.b16 %v7732
    %v8046 = vunpack.c.h.b16 %v7732
    %v8047 = vunpack.c.l.b16 %v7733
    %v8048 = vunpack.c.h.b16 %v7733
    %v8049 = vunpack.c.l.b16 %v7734
    %v8050 = vunpack.c.h.b16 %v7734
    %v8051 = vunpack.c.l.b16 %v7735
    %v8052 = vunpack.c.h.b16 %v7735
    %v8053 = vunpack.c.l.b16 %v7736
    %v8054 = vunpack.c.h.b16 %v7736
    %v8055 = vunpack.c.l.b16 %v7737
    %v8056 = vunpack.c.h.b16 %v7737
    %v8057 = vunpack.c.l.b16 %v7738
    %v8058 = vunpack.c.h.b16 %v7738
    %v8059 = vunpack.c.l.b16 %v7739
    %v8060 = vunpack.c.h.b16 %v7739
    %v8061 = vunpack.c.l.b16 %v7740
    %v8062 = vunpack.c.h.b16 %v7740
    %v8063 = vunpack.c.l.b16 %v7741
    %v8064 = vunpack.c.h.b16 %v7741
    %v8065 = vunpack.c.l.b16 %v7742
    %v8066 = vunpack.c.h.b16 %v7742
    %v8067 = vunpack.c.l.b16 %v7743
    %v8068 = vunpack.c.h.b16 %v7743
    %v8069 = vunpack.c.l.b16 %v7744
    %v8070 = vunpack.c.h.b16 %v7744
    %v8071 = vunpack.c.l.b16 %v7745
    %v8072 = vunpack.c.h.b16 %v7745
    %v8073 = vunpack.c.l.b16 %v7746
    %v8074 = vunpack.c.h.b16 %v7746
    %v8075 = vunpack.c.l.b16 %v7747
    %v8076 = vunpack.c.h.b16 %v7747
    %v8077 = vunpack.c.l.b16 %v7748
    %v8078 = vunpack.c.h.b16 %v7748
    %v8079 = vunpack.c.l.b16 %v7749
    %v8080 = vunpack.c.h.b16 %v7749
    %v8081 = vunpack.c.l.b16 %v7750
    %v8082 = vunpack.c.h.b16 %v7750
    %v8083 = vunpack.c.l.b16 %v7751
    %v8084 = vunpack.c.h.b16 %v7751
    %v8085 = vunpack.c.l.b16 %v7752
    %v8086 = vunpack.c.h.b16 %v7752
    %v8087 = vunpack.c.l.b16 %v7753
    %v8088 = vunpack.c.h.b16 %v7753
    %v8089 = vunpack.c.l.b16 %v7754
    %v8090 = vunpack.c.h.b16 %v7754
    %v8091 = vunpack.c.l.b16 %v7755
    %v8092 = vunpack.c.h.b16 %v7755
    %v8093 = vunpack.c.l.b16 %v7756
    %v8094 = vunpack.c.h.b16 %v7756
    %v8095 = vunpack.c.l.b16 %v7757
    %v8096 = vunpack.c.h.b16 %v7757
    %v8097 = vunpack.c.l.b16 %v7758
    %v8098 = vunpack.c.h.b16 %v7758
    %v8099 = vunpack.c.l.b16 %v7759
    %v8100 = vunpack.c.h.b16 %v7759
    %v8101 = vunpack.c.l.b16 %v7760
    %v8102 = vunpack.c.h.b16 %v7760
    %v8103 = vunpack.c.l.b16 %v7761
    %v8104 = vunpack.c.h.b16 %v7761
    %v8105 = vunpack.c.l.b16 %v7762
    %v8106 = vunpack.c.h.b16 %v7762
    %v8107 = vunpack.c.l.b16 %v7763
    %v8108 = vunpack.c.h.b16 %v7763
    %v8109 = vunpack.c.l.b16 %v7764
    %v8110 = vunpack.c.h.b16 %v7764
    %v8111 = vunpack.c.l.b16 %v7765
    %v8112 = vunpack.c.h.b16 %v7765
    %v8113 = vunpack.c.l.b16 %v7766
    %v8114 = vunpack.c.h.b16 %v7766
    %v8115 = vunpack.c.l.b16 %v7767
    %v8116 = vunpack.c.h.b16 %v7767
    %v8117 = vunpack.c.l.b16 %v7768
    %v8118 = vunpack.c.h.b16 %v7768
    %v8119 = vunpack.c.l.b16 %v7769
    %v8120 = vunpack.c.h.b16 %v7769
    %v8121 = vunpack.c.l.b16 %v7770
    %v8122 = vunpack.c.h.b16 %v7770
    %v8123 = vunpack.c.l.b16 %v7771
    %v8124 = vunpack.c.h.b16 %v7771
    %v8125 = vunpack.c.l.b16 %v7772
    %v8126 = vunpack.c.h.b16 %v7772
    %v8127 = vunpack.c.l.b16 %v7773
    %v8128 = vunpack.c.h.b16 %v7773
    %v8129 = vunpack.c.l.b16 %v7774
    %v8130 = vunpack.c.h.b16 %v7774
    %v8131 = vunpack.c.l.b16 %v7775
    %v8132 = vunpack.c.h.b16 %v7775
    %v8133 = vunpack.c.l.b16 %v7776
    %v8134 = vunpack.c.h.b16 %v7776
    %v8135 = vunpack.c.l.b16 %v7777
    %v8136 = vunpack.c.h.b16 %v7777
    %v8137 = vunpack.c.l.b16 %v7778
    %v8138 = vunpack.c.h.b16 %v7778
    %v8139 = vunpack.c.l.b16 %v7779
    %v8140 = vunpack.c.h.b16 %v7779
    %v8141 = vunpack.c.l.b16 %v7780
    %v8142 = vunpack.c.h.b16 %v7780
    %v8143 = vunpack.c.l.b16 %v7781
    %v8144 = vunpack.c.h.b16 %v7781
    %v8145 = vunpack.c.l.b16 %v7782
    %v8146 = vunpack.c.h.b16 %v7782
    %v8147 = vunpack.c.l.b16 %v7783
    %v8148 = vunpack.c.h.b16 %v7783
    %v8149 = vunpack.c.l.b16 %v7784
    %v8150 = vunpack.c.h.b16 %v7784
    %v8151 = vunpack.c.l.b16 %v7785
    %v8152 = vunpack.c.h.b16 %v7785
    %v8153 = vunpack.c.l.b16 %v7786
    %v8154 = vunpack.c.h.b16 %v7786
    %v8155 = vunpack.c.l.b16 %v7787
    %v8156 = vunpack.c.h.b16 %v7787
    %v8157 = vunpack.c.l.b16 %v7788
    %v8158 = vunpack.c.h.b16 %v7788
    %v8159 = vunpack.c.l.b16 %v7789
    %v8160 = vunpack.c.h.b16 %v7789
    %v8161 = vunpack.c.l.b16 %v7790
    %v8162 = vunpack.c.h.b16 %v7790
    %v8163 = vunpack.c.l.b16 %v7791
    %v8164 = vunpack.c.h.b16 %v7791
    %v8165 = vunpack.c.l.b16 %v7792
    %v8166 = vunpack.c.h.b16 %v7792
    %v8167 = vunpack.c.l.b16 %v7793
    %v8168 = vunpack.c.h.b16 %v7793
    %v8169 = vunpack.c.l.b16 %v7794
    %v8170 = vunpack.c.h.b16 %v7794
    %v8171 = vunpack.c.l.b16 %v7795
    %v8172 = vunpack.c.h.b16 %v7795
    %v8173 = vunpack.c.l.b16 %v7796
    %v8174 = vunpack.c.h.b16 %v7796
    %v8175 = vunpack.c.l.b16 %v7797
    %v8176 = vunpack.c.h.b16 %v7797
    %v8177 = vunpack.c.l.b16 %v7798
    %v8178 = vunpack.c.h.b16 %v7798
    %v8179 = vunpack.c.l.b16 %v7799
    %v8180 = vunpack.c.h.b16 %v7799
    %v8181 = vunpack.c.l.b16 %v7800
    %v8182 = vunpack.c.h.b16 %v7800
    %v8183 = vunpack.c.l.b16 %v7801
    %v8184 = vunpack.c.h.b16 %v7801
    %v8185 = vunpack.c.l.b16 %v7802
    %v8186 = vunpack.c.h.b16 %v7802
    %v8187 = vunpack.c.l.b16 %v7803
    %v8188 = vunpack.c.h.b16 %v7803
    %v8189 = vunpack.c.l.b16 %v7804
    %v8190 = vunpack.c.h.b16 %v7804
    %v8191 = vunpack.c.l.b16 %v7805
    %v8192 = vunpack.c.h.b16 %v7805
    %v8193 = vunpack.c.l.b16 %v7806
    %v8194 = vunpack.c.h.b16 %v7806
    %v8195 = vunpack.c.l.b16 %v7807
    %v8196 = vunpack.c.h.b16 %v7807
    %v8197 = vunpack.c.l.b16 %v7808
    %v8198 = vunpack.c.h.b16 %v7808
    %v8199 = vunpack.c.l.b16 %v7809
    %v8200 = vunpack.c.h.b16 %v7809
    %v8201 = vunpack.c.l.b16 %v7810
    %v8202 = vunpack.c.h.b16 %v7810
    %v8203 = vunpack.c.l.b16 %v7811
    %v8204 = vunpack.c.h.b16 %v7811
    %v8205 = vunpack.c.l.b16 %v7812
    %v8206 = vunpack.c.h.b16 %v7812
    %v8207 = vunpack.c.l.b16 %v7813
    %v8208 = vunpack.c.h.b16 %v7813
    %v8209 = vunpack.c.l.b16 %v7814
    %v8210 = vunpack.c.h.b16 %v7814
    %v8211 = vunpack.c.l.b16 %v7815
    %v8212 = vunpack.c.h.b16 %v7815
    %v8213 = vunpack.c.l.b16 %v7816
    %v8214 = vunpack.c.h.b16 %v7816
    %v8215 = vunpack.c.l.b16 %v7817
    %v8216 = vunpack.c.h.b16 %v7817
    %v8217 = vunpack.c.l.b16 %v7818
    %v8218 = vunpack.c.h.b16 %v7818
    %v8219 = vunpack.c.l.b16 %v7819
    %v8220 = vunpack.c.h.b16 %v7819
    %v8221 = vunpack.c.l.b16 %v7820
    %v8222 = vunpack.c.h.b16 %v7820
    %v8223 = vunpack.c.l.b16 %v7821
    %v8224 = vunpack.c.h.b16 %v7821
    %v8225 = vunpack.c.l.b16 %v7822
    %v8226 = vunpack.c.h.b16 %v7822
    %v8227 = vunpack.c.l.b16 %v7823
    %v8228 = vunpack.c.h.b16 %v7823
    %v8229 = vunpack.c.l.b16 %v7824
    %v8230 = vunpack.c.h.b16 %v7824
    %v8231 = vpack.c.b16 %v7979, %v7975
    %v8232 = vpack.c.b16 %v7980, %v7976
    %v8233 = vpack.c.b16 %v7981, %v7977
    %v8234 = vpack.c.b16 %v7982, %v7978
    %v8235 = vpack.c.b16 %v7987, %v7983
    %v8236 = vpack.c.b16 %v7988, %v7984
    %v8237 = vpack.c.b16 %v7989, %v7985
    %v8238 = vpack.c.b16 %v7990, %v7986
    %v8239 = vpack.c.b16 %v7995, %v7991
    %v8240 = vpack.c.b16 %v7996, %v7992
    %v8241 = vpack.c.b16 %v7997, %v7993
    %v8242 = vpack.c.b16 %v7998, %v7994
    %v8243 = vpack.c.b16 %v8003, %v7999
    %v8244 = vpack.c.b16 %v8004, %v8000
    %v8245 = vpack.c.b16 %v8005, %v8001
    %v8246 = vpack.c.b16 %v8006, %v8002
    %v8247 = vpack.c.b16 %v8011, %v8007
    %v8248 = vpack.c.b16 %v8012, %v8008
    %v8249 = vpack.c.b16 %v8013, %v8009
    %v8250 = vpack.c.b16 %v8014, %v8010
    %v8251 = vpack.c.b16 %v8019, %v8015
    %v8252 = vpack.c.b16 %v8020, %v8016
    %v8253 = vpack.c.b16 %v8021, %v8017
    %v8254 = vpack.c.b16 %v8022, %v8018
    %v8255 = vpack.c.b16 %v8027, %v8023
    %v8256 = vpack.c.b16 %v8028, %v8024
    %v8257 = vpack.c.b16 %v8029, %v8025
    %v8258 = vpack.c.b16 %v8030, %v8026
    %v8259 = vpack.c.b16 %v8035, %v8031
    %v8260 = vpack.c.b16 %v8036, %v8032
    %v8261 = vpack.c.b16 %v8037, %v8033
    %v8262 = vpack.c.b16 %v8038, %v8034
    %v8263 = vpack.c.b16 %v8043, %v8039
    %v8264 = vpack.c.b16 %v8044, %v8040
    %v8265 = vpack.c.b16 %v8045, %v8041
    %v8266 = vpack.c.b16 %v8046, %v8042
    %v8267 = vpack.c.b16 %v8051, %v8047
    %v8268 = vpack.c.b16 %v8052, %v8048
    %v8269 = vpack.c.b16 %v8053, %v8049
    %v8270 = vpack.c.b16 %v8054, %v8050
    %v8271 = vpack.c.b16 %v8059, %v8055
    %v8272 = vpack.c.b16 %v8060, %v8056
    %v8273 = vpack.c.b16 %v8061, %v8057
    %v8274 = vpack.c.b16 %v8062, %v8058
    %v8275 = vpack.c.b16 %v8067, %v8063
    %v8276 = vpack.c.b16 %v8068, %v8064
    %v8277 = vpack.c.b16 %v8069, %v8065
    %v8278 = vpack.c.b16 %v8070, %v8066
    %v8279 = vpack.c.b16 %v8075, %v8071
    %v8280 = vpack.c.b16 %v8076, %v8072
    %v8281 = vpack.c.b16 %v8077, %v8073
    %v8282 = vpack.c.b16 %v8078, %v8074
    %v8283 = vpack.c.b16 %v8083, %v8079
    %v8284 = vpack.c.b16 %v8084, %v8080
    %v8285 = vpack.c.b16 %v8085, %v8081
    %v8286 = vpack.c.b16 %v8086, %v8082
    %v8287 = vpack.c.b16 %v8091, %v8087
    %v8288 = vpack.c.b16 %v8092, %v8088
    %v8289 = vpack.c.b16 %v8093, %v8089
    %v8290 = vpack.c.b16 %v8094, %v8090
    %v8291 = vpack.c.b16 %v8099, %v8095
    %v8292 = vpack.c.b16 %v8100, %v8096
    %v8293 = vpack.c.b16 %v8101, %v8097
    %v8294 = vpack.c.b16 %v8102, %v8098
    %v8295 = vpack.c.b16 %v8107, %v8103
    %v8296 = vpack.c.b16 %v8108, %v8104
    %v8297 = vpack.c.b16 %v8109, %v8105
    %v8298 = vpack.c.b16 %v8110, %v8106
    %v8299 = vpack.c.b16 %v8115, %v8111
    %v8300 = vpack.c.b16 %v8116, %v8112
    %v8301 = vpack.c.b16 %v8117, %v8113
    %v8302 = vpack.c.b16 %v8118, %v8114
    %v8303 = vpack.c.b16 %v8123, %v8119
    %v8304 = vpack.c.b16 %v8124, %v8120
    %v8305 = vpack.c.b16 %v8125, %v8121
    %v8306 = vpack.c.b16 %v8126, %v8122
    %v8307 = vpack.c.b16 %v8131, %v8127
    %v8308 = vpack.c.b16 %v8132, %v8128
    %v8309 = vpack.c.b16 %v8133, %v8129
    %v8310 = vpack.c.b16 %v8134, %v8130
    %v8311 = vpack.c.b16 %v8139, %v8135
    %v8312 = vpack.c.b16 %v8140, %v8136
    %v8313 = vpack.c.b16 %v8141, %v8137
    %v8314 = vpack.c.b16 %v8142, %v8138
    %v8315 = vpack.c.b16 %v8147, %v8143
    %v8316 = vpack.c.b16 %v8148, %v8144
    %v8317 = vpack.c.b16 %v8149, %v8145
    %v8318 = vpack.c.b16 %v8150, %v8146
    %v8319 = vpack.c.b16 %v8155, %v8151
    %v8320 = vpack.c.b16 %v8156, %v8152
    %v8321 = vpack.c.b16 %v8157, %v8153
    %v8322 = vpack.c.b16 %v8158, %v8154
    %v8323 = vpack.c.b16 %v8163, %v8159
    %v8324 = vpack.c.b16 %v8164, %v8160
    %v8325 = vpack.c.b16 %v8165, %v8161
    %v8326 = vpack.c.b16 %v8166, %v8162
    %v8327 = vpack.c.b16 %v8171, %v8167
    %v8328 = vpack.c.b16 %v8172, %v8168
    %v8329 = vpack.c.b16 %v8173, %v8169
    %v8330 = vpack.c.b16 %v8174, %v8170
    %v8331 = vpack.c.b16 %v8179, %v8175
    %v8332 = vpack.c.b16 %v8180, %v8176
    %v8333 = vpack.c.b16 %v8181, %v8177
    %v8334 = vpack.c.b16 %v8182, %v8178
    %v8335 = vpack.c.b16 %v8187, %v8183
    %v8336 = vpack.c.b16 %v8188, %v8184
    %v8337 = vpack.c.b16 %v8189, %v8185
    %v8338 = vpack.c.b16 %v8190, %v8186
    %v8339 = vpack.c.b16 %v8195, %v8191
    %v8340 = vpack.c.b16 %v8196, %v8192
    %v8341 = vpack.c.b16 %v8197, %v8193
    %v8342 = vpack.c.b16 %v8198, %v8194
    %v8343 = vpack.c.b16 %v8203, %v8199
    %v8344 = vpack.c.b16 %v8204, %v8200
    %v8345 = vpack.c.b16 %v8205, %v8201
    %v8346 = vpack.c.b16 %v8206, %v8202
    %v8347 = vpack.c.b16 %v8211, %v8207
    %v8348 = vpack.c.b16 %v8212, %v8208
    %v8349 = vpack.c.b16 %v8213, %v8209
    %v8350 = vpack.c.b16 %v8214, %v8210
    %v8351 = vpack.c.b16 %v8219, %v8215
    %v8352 = vpack.c.b16 %v8220, %v8216
    %v8353 = vpack.c.b16 %v8221, %v8217
    %v8354 = vpack.c.b16 %v8222, %v8218
    %v8355 = vpack.c.b16 %v8227, %v8223
    %v8356 = vpack.c.b16 %v8228, %v8224
    %v8357 = vpack.c.b16 %v8229, %v8225
    %v8358 = vpack.c.b16 %v8230, %v8226
    %8487 = vmatprep.subr.bf16.mxu0 %v8260
    %8488 = vmatpush1.bf16.msra.mxu0 %v8259
    %8489 = vmatprep.subr.bf16.mxu0 %v8256
    %8490 = vmatpush1.bf16.msra.mxu0 %v8255
    %8491 = vmatprep.subr.bf16.mxu0 %v8252
    %8492 = vmatpush1.bf16.msra.mxu0 %v8251
    %8493 = vmatprep.subr.bf16.mxu0 %v8248
    %8494 = vmatpush1.bf16.msra.mxu0 %v8247
    %8495 = vmatprep.subr.bf16.mxu0 %v8244
    %8496 = vmatpush1.bf16.msra.mxu0 %v8243
    %8497 = vmatprep.subr.bf16.mxu0 %v8240
    %8498 = vmatpush1.bf16.msra.mxu0 %v8239
    %8499 = vmatprep.subr.bf16.mxu0 %v8236
    %8500 = vmatpush1.bf16.msra.mxu0 %v8235
    %8501 = vmatprep.subr.bf16.mxu0 %v8232
    %8502 = vmatpush1.bf16.msra.mxu0 %v8231
    %8503 = vmatprep.subr.bf16.mxu0 %v8292
    %8504 = vmatpush2.bf16.msra.mxu0 %v8291
    %8505 = vmatprep.subr.bf16.mxu0 %v8288
    %8506 = vmatpush2.bf16.msra.mxu0 %v8287
    %8507 = vmatprep.subr.bf16.mxu0 %v8284
    %8508 = vmatpush2.bf16.msra.mxu0 %v8283
    %8509 = vmatprep.subr.bf16.mxu0 %v8280
    %8510 = vmatpush2.bf16.msra.mxu0 %v8279
    %8511 = vmatprep.subr.bf16.mxu0 %v8276
    %8512 = vmatpush2.bf16.msra.mxu0 %v8275
    %8513 = vmatprep.subr.bf16.mxu0 %v8272
    %8514 = vmatpush2.bf16.msra.mxu0 %v8271
    %8515 = vmatprep.subr.bf16.mxu0 %v8268
    %8516 = vmatpush2.bf16.msra.mxu0 %v8267
    %8517 = vmatprep.subr.bf16.mxu0 %v8264
    %8518 = vmatpush2.bf16.msra.mxu0 %v8263
    %8519 = vmatprep.mubr.bf16.mxu0 %v7694
    %8520 = vmatmul.mubr.bf16.gmra.mxu0 %v7693
    %v8521 = vpop.f32.mrf.mxu0
    %v8522 = vadd.f32 %v7830, %v8521
    %v8523 = vpop.f32.mrf.mxu0
    %v8524 = vadd.f32 %v7834, %v8523
    %v8525 = vpop.f32.mrf.mxu0
    %v8526 = vpop.f32.mrf.mxu0
    %8527 = vdwg.mxu0
    %8528 = vmatprep.subr.bf16.mxu0 %v8324
    %8529 = vmatpush1.bf16.msra.mxu0 %v8323
    %8530 = vmatprep.subr.bf16.mxu0 %v8320
    %8531 = vmatpush1.bf16.msra.mxu0 %v8319
    %8532 = vmatprep.subr.bf16.mxu0 %v8316
    %8533 = vmatpush1.bf16.msra.mxu0 %v8315
    %8534 = vmatprep.subr.bf16.mxu0 %v8312
    %8535 = vmatpush1.bf16.msra.mxu0 %v8311
    %8536 = vmatprep.subr.bf16.mxu0 %v8308
    %8537 = vmatpush1.bf16.msra.mxu0 %v8307
    %8538 = vmatprep.subr.bf16.mxu0 %v8304
    %8539 = vmatpush1.bf16.msra.mxu0 %v8303
    %8540 = vmatprep.subr.bf16.mxu0 %v8300
    %8541 = vmatpush1.bf16.msra.mxu0 %v8299
    %8542 = vmatprep.subr.bf16.mxu0 %v8296
    %8543 = vmatpush1.bf16.msra.mxu0 %v8295
    %8544 = vmatprep.subr.bf16.mxu0 %v8356
    %8545 = vmatpush2.bf16.msra.mxu0 %v8355
    %8546 = vmatprep.subr.bf16.mxu0 %v8352
    %8547 = vmatpush2.bf16.msra.mxu0 %v8351
    %8548 = vmatprep.subr.bf16.mxu0 %v8348
    %8549 = vmatpush2.bf16.msra.mxu0 %v8347
    %8550 = vmatprep.subr.bf16.mxu0 %v8344
    %8551 = vmatpush2.bf16.msra.mxu0 %v8343
    %8552 = vmatprep.subr.bf16.mxu0 %v8340
    %8553 = vmatpush2.bf16.msra.mxu0 %v8339
    %8554 = vmatprep.subr.bf16.mxu0 %v8336
    %8555 = vmatpush2.bf16.msra.mxu0 %v8335
    %8556 = vmatprep.subr.bf16.mxu0 %v8332
    %8557 = vmatpush2.bf16.msra.mxu0 %v8331
    %8558 = vmatprep.subr.bf16.mxu0 %v8328
    %8559 = vmatpush2.bf16.msra.mxu0 %v8327
    %8560 = vmatprep.mubr.bf16.mxu0 %v7696
    %8561 = vmatmul.mubr.bf16.gmra.mxu0 %v7695
    %v8562 = vpop.f32.mrf.mxu0
    %v8563 = vadd.f32 %v8522, %v8562
    %v8564 = vpop.f32.mrf.mxu0
    %v8565 = vadd.f32 %v8524, %v8564
    %v8566 = vpop.f32.mrf.mxu0
    %v8567 = vpop.f32.mrf.mxu0
    %8568 = vdwg.mxu0
    %8569 = vmatprep.subr.bf16.mxu0 %v8262
    %8570 = vmatpush1.bf16.msra.mxu0 %v8261
    %8571 = vmatprep.subr.bf16.mxu0 %v8258
    %8572 = vmatpush1.bf16.msra.mxu0 %v8257
    %8573 = vmatprep.subr.bf16.mxu0 %v8254
    %8574 = vmatpush1.bf16.msra.mxu0 %v8253
    %8575 = vmatprep.subr.bf16.mxu0 %v8250
    %8576 = vmatpush1.bf16.msra.mxu0 %v8249
    %8577 = vmatprep.subr.bf16.mxu0 %v8246
    %8578 = vmatpush1.bf16.msra.mxu0 %v8245
    %8579 = vmatprep.subr.bf16.mxu0 %v8242
    %8580 = vmatpush1.bf16.msra.mxu0 %v8241
    %8581 = vmatprep.subr.bf16.mxu0 %v8238
    %8582 = vmatpush1.bf16.msra.mxu0 %v8237
    %8583 = vmatprep.subr.bf16.mxu0 %v8234
    %8584 = vmatpush1.bf16.msra.mxu0 %v8233
    %8585 = vmatprep.subr.bf16.mxu0 %v8294
    %8586 = vmatpush2.bf16.msra.mxu0 %v8293
    %8587 = vmatprep.subr.bf16.mxu0 %v8290
    %8588 = vmatpush2.bf16.msra.mxu0 %v8289
    %8589 = vmatprep.subr.bf16.mxu0 %v8286
    %8590 = vmatpush2.bf16.msra.mxu0 %v8285
    %8591 = vmatprep.subr.bf16.mxu0 %v8282
    %8592 = vmatpush2.bf16.msra.mxu0 %v8281
    %8593 = vmatprep.subr.bf16.mxu0 %v8278
    %8594 = vmatpush2.bf16.msra.mxu0 %v8277
    %8595 = vmatprep.subr.bf16.mxu0 %v8274
    %8596 = vmatpush2.bf16.msra.mxu0 %v8273
    %8597 = vmatprep.subr.bf16.mxu0 %v8270
    %8598 = vmatpush2.bf16.msra.mxu0 %v8269
    %8599 = vmatprep.subr.bf16.mxu0 %v8266
    %8600 = vmatpush2.bf16.msra.mxu0 %v8265
    %8601 = vmatprep.mubr.bf16.mxu0 %v7694
    %8602 = vmatmul.mubr.bf16.gmra.mxu0 %v7693
    %v8603 = vpop.f32.mrf.mxu0
    %v8604 = vadd.f32 %v7838, %v8603
    %v8605 = vpop.f32.mrf.mxu0
    %v8606 = vadd.f32 %v7842, %v8605
    %v8607 = vpop.f32.mrf.mxu0
    %v8608 = vpop.f32.mrf.mxu0
    %8609 = vdwg.mxu0
    %8610 = vmatprep.subr.bf16.mxu0 %v8326
    %8611 = vmatpush1.bf16.msra.mxu0 %v8325
    %8612 = vmatprep.subr.bf16.mxu0 %v8322
    %8613 = vmatpush1.bf16.msra.mxu0 %v8321
    %8614 = vmatprep.subr.bf16.mxu0 %v8318
    %8615 = vmatpush1.bf16.msra.mxu0 %v8317
    %8616 = vmatprep.subr.bf16.mxu0 %v8314
    %8617 = vmatpush1.bf16.msra.mxu0 %v8313
    %8618 = vmatprep.subr.bf16.mxu0 %v8310
    %8619 = vmatpush1.bf16.msra.mxu0 %v8309
    %8620 = vmatprep.subr.bf16.mxu0 %v8306
    %8621 = vmatpush1.bf16.msra.mxu0 %v8305
    %8622 = vmatprep.subr.bf16.mxu0 %v8302
    %8623 = vmatpush1.bf16.msra.mxu0 %v8301
    %8624 = vmatprep.subr.bf16.mxu0 %v8298
    %8625 = vmatpush1.bf16.msra.mxu0 %v8297
    %8626 = vmatprep.subr.bf16.mxu0 %v8358
    %8627 = vmatpush2.bf16.msra.mxu0 %v8357
    %8628 = vmatprep.subr.bf16.mxu0 %v8354
    %8629 = vmatpush2.bf16.msra.mxu0 %v8353
    %8630 = vmatprep.subr.bf16.mxu0 %v8350
    %8631 = vmatpush2.bf16.msra.mxu0 %v8349
    %8632 = vmatprep.subr.bf16.mxu0 %v8346
    %8633 = vmatpush2.bf16.msra.mxu0 %v8345
    %8634 = vmatprep.subr.bf16.mxu0 %v8342
    %8635 = vmatpush2.bf16.msra.mxu0 %v8341
    %8636 = vmatprep.subr.bf16.mxu0 %v8338
    %8637 = vmatpush2.bf16.msra.mxu0 %v8337
    %8638 = vmatprep.subr.bf16.mxu0 %v8334
    %8639 = vmatpush2.bf16.msra.mxu0 %v8333
    %8640 = vmatprep.subr.bf16.mxu0 %v8330
    %8641 = vmatpush2.bf16.msra.mxu0 %v8329
    %8642 = vmatprep.mubr.bf16.mxu0 %v7696
    %8643 = vmatmul.mubr.bf16.gmra.mxu0 %v7695
    %v8644 = vpop.f32.mrf.mxu0
    %v8645 = vadd.f32 %v8604, %v8644
    %v8646 = vpop.f32.mrf.mxu0
    %v8647 = vadd.f32 %v8606, %v8646
    %v8648 = vpop.f32.mrf.mxu0
    %v8649 = vpop.f32.mrf.mxu0
    %8650 = vdwg.mxu0
    %v8651 = vmax.f32 %v8563, 0.0
    %v8652 = vmax.f32 %v8565, 0.0
    %v8653 = vmax.f32 %v8645, 0.0
    %v8654 = vmax.f32 %v8647, 0.0
    %v8655 = vpack.c.bf16 %v8651, %v8651
    %v8656 = vpack.c.bf16 %v8652, %v8652
    %v8657 = vpack.c.bf16 %v8653, %v8653
    %v8658 = vpack.c.bf16 %v8654, %v8654
    %v8659 = vld [vmem:[#allocation10] sm:$0xf]
    %v8660 = vld [vmem:[#allocation10 + $0x4] sm:$0xf]
    %v8661 = vld [vmem:[#allocation10 + $0x8] sm:$0xf]
    %v8662 = vld [vmem:[#allocation10 + $0xc] sm:$0xf]
    %v8663 = vld [vmem:[#allocation10 + $0x10] sm:$0xf]
    %v8664 = vld [vmem:[#allocation10 + $0x14] sm:$0xf]
    %v8665 = vld [vmem:[#allocation10 + $0x18] sm:$0xf]
    %v8666 = vld [vmem:[#allocation10 + $0x1c] sm:$0xf]
    %v8667 = vld [vmem:[#allocation10 + $0x20] sm:$0xf]
    %v8668 = vld [vmem:[#allocation10 + $0x24] sm:$0xf]
    %v8669 = vld [vmem:[#allocation10 + $0x28] sm:$0xf]
    %v8670 = vld [vmem:[#allocation10 + $0x2c] sm:$0xf]
    %v8671 = vld [vmem:[#allocation10 + $0x30] sm:$0xf]
    %v8672 = vld [vmem:[#allocation10 + $0x34] sm:$0xf]
    %v8673 = vld [vmem:[#allocation10 + $0x38] sm:$0xf]
    %v8674 = vld [vmem:[#allocation10 + $0x3c] sm:$0xf]
    %v8675 = vld [vmem:[#allocation10 + $0x40] sm:$0xf]
    %v8676 = vld [vmem:[#allocation10 + $0x44] sm:$0xf]
    %v8677 = vld [vmem:[#allocation10 + $0x48] sm:$0xf]
    %v8678 = vld [vmem:[#allocation10 + $0x4c] sm:$0xf]
    %v8679 = vld [vmem:[#allocation10 + $0x50] sm:$0xf]
    %v8680 = vld [vmem:[#allocation10 + $0x54] sm:$0xf]
    %v8681 = vld [vmem:[#allocation10 + $0x58] sm:$0xf]
    %v8682 = vld [vmem:[#allocation10 + $0x5c] sm:$0xf]
    %v8683 = vld [vmem:[#allocation10 + $0x60] sm:$0xf]
    %v8684 = vld [vmem:[#allocation10 + $0x64] sm:$0xf]
    %v8685 = vld [vmem:[#allocation10 + $0x68] sm:$0xf]
    %v8686 = vld [vmem:[#allocation10 + $0x6c] sm:$0xf]
    %v8687 = vld [vmem:[#allocation10 + $0x70] sm:$0xf]
    %v8688 = vld [vmem:[#allocation10 + $0x74] sm:$0xf]
    %v8689 = vld [vmem:[#allocation10 + $0x78] sm:$0xf]
    %v8690 = vld [vmem:[#allocation10 + $0x7c] sm:$0xf]
    %v8691 = vld [vmem:[#allocation10 + $0x80] sm:$0xf]
    %v8692 = vld [vmem:[#allocation10 + $0x84] sm:$0xf]
    %v8693 = vld [vmem:[#allocation10 + $0x88] sm:$0xf]
    %v8694 = vld [vmem:[#allocation10 + $0x8c] sm:$0xf]
    %v8695 = vld [vmem:[#allocation10 + $0x90] sm:$0xf]
    %v8696 = vld [vmem:[#allocation10 + $0x94] sm:$0xf]
    %v8697 = vld [vmem:[#allocation10 + $0x98] sm:$0xf]
    %v8698 = vld [vmem:[#allocation10 + $0x9c] sm:$0xf]
    %v8699 = vld [vmem:[#allocation10 + $0xa0] sm:$0xf]
    %v8700 = vld [vmem:[#allocation10 + $0xa4] sm:$0xf]
    %v8701 = vld [vmem:[#allocation10 + $0xa8] sm:$0xf]
    %v8702 = vld [vmem:[#allocation10 + $0xac] sm:$0xf]
    %v8703 = vld [vmem:[#allocation10 + $0xb0] sm:$0xf]
    %v8704 = vld [vmem:[#allocation10 + $0xb4] sm:$0xf]
    %v8705 = vld [vmem:[#allocation10 + $0xb8] sm:$0xf]
    %v8706 = vld [vmem:[#allocation10 + $0xbc] sm:$0xf]
    %v8707 = vld [vmem:[#allocation10 + $0xc0] sm:$0xf]
    %v8708 = vld [vmem:[#allocation10 + $0xc4] sm:$0xf]
    %v8709 = vld [vmem:[#allocation10 + $0xc8] sm:$0xf]
    %v8710 = vld [vmem:[#allocation10 + $0xcc] sm:$0xf]
    %v8711 = vld [vmem:[#allocation10 + $0xd0] sm:$0xf]
    %v8712 = vld [vmem:[#allocation10 + $0xd4] sm:$0xf]
    %v8713 = vld [vmem:[#allocation10 + $0xd8] sm:$0xf]
    %v8714 = vld [vmem:[#allocation10 + $0xdc] sm:$0xf]
    %v8715 = vld [vmem:[#allocation10 + $0xe0] sm:$0xf]
    %v8716 = vld [vmem:[#allocation10 + $0xe4] sm:$0xf]
    %v8717 = vld [vmem:[#allocation10 + $0xe8] sm:$0xf]
    %v8718 = vld [vmem:[#allocation10 + $0xec] sm:$0xf]
    %v8719 = vld [vmem:[#allocation10 + $0xf0] sm:$0xf]
    %v8720 = vld [vmem:[#allocation10 + $0xf4] sm:$0xf]
    %v8721 = vld [vmem:[#allocation10 + $0xf8] sm:$0xf]
    %v8722 = vld [vmem:[#allocation10 + $0xfc] sm:$0xf]
    %v8723 = vld [vmem:[#allocation11] sm:$0x1]
    %v8725 = vlaneseq
    %v8726 = vshrl.u32 %v8725, 7
    %v8727 = vsub.s32 0, %v8726
    %v8728 = vrot.slane %v8723, %v8727
    %v8794 = vunpack.c.l.b16 %v8659
    %v8795 = vunpack.c.l.b16 %v8660
    %v8796 = vunpack.c.l.b16 %v8661
    %v8797 = vunpack.c.l.b16 %v8662
    %v8798 = vunpack.c.l.b16 %v8663
    %v8799 = vunpack.c.l.b16 %v8664
    %v8800 = vunpack.c.l.b16 %v8665
    %v8801 = vunpack.c.l.b16 %v8666
    %v8802 = vunpack.c.l.b16 %v8667
    %v8803 = vunpack.c.l.b16 %v8668
    %v8804 = vunpack.c.l.b16 %v8669
    %v8805 = vunpack.c.l.b16 %v8670
    %v8806 = vunpack.c.l.b16 %v8671
    %v8807 = vunpack.c.l.b16 %v8672
    %v8808 = vunpack.c.l.b16 %v8673
    %v8809 = vunpack.c.l.b16 %v8674
    %v8810 = vunpack.c.l.b16 %v8675
    %v8811 = vunpack.c.l.b16 %v8676
    %v8812 = vunpack.c.l.b16 %v8677
    %v8813 = vunpack.c.l.b16 %v8678
    %v8814 = vunpack.c.l.b16 %v8679
    %v8815 = vunpack.c.l.b16 %v8680
    %v8816 = vunpack.c.l.b16 %v8681
    %v8817 = vunpack.c.l.b16 %v8682
    %v8818 = vunpack.c.l.b16 %v8683
    %v8819 = vunpack.c.l.b16 %v8684
    %v8820 = vunpack.c.l.b16 %v8685
    %v8821 = vunpack.c.l.b16 %v8686
    %v8822 = vunpack.c.l.b16 %v8687
    %v8823 = vunpack.c.l.b16 %v8688
    %v8824 = vunpack.c.l.b16 %v8689
    %v8825 = vunpack.c.l.b16 %v8690
    %v8826 = vunpack.c.l.b16 %v8691
    %v8827 = vunpack.c.l.b16 %v8692
    %v8828 = vunpack.c.l.b16 %v8693
    %v8829 = vunpack.c.l.b16 %v8694
    %v8830 = vunpack.c.l.b16 %v8695
    %v8831 = vunpack.c.l.b16 %v8696
    %v8832 = vunpack.c.l.b16 %v8697
    %v8833 = vunpack.c.l.b16 %v8698
    %v8834 = vunpack.c.l.b16 %v8699
    %v8835 = vunpack.c.l.b16 %v8700
    %v8836 = vunpack.c.l.b16 %v8701
    %v8837 = vunpack.c.l.b16 %v8702
    %v8838 = vunpack.c.l.b16 %v8703
    %v8839 = vunpack.c.l.b16 %v8704
    %v8840 = vunpack.c.l.b16 %v8705
    %v8841 = vunpack.c.l.b16 %v8706
    %v8842 = vunpack.c.l.b16 %v8707
    %v8843 = vunpack.c.l.b16 %v8708
    %v8844 = vunpack.c.l.b16 %v8709
    %v8845 = vunpack.c.l.b16 %v8710
    %v8846 = vunpack.c.l.b16 %v8711
    %v8847 = vunpack.c.l.b16 %v8712
    %v8848 = vunpack.c.l.b16 %v8713
    %v8849 = vunpack.c.l.b16 %v8714
    %v8850 = vunpack.c.l.b16 %v8715
    %v8851 = vunpack.c.l.b16 %v8716
    %v8852 = vunpack.c.l.b16 %v8717
    %v8853 = vunpack.c.l.b16 %v8718
    %v8854 = vunpack.c.l.b16 %v8719
    %v8855 = vunpack.c.l.b16 %v8720
    %v8856 = vunpack.c.l.b16 %v8721
    %v8857 = vunpack.c.l.b16 %v8722
    %v8858 = vpack.c.b16 %v8795, %v8794
    %v8859 = vpack.c.b16 %v8797, %v8796
    %v8860 = vpack.c.b16 %v8799, %v8798
    %v8861 = vpack.c.b16 %v8801, %v8800
    %v8862 = vpack.c.b16 %v8803, %v8802
    %v8863 = vpack.c.b16 %v8805, %v8804
    %v8864 = vpack.c.b16 %v8807, %v8806
    %v8865 = vpack.c.b16 %v8809, %v8808
    %v8866 = vpack.c.b16 %v8811, %v8810
    %v8867 = vpack.c.b16 %v8813, %v8812
    %v8868 = vpack.c.b16 %v8815, %v8814
    %v8869 = vpack.c.b16 %v8817, %v8816
    %v8870 = vpack.c.b16 %v8819, %v8818
    %v8871 = vpack.c.b16 %v8821, %v8820
    %v8872 = vpack.c.b16 %v8823, %v8822
    %v8873 = vpack.c.b16 %v8825, %v8824
    %v8874 = vpack.c.b16 %v8827, %v8826
    %v8875 = vpack.c.b16 %v8829, %v8828
    %v8876 = vpack.c.b16 %v8831, %v8830
    %v8877 = vpack.c.b16 %v8833, %v8832
    %v8878 = vpack.c.b16 %v8835, %v8834
    %v8879 = vpack.c.b16 %v8837, %v8836
    %v8880 = vpack.c.b16 %v8839, %v8838
    %v8881 = vpack.c.b16 %v8841, %v8840
    %v8882 = vpack.c.b16 %v8843, %v8842
    %v8883 = vpack.c.b16 %v8845, %v8844
    %v8884 = vpack.c.b16 %v8847, %v8846
    %v8885 = vpack.c.b16 %v8849, %v8848
    %v8886 = vpack.c.b16 %v8851, %v8850
    %v8887 = vpack.c.b16 %v8853, %v8852
    %v8888 = vpack.c.b16 %v8855, %v8854
    %v8889 = vpack.c.b16 %v8857, %v8856
    %8922 = vmatprep.subr.bf16.mxu0 0
    %8923 = vmatpush1.bf16.msra.mxu0 %v8865
    %8924 = vmatprep.subr.bf16.mxu0 0
    %8925 = vmatpush1.bf16.msra.mxu0 %v8864
    %8926 = vmatprep.subr.bf16.mxu0 0
    %8927 = vmatpush1.bf16.msra.mxu0 %v8863
    %8928 = vmatprep.subr.bf16.mxu0 0
    %8929 = vmatpush1.bf16.msra.mxu0 %v8862
    %8930 = vmatprep.subr.bf16.mxu0 0
    %8931 = vmatpush1.bf16.msra.mxu0 %v8861
    %8932 = vmatprep.subr.bf16.mxu0 0
    %8933 = vmatpush1.bf16.msra.mxu0 %v8860
    %8934 = vmatprep.subr.bf16.mxu0 0
    %8935 = vmatpush1.bf16.msra.mxu0 %v8859
    %8936 = vmatprep.subr.bf16.mxu0 0
    %8937 = vmatpush1.bf16.msra.mxu0 %v8858
    %8938 = vmatprep.subr.bf16.mxu0 0
    %8939 = vmatpush2.bf16.msra.mxu0 %v8873
    %8940 = vmatprep.subr.bf16.mxu0 0
    %8941 = vmatpush2.bf16.msra.mxu0 %v8872
    %8942 = vmatprep.subr.bf16.mxu0 0
    %8943 = vmatpush2.bf16.msra.mxu0 %v8871
    %8944 = vmatprep.subr.bf16.mxu0 0
    %8945 = vmatpush2.bf16.msra.mxu0 %v8870
    %8946 = vmatprep.subr.bf16.mxu0 0
    %8947 = vmatpush2.bf16.msra.mxu0 %v8869
    %8948 = vmatprep.subr.bf16.mxu0 0
    %8949 = vmatpush2.bf16.msra.mxu0 %v8868
    %8950 = vmatprep.subr.bf16.mxu0 0
    %8951 = vmatpush2.bf16.msra.mxu0 %v8867
    %8952 = vmatprep.subr.bf16.mxu0 0
    %8953 = vmatpush2.bf16.msra.mxu0 %v8866
    %8954 = vmatprep.mubr.bf16.mxu0 %v8656
    %8955 = vmatmul.mubr.bf16.gmra.mxu0 %v8655
    %v8956 = vpop.f32.mrf.mxu0
    %v8957 = vadd.f32 %v8728, %v8956
    %v8958 = vpop.f32.mrf.mxu0
    %v8959 = vpop.f32.mrf.mxu0
    %v8960 = vpop.f32.mrf.mxu0
    %8961 = vdwg.mxu0
    %8962 = vmatprep.subr.bf16.mxu0 0
    %8963 = vmatpush1.bf16.msra.mxu0 %v8881
    %8964 = vmatprep.subr.bf16.mxu0 0
    %8965 = vmatpush1.bf16.msra.mxu0 %v8880
    %8966 = vmatprep.subr.bf16.mxu0 0
    %8967 = vmatpush1.bf16.msra.mxu0 %v8879
    %8968 = vmatprep.subr.bf16.mxu0 0
    %8969 = vmatpush1.bf16.msra.mxu0 %v8878
    %8970 = vmatprep.subr.bf16.mxu0 0
    %8971 = vmatpush1.bf16.msra.mxu0 %v8877
    %8972 = vmatprep.subr.bf16.mxu0 0
    %8973 = vmatpush1.bf16.msra.mxu0 %v8876
    %8974 = vmatprep.subr.bf16.mxu0 0
    %8975 = vmatpush1.bf16.msra.mxu0 %v8875
    %8976 = vmatprep.subr.bf16.mxu0 0
    %8977 = vmatpush1.bf16.msra.mxu0 %v8874
    %8978 = vmatprep.subr.bf16.mxu0 0
    %8979 = vmatpush2.bf16.msra.mxu0 %v8889
    %8980 = vmatprep.subr.bf16.mxu0 0
    %8981 = vmatpush2.bf16.msra.mxu0 %v8888
    %8982 = vmatprep.subr.bf16.mxu0 0
    %8983 = vmatpush2.bf16.msra.mxu0 %v8887
    %8984 = vmatprep.subr.bf16.mxu0 0
    %8985 = vmatpush2.bf16.msra.mxu0 %v8886
    %8986 = vmatprep.subr.bf16.mxu0 0
    %8987 = vmatpush2.bf16.msra.mxu0 %v8885
    %8988 = vmatprep.subr.bf16.mxu0 0
    %8989 = vmatpush2.bf16.msra.mxu0 %v8884
    %8990 = vmatprep.subr.bf16.mxu0 0
    %8991 = vmatpush2.bf16.msra.mxu0 %v8883
    %8992 = vmatprep.subr.bf16.mxu0 0
    %8993 = vmatpush2.bf16.msra.mxu0 %v8882
    %8994 = vmatprep.mubr.bf16.mxu0 %v8658
    %8995 = vmatmul.mubr.bf16.gmra.mxu0 %v8657
    %v8996 = vpop.f32.mrf.mxu0
    %v8997 = vadd.f32 %v8957, %v8996
    %v8998 = vpop.f32.mrf.mxu0
    %v8999 = vpop.f32.mrf.mxu0
    %v9000 = vpop.f32.mrf.mxu0
    %9001 = vdwg.mxu0
    %v9002 = vpack.c.bf16 %v8997, %v8997
    %9003 = vst [vmem:[%s11] sm:$0xf] %v9002
    %v9004 = vpack.c.bf16 %v7689, %v7689
    %v9005 = vpack.c.bf16 %v7690, %v7690
    %v9006 = vpack.c.bf16 %v7691, %v7691
    %v9007 = vpack.c.bf16 %v7692, %v7692
    %v9008 = vld [vmem:[#allocation13] sm:$0xf]
    %v9009 = vld [vmem:[#allocation13 + $0x4] sm:$0xf]
    %v9010 = vld [vmem:[#allocation13 + $0x8] sm:$0xf]
    %v9011 = vld [vmem:[#allocation13 + $0xc] sm:$0xf]
    %v9012 = vld [vmem:[#allocation13 + $0x10] sm:$0xf]
    %v9013 = vld [vmem:[#allocation13 + $0x14] sm:$0xf]
    %v9014 = vld [vmem:[#allocation13 + $0x18] sm:$0xf]
    %v9015 = vld [vmem:[#allocation13 + $0x1c] sm:$0xf]
    %v9016 = vld [vmem:[#allocation13 + $0x20] sm:$0xf]
    %v9017 = vld [vmem:[#allocation13 + $0x24] sm:$0xf]
    %v9018 = vld [vmem:[#allocation13 + $0x28] sm:$0xf]
    %v9019 = vld [vmem:[#allocation13 + $0x2c] sm:$0xf]
    %v9020 = vld [vmem:[#allocation13 + $0x30] sm:$0xf]
    %v9021 = vld [vmem:[#allocation13 + $0x34] sm:$0xf]
    %v9022 = vld [vmem:[#allocation13 + $0x38] sm:$0xf]
    %v9023 = vld [vmem:[#allocation13 + $0x3c] sm:$0xf]
    %v9024 = vld [vmem:[#allocation13 + $0x40] sm:$0xf]
    %v9025 = vld [vmem:[#allocation13 + $0x44] sm:$0xf]
    %v9026 = vld [vmem:[#allocation13 + $0x48] sm:$0xf]
    %v9027 = vld [vmem:[#allocation13 + $0x4c] sm:$0xf]
    %v9028 = vld [vmem:[#allocation13 + $0x50] sm:$0xf]
    %v9029 = vld [vmem:[#allocation13 + $0x54] sm:$0xf]
    %v9030 = vld [vmem:[#allocation13 + $0x58] sm:$0xf]
    %v9031 = vld [vmem:[#allocation13 + $0x5c] sm:$0xf]
    %v9032 = vld [vmem:[#allocation13 + $0x60] sm:$0xf]
    %v9033 = vld [vmem:[#allocation13 + $0x64] sm:$0xf]
    %v9034 = vld [vmem:[#allocation13 + $0x68] sm:$0xf]
    %v9035 = vld [vmem:[#allocation13 + $0x6c] sm:$0xf]
    %v9036 = vld [vmem:[#allocation13 + $0x70] sm:$0xf]
    %v9037 = vld [vmem:[#allocation13 + $0x74] sm:$0xf]
    %v9038 = vld [vmem:[#allocation13 + $0x78] sm:$0xf]
    %v9039 = vld [vmem:[#allocation13 + $0x7c] sm:$0xf]
    %v9040 = vld [vmem:[#allocation13 + $0x80] sm:$0xf]
    %v9041 = vld [vmem:[#allocation13 + $0x84] sm:$0xf]
    %v9042 = vld [vmem:[#allocation13 + $0x88] sm:$0xf]
    %v9043 = vld [vmem:[#allocation13 + $0x8c] sm:$0xf]
    %v9044 = vld [vmem:[#allocation13 + $0x90] sm:$0xf]
    %v9045 = vld [vmem:[#allocation13 + $0x94] sm:$0xf]
    %v9046 = vld [vmem:[#allocation13 + $0x98] sm:$0xf]
    %v9047 = vld [vmem:[#allocation13 + $0x9c] sm:$0xf]
    %v9048 = vld [vmem:[#allocation13 + $0xa0] sm:$0xf]
    %v9049 = vld [vmem:[#allocation13 + $0xa4] sm:$0xf]
    %v9050 = vld [vmem:[#allocation13 + $0xa8] sm:$0xf]
    %v9051 = vld [vmem:[#allocation13 + $0xac] sm:$0xf]
    %v9052 = vld [vmem:[#allocation13 + $0xb0] sm:$0xf]
    %v9053 = vld [vmem:[#allocation13 + $0xb4] sm:$0xf]
    %v9054 = vld [vmem:[#allocation13 + $0xb8] sm:$0xf]
    %v9055 = vld [vmem:[#allocation13 + $0xbc] sm:$0xf]
    %v9056 = vld [vmem:[#allocation13 + $0xc0] sm:$0xf]
    %v9057 = vld [vmem:[#allocation13 + $0xc4] sm:$0xf]
    %v9058 = vld [vmem:[#allocation13 + $0xc8] sm:$0xf]
    %v9059 = vld [vmem:[#allocation13 + $0xcc] sm:$0xf]
    %v9060 = vld [vmem:[#allocation13 + $0xd0] sm:$0xf]
    %v9061 = vld [vmem:[#allocation13 + $0xd4] sm:$0xf]
    %v9062 = vld [vmem:[#allocation13 + $0xd8] sm:$0xf]
    %v9063 = vld [vmem:[#allocation13 + $0xdc] sm:$0xf]
    %v9064 = vld [vmem:[#allocation13 + $0xe0] sm:$0xf]
    %v9065 = vld [vmem:[#allocation13 + $0xe4] sm:$0xf]
    %v9066 = vld [vmem:[#allocation13 + $0xe8] sm:$0xf]
    %v9067 = vld [vmem:[#allocation13 + $0xec] sm:$0xf]
    %v9068 = vld [vmem:[#allocation13 + $0xf0] sm:$0xf]
    %v9069 = vld [vmem:[#allocation13 + $0xf4] sm:$0xf]
    %v9070 = vld [vmem:[#allocation13 + $0xf8] sm:$0xf]
    %v9071 = vld [vmem:[#allocation13 + $0xfc] sm:$0xf]
    %v9072 = vld [vmem:[#allocation14] sm:$0x1]
    %v9074 = vlaneseq
    %v9075 = vshrl.u32 %v9074, 7
    %v9076 = vsub.s32 0, %v9075
    %v9077 = vrot.slane %v9072, %v9076
    %v9143 = vunpack.c.l.b16 %v9008
    %v9144 = vunpack.c.l.b16 %v9009
    %v9145 = vunpack.c.l.b16 %v9010
    %v9146 = vunpack.c.l.b16 %v9011
    %v9147 = vunpack.c.l.b16 %v9012
    %v9148 = vunpack.c.l.b16 %v9013
    %v9149 = vunpack.c.l.b16 %v9014
    %v9150 = vunpack.c.l.b16 %v9015
    %v9151 = vunpack.c.l.b16 %v9016
    %v9152 = vunpack.c.l.b16 %v9017
    %v9153 = vunpack.c.l.b16 %v9018
    %v9154 = vunpack.c.l.b16 %v9019
    %v9155 = vunpack.c.l.b16 %v9020
    %v9156 = vunpack.c.l.b16 %v9021
    %v9157 = vunpack.c.l.b16 %v9022
    %v9158 = vunpack.c.l.b16 %v9023
    %v9159 = vunpack.c.l.b16 %v9024
    %v9160 = vunpack.c.l.b16 %v9025
    %v9161 = vunpack.c.l.b16 %v9026
    %v9162 = vunpack.c.l.b16 %v9027
    %v9163 = vunpack.c.l.b16 %v9028
    %v9164 = vunpack.c.l.b16 %v9029
    %v9165 = vunpack.c.l.b16 %v9030
    %v9166 = vunpack.c.l.b16 %v9031
    %v9167 = vunpack.c.l.b16 %v9032
    %v9168 = vunpack.c.l.b16 %v9033
    %v9169 = vunpack.c.l.b16 %v9034
    %v9170 = vunpack.c.l.b16 %v9035
    %v9171 = vunpack.c.l.b16 %v9036
    %v9172 = vunpack.c.l.b16 %v9037
    %v9173 = vunpack.c.l.b16 %v9038
    %v9174 = vunpack.c.l.b16 %v9039
    %v9175 = vunpack.c.l.b16 %v9040
    %v9176 = vunpack.c.l.b16 %v9041
    %v9177 = vunpack.c.l.b16 %v9042
    %v9178 = vunpack.c.l.b16 %v9043
    %v9179 = vunpack.c.l.b16 %v9044
    %v9180 = vunpack.c.l.b16 %v9045
    %v9181 = vunpack.c.l.b16 %v9046
    %v9182 = vunpack.c.l.b16 %v9047
    %v9183 = vunpack.c.l.b16 %v9048
    %v9184 = vunpack.c.l.b16 %v9049
    %v9185 = vunpack.c.l.b16 %v9050
    %v9186 = vunpack.c.l.b16 %v9051
    %v9187 = vunpack.c.l.b16 %v9052
    %v9188 = vunpack.c.l.b16 %v9053
    %v9189 = vunpack.c.l.b16 %v9054
    %v9190 = vunpack.c.l.b16 %v9055
    %v9191 = vunpack.c.l.b16 %v9056
    %v9192 = vunpack.c.l.b16 %v9057
    %v9193 = vunpack.c.l.b16 %v9058
    %v9194 = vunpack.c.l.b16 %v9059
    %v9195 = vunpack.c.l.b16 %v9060
    %v9196 = vunpack.c.l.b16 %v9061
    %v9197 = vunpack.c.l.b16 %v9062
    %v9198 = vunpack.c.l.b16 %v9063
    %v9199 = vunpack.c.l.b16 %v9064
    %v9200 = vunpack.c.l.b16 %v9065
    %v9201 = vunpack.c.l.b16 %v9066
    %v9202 = vunpack.c.l.b16 %v9067
    %v9203 = vunpack.c.l.b16 %v9068
    %v9204 = vunpack.c.l.b16 %v9069
    %v9205 = vunpack.c.l.b16 %v9070
    %v9206 = vunpack.c.l.b16 %v9071
    %v9207 = vpack.c.b16 %v9144, %v9143
    %v9208 = vpack.c.b16 %v9146, %v9145
    %v9209 = vpack.c.b16 %v9148, %v9147
    %v9210 = vpack.c.b16 %v9150, %v9149
    %v9211 = vpack.c.b16 %v9152, %v9151
    %v9212 = vpack.c.b16 %v9154, %v9153
    %v9213 = vpack.c.b16 %v9156, %v9155
    %v9214 = vpack.c.b16 %v9158, %v9157
    %v9215 = vpack.c.b16 %v9160, %v9159
    %v9216 = vpack.c.b16 %v9162, %v9161
    %v9217 = vpack.c.b16 %v9164, %v9163
    %v9218 = vpack.c.b16 %v9166, %v9165
    %v9219 = vpack.c.b16 %v9168, %v9167
    %v9220 = vpack.c.b16 %v9170, %v9169
    %v9221 = vpack.c.b16 %v9172, %v9171
    %v9222 = vpack.c.b16 %v9174, %v9173
    %v9223 = vpack.c.b16 %v9176, %v9175
    %v9224 = vpack.c.b16 %v9178, %v9177
    %v9225 = vpack.c.b16 %v9180, %v9179
    %v9226 = vpack.c.b16 %v9182, %v9181
    %v9227 = vpack.c.b16 %v9184, %v9183
    %v9228 = vpack.c.b16 %v9186, %v9185
    %v9229 = vpack.c.b16 %v9188, %v9187
    %v9230 = vpack.c.b16 %v9190, %v9189
    %v9231 = vpack.c.b16 %v9192, %v9191
    %v9232 = vpack.c.b16 %v9194, %v9193
    %v9233 = vpack.c.b16 %v9196, %v9195
    %v9234 = vpack.c.b16 %v9198, %v9197
    %v9235 = vpack.c.b16 %v9200, %v9199
    %v9236 = vpack.c.b16 %v9202, %v9201
    %v9237 = vpack.c.b16 %v9204, %v9203
    %v9238 = vpack.c.b16 %v9206, %v9205
    %9271 = vmatprep.subr.bf16.mxu0 0
    %9272 = vmatpush1.bf16.msra.mxu0 %v9214
    %9273 = vmatprep.subr.bf16.mxu0 0
    %9274 = vmatpush1.bf16.msra.mxu0 %v9213
    %9275 = vmatprep.subr.bf16.mxu0 0
    %9276 = vmatpush1.bf16.msra.mxu0 %v9212
    %9277 = vmatprep.subr.bf16.mxu0 0
    %9278 = vmatpush1.bf16.msra.mxu0 %v9211
    %9279 = vmatprep.subr.bf16.mxu0 0
    %9280 = vmatpush1.bf16.msra.mxu0 %v9210
    %9281 = vmatprep.subr.bf16.mxu0 0
    %9282 = vmatpush1.bf16.msra.mxu0 %v9209
    %9283 = vmatprep.subr.bf16.mxu0 0
    %9284 = vmatpush1.bf16.msra.mxu0 %v9208
    %9285 = vmatprep.subr.bf16.mxu0 0
    %9286 = vmatpush1.bf16.msra.mxu0 %v9207
    %9287 = vmatprep.subr.bf16.mxu0 0
    %9288 = vmatpush2.bf16.msra.mxu0 %v9222
    %9289 = vmatprep.subr.bf16.mxu0 0
    %9290 = vmatpush2.bf16.msra.mxu0 %v9221
    %9291 = vmatprep.subr.bf16.mxu0 0
    %9292 = vmatpush2.bf16.msra.mxu0 %v9220
    %9293 = vmatprep.subr.bf16.mxu0 0
    %9294 = vmatpush2.bf16.msra.mxu0 %v9219
    %9295 = vmatprep.subr.bf16.mxu0 0
    %9296 = vmatpush2.bf16.msra.mxu0 %v9218
    %9297 = vmatprep.subr.bf16.mxu0 0
    %9298 = vmatpush2.bf16.msra.mxu0 %v9217
    %9299 = vmatprep.subr.bf16.mxu0 0
    %9300 = vmatpush2.bf16.msra.mxu0 %v9216
    %9301 = vmatprep.subr.bf16.mxu0 0
    %9302 = vmatpush2.bf16.msra.mxu0 %v9215
    %9303 = vmatprep.mubr.bf16.mxu0 %v9005
    %9304 = vmatmul.mubr.bf16.gmra.mxu0 %v9004
    %v9305 = vpop.f32.mrf.mxu0
    %v9306 = vadd.f32 %v9077, %v9305
    %v9307 = vpop.f32.mrf.mxu0
    %v9308 = vpop.f32.mrf.mxu0
    %v9309 = vpop.f32.mrf.mxu0
    %9310 = vdwg.mxu0
    %9311 = vmatprep.subr.bf16.mxu0 0
    %9312 = vmatpush1.bf16.msra.mxu0 %v9230
    %9313 = vmatprep.subr.bf16.mxu0 0
    %9314 = vmatpush1.bf16.msra.mxu0 %v9229
    %9315 = vmatprep.subr.bf16.mxu0 0
    %9316 = vmatpush1.bf16.msra.mxu0 %v9228
    %9317 = vmatprep.subr.bf16.mxu0 0
    %9318 = vmatpush1.bf16.msra.mxu0 %v9227
    %9319 = vmatprep.subr.bf16.mxu0 0
    %9320 = vmatpush1.bf16.msra.mxu0 %v9226
    %9321 = vmatprep.subr.bf16.mxu0 0
    %9322 = vmatpush1.bf16.msra.mxu0 %v9225
    %9323 = vmatprep.subr.bf16.mxu0 0
    %9324 = vmatpush1.bf16.msra.mxu0 %v9224
    %9325 = vmatprep.subr.bf16.mxu0 0
    %9326 = vmatpush1.bf16.msra.mxu0 %v9223
    %9327 = vmatprep.subr.bf16.mxu0 0
    %9328 = vmatpush2.bf16.msra.mxu0 %v9238
    %9329 = vmatprep.subr.bf16.mxu0 0
    %9330 = vmatpush2.bf16.msra.mxu0 %v9237
    %9331 = vmatprep.subr.bf16.mxu0 0
    %9332 = vmatpush2.bf16.msra.mxu0 %v9236
    %9333 = vmatprep.subr.bf16.mxu0 0
    %9334 = vmatpush2.bf16.msra.mxu0 %v9235
    %9335 = vmatprep.subr.bf16.mxu0 0
    %9336 = vmatpush2.bf16.msra.mxu0 %v9234
    %9337 = vmatprep.subr.bf16.mxu0 0
    %9338 = vmatpush2.bf16.msra.mxu0 %v9233
    %9339 = vmatprep.subr.bf16.mxu0 0
    %9340 = vmatpush2.bf16.msra.mxu0 %v9232
    %9341 = vmatprep.subr.bf16.mxu0 0
    %9342 = vmatpush2.bf16.msra.mxu0 %v9231
    %9343 = vmatprep.mubr.bf16.mxu0 %v9007
    %9344 = vmatmul.mubr.bf16.gmra.mxu0 %v9006
    %v9345 = vpop.f32.mrf.mxu0
    %v9346 = vadd.f32 %v9306, %v9345
    %v9347 = vpop.f32.mrf.mxu0
    %v9348 = vpop.f32.mrf.mxu0
    %v9349 = vpop.f32.mrf.mxu0
    %9350 = vdwg.mxu0
    %v9351 = vmax.f32 %v9346, 0.0
    %v9352 = vld [vmem:[#allocation16] sm:$0x1]
    %v9354 = vlaneseq
    %v9355 = vshrl.u32 %v9354, 7
    %v9356 = vsub.s32 0, %v9355
    %v9357 = vrot.slane %v9352, %v9356
    %v9359 = vmul.f32 %v9351, %v9357
    %9360 = vadd.xlane.f32.xlu0 %v9359
    %v9361 = vpop.xlane.xlu0 %9360
    %v9362 = vld [vmem:[#allocation2] sm:$0x1]
    %v9364 = vlaneseq
    %v9365 = vshrl.u32 %v9364, 7
    %v9366 = vsub.s32 0, %v9365
    %v9367 = vrot.slane %v9362, %v9366
    %v9369 = vadd.f32 %v9361, %v9367
    %vm9370 = vcmask 7168
    %9371 = vst.msk [vmem:[%s12] sm:$0xff] %vm9370, %v9369
    // Predicated region
    $region82: #{_classifier_forward_impl.1} parent=1 // pred_check
      _
    $region83: #{_classifier_forward_impl.1} parent=1 // pred_check_branch
      %9373 = sbr.rel (0) target = $region85
    $region84: #{_classifier_forward_impl.1} parent=1 // pred_region
      _
    $region85: #{_classifier_forward_impl.1} parent=1 // pred_fallthru
      _
    // Predicated region
    $region86: #{_classifier_forward_impl.1} parent=1 // pred_check
      _
    $region87: #{_classifier_forward_impl.1} parent=1 // pred_check_branch
      %9375 = sbr.rel (0) target = $region89
    $region88: #{_classifier_forward_impl.1} parent=1 // pred_region
      _
    $region89: #{_classifier_forward_impl.1} parent=1 // pred_fallthru
      _
    // Predicated region
    $region90: #{_classifier_forward_impl.1} parent=1 // pred_check
      _
    $region91: #{_classifier_forward_impl.1} parent=1 // pred_check_branch
      %9377 = sbr.rel (0) target = $region93
    $region92: #{_classifier_forward_impl.1} parent=1 // pred_region
      _
    $region93: #{_classifier_forward_impl.1} parent=1 // pred_fallthru
      _
    // Predicated region
    $region94: #{_classifier_forward_impl.1} parent=1 // pred_check
      _
    $region95: #{_classifier_forward_impl.1} parent=1 // pred_check_branch
      %9379 = sbr.rel (0) target = $region97
    $region96: #{_classifier_forward_impl.1} parent=1 // pred_region
      _
    $region97: #{_classifier_forward_impl.1} parent=1 // pred_fallthru
      _
    %9380 = vsyncpa [#allocation4], 1
    %9381 = vsyncpa [#allocation6], 1
    %9382 = vsyncpa [#allocation9], 1
    %9383 = vsyncpa [#allocation12], 1
    %9384 = vsyncpa [#allocation15], 1

</llo_original>
